<compile_context>
chip_gen: v7x
topology: tpu7x:2x2x1
jax: 0.10.0
libtpu: 0.0.40
codegen_flags: <defaults>
</compile_context>

<pallas_src>
import functools

import jax
import jax.numpy as jnp
from jax import lax
from jax.experimental import pallas as pl
from jax.experimental.pallas import tpu as pltpu  # noqa: F401  (TPU backend)

K = 5            # conv kernel size (both convs)
S = 3            # conv stride (both convs)
F1 = 32          # conv1 output channels
F2 = 64          # conv2 output channels
H_IN = 56        # input spatial size: 56 -> 18 -> 5 under two k=5, s=3 convs
H1 = (H_IN - K) // S + 1          # 18
H2 = (H1 - K) // S + 1            # 5
N_POS = H2 * H2                   # 25 conv2 output positions
N_TAP = K * K                     # 25 conv2 taps
N_CLASSES = 10


def _round_up(n, m):
    return ((n + m - 1) // m) * m


# ----------------------------------------------------------------------------
# Fused kernel: conv1 + ReLU + conv2 + ReLU + Linear, all activations resident.
# ----------------------------------------------------------------------------
def _convnet_kernel(p1g_ref, w1_ref, b1_ref, w2_ref, b2_ref, wfc_ref, bfc_ref,
                    out_ref, *, batch, tap_rows):
    """Refs:
      p1g_ref : [N_TAP*tap_rows, K*K] bf16  gathered conv1 input patches;
                row = tap*tap_rows + pos*batch + b (rows >= N_POS*batch are pad)
      w1_ref  : [K*K, F1]            bf16
      b1_ref  : [1, F1]              f32
      w2_ref  : [N_TAP, F1, F2]      bf16  conv2 weights, one [F1, F2] per tap
      b2_ref  : [1, F2]              f32
      wfc_ref : [N_POS, F2, 10]      f32   FC weights per conv2 spatial position
                                           (PyTorch NCHW flatten folded in)
      bfc_ref : [1, 10]              f32
      out_ref : [batch, 10]          f32
    """
    w1 = w1_ref[...]
    b1 = b1_ref[...]

    # conv2 pre-activation accumulator; rows ordered (position, batch).
    acc2 = jnp.zeros((tap_rows, F2), jnp.float32) + b2_ref[...]
    for t in range(N_TAP):
        # conv1 (+bias+ReLU) evaluated exactly at the positions tap t reads.
        p_t = p1g_ref[t * tap_rows:(t + 1) * tap_rows, :]               # bf16
        y1_t = jnp.dot(p_t, w1, preferred_element_type=jnp.float32)     # [tap_rows, F1]
        y1_t = jnp.maximum(y1_t + b1, 0.0).astype(jnp.bfloat16)
        # tap-t contribution to conv2 (MXU, f32 accumulation).
        acc2 = acc2 + jnp.dot(y1_t, w2_ref[t],
                              preferred_element_type=jnp.float32)
    y2 = jnp.maximum(acc2, 0.0)                                         # [tap_rows, F2] f32

    # Linear layer: logits[b] = bfc + sum_pos y2[pos*batch + b] @ wfc[pos].
    acc3 = jnp.zeros((batch, N_CLASSES), jnp.float32) + bfc_ref[...]
    for pos in range(N_POS):
        acc3 = acc3 + jnp.dot(y2[pos * batch:(pos + 1) * batch, :], wfc_ref[pos],
                              preferred_element_type=jnp.float32)
    out_ref[...] = acc3


# ----------------------------------------------------------------------------
# Wrapper-side layout glue (plain JAX, runs once per forward / once at init)
# ----------------------------------------------------------------------------
def _gather_conv1_patches(x_nchw, tap_rows):
    """[B,1,56,56] f32 -> [N_TAP*tap_rows, K*K] bf16 gathered conv1 patches.

    For conv2 output position (oh2, ow2) and tap (kh2, kw2), the conv1 output
    it needs sits at (S*oh2+kh2, S*ow2+kw2); that conv1 output's input patch
    starts at (S*S*oh2 + S*kh2, S*S*ow2 + S*kw2) in the image.  Pure layout
    work on the tiny input image; it lets the kernel keep every activation
    on-chip (no im2col of the conv1 activation is ever materialized).
    """
    b = x_nchw.shape[0]
    img = x_nchw[:, 0, :, :]                                # [B, 56, 56]
    r = jnp.arange(K)
    # off[k2, o2, k1] = S*k2 + S*S*o2 + k1 (same table for rows and columns)
    off = S * r[:, None, None] + (S * S) * r[None, :, None] + r[None, None, :]
    rows = off[:, :, :, None, None, None]                   # (kh2, oh2, kh1, 1, 1, 1)
    cols = off[None, None, None, :, :, :]                   # (1, 1, 1, kw2, ow2, kw1)
    # advanced indexing -> [B, kh2, oh2, kh1, kw2, ow2, kw1]
    patches = img[:, rows, cols]
    # -> [kh2, kw2, oh2, ow2, B, kh1, kw1]
    patches = jnp.transpose(patches, (1, 4, 2, 5, 0, 3, 6))
    patches = patches.reshape(N_TAP, N_POS * b, K * K)
    patches = jnp.pad(patches, ((0, 0), (0, tap_rows - N_POS * b), (0, 0)))
    return patches.reshape(N_TAP * tap_rows, K * K).astype(jnp.bfloat16)


def convnet_forward(x_nchw, prep):
    batch = x_nchw.shape[0]
    tap_rows = _round_up(N_POS * batch, 16)   # keep bf16 ref slices tile-aligned
    p1g = _gather_conv1_patches(x_nchw, tap_rows)
    kernel = functools.partial(_convnet_kernel, batch=batch, tap_rows=tap_rows)
    return pl.pallas_call(
        kernel,
        out_shape=jax.ShapeDtypeStruct((batch, N_CLASSES), jnp.float32),
        in_specs=[
            pl.BlockSpec((N_TAP * tap_rows, K * K), lambda: (0, 0)),
            pl.BlockSpec((K * K, F1), lambda: (0, 0)),
            pl.BlockSpec((1, F1), lambda: (0, 0)),
            pl.BlockSpec((N_TAP, F1, F2), lambda: (0, 0, 0)),
            pl.BlockSpec((1, F2), lambda: (0, 0)),
            pl.BlockSpec((N_POS, F2, N_CLASSES), lambda: (0, 0, 0)),
            pl.BlockSpec((1, N_CLASSES), lambda: (0, 0)),
        ],
        out_specs=pl.BlockSpec((batch, N_CLASSES), lambda: (0, 0)),
    )(p1g, prep["w1"], prep["b1"], prep["w2"], prep["b2"],
      prep["wfc"], prep["bfc"])


# ----------------------------------------------------------------------------
# Parameters (PyTorch layouts) and one-time re-layout for the fused kernel
# ----------------------------------------------------------------------------
def init_params(key):
    """PyTorch-layout params (Conv2d OIHW weights, Linear stored as [in, out])."""
    ks = jax.random.split(key, 6)

    def u(k, shape, fan_in):
        bound = 1.0 / jnp.sqrt(fan_in)
        return jax.random.uniform(k, shape, jnp.float32, -bound, bound)

    return {
        "w1": u(ks[0], (F1, 1, K, K), 1 * K * K),
        "b1": u(ks[1], (F1,), 1 * K * K),
        "w2": u(ks[2], (F2, F1, K, K), F1 * K * K),
        "b2": u(ks[3], (F2,), F1 * K * K),
        "w_fc": u(ks[4], (F2 * N_POS, N_CLASSES), F2 * N_POS),
        "b_fc": u(ks[5], (N_CLASSES,), F2 * N_POS),
    }


def prepare_params(params):
    """One-time re-layout + bf16 cast of the weights for the fused kernel."""
    # conv1: [F1,1,K,K] -> [K*K, F1], rows in (kh, kw, cin) patch order.
    w1 = jnp.transpose(params["w1"], (2, 3, 1, 0)).reshape(K * K, F1)
    # conv2: [F2,F1,K,K] -> [N_TAP, F1, F2], one [F1, F2] matrix per tap.
    w2 = jnp.transpose(params["w2"], (2, 3, 1, 0)).reshape(N_TAP, F1, F2)
    # FC: fold PyTorch's NCHW flatten (c, oh, ow) into per-position blocks:
    # [F2*25, 10] -> [25, F2, 10] with wfc[s, c, :] = w_fc[c*25 + s, :].
    wfc = params["w_fc"].reshape(F2, H2, H2, N_CLASSES)
    wfc = jnp.transpose(wfc, (1, 2, 0, 3)).reshape(N_POS, F2, N_CLASSES)
    return {
        "w1": w1.astype(jnp.bfloat16),
        "b1": params["b1"].reshape(1, F1).astype(jnp.float32),
        "w2": w2.astype(jnp.bfloat16),
        "b2": params["b2"].reshape(1, F2).astype(jnp.float32),
        "wfc": wfc.astype(jnp.float32),   # FC is tiny; keep f32 (no y2 recast)
        "bfc": params["b_fc"].reshape(1, N_CLASSES).astype(jnp.float32),
    }


def convnet_reference(x, params):
    """Plain-XLA f32 reference matching the PyTorch module."""
    dn = ("NCHW", "OIHW", "NCHW")
    y = lax.conv_general_dilated(x, params["w1"], (S, S), "VALID",
                                 dimension_numbers=dn)
    y = jax.nn.relu(y + params["b1"].reshape(1, F1, 1, 1))
    y = lax.conv_general_dilated(y, params["w2"], (S, S), "VALID",
                                 dimension_numbers=dn)
    y = jax.nn.relu(y + params["b2"].reshape(1, F2, 1, 1))
    y = y.reshape(y.shape[0], -1)                 # NCHW flatten, like PyTorch
    return y @ params["w_fc"] + params["b_fc"]


if __name__ == "__main__":
    key = jax.random.PRNGKey(0)
    kx, kp = jax.random.split(key)
    # Input spatial size must yield a 5x5 map after two stride-3 k=5 convs
    # (the Linear layer expects 64*5*5 = 1600 features) -> 56x56, 1 channel.
    x = jax.random.normal(kx, (2, 1, H_IN, H_IN), jnp.float32)
    params = init_params(kp)
    prep = prepare_params(params)

    out = jax.jit(convnet_forward)(x, prep)
    out = jax.block_until_ready(out)
    assert out.shape == (2, N_CLASSES) and out.dtype == jnp.float32

    # Sanity check against a plain-XLA f32 reference (bf16 matmul operands in
    # the kernel -> loose tolerance).
    ref = jax.block_until_ready(jax.jit(convnet_reference)(x, params))
    err = float(jnp.max(jnp.abs(out - ref)))
    assert err < 5e-2, f"max |out - ref| = {err}"
    print("KERNEL_OK")
</pallas_src>

<mosaic_0001>
module attributes {stable_mosaic.version = 11 : i64} {
  func.func @_convnet_kernel(%arg0: memref<1600x25xbf16, #tpu.memory_space<vmem>>, %arg1: memref<25x32xbf16, #tpu.memory_space<vmem>>, %arg2: memref<1x32xf32, #tpu.memory_space<vmem>>, %arg3: memref<25x32x64xbf16, #tpu.memory_space<vmem>>, %arg4: memref<1x64xf32, #tpu.memory_space<vmem>>, %arg5: memref<25x64x10xf32, #tpu.memory_space<vmem>>, %arg6: memref<1x10xf32, #tpu.memory_space<vmem>>, %arg7: memref<2x10xf32, #tpu.memory_space<vmem>>) attributes {dimension_semantics = [], scalar_prefetch = 0 : i64, scratch_operands = 0 : i64, tpu.core_type = #tpu.core_type<tc>} {
    %c0 = arith.constant 0 : index
    %c0_0 = arith.constant 0 : index
    %0 = vector.load %arg1[%c0, %c0_0] : memref<25x32xbf16, #tpu.memory_space<vmem>>, vector<25x32xbf16>
    %c0_1 = arith.constant 0 : index
    %c0_2 = arith.constant 0 : index
    %1 = vector.load %arg2[%c0_1, %c0_2] : memref<1x32xf32, #tpu.memory_space<vmem>>, vector<1x32xf32>
    %cst = arith.constant 0.000000e+00 : f32
    %2 = vector.broadcast %cst : f32 to vector<64x64xf32>
    %c0_3 = arith.constant 0 : index
    %c0_4 = arith.constant 0 : index
    %3 = vector.load %arg4[%c0_3, %c0_4] : memref<1x64xf32, #tpu.memory_space<vmem>>, vector<1x64xf32>
    %4 = vector.broadcast %3 : vector<1x64xf32> to vector<64x64xf32>
    %5 = arith.addf %2, %4 : vector<64x64xf32>
    %c0_5 = arith.constant 0 : index
    %c0_6 = arith.constant 0 : index
    %6 = vector.load %arg0[%c0_5, %c0_6] : memref<1600x25xbf16, #tpu.memory_space<vmem>>, vector<64x25xbf16>
    %cst_7 = arith.constant dense<0.000000e+00> : vector<64x32xf32>
    %7 = tpu.matmul %6, %0, %cst_7 {dimension_numbers = #tpu.dot_dimension_numbers<[1], [0], [0], [1], [0, 0, 1, 1], [], []>} : vector<64x25xbf16>, vector<25x32xbf16>, vector<64x32xf32> -> vector<64x32xf32>
    %8 = vector.broadcast %1 : vector<1x32xf32> to vector<64x32xf32>
    %9 = arith.addf %7, %8 : vector<64x32xf32>
    %cst_8 = arith.constant 0.000000e+00 : f32
    %10 = vector.broadcast %cst_8 : f32 to vector<64x32xf32>
    %11 = arith.maximumf %9, %10 : vector<64x32xf32>
    %12 = arith.truncf %11 : vector<64x32xf32> to vector<64x32xbf16>
    %c0_9 = arith.constant 0 : index
    %c0_10 = arith.constant 0 : index
    %c0_11 = arith.constant 0 : index
    %13 = vector.load %arg3[%c0_9, %c0_10, %c0_11] : memref<25x32x64xbf16, #tpu.memory_space<vmem>>, vector<1x32x64xbf16>
    %14 = vector.shape_cast %13 : vector<1x32x64xbf16> to vector<32x64xbf16>
    %cst_12 = arith.constant dense<0.000000e+00> : vector<64x64xf32>
    %15 = tpu.matmul %12, %14, %cst_12 {dimension_numbers = #tpu.dot_dimension_numbers<[1], [0], [0], [1], [0, 0, 1, 1], [], []>} : vector<64x32xbf16>, vector<32x64xbf16>, vector<64x64xf32> -> vector<64x64xf32>
    %16 = arith.addf %5, %15 : vector<64x64xf32>
    %c64 = arith.constant 64 : index
    %c0_13 = arith.constant 0 : index
    %17 = vector.load %arg0[%c64, %c0_13] : memref<1600x25xbf16, #tpu.memory_space<vmem>>, vector<64x25xbf16>
    %cst_14 = arith.constant dense<0.000000e+00> : vector<64x32xf32>
    %18 = tpu.matmul %17, %0, %cst_14 {dimension_numbers = #tpu.dot_dimension_numbers<[1], [0], [0], [1], [0, 0, 1, 1], [], []>} : vector<64x25xbf16>, vector<25x32xbf16>, vector<64x32xf32> -> vector<64x32xf32>
    %19 = vector.broadcast %1 : vector<1x32xf32> to vector<64x32xf32>
    %20 = arith.addf %18, %19 : vector<64x32xf32>
    %cst_15 = arith.constant 0.000000e+00 : f32
    %21 = vector.broadcast %cst_15 : f32 to vector<64x32xf32>
    %22 = arith.maximumf %20, %21 : vector<64x32xf32>
    %23 = arith.truncf %22 : vector<64x32xf32> to vector<64x32xbf16>
    %c1 = arith.constant 1 : index
    %c0_16 = arith.constant 0 : index
    %c0_17 = arith.constant 0 : index
    %24 = vector.load %arg3[%c1, %c0_16, %c0_17] : memref<25x32x64xbf16, #tpu.memory_space<vmem>>, vector<1x32x64xbf16>
    %25 = vector.shape_cast %24 : vector<1x32x64xbf16> to vector<32x64xbf16>
    %cst_18 = arith.constant dense<0.000000e+00> : vector<64x64xf32>
    %26 = tpu.matmul %23, %25, %cst_18 {dimension_numbers = #tpu.dot_dimension_numbers<[1], [0], [0], [1], [0, 0, 1, 1], [], []>} : vector<64x32xbf16>, vector<32x64xbf16>, vector<64x64xf32> -> vector<64x64xf32>
    %27 = arith.addf %16, %26 : vector<64x64xf32>
    %c128 = arith.constant 128 : index
    %c0_19 = arith.constant 0 : index
    %28 = vector.load %arg0[%c128, %c0_19] : memref<1600x25xbf16, #tpu.memory_space<vmem>>, vector<64x25xbf16>
    %cst_20 = arith.constant dense<0.000000e+00> : vector<64x32xf32>
    %29 = tpu.matmul %28, %0, %cst_20 {dimension_numbers = #tpu.dot_dimension_numbers<[1], [0], [0], [1], [0, 0, 1, 1], [], []>} : vector<64x25xbf16>, vector<25x32xbf16>, vector<64x32xf32> -> vector<64x32xf32>
    %30 = vector.broadcast %1 : vector<1x32xf32> to vector<64x32xf32>
    %31 = arith.addf %29, %30 : vector<64x32xf32>
    %cst_21 = arith.constant 0.000000e+00 : f32
    %32 = vector.broadcast %cst_21 : f32 to vector<64x32xf32>
    %33 = arith.maximumf %31, %32 : vector<64x32xf32>
    %34 = arith.truncf %33 : vector<64x32xf32> to vector<64x32xbf16>
    %c2 = arith.constant 2 : index
    %c0_22 = arith.constant 0 : index
    %c0_23 = arith.constant 0 : index
    %35 = vector.load %arg3[%c2, %c0_22, %c0_23] : memref<25x32x64xbf16, #tpu.memory_space<vmem>>, vector<1x32x64xbf16>
    %36 = vector.shape_cast %35 : vector<1x32x64xbf16> to vector<32x64xbf16>
    %cst_24 = arith.constant dense<0.000000e+00> : vector<64x64xf32>
    %37 = tpu.matmul %34, %36, %cst_24 {dimension_numbers = #tpu.dot_dimension_numbers<[1], [0], [0], [1], [0, 0, 1, 1], [], []>} : vector<64x32xbf16>, vector<32x64xbf16>, vector<64x64xf32> -> vector<64x64xf32>
    %38 = arith.addf %27, %37 : vector<64x64xf32>
    %c192 = arith.constant 192 : index
    %c0_25 = arith.constant 0 : index
    %39 = vector.load %arg0[%c192, %c0_25] : memref<1600x25xbf16, #tpu.memory_space<vmem>>, vector<64x25xbf16>
    %cst_26 = arith.constant dense<0.000000e+00> : vector<64x32xf32>
    %40 = tpu.matmul %39, %0, %cst_26 {dimension_numbers = #tpu.dot_dimension_numbers<[1], [0], [0], [1], [0, 0, 1, 1], [], []>} : vector<64x25xbf16>, vector<25x32xbf16>, vector<64x32xf32> -> vector<64x32xf32>
    %41 = vector.broadcast %1 : vector<1x32xf32> to vector<64x32xf32>
    %42 = arith.addf %40, %41 : vector<64x32xf32>
    %cst_27 = arith.constant 0.000000e+00 : f32
    %43 = vector.broadcast %cst_27 : f32 to vector<64x32xf32>
    %44 = arith.maximumf %42, %43 : vector<64x32xf32>
    %45 = arith.truncf %44 : vector<64x32xf32> to vector<64x32xbf16>
    %c3 = arith.constant 3 : index
    %c0_28 = arith.constant 0 : index
    %c0_29 = arith.constant 0 : index
    %46 = vector.load %arg3[%c3, %c0_28, %c0_29] : memref<25x32x64xbf16, #tpu.memory_space<vmem>>, vector<1x32x64xbf16>
    %47 = vector.shape_cast %46 : vector<1x32x64xbf16> to vector<32x64xbf16>
    %cst_30 = arith.constant dense<0.000000e+00> : vector<64x64xf32>
    %48 = tpu.matmul %45, %47, %cst_30 {dimension_numbers = #tpu.dot_dimension_numbers<[1], [0], [0], [1], [0, 0, 1, 1], [], []>} : vector<64x32xbf16>, vector<32x64xbf16>, vector<64x64xf32> -> vector<64x64xf32>
    %49 = arith.addf %38, %48 : vector<64x64xf32>
    %c256 = arith.constant 256 : index
    %c0_31 = arith.constant 0 : index
    %50 = vector.load %arg0[%c256, %c0_31] : memref<1600x25xbf16, #tpu.memory_space<vmem>>, vector<64x25xbf16>
    %cst_32 = arith.constant dense<0.000000e+00> : vector<64x32xf32>
    %51 = tpu.matmul %50, %0, %cst_32 {dimension_numbers = #tpu.dot_dimension_numbers<[1], [0], [0], [1], [0, 0, 1, 1], [], []>} : vector<64x25xbf16>, vector<25x32xbf16>, vector<64x32xf32> -> vector<64x32xf32>
    %52 = vector.broadcast %1 : vector<1x32xf32> to vector<64x32xf32>
    %53 = arith.addf %51, %52 : vector<64x32xf32>
    %cst_33 = arith.constant 0.000000e+00 : f32
    %54 = vector.broadcast %cst_33 : f32 to vector<64x32xf32>
    %55 = arith.maximumf %53, %54 : vector<64x32xf32>
    %56 = arith.truncf %55 : vector<64x32xf32> to vector<64x32xbf16>
    %c4 = arith.constant 4 : index
    %c0_34 = arith.constant 0 : index
    %c0_35 = arith.constant 0 : index
    %57 = vector.load %arg3[%c4, %c0_34, %c0_35] : memref<25x32x64xbf16, #tpu.memory_space<vmem>>, vector<1x32x64xbf16>
    %58 = vector.shape_cast %57 : vector<1x32x64xbf16> to vector<32x64xbf16>
    %cst_36 = arith.constant dense<0.000000e+00> : vector<64x64xf32>
    %59 = tpu.matmul %56, %58, %cst_36 {dimension_numbers = #tpu.dot_dimension_numbers<[1], [0], [0], [1], [0, 0, 1, 1], [], []>} : vector<64x32xbf16>, vector<32x64xbf16>, vector<64x64xf32> -> vector<64x64xf32>
    %60 = arith.addf %49, %59 : vector<64x64xf32>
    %c320 = arith.constant 320 : index
    %c0_37 = arith.constant 0 : index
    %61 = vector.load %arg0[%c320, %c0_37] : memref<1600x25xbf16, #tpu.memory_space<vmem>>, vector<64x25xbf16>
    %cst_38 = arith.constant dense<0.000000e+00> : vector<64x32xf32>
    %62 = tpu.matmul %61, %0, %cst_38 {dimension_numbers = #tpu.dot_dimension_numbers<[1], [0], [0], [1], [0, 0, 1, 1], [], []>} : vector<64x25xbf16>, vector<25x32xbf16>, vector<64x32xf32> -> vector<64x32xf32>
    %63 = vector.broadcast %1 : vector<1x32xf32> to vector<64x32xf32>
    %64 = arith.addf %62, %63 : vector<64x32xf32>
    %cst_39 = arith.constant 0.000000e+00 : f32
    %65 = vector.broadcast %cst_39 : f32 to vector<64x32xf32>
    %66 = arith.maximumf %64, %65 : vector<64x32xf32>
    %67 = arith.truncf %66 : vector<64x32xf32> to vector<64x32xbf16>
    %c5 = arith.constant 5 : index
    %c0_40 = arith.constant 0 : index
    %c0_41 = arith.constant 0 : index
    %68 = vector.load %arg3[%c5, %c0_40, %c0_41] : memref<25x32x64xbf16, #tpu.memory_space<vmem>>, vector<1x32x64xbf16>
    %69 = vector.shape_cast %68 : vector<1x32x64xbf16> to vector<32x64xbf16>
    %cst_42 = arith.constant dense<0.000000e+00> : vector<64x64xf32>
    %70 = tpu.matmul %67, %69, %cst_42 {dimension_numbers = #tpu.dot_dimension_numbers<[1], [0], [0], [1], [0, 0, 1, 1], [], []>} : vector<64x32xbf16>, vector<32x64xbf16>, vector<64x64xf32> -> vector<64x64xf32>
    %71 = arith.addf %60, %70 : vector<64x64xf32>
    %c384 = arith.constant 384 : index
    %c0_43 = arith.constant 0 : index
    %72 = vector.load %arg0[%c384, %c0_43] : memref<1600x25xbf16, #tpu.memory_space<vmem>>, vector<64x25xbf16>
    %cst_44 = arith.constant dense<0.000000e+00> : vector<64x32xf32>
    %73 = tpu.matmul %72, %0, %cst_44 {dimension_numbers = #tpu.dot_dimension_numbers<[1], [0], [0], [1], [0, 0, 1, 1], [], []>} : vector<64x25xbf16>, vector<25x32xbf16>, vector<64x32xf32> -> vector<64x32xf32>
    %74 = vector.broadcast %1 : vector<1x32xf32> to vector<64x32xf32>
    %75 = arith.addf %73, %74 : vector<64x32xf32>
    %cst_45 = arith.constant 0.000000e+00 : f32
    %76 = vector.broadcast %cst_45 : f32 to vector<64x32xf32>
    %77 = arith.maximumf %75, %76 : vector<64x32xf32>
    %78 = arith.truncf %77 : vector<64x32xf32> to vector<64x32xbf16>
    %c6 = arith.constant 6 : index
    %c0_46 = arith.constant 0 : index
    %c0_47 = arith.constant 0 : index
    %79 = vector.load %arg3[%c6, %c0_46, %c0_47] : memref<25x32x64xbf16, #tpu.memory_space<vmem>>, vector<1x32x64xbf16>
    %80 = vector.shape_cast %79 : vector<1x32x64xbf16> to vector<32x64xbf16>
    %cst_48 = arith.constant dense<0.000000e+00> : vector<64x64xf32>
    %81 = tpu.matmul %78, %80, %cst_48 {dimension_numbers = #tpu.dot_dimension_numbers<[1], [0], [0], [1], [0, 0, 1, 1], [], []>} : vector<64x32xbf16>, vector<32x64xbf16>, vector<64x64xf32> -> vector<64x64xf32>
    %82 = arith.addf %71, %81 : vector<64x64xf32>
    %c448 = arith.constant 448 : index
    %c0_49 = arith.constant 0 : index
    %83 = vector.load %arg0[%c448, %c0_49] : memref<1600x25xbf16, #tpu.memory_space<vmem>>, vector<64x25xbf16>
    %cst_50 = arith.constant dense<0.000000e+00> : vector<64x32xf32>
    %84 = tpu.matmul %83, %0, %cst_50 {dimension_numbers = #tpu.dot_dimension_numbers<[1], [0], [0], [1], [0, 0, 1, 1], [], []>} : vector<64x25xbf16>, vector<25x32xbf16>, vector<64x32xf32> -> vector<64x32xf32>
    %85 = vector.broadcast %1 : vector<1x32xf32> to vector<64x32xf32>
    %86 = arith.addf %84, %85 : vector<64x32xf32>
    %cst_51 = arith.constant 0.000000e+00 : f32
    %87 = vector.broadcast %cst_51 : f32 to vector<64x32xf32>
    %88 = arith.maximumf %86, %87 : vector<64x32xf32>
    %89 = arith.truncf %88 : vector<64x32xf32> to vector<64x32xbf16>
    %c7 = arith.constant 7 : index
    %c0_52 = arith.constant 0 : index
    %c0_53 = arith.constant 0 : index
    %90 = vector.load %arg3[%c7, %c0_52, %c0_53] : memref<25x32x64xbf16, #tpu.memory_space<vmem>>, vector<1x32x64xbf16>
    %91 = vector.shape_cast %90 : vector<1x32x64xbf16> to vector<32x64xbf16>
    %cst_54 = arith.constant dense<0.000000e+00> : vector<64x64xf32>
    %92 = tpu.matmul %89, %91, %cst_54 {dimension_numbers = #tpu.dot_dimension_numbers<[1], [0], [0], [1], [0, 0, 1, 1], [], []>} : vector<64x32xbf16>, vector<32x64xbf16>, vector<64x64xf32> -> vector<64x64xf32>
    %93 = arith.addf %82, %92 : vector<64x64xf32>
    %c512 = arith.constant 512 : index
    %c0_55 = arith.constant 0 : index
    %94 = vector.load %arg0[%c512, %c0_55] : memref<1600x25xbf16, #tpu.memory_space<vmem>>, vector<64x25xbf16>
    %cst_56 = arith.constant dense<0.000000e+00> : vector<64x32xf32>
    %95 = tpu.matmul %94, %0, %cst_56 {dimension_numbers = #tpu.dot_dimension_numbers<[1], [0], [0], [1], [0, 0, 1, 1], [], []>} : vector<64x25xbf16>, vector<25x32xbf16>, vector<64x32xf32> -> vector<64x32xf32>
    %96 = vector.broadcast %1 : vector<1x32xf32> to vector<64x32xf32>
    %97 = arith.addf %95, %96 : vector<64x32xf32>
    %cst_57 = arith.constant 0.000000e+00 : f32
    %98 = vector.broadcast %cst_57 : f32 to vector<64x32xf32>
    %99 = arith.maximumf %97, %98 : vector<64x32xf32>
    %100 = arith.truncf %99 : vector<64x32xf32> to vector<64x32xbf16>
    %c8 = arith.constant 8 : index
    %c0_58 = arith.constant 0 : index
    %c0_59 = arith.constant 0 : index
    %101 = vector.load %arg3[%c8, %c0_58, %c0_59] : memref<25x32x64xbf16, #tpu.memory_space<vmem>>, vector<1x32x64xbf16>
    %102 = vector.shape_cast %101 : vector<1x32x64xbf16> to vector<32x64xbf16>
    %cst_60 = arith.constant dense<0.000000e+00> : vector<64x64xf32>
    %103 = tpu.matmul %100, %102, %cst_60 {dimension_numbers = #tpu.dot_dimension_numbers<[1], [0], [0], [1], [0, 0, 1, 1], [], []>} : vector<64x32xbf16>, vector<32x64xbf16>, vector<64x64xf32> -> vector<64x64xf32>
    %104 = arith.addf %93, %103 : vector<64x64xf32>
    %c576 = arith.constant 576 : index
    %c0_61 = arith.constant 0 : index
    %105 = vector.load %arg0[%c576, %c0_61] : memref<1600x25xbf16, #tpu.memory_space<vmem>>, vector<64x25xbf16>
    %cst_62 = arith.constant dense<0.000000e+00> : vector<64x32xf32>
    %106 = tpu.matmul %105, %0, %cst_62 {dimension_numbers = #tpu.dot_dimension_numbers<[1], [0], [0], [1], [0, 0, 1, 1], [], []>} : vector<64x25xbf16>, vector<25x32xbf16>, vector<64x32xf32> -> vector<64x32xf32>
    %107 = vector.broadcast %1 : vector<1x32xf32> to vector<64x32xf32>
    %108 = arith.addf %106, %107 : vector<64x32xf32>
    %cst_63 = arith.constant 0.000000e+00 : f32
    %109 = vector.broadcast %cst_63 : f32 to vector<64x32xf32>
    %110 = arith.maximumf %108, %109 : vector<64x32xf32>
    %111 = arith.truncf %110 : vector<64x32xf32> to vector<64x32xbf16>
    %c9 = arith.constant 9 : index
    %c0_64 = arith.constant 0 : index
    %c0_65 = arith.constant 0 : index
    %112 = vector.load %arg3[%c9, %c0_64, %c0_65] : memref<25x32x64xbf16, #tpu.memory_space<vmem>>, vector<1x32x64xbf16>
    %113 = vector.shape_cast %112 : vector<1x32x64xbf16> to vector<32x64xbf16>
    %cst_66 = arith.constant dense<0.000000e+00> : vector<64x64xf32>
    %114 = tpu.matmul %111, %113, %cst_66 {dimension_numbers = #tpu.dot_dimension_numbers<[1], [0], [0], [1], [0, 0, 1, 1], [], []>} : vector<64x32xbf16>, vector<32x64xbf16>, vector<64x64xf32> -> vector<64x64xf32>
    %115 = arith.addf %104, %114 : vector<64x64xf32>
    %c640 = arith.constant 640 : index
    %c0_67 = arith.constant 0 : index
    %116 = vector.load %arg0[%c640, %c0_67] : memref<1600x25xbf16, #tpu.memory_space<vmem>>, vector<64x25xbf16>
    %cst_68 = arith.constant dense<0.000000e+00> : vector<64x32xf32>
    %117 = tpu.matmul %116, %0, %cst_68 {dimension_numbers = #tpu.dot_dimension_numbers<[1], [0], [0], [1], [0, 0, 1, 1], [], []>} : vector<64x25xbf16>, vector<25x32xbf16>, vector<64x32xf32> -> vector<64x32xf32>
    %118 = vector.broadcast %1 : vector<1x32xf32> to vector<64x32xf32>
    %119 = arith.addf %117, %118 : vector<64x32xf32>
    %cst_69 = arith.constant 0.000000e+00 : f32
    %120 = vector.broadcast %cst_69 : f32 to vector<64x32xf32>
    %121 = arith.maximumf %119, %120 : vector<64x32xf32>
    %122 = arith.truncf %121 : vector<64x32xf32> to vector<64x32xbf16>
    %c10 = arith.constant 10 : index
    %c0_70 = arith.constant 0 : index
    %c0_71 = arith.constant 0 : index
    %123 = vector.load %arg3[%c10, %c0_70, %c0_71] : memref<25x32x64xbf16, #tpu.memory_space<vmem>>, vector<1x32x64xbf16>
    %124 = vector.shape_cast %123 : vector<1x32x64xbf16> to vector<32x64xbf16>
    %cst_72 = arith.constant dense<0.000000e+00> : vector<64x64xf32>
    %125 = tpu.matmul %122, %124, %cst_72 {dimension_numbers = #tpu.dot_dimension_numbers<[1], [0], [0], [1], [0, 0, 1, 1], [], []>} : vector<64x32xbf16>, vector<32x64xbf16>, vector<64x64xf32> -> vector<64x64xf32>
    %126 = arith.addf %115, %125 : vector<64x64xf32>
    %c704 = arith.constant 704 : index
    %c0_73 = arith.constant 0 : index
    %127 = vector.load %arg0[%c704, %c0_73] : memref<1600x25xbf16, #tpu.memory_space<vmem>>, vector<64x25xbf16>
    %cst_74 = arith.constant dense<0.000000e+00> : vector<64x32xf32>
    %128 = tpu.matmul %127, %0, %cst_74 {dimension_numbers = #tpu.dot_dimension_numbers<[1], [0], [0], [1], [0, 0, 1, 1], [], []>} : vector<64x25xbf16>, vector<25x32xbf16>, vector<64x32xf32> -> vector<64x32xf32>
    %129 = vector.broadcast %1 : vector<1x32xf32> to vector<64x32xf32>
    %130 = arith.addf %128, %129 : vector<64x32xf32>
    %cst_75 = arith.constant 0.000000e+00 : f32
    %131 = vector.broadcast %cst_75 : f32 to vector<64x32xf32>
    %132 = arith.maximumf %130, %131 : vector<64x32xf32>
    %133 = arith.truncf %132 : vector<64x32xf32> to vector<64x32xbf16>
    %c11 = arith.constant 11 : index
    %c0_76 = arith.constant 0 : index
    %c0_77 = arith.constant 0 : index
    %134 = vector.load %arg3[%c11, %c0_76, %c0_77] : memref<25x32x64xbf16, #tpu.memory_space<vmem>>, vector<1x32x64xbf16>
    %135 = vector.shape_cast %134 : vector<1x32x64xbf16> to vector<32x64xbf16>
    %cst_78 = arith.constant dense<0.000000e+00> : vector<64x64xf32>
    %136 = tpu.matmul %133, %135, %cst_78 {dimension_numbers = #tpu.dot_dimension_numbers<[1], [0], [0], [1], [0, 0, 1, 1], [], []>} : vector<64x32xbf16>, vector<32x64xbf16>, vector<64x64xf32> -> vector<64x64xf32>
    %137 = arith.addf %126, %136 : vector<64x64xf32>
    %c768 = arith.constant 768 : index
    %c0_79 = arith.constant 0 : index
    %138 = vector.load %arg0[%c768, %c0_79] : memref<1600x25xbf16, #tpu.memory_space<vmem>>, vector<64x25xbf16>
    %cst_80 = arith.constant dense<0.000000e+00> : vector<64x32xf32>
    %139 = tpu.matmul %138, %0, %cst_80 {dimension_numbers = #tpu.dot_dimension_numbers<[1], [0], [0], [1], [0, 0, 1, 1], [], []>} : vector<64x25xbf16>, vector<25x32xbf16>, vector<64x32xf32> -> vector<64x32xf32>
    %140 = vector.broadcast %1 : vector<1x32xf32> to vector<64x32xf32>
    %141 = arith.addf %139, %140 : vector<64x32xf32>
    %cst_81 = arith.constant 0.000000e+00 : f32
    %142 = vector.broadcast %cst_81 : f32 to vector<64x32xf32>
    %143 = arith.maximumf %141, %142 : vector<64x32xf32>
    %144 = arith.truncf %143 : vector<64x32xf32> to vector<64x32xbf16>
    %c12 = arith.constant 12 : index
    %c0_82 = arith.constant 0 : index
    %c0_83 = arith.constant 0 : index
    %145 = vector.load %arg3[%c12, %c0_82, %c0_83] : memref<25x32x64xbf16, #tpu.memory_space<vmem>>, vector<1x32x64xbf16>
    %146 = vector.shape_cast %145 : vector<1x32x64xbf16> to vector<32x64xbf16>
    %cst_84 = arith.constant dense<0.000000e+00> : vector<64x64xf32>
    %147 = tpu.matmul %144, %146, %cst_84 {dimension_numbers = #tpu.dot_dimension_numbers<[1], [0], [0], [1], [0, 0, 1, 1], [], []>} : vector<64x32xbf16>, vector<32x64xbf16>, vector<64x64xf32> -> vector<64x64xf32>
    %148 = arith.addf %137, %147 : vector<64x64xf32>
    %c832 = arith.constant 832 : index
    %c0_85 = arith.constant 0 : index
    %149 = vector.load %arg0[%c832, %c0_85] : memref<1600x25xbf16, #tpu.memory_space<vmem>>, vector<64x25xbf16>
    %cst_86 = arith.constant dense<0.000000e+00> : vector<64x32xf32>
    %150 = tpu.matmul %149, %0, %cst_86 {dimension_numbers = #tpu.dot_dimension_numbers<[1], [0], [0], [1], [0, 0, 1, 1], [], []>} : vector<64x25xbf16>, vector<25x32xbf16>, vector<64x32xf32> -> vector<64x32xf32>
    %151 = vector.broadcast %1 : vector<1x32xf32> to vector<64x32xf32>
    %152 = arith.addf %150, %151 : vector<64x32xf32>
    %cst_87 = arith.constant 0.000000e+00 : f32
    %153 = vector.broadcast %cst_87 : f32 to vector<64x32xf32>
    %154 = arith.maximumf %152, %153 : vector<64x32xf32>
    %155 = arith.truncf %154 : vector<64x32xf32> to vector<64x32xbf16>
    %c13 = arith.constant 13 : index
    %c0_88 = arith.constant 0 : index
    %c0_89 = arith.constant 0 : index
    %156 = vector.load %arg3[%c13, %c0_88, %c0_89] : memref<25x32x64xbf16, #tpu.memory_space<vmem>>, vector<1x32x64xbf16>
    %157 = vector.shape_cast %156 : vector<1x32x64xbf16> to vector<32x64xbf16>
    %cst_90 = arith.constant dense<0.000000e+00> : vector<64x64xf32>
    %158 = tpu.matmul %155, %157, %cst_90 {dimension_numbers = #tpu.dot_dimension_numbers<[1], [0], [0], [1], [0, 0, 1, 1], [], []>} : vector<64x32xbf16>, vector<32x64xbf16>, vector<64x64xf32> -> vector<64x64xf32>
    %159 = arith.addf %148, %158 : vector<64x64xf32>
    %c896 = arith.constant 896 : index
    %c0_91 = arith.constant 0 : index
    %160 = vector.load %arg0[%c896, %c0_91] : memref<1600x25xbf16, #tpu.memory_space<vmem>>, vector<64x25xbf16>
    %cst_92 = arith.constant dense<0.000000e+00> : vector<64x32xf32>
    %161 = tpu.matmul %160, %0, %cst_92 {dimension_numbers = #tpu.dot_dimension_numbers<[1], [0], [0], [1], [0, 0, 1, 1], [], []>} : vector<64x25xbf16>, vector<25x32xbf16>, vector<64x32xf32> -> vector<64x32xf32>
    %162 = vector.broadcast %1 : vector<1x32xf32> to vector<64x32xf32>
    %163 = arith.addf %161, %162 : vector<64x32xf32>
    %cst_93 = arith.constant 0.000000e+00 : f32
    %164 = vector.broadcast %cst_93 : f32 to vector<64x32xf32>
    %165 = arith.maximumf %163, %164 : vector<64x32xf32>
    %166 = arith.truncf %165 : vector<64x32xf32> to vector<64x32xbf16>
    %c14 = arith.constant 14 : index
    %c0_94 = arith.constant 0 : index
    %c0_95 = arith.constant 0 : index
    %167 = vector.load %arg3[%c14, %c0_94, %c0_95] : memref<25x32x64xbf16, #tpu.memory_space<vmem>>, vector<1x32x64xbf16>
    %168 = vector.shape_cast %167 : vector<1x32x64xbf16> to vector<32x64xbf16>
    %cst_96 = arith.constant dense<0.000000e+00> : vector<64x64xf32>
    %169 = tpu.matmul %166, %168, %cst_96 {dimension_numbers = #tpu.dot_dimension_numbers<[1], [0], [0], [1], [0, 0, 1, 1], [], []>} : vector<64x32xbf16>, vector<32x64xbf16>, vector<64x64xf32> -> vector<64x64xf32>
    %170 = arith.addf %159, %169 : vector<64x64xf32>
    %c960 = arith.constant 960 : index
    %c0_97 = arith.constant 0 : index
    %171 = vector.load %arg0[%c960, %c0_97] : memref<1600x25xbf16, #tpu.memory_space<vmem>>, vector<64x25xbf16>
    %cst_98 = arith.constant dense<0.000000e+00> : vector<64x32xf32>
    %172 = tpu.matmul %171, %0, %cst_98 {dimension_numbers = #tpu.dot_dimension_numbers<[1], [0], [0], [1], [0, 0, 1, 1], [], []>} : vector<64x25xbf16>, vector<25x32xbf16>, vector<64x32xf32> -> vector<64x32xf32>
    %173 = vector.broadcast %1 : vector<1x32xf32> to vector<64x32xf32>
    %174 = arith.addf %172, %173 : vector<64x32xf32>
    %cst_99 = arith.constant 0.000000e+00 : f32
    %175 = vector.broadcast %cst_99 : f32 to vector<64x32xf32>
    %176 = arith.maximumf %174, %175 : vector<64x32xf32>
    %177 = arith.truncf %176 : vector<64x32xf32> to vector<64x32xbf16>
    %c15 = arith.constant 15 : index
    %c0_100 = arith.constant 0 : index
    %c0_101 = arith.constant 0 : index
    %178 = vector.load %arg3[%c15, %c0_100, %c0_101] : memref<25x32x64xbf16, #tpu.memory_space<vmem>>, vector<1x32x64xbf16>
    %179 = vector.shape_cast %178 : vector<1x32x64xbf16> to vector<32x64xbf16>
    %cst_102 = arith.constant dense<0.000000e+00> : vector<64x64xf32>
    %180 = tpu.matmul %177, %179, %cst_102 {dimension_numbers = #tpu.dot_dimension_numbers<[1], [0], [0], [1], [0, 0, 1, 1], [], []>} : vector<64x32xbf16>, vector<32x64xbf16>, vector<64x64xf32> -> vector<64x64xf32>
    %181 = arith.addf %170, %180 : vector<64x64xf32>
    %c1024 = arith.constant 1024 : index
    %c0_103 = arith.constant 0 : index
    %182 = vector.load %arg0[%c1024, %c0_103] : memref<1600x25xbf16, #tpu.memory_space<vmem>>, vector<64x25xbf16>
    %cst_104 = arith.constant dense<0.000000e+00> : vector<64x32xf32>
    %183 = tpu.matmul %182, %0, %cst_104 {dimension_numbers = #tpu.dot_dimension_numbers<[1], [0], [0], [1], [0, 0, 1, 1], [], []>} : vector<64x25xbf16>, vector<25x32xbf16>, vector<64x32xf32> -> vector<64x32xf32>
    %184 = vector.broadcast %1 : vector<1x32xf32> to vector<64x32xf32>
    %185 = arith.addf %183, %184 : vector<64x32xf32>
    %cst_105 = arith.constant 0.000000e+00 : f32
    %186 = vector.broadcast %cst_105 : f32 to vector<64x32xf32>
    %187 = arith.maximumf %185, %186 : vector<64x32xf32>
    %188 = arith.truncf %187 : vector<64x32xf32> to vector<64x32xbf16>
    %c16 = arith.constant 16 : index
    %c0_106 = arith.constant 0 : index
    %c0_107 = arith.constant 0 : index
    %189 = vector.load %arg3[%c16, %c0_106, %c0_107] : memref<25x32x64xbf16, #tpu.memory_space<vmem>>, vector<1x32x64xbf16>
    %190 = vector.shape_cast %189 : vector<1x32x64xbf16> to vector<32x64xbf16>
    %cst_108 = arith.constant dense<0.000000e+00> : vector<64x64xf32>
    %191 = tpu.matmul %188, %190, %cst_108 {dimension_numbers = #tpu.dot_dimension_numbers<[1], [0], [0], [1], [0, 0, 1, 1], [], []>} : vector<64x32xbf16>, vector<32x64xbf16>, vector<64x64xf32> -> vector<64x64xf32>
    %192 = arith.addf %181, %191 : vector<64x64xf32>
    %c1088 = arith.constant 1088 : index
    %c0_109 = arith.constant 0 : index
    %193 = vector.load %arg0[%c1088, %c0_109] : memref<1600x25xbf16, #tpu.memory_space<vmem>>, vector<64x25xbf16>
    %cst_110 = arith.constant dense<0.000000e+00> : vector<64x32xf32>
    %194 = tpu.matmul %193, %0, %cst_110 {dimension_numbers = #tpu.dot_dimension_numbers<[1], [0], [0], [1], [0, 0, 1, 1], [], []>} : vector<64x25xbf16>, vector<25x32xbf16>, vector<64x32xf32> -> vector<64x32xf32>
    %195 = vector.broadcast %1 : vector<1x32xf32> to vector<64x32xf32>
    %196 = arith.addf %194, %195 : vector<64x32xf32>
    %cst_111 = arith.constant 0.000000e+00 : f32
    %197 = vector.broadcast %cst_111 : f32 to vector<64x32xf32>
    %198 = arith.maximumf %196, %197 : vector<64x32xf32>
    %199 = arith.truncf %198 : vector<64x32xf32> to vector<64x32xbf16>
    %c17 = arith.constant 17 : index
    %c0_112 = arith.constant 0 : index
    %c0_113 = arith.constant 0 : index
    %200 = vector.load %arg3[%c17, %c0_112, %c0_113] : memref<25x32x64xbf16, #tpu.memory_space<vmem>>, vector<1x32x64xbf16>
    %201 = vector.shape_cast %200 : vector<1x32x64xbf16> to vector<32x64xbf16>
    %cst_114 = arith.constant dense<0.000000e+00> : vector<64x64xf32>
    %202 = tpu.matmul %199, %201, %cst_114 {dimension_numbers = #tpu.dot_dimension_numbers<[1], [0], [0], [1], [0, 0, 1, 1], [], []>} : vector<64x32xbf16>, vector<32x64xbf16>, vector<64x64xf32> -> vector<64x64xf32>
    %203 = arith.addf %192, %202 : vector<64x64xf32>
    %c1152 = arith.constant 1152 : index
    %c0_115 = arith.constant 0 : index
    %204 = vector.load %arg0[%c1152, %c0_115] : memref<1600x25xbf16, #tpu.memory_space<vmem>>, vector<64x25xbf16>
    %cst_116 = arith.constant dense<0.000000e+00> : vector<64x32xf32>
    %205 = tpu.matmul %204, %0, %cst_116 {dimension_numbers = #tpu.dot_dimension_numbers<[1], [0], [0], [1], [0, 0, 1, 1], [], []>} : vector<64x25xbf16>, vector<25x32xbf16>, vector<64x32xf32> -> vector<64x32xf32>
    %206 = vector.broadcast %1 : vector<1x32xf32> to vector<64x32xf32>
    %207 = arith.addf %205, %206 : vector<64x32xf32>
    %cst_117 = arith.constant 0.000000e+00 : f32
    %208 = vector.broadcast %cst_117 : f32 to vector<64x32xf32>
    %209 = arith.maximumf %207, %208 : vector<64x32xf32>
    %210 = arith.truncf %209 : vector<64x32xf32> to vector<64x32xbf16>
    %c18 = arith.constant 18 : index
    %c0_118 = arith.constant 0 : index
    %c0_119 = arith.constant 0 : index
    %211 = vector.load %arg3[%c18, %c0_118, %c0_119] : memref<25x32x64xbf16, #tpu.memory_space<vmem>>, vector<1x32x64xbf16>
    %212 = vector.shape_cast %211 : vector<1x32x64xbf16> to vector<32x64xbf16>
    %cst_120 = arith.constant dense<0.000000e+00> : vector<64x64xf32>
    %213 = tpu.matmul %210, %212, %cst_120 {dimension_numbers = #tpu.dot_dimension_numbers<[1], [0], [0], [1], [0, 0, 1, 1], [], []>} : vector<64x32xbf16>, vector<32x64xbf16>, vector<64x64xf32> -> vector<64x64xf32>
    %214 = arith.addf %203, %213 : vector<64x64xf32>
    %c1216 = arith.constant 1216 : index
    %c0_121 = arith.constant 0 : index
    %215 = vector.load %arg0[%c1216, %c0_121] : memref<1600x25xbf16, #tpu.memory_space<vmem>>, vector<64x25xbf16>
    %cst_122 = arith.constant dense<0.000000e+00> : vector<64x32xf32>
    %216 = tpu.matmul %215, %0, %cst_122 {dimension_numbers = #tpu.dot_dimension_numbers<[1], [0], [0], [1], [0, 0, 1, 1], [], []>} : vector<64x25xbf16>, vector<25x32xbf16>, vector<64x32xf32> -> vector<64x32xf32>
    %217 = vector.broadcast %1 : vector<1x32xf32> to vector<64x32xf32>
    %218 = arith.addf %216, %217 : vector<64x32xf32>
    %cst_123 = arith.constant 0.000000e+00 : f32
    %219 = vector.broadcast %cst_123 : f32 to vector<64x32xf32>
    %220 = arith.maximumf %218, %219 : vector<64x32xf32>
    %221 = arith.truncf %220 : vector<64x32xf32> to vector<64x32xbf16>
    %c19 = arith.constant 19 : index
    %c0_124 = arith.constant 0 : index
    %c0_125 = arith.constant 0 : index
    %222 = vector.load %arg3[%c19, %c0_124, %c0_125] : memref<25x32x64xbf16, #tpu.memory_space<vmem>>, vector<1x32x64xbf16>
    %223 = vector.shape_cast %222 : vector<1x32x64xbf16> to vector<32x64xbf16>
    %cst_126 = arith.constant dense<0.000000e+00> : vector<64x64xf32>
    %224 = tpu.matmul %221, %223, %cst_126 {dimension_numbers = #tpu.dot_dimension_numbers<[1], [0], [0], [1], [0, 0, 1, 1], [], []>} : vector<64x32xbf16>, vector<32x64xbf16>, vector<64x64xf32> -> vector<64x64xf32>
    %225 = arith.addf %214, %224 : vector<64x64xf32>
    %c1280 = arith.constant 1280 : index
    %c0_127 = arith.constant 0 : index
    %226 = vector.load %arg0[%c1280, %c0_127] : memref<1600x25xbf16, #tpu.memory_space<vmem>>, vector<64x25xbf16>
    %cst_128 = arith.constant dense<0.000000e+00> : vector<64x32xf32>
    %227 = tpu.matmul %226, %0, %cst_128 {dimension_numbers = #tpu.dot_dimension_numbers<[1], [0], [0], [1], [0, 0, 1, 1], [], []>} : vector<64x25xbf16>, vector<25x32xbf16>, vector<64x32xf32> -> vector<64x32xf32>
    %228 = vector.broadcast %1 : vector<1x32xf32> to vector<64x32xf32>
    %229 = arith.addf %227, %228 : vector<64x32xf32>
    %cst_129 = arith.constant 0.000000e+00 : f32
    %230 = vector.broadcast %cst_129 : f32 to vector<64x32xf32>
    %231 = arith.maximumf %229, %230 : vector<64x32xf32>
    %232 = arith.truncf %231 : vector<64x32xf32> to vector<64x32xbf16>
    %c20 = arith.constant 20 : index
    %c0_130 = arith.constant 0 : index
    %c0_131 = arith.constant 0 : index
    %233 = vector.load %arg3[%c20, %c0_130, %c0_131] : memref<25x32x64xbf16, #tpu.memory_space<vmem>>, vector<1x32x64xbf16>
    %234 = vector.shape_cast %233 : vector<1x32x64xbf16> to vector<32x64xbf16>
    %cst_132 = arith.constant dense<0.000000e+00> : vector<64x64xf32>
    %235 = tpu.matmul %232, %234, %cst_132 {dimension_numbers = #tpu.dot_dimension_numbers<[1], [0], [0], [1], [0, 0, 1, 1], [], []>} : vector<64x32xbf16>, vector<32x64xbf16>, vector<64x64xf32> -> vector<64x64xf32>
    %236 = arith.addf %225, %235 : vector<64x64xf32>
    %c1344 = arith.constant 1344 : index
    %c0_133 = arith.constant 0 : index
    %237 = vector.load %arg0[%c1344, %c0_133] : memref<1600x25xbf16, #tpu.memory_space<vmem>>, vector<64x25xbf16>
    %cst_134 = arith.constant dense<0.000000e+00> : vector<64x32xf32>
    %238 = tpu.matmul %237, %0, %cst_134 {dimension_numbers = #tpu.dot_dimension_numbers<[1], [0], [0], [1], [0, 0, 1, 1], [], []>} : vector<64x25xbf16>, vector<25x32xbf16>, vector<64x32xf32> -> vector<64x32xf32>
    %239 = vector.broadcast %1 : vector<1x32xf32> to vector<64x32xf32>
    %240 = arith.addf %238, %239 : vector<64x32xf32>
    %cst_135 = arith.constant 0.000000e+00 : f32
    %241 = vector.broadcast %cst_135 : f32 to vector<64x32xf32>
    %242 = arith.maximumf %240, %241 : vector<64x32xf32>
    %243 = arith.truncf %242 : vector<64x32xf32> to vector<64x32xbf16>
    %c21 = arith.constant 21 : index
    %c0_136 = arith.constant 0 : index
    %c0_137 = arith.constant 0 : index
    %244 = vector.load %arg3[%c21, %c0_136, %c0_137] : memref<25x32x64xbf16, #tpu.memory_space<vmem>>, vector<1x32x64xbf16>
    %245 = vector.shape_cast %244 : vector<1x32x64xbf16> to vector<32x64xbf16>
    %cst_138 = arith.constant dense<0.000000e+00> : vector<64x64xf32>
    %246 = tpu.matmul %243, %245, %cst_138 {dimension_numbers = #tpu.dot_dimension_numbers<[1], [0], [0], [1], [0, 0, 1, 1], [], []>} : vector<64x32xbf16>, vector<32x64xbf16>, vector<64x64xf32> -> vector<64x64xf32>
    %247 = arith.addf %236, %246 : vector<64x64xf32>
    %c1408 = arith.constant 1408 : index
    %c0_139 = arith.constant 0 : index
    %248 = vector.load %arg0[%c1408, %c0_139] : memref<1600x25xbf16, #tpu.memory_space<vmem>>, vector<64x25xbf16>
    %cst_140 = arith.constant dense<0.000000e+00> : vector<64x32xf32>
    %249 = tpu.matmul %248, %0, %cst_140 {dimension_numbers = #tpu.dot_dimension_numbers<[1], [0], [0], [1], [0, 0, 1, 1], [], []>} : vector<64x25xbf16>, vector<25x32xbf16>, vector<64x32xf32> -> vector<64x32xf32>
    %250 = vector.broadcast %1 : vector<1x32xf32> to vector<64x32xf32>
    %251 = arith.addf %249, %250 : vector<64x32xf32>
    %cst_141 = arith.constant 0.000000e+00 : f32
    %252 = vector.broadcast %cst_141 : f32 to vector<64x32xf32>
    %253 = arith.maximumf %251, %252 : vector<64x32xf32>
    %254 = arith.truncf %253 : vector<64x32xf32> to vector<64x32xbf16>
    %c22 = arith.constant 22 : index
    %c0_142 = arith.constant 0 : index
    %c0_143 = arith.constant 0 : index
    %255 = vector.load %arg3[%c22, %c0_142, %c0_143] : memref<25x32x64xbf16, #tpu.memory_space<vmem>>, vector<1x32x64xbf16>
    %256 = vector.shape_cast %255 : vector<1x32x64xbf16> to vector<32x64xbf16>
    %cst_144 = arith.constant dense<0.000000e+00> : vector<64x64xf32>
    %257 = tpu.matmul %254, %256, %cst_144 {dimension_numbers = #tpu.dot_dimension_numbers<[1], [0], [0], [1], [0, 0, 1, 1], [], []>} : vector<64x32xbf16>, vector<32x64xbf16>, vector<64x64xf32> -> vector<64x64xf32>
    %258 = arith.addf %247, %257 : vector<64x64xf32>
    %c1472 = arith.constant 1472 : index
    %c0_145 = arith.constant 0 : index
    %259 = vector.load %arg0[%c1472, %c0_145] : memref<1600x25xbf16, #tpu.memory_space<vmem>>, vector<64x25xbf16>
    %cst_146 = arith.constant dense<0.000000e+00> : vector<64x32xf32>
    %260 = tpu.matmul %259, %0, %cst_146 {dimension_numbers = #tpu.dot_dimension_numbers<[1], [0], [0], [1], [0, 0, 1, 1], [], []>} : vector<64x25xbf16>, vector<25x32xbf16>, vector<64x32xf32> -> vector<64x32xf32>
    %261 = vector.broadcast %1 : vector<1x32xf32> to vector<64x32xf32>
    %262 = arith.addf %260, %261 : vector<64x32xf32>
    %cst_147 = arith.constant 0.000000e+00 : f32
    %263 = vector.broadcast %cst_147 : f32 to vector<64x32xf32>
    %264 = arith.maximumf %262, %263 : vector<64x32xf32>
    %265 = arith.truncf %264 : vector<64x32xf32> to vector<64x32xbf16>
    %c23 = arith.constant 23 : index
    %c0_148 = arith.constant 0 : index
    %c0_149 = arith.constant 0 : index
    %266 = vector.load %arg3[%c23, %c0_148, %c0_149] : memref<25x32x64xbf16, #tpu.memory_space<vmem>>, vector<1x32x64xbf16>
    %267 = vector.shape_cast %266 : vector<1x32x64xbf16> to vector<32x64xbf16>
    %cst_150 = arith.constant dense<0.000000e+00> : vector<64x64xf32>
    %268 = tpu.matmul %265, %267, %cst_150 {dimension_numbers = #tpu.dot_dimension_numbers<[1], [0], [0], [1], [0, 0, 1, 1], [], []>} : vector<64x32xbf16>, vector<32x64xbf16>, vector<64x64xf32> -> vector<64x64xf32>
    %269 = arith.addf %258, %268 : vector<64x64xf32>
    %c1536 = arith.constant 1536 : index
    %c0_151 = arith.constant 0 : index
    %270 = vector.load %arg0[%c1536, %c0_151] : memref<1600x25xbf16, #tpu.memory_space<vmem>>, vector<64x25xbf16>
    %cst_152 = arith.constant dense<0.000000e+00> : vector<64x32xf32>
    %271 = tpu.matmul %270, %0, %cst_152 {dimension_numbers = #tpu.dot_dimension_numbers<[1], [0], [0], [1], [0, 0, 1, 1], [], []>} : vector<64x25xbf16>, vector<25x32xbf16>, vector<64x32xf32> -> vector<64x32xf32>
    %272 = vector.broadcast %1 : vector<1x32xf32> to vector<64x32xf32>
    %273 = arith.addf %271, %272 : vector<64x32xf32>
    %cst_153 = arith.constant 0.000000e+00 : f32
    %274 = vector.broadcast %cst_153 : f32 to vector<64x32xf32>
    %275 = arith.maximumf %273, %274 : vector<64x32xf32>
    %276 = arith.truncf %275 : vector<64x32xf32> to vector<64x32xbf16>
    %c24 = arith.constant 24 : index
    %c0_154 = arith.constant 0 : index
    %c0_155 = arith.constant 0 : index
    %277 = vector.load %arg3[%c24, %c0_154, %c0_155] : memref<25x32x64xbf16, #tpu.memory_space<vmem>>, vector<1x32x64xbf16>
    %278 = vector.shape_cast %277 : vector<1x32x64xbf16> to vector<32x64xbf16>
    %cst_156 = arith.constant dense<0.000000e+00> : vector<64x64xf32>
    %279 = tpu.matmul %276, %278, %cst_156 {dimension_numbers = #tpu.dot_dimension_numbers<[1], [0], [0], [1], [0, 0, 1, 1], [], []>} : vector<64x32xbf16>, vector<32x64xbf16>, vector<64x64xf32> -> vector<64x64xf32>
    %280 = arith.addf %269, %279 : vector<64x64xf32>
    %cst_157 = arith.constant 0.000000e+00 : f32
    %281 = vector.broadcast %cst_157 : f32 to vector<64x64xf32>
    %282 = arith.maximumf %280, %281 : vector<64x64xf32>
    %cst_158 = arith.constant 0.000000e+00 : f32
    %283 = vector.broadcast %cst_158 : f32 to vector<2x10xf32>
    %c0_159 = arith.constant 0 : index
    %c0_160 = arith.constant 0 : index
    %284 = vector.load %arg6[%c0_159, %c0_160] : memref<1x10xf32, #tpu.memory_space<vmem>>, vector<1x10xf32>
    %285 = vector.broadcast %284 : vector<1x10xf32> to vector<2x10xf32>
    %286 = arith.addf %283, %285 : vector<2x10xf32>
    %287 = vector.extract_strided_slice %282 {offsets = [0, 0], sizes = [2, 64], strides = [1, 1]} : vector<64x64xf32> to vector<2x64xf32>
    %c0_161 = arith.constant 0 : index
    %c0_162 = arith.constant 0 : index
    %c0_163 = arith.constant 0 : index
    %288 = vector.load %arg5[%c0_161, %c0_162, %c0_163] : memref<25x64x10xf32, #tpu.memory_space<vmem>>, vector<1x64x10xf32>
    %289 = vector.shape_cast %288 : vector<1x64x10xf32> to vector<64x10xf32>
    %cst_164 = arith.constant dense<0.000000e+00> : vector<2x10xf32>
    %290 = tpu.matmul %287, %289, %cst_164 {dimension_numbers = #tpu.dot_dimension_numbers<[1], [0], [0], [1], [0, 0, 1, 1], [], []>} : vector<2x64xf32>, vector<64x10xf32>, vector<2x10xf32> -> vector<2x10xf32>
    %291 = arith.addf %286, %290 : vector<2x10xf32>
    %292 = vector.extract_strided_slice %282 {offsets = [2, 0], sizes = [2, 64], strides = [1, 1]} : vector<64x64xf32> to vector<2x64xf32>
    %c1_165 = arith.constant 1 : index
    %c0_166 = arith.constant 0 : index
    %c0_167 = arith.constant 0 : index
    %293 = vector.load %arg5[%c1_165, %c0_166, %c0_167] : memref<25x64x10xf32, #tpu.memory_space<vmem>>, vector<1x64x10xf32>
    %294 = vector.shape_cast %293 : vector<1x64x10xf32> to vector<64x10xf32>
    %cst_168 = arith.constant dense<0.000000e+00> : vector<2x10xf32>
    %295 = tpu.matmul %292, %294, %cst_168 {dimension_numbers = #tpu.dot_dimension_numbers<[1], [0], [0], [1], [0, 0, 1, 1], [], []>} : vector<2x64xf32>, vector<64x10xf32>, vector<2x10xf32> -> vector<2x10xf32>
    %296 = arith.addf %291, %295 : vector<2x10xf32>
    %297 = vector.extract_strided_slice %282 {offsets = [4, 0], sizes = [2, 64], strides = [1, 1]} : vector<64x64xf32> to vector<2x64xf32>
    %c2_169 = arith.constant 2 : index
    %c0_170 = arith.constant 0 : index
    %c0_171 = arith.constant 0 : index
    %298 = vector.load %arg5[%c2_169, %c0_170, %c0_171] : memref<25x64x10xf32, #tpu.memory_space<vmem>>, vector<1x64x10xf32>
    %299 = vector.shape_cast %298 : vector<1x64x10xf32> to vector<64x10xf32>
    %cst_172 = arith.constant dense<0.000000e+00> : vector<2x10xf32>
    %300 = tpu.matmul %297, %299, %cst_172 {dimension_numbers = #tpu.dot_dimension_numbers<[1], [0], [0], [1], [0, 0, 1, 1], [], []>} : vector<2x64xf32>, vector<64x10xf32>, vector<2x10xf32> -> vector<2x10xf32>
    %301 = arith.addf %296, %300 : vector<2x10xf32>
    %302 = vector.extract_strided_slice %282 {offsets = [6, 0], sizes = [2, 64], strides = [1, 1]} : vector<64x64xf32> to vector<2x64xf32>
    %c3_173 = arith.constant 3 : index
    %c0_174 = arith.constant 0 : index
    %c0_175 = arith.constant 0 : index
    %303 = vector.load %arg5[%c3_173, %c0_174, %c0_175] : memref<25x64x10xf32, #tpu.memory_space<vmem>>, vector<1x64x10xf32>
    %304 = vector.shape_cast %303 : vector<1x64x10xf32> to vector<64x10xf32>
    %cst_176 = arith.constant dense<0.000000e+00> : vector<2x10xf32>
    %305 = tpu.matmul %302, %304, %cst_176 {dimension_numbers = #tpu.dot_dimension_numbers<[1], [0], [0], [1], [0, 0, 1, 1], [], []>} : vector<2x64xf32>, vector<64x10xf32>, vector<2x10xf32> -> vector<2x10xf32>
    %306 = arith.addf %301, %305 : vector<2x10xf32>
    %307 = vector.extract_strided_slice %282 {offsets = [8, 0], sizes = [2, 64], strides = [1, 1]} : vector<64x64xf32> to vector<2x64xf32>
    %c4_177 = arith.constant 4 : index
    %c0_178 = arith.constant 0 : index
    %c0_179 = arith.constant 0 : index
    %308 = vector.load %arg5[%c4_177, %c0_178, %c0_179] : memref<25x64x10xf32, #tpu.memory_space<vmem>>, vector<1x64x10xf32>
    %309 = vector.shape_cast %308 : vector<1x64x10xf32> to vector<64x10xf32>
    %cst_180 = arith.constant dense<0.000000e+00> : vector<2x10xf32>
    %310 = tpu.matmul %307, %309, %cst_180 {dimension_numbers = #tpu.dot_dimension_numbers<[1], [0], [0], [1], [0, 0, 1, 1], [], []>} : vector<2x64xf32>, vector<64x10xf32>, vector<2x10xf32> -> vector<2x10xf32>
    %311 = arith.addf %306, %310 : vector<2x10xf32>
    %312 = vector.extract_strided_slice %282 {offsets = [10, 0], sizes = [2, 64], strides = [1, 1]} : vector<64x64xf32> to vector<2x64xf32>
    %c5_181 = arith.constant 5 : index
    %c0_182 = arith.constant 0 : index
    %c0_183 = arith.constant 0 : index
    %313 = vector.load %arg5[%c5_181, %c0_182, %c0_183] : memref<25x64x10xf32, #tpu.memory_space<vmem>>, vector<1x64x10xf32>
    %314 = vector.shape_cast %313 : vector<1x64x10xf32> to vector<64x10xf32>
    %cst_184 = arith.constant dense<0.000000e+00> : vector<2x10xf32>
    %315 = tpu.matmul %312, %314, %cst_184 {dimension_numbers = #tpu.dot_dimension_numbers<[1], [0], [0], [1], [0, 0, 1, 1], [], []>} : vector<2x64xf32>, vector<64x10xf32>, vector<2x10xf32> -> vector<2x10xf32>
    %316 = arith.addf %311, %315 : vector<2x10xf32>
    %317 = vector.extract_strided_slice %282 {offsets = [12, 0], sizes = [2, 64], strides = [1, 1]} : vector<64x64xf32> to vector<2x64xf32>
    %c6_185 = arith.constant 6 : index
    %c0_186 = arith.constant 0 : index
    %c0_187 = arith.constant 0 : index
    %318 = vector.load %arg5[%c6_185, %c0_186, %c0_187] : memref<25x64x10xf32, #tpu.memory_space<vmem>>, vector<1x64x10xf32>
    %319 = vector.shape_cast %318 : vector<1x64x10xf32> to vector<64x10xf32>
    %cst_188 = arith.constant dense<0.000000e+00> : vector<2x10xf32>
    %320 = tpu.matmul %317, %319, %cst_188 {dimension_numbers = #tpu.dot_dimension_numbers<[1], [0], [0], [1], [0, 0, 1, 1], [], []>} : vector<2x64xf32>, vector<64x10xf32>, vector<2x10xf32> -> vector<2x10xf32>
    %321 = arith.addf %316, %320 : vector<2x10xf32>
    %322 = vector.extract_strided_slice %282 {offsets = [14, 0], sizes = [2, 64], strides = [1, 1]} : vector<64x64xf32> to vector<2x64xf32>
    %c7_189 = arith.constant 7 : index
    %c0_190 = arith.constant 0 : index
    %c0_191 = arith.constant 0 : index
    %323 = vector.load %arg5[%c7_189, %c0_190, %c0_191] : memref<25x64x10xf32, #tpu.memory_space<vmem>>, vector<1x64x10xf32>
    %324 = vector.shape_cast %323 : vector<1x64x10xf32> to vector<64x10xf32>
    %cst_192 = arith.constant dense<0.000000e+00> : vector<2x10xf32>
    %325 = tpu.matmul %322, %324, %cst_192 {dimension_numbers = #tpu.dot_dimension_numbers<[1], [0], [0], [1], [0, 0, 1, 1], [], []>} : vector<2x64xf32>, vector<64x10xf32>, vector<2x10xf32> -> vector<2x10xf32>
    %326 = arith.addf %321, %325 : vector<2x10xf32>
    %327 = vector.extract_strided_slice %282 {offsets = [16, 0], sizes = [2, 64], strides = [1, 1]} : vector<64x64xf32> to vector<2x64xf32>
    %c8_193 = arith.constant 8 : index
    %c0_194 = arith.constant 0 : index
    %c0_195 = arith.constant 0 : index
    %328 = vector.load %arg5[%c8_193, %c0_194, %c0_195] : memref<25x64x10xf32, #tpu.memory_space<vmem>>, vector<1x64x10xf32>
    %329 = vector.shape_cast %328 : vector<1x64x10xf32> to vector<64x10xf32>
    %cst_196 = arith.constant dense<0.000000e+00> : vector<2x10xf32>
    %330 = tpu.matmul %327, %329, %cst_196 {dimension_numbers = #tpu.dot_dimension_numbers<[1], [0], [0], [1], [0, 0, 1, 1], [], []>} : vector<2x64xf32>, vector<64x10xf32>, vector<2x10xf32> -> vector<2x10xf32>
    %331 = arith.addf %326, %330 : vector<2x10xf32>
    %332 = vector.extract_strided_slice %282 {offsets = [18, 0], sizes = [2, 64], strides = [1, 1]} : vector<64x64xf32> to vector<2x64xf32>
    %c9_197 = arith.constant 9 : index
    %c0_198 = arith.constant 0 : index
    %c0_199 = arith.constant 0 : index
    %333 = vector.load %arg5[%c9_197, %c0_198, %c0_199] : memref<25x64x10xf32, #tpu.memory_space<vmem>>, vector<1x64x10xf32>
    %334 = vector.shape_cast %333 : vector<1x64x10xf32> to vector<64x10xf32>
    %cst_200 = arith.constant dense<0.000000e+00> : vector<2x10xf32>
    %335 = tpu.matmul %332, %334, %cst_200 {dimension_numbers = #tpu.dot_dimension_numbers<[1], [0], [0], [1], [0, 0, 1, 1], [], []>} : vector<2x64xf32>, vector<64x10xf32>, vector<2x10xf32> -> vector<2x10xf32>
    %336 = arith.addf %331, %335 : vector<2x10xf32>
    %337 = vector.extract_strided_slice %282 {offsets = [20, 0], sizes = [2, 64], strides = [1, 1]} : vector<64x64xf32> to vector<2x64xf32>
    %c10_201 = arith.constant 10 : index
    %c0_202 = arith.constant 0 : index
    %c0_203 = arith.constant 0 : index
    %338 = vector.load %arg5[%c10_201, %c0_202, %c0_203] : memref<25x64x10xf32, #tpu.memory_space<vmem>>, vector<1x64x10xf32>
    %339 = vector.shape_cast %338 : vector<1x64x10xf32> to vector<64x10xf32>
    %cst_204 = arith.constant dense<0.000000e+00> : vector<2x10xf32>
    %340 = tpu.matmul %337, %339, %cst_204 {dimension_numbers = #tpu.dot_dimension_numbers<[1], [0], [0], [1], [0, 0, 1, 1], [], []>} : vector<2x64xf32>, vector<64x10xf32>, vector<2x10xf32> -> vector<2x10xf32>
    %341 = arith.addf %336, %340 : vector<2x10xf32>
    %342 = vector.extract_strided_slice %282 {offsets = [22, 0], sizes = [2, 64], strides = [1, 1]} : vector<64x64xf32> to vector<2x64xf32>
    %c11_205 = arith.constant 11 : index
    %c0_206 = arith.constant 0 : index
    %c0_207 = arith.constant 0 : index
    %343 = vector.load %arg5[%c11_205, %c0_206, %c0_207] : memref<25x64x10xf32, #tpu.memory_space<vmem>>, vector<1x64x10xf32>
    %344 = vector.shape_cast %343 : vector<1x64x10xf32> to vector<64x10xf32>
    %cst_208 = arith.constant dense<0.000000e+00> : vector<2x10xf32>
    %345 = tpu.matmul %342, %344, %cst_208 {dimension_numbers = #tpu.dot_dimension_numbers<[1], [0], [0], [1], [0, 0, 1, 1], [], []>} : vector<2x64xf32>, vector<64x10xf32>, vector<2x10xf32> -> vector<2x10xf32>
    %346 = arith.addf %341, %345 : vector<2x10xf32>
    %347 = vector.extract_strided_slice %282 {offsets = [24, 0], sizes = [2, 64], strides = [1, 1]} : vector<64x64xf32> to vector<2x64xf32>
    %c12_209 = arith.constant 12 : index
    %c0_210 = arith.constant 0 : index
    %c0_211 = arith.constant 0 : index
    %348 = vector.load %arg5[%c12_209, %c0_210, %c0_211] : memref<25x64x10xf32, #tpu.memory_space<vmem>>, vector<1x64x10xf32>
    %349 = vector.shape_cast %348 : vector<1x64x10xf32> to vector<64x10xf32>
    %cst_212 = arith.constant dense<0.000000e+00> : vector<2x10xf32>
    %350 = tpu.matmul %347, %349, %cst_212 {dimension_numbers = #tpu.dot_dimension_numbers<[1], [0], [0], [1], [0, 0, 1, 1], [], []>} : vector<2x64xf32>, vector<64x10xf32>, vector<2x10xf32> -> vector<2x10xf32>
    %351 = arith.addf %346, %350 : vector<2x10xf32>
    %352 = vector.extract_strided_slice %282 {offsets = [26, 0], sizes = [2, 64], strides = [1, 1]} : vector<64x64xf32> to vector<2x64xf32>
    %c13_213 = arith.constant 13 : index
    %c0_214 = arith.constant 0 : index
    %c0_215 = arith.constant 0 : index
    %353 = vector.load %arg5[%c13_213, %c0_214, %c0_215] : memref<25x64x10xf32, #tpu.memory_space<vmem>>, vector<1x64x10xf32>
    %354 = vector.shape_cast %353 : vector<1x64x10xf32> to vector<64x10xf32>
    %cst_216 = arith.constant dense<0.000000e+00> : vector<2x10xf32>
    %355 = tpu.matmul %352, %354, %cst_216 {dimension_numbers = #tpu.dot_dimension_numbers<[1], [0], [0], [1], [0, 0, 1, 1], [], []>} : vector<2x64xf32>, vector<64x10xf32>, vector<2x10xf32> -> vector<2x10xf32>
    %356 = arith.addf %351, %355 : vector<2x10xf32>
    %357 = vector.extract_strided_slice %282 {offsets = [28, 0], sizes = [2, 64], strides = [1, 1]} : vector<64x64xf32> to vector<2x64xf32>
    %c14_217 = arith.constant 14 : index
    %c0_218 = arith.constant 0 : index
    %c0_219 = arith.constant 0 : index
    %358 = vector.load %arg5[%c14_217, %c0_218, %c0_219] : memref<25x64x10xf32, #tpu.memory_space<vmem>>, vector<1x64x10xf32>
    %359 = vector.shape_cast %358 : vector<1x64x10xf32> to vector<64x10xf32>
    %cst_220 = arith.constant dense<0.000000e+00> : vector<2x10xf32>
    %360 = tpu.matmul %357, %359, %cst_220 {dimension_numbers = #tpu.dot_dimension_numbers<[1], [0], [0], [1], [0, 0, 1, 1], [], []>} : vector<2x64xf32>, vector<64x10xf32>, vector<2x10xf32> -> vector<2x10xf32>
    %361 = arith.addf %356, %360 : vector<2x10xf32>
    %362 = vector.extract_strided_slice %282 {offsets = [30, 0], sizes = [2, 64], strides = [1, 1]} : vector<64x64xf32> to vector<2x64xf32>
    %c15_221 = arith.constant 15 : index
    %c0_222 = arith.constant 0 : index
    %c0_223 = arith.constant 0 : index
    %363 = vector.load %arg5[%c15_221, %c0_222, %c0_223] : memref<25x64x10xf32, #tpu.memory_space<vmem>>, vector<1x64x10xf32>
    %364 = vector.shape_cast %363 : vector<1x64x10xf32> to vector<64x10xf32>
    %cst_224 = arith.constant dense<0.000000e+00> : vector<2x10xf32>
    %365 = tpu.matmul %362, %364, %cst_224 {dimension_numbers = #tpu.dot_dimension_numbers<[1], [0], [0], [1], [0, 0, 1, 1], [], []>} : vector<2x64xf32>, vector<64x10xf32>, vector<2x10xf32> -> vector<2x10xf32>
    %366 = arith.addf %361, %365 : vector<2x10xf32>
    %367 = vector.extract_strided_slice %282 {offsets = [32, 0], sizes = [2, 64], strides = [1, 1]} : vector<64x64xf32> to vector<2x64xf32>
    %c16_225 = arith.constant 16 : index
    %c0_226 = arith.constant 0 : index
    %c0_227 = arith.constant 0 : index
    %368 = vector.load %arg5[%c16_225, %c0_226, %c0_227] : memref<25x64x10xf32, #tpu.memory_space<vmem>>, vector<1x64x10xf32>
    %369 = vector.shape_cast %368 : vector<1x64x10xf32> to vector<64x10xf32>
    %cst_228 = arith.constant dense<0.000000e+00> : vector<2x10xf32>
    %370 = tpu.matmul %367, %369, %cst_228 {dimension_numbers = #tpu.dot_dimension_numbers<[1], [0], [0], [1], [0, 0, 1, 1], [], []>} : vector<2x64xf32>, vector<64x10xf32>, vector<2x10xf32> -> vector<2x10xf32>
    %371 = arith.addf %366, %370 : vector<2x10xf32>
    %372 = vector.extract_strided_slice %282 {offsets = [34, 0], sizes = [2, 64], strides = [1, 1]} : vector<64x64xf32> to vector<2x64xf32>
    %c17_229 = arith.constant 17 : index
    %c0_230 = arith.constant 0 : index
    %c0_231 = arith.constant 0 : index
    %373 = vector.load %arg5[%c17_229, %c0_230, %c0_231] : memref<25x64x10xf32, #tpu.memory_space<vmem>>, vector<1x64x10xf32>
    %374 = vector.shape_cast %373 : vector<1x64x10xf32> to vector<64x10xf32>
    %cst_232 = arith.constant dense<0.000000e+00> : vector<2x10xf32>
    %375 = tpu.matmul %372, %374, %cst_232 {dimension_numbers = #tpu.dot_dimension_numbers<[1], [0], [0], [1], [0, 0, 1, 1], [], []>} : vector<2x64xf32>, vector<64x10xf32>, vector<2x10xf32> -> vector<2x10xf32>
    %376 = arith.addf %371, %375 : vector<2x10xf32>
    %377 = vector.extract_strided_slice %282 {offsets = [36, 0], sizes = [2, 64], strides = [1, 1]} : vector<64x64xf32> to vector<2x64xf32>
    %c18_233 = arith.constant 18 : index
    %c0_234 = arith.constant 0 : index
    %c0_235 = arith.constant 0 : index
    %378 = vector.load %arg5[%c18_233, %c0_234, %c0_235] : memref<25x64x10xf32, #tpu.memory_space<vmem>>, vector<1x64x10xf32>
    %379 = vector.shape_cast %378 : vector<1x64x10xf32> to vector<64x10xf32>
    %cst_236 = arith.constant dense<0.000000e+00> : vector<2x10xf32>
    %380 = tpu.matmul %377, %379, %cst_236 {dimension_numbers = #tpu.dot_dimension_numbers<[1], [0], [0], [1], [0, 0, 1, 1], [], []>} : vector<2x64xf32>, vector<64x10xf32>, vector<2x10xf32> -> vector<2x10xf32>
    %381 = arith.addf %376, %380 : vector<2x10xf32>
    %382 = vector.extract_strided_slice %282 {offsets = [38, 0], sizes = [2, 64], strides = [1, 1]} : vector<64x64xf32> to vector<2x64xf32>
    %c19_237 = arith.constant 19 : index
    %c0_238 = arith.constant 0 : index
    %c0_239 = arith.constant 0 : index
    %383 = vector.load %arg5[%c19_237, %c0_238, %c0_239] : memref<25x64x10xf32, #tpu.memory_space<vmem>>, vector<1x64x10xf32>
    %384 = vector.shape_cast %383 : vector<1x64x10xf32> to vector<64x10xf32>
    %cst_240 = arith.constant dense<0.000000e+00> : vector<2x10xf32>
    %385 = tpu.matmul %382, %384, %cst_240 {dimension_numbers = #tpu.dot_dimension_numbers<[1], [0], [0], [1], [0, 0, 1, 1], [], []>} : vector<2x64xf32>, vector<64x10xf32>, vector<2x10xf32> -> vector<2x10xf32>
    %386 = arith.addf %381, %385 : vector<2x10xf32>
    %387 = vector.extract_strided_slice %282 {offsets = [40, 0], sizes = [2, 64], strides = [1, 1]} : vector<64x64xf32> to vector<2x64xf32>
    %c20_241 = arith.constant 20 : index
    %c0_242 = arith.constant 0 : index
    %c0_243 = arith.constant 0 : index
    %388 = vector.load %arg5[%c20_241, %c0_242, %c0_243] : memref<25x64x10xf32, #tpu.memory_space<vmem>>, vector<1x64x10xf32>
    %389 = vector.shape_cast %388 : vector<1x64x10xf32> to vector<64x10xf32>
    %cst_244 = arith.constant dense<0.000000e+00> : vector<2x10xf32>
    %390 = tpu.matmul %387, %389, %cst_244 {dimension_numbers = #tpu.dot_dimension_numbers<[1], [0], [0], [1], [0, 0, 1, 1], [], []>} : vector<2x64xf32>, vector<64x10xf32>, vector<2x10xf32> -> vector<2x10xf32>
    %391 = arith.addf %386, %390 : vector<2x10xf32>
    %392 = vector.extract_strided_slice %282 {offsets = [42, 0], sizes = [2, 64], strides = [1, 1]} : vector<64x64xf32> to vector<2x64xf32>
    %c21_245 = arith.constant 21 : index
    %c0_246 = arith.constant 0 : index
    %c0_247 = arith.constant 0 : index
    %393 = vector.load %arg5[%c21_245, %c0_246, %c0_247] : memref<25x64x10xf32, #tpu.memory_space<vmem>>, vector<1x64x10xf32>
    %394 = vector.shape_cast %393 : vector<1x64x10xf32> to vector<64x10xf32>
    %cst_248 = arith.constant dense<0.000000e+00> : vector<2x10xf32>
    %395 = tpu.matmul %392, %394, %cst_248 {dimension_numbers = #tpu.dot_dimension_numbers<[1], [0], [0], [1], [0, 0, 1, 1], [], []>} : vector<2x64xf32>, vector<64x10xf32>, vector<2x10xf32> -> vector<2x10xf32>
    %396 = arith.addf %391, %395 : vector<2x10xf32>
    %397 = vector.extract_strided_slice %282 {offsets = [44, 0], sizes = [2, 64], strides = [1, 1]} : vector<64x64xf32> to vector<2x64xf32>
    %c22_249 = arith.constant 22 : index
    %c0_250 = arith.constant 0 : index
    %c0_251 = arith.constant 0 : index
    %398 = vector.load %arg5[%c22_249, %c0_250, %c0_251] : memref<25x64x10xf32, #tpu.memory_space<vmem>>, vector<1x64x10xf32>
    %399 = vector.shape_cast %398 : vector<1x64x10xf32> to vector<64x10xf32>
    %cst_252 = arith.constant dense<0.000000e+00> : vector<2x10xf32>
    %400 = tpu.matmul %397, %399, %cst_252 {dimension_numbers = #tpu.dot_dimension_numbers<[1], [0], [0], [1], [0, 0, 1, 1], [], []>} : vector<2x64xf32>, vector<64x10xf32>, vector<2x10xf32> -> vector<2x10xf32>
    %401 = arith.addf %396, %400 : vector<2x10xf32>
    %402 = vector.extract_strided_slice %282 {offsets = [46, 0], sizes = [2, 64], strides = [1, 1]} : vector<64x64xf32> to vector<2x64xf32>
    %c23_253 = arith.constant 23 : index
    %c0_254 = arith.constant 0 : index
    %c0_255 = arith.constant 0 : index
    %403 = vector.load %arg5[%c23_253, %c0_254, %c0_255] : memref<25x64x10xf32, #tpu.memory_space<vmem>>, vector<1x64x10xf32>
    %404 = vector.shape_cast %403 : vector<1x64x10xf32> to vector<64x10xf32>
    %cst_256 = arith.constant dense<0.000000e+00> : vector<2x10xf32>
    %405 = tpu.matmul %402, %404, %cst_256 {dimension_numbers = #tpu.dot_dimension_numbers<[1], [0], [0], [1], [0, 0, 1, 1], [], []>} : vector<2x64xf32>, vector<64x10xf32>, vector<2x10xf32> -> vector<2x10xf32>
    %406 = arith.addf %401, %405 : vector<2x10xf32>
    %407 = vector.extract_strided_slice %282 {offsets = [48, 0], sizes = [2, 64], strides = [1, 1]} : vector<64x64xf32> to vector<2x64xf32>
    %c24_257 = arith.constant 24 : index
    %c0_258 = arith.constant 0 : index
    %c0_259 = arith.constant 0 : index
    %408 = vector.load %arg5[%c24_257, %c0_258, %c0_259] : memref<25x64x10xf32, #tpu.memory_space<vmem>>, vector<1x64x10xf32>
    %409 = vector.shape_cast %408 : vector<1x64x10xf32> to vector<64x10xf32>
    %cst_260 = arith.constant dense<0.000000e+00> : vector<2x10xf32>
    %410 = tpu.matmul %407, %409, %cst_260 {dimension_numbers = #tpu.dot_dimension_numbers<[1], [0], [0], [1], [0, 0, 1, 1], [], []>} : vector<2x64xf32>, vector<64x10xf32>, vector<2x10xf32> -> vector<2x10xf32>
    %411 = arith.addf %406, %410 : vector<2x10xf32>
    %c0_261 = arith.constant 0 : index
    %c0_262 = arith.constant 0 : index
    %412 = vector.load %arg7[%c0_261, %c0_262] : memref<2x10xf32, #tpu.memory_space<vmem>>, vector<2x10xf32>
    tpu.vector_store %arg7[%c0_261, %c0_262], %411 {strides = array<i32>} : memref<2x10xf32, #tpu.memory_space<vmem>>, vector<2x10xf32>,
    return
  }
}

</mosaic_0001>

<llo_original>
// kernel: convnet_forward.1
$region0: #{convnet_forward.1}
  #allocation0 [shape = 'u32[]', space=smem, size = 0x4, offset = 0x4, fixed_abs, tag = 'smem constant byte address 0x4 - core index']
  #allocation1 [shape = 'u32[144,128]{1,0:T(1,128)}', space=vmem, size = 0x12000, scoped, tag = 'internal scratch']
  %s0 = inlined_call_operand.vmem [shape: bf16[1600,25], index: 0, kind: input, shape index: {}]
  %s1 = inlined_call_operand.vmem [shape: bf16[25,32], index: 1, kind: input, shape index: {}]
  %s2 = inlined_call_operand.vmem [shape: f32[1,32], index: 2, kind: input, shape index: {}]
  %s3 = inlined_call_operand.vmem [shape: bf16[25,32,64], index: 3, kind: input, shape index: {}]
  %s4 = inlined_call_operand.vmem [shape: f32[1,64], index: 4, kind: input, shape index: {}]
  %s5 = inlined_call_operand.vmem [shape: f32[25,64,10], index: 5, kind: input, shape index: {}]
  %s6 = inlined_call_operand.vmem [shape: f32[1,10], index: 6, kind: input, shape index: {}]
  %s7 = inlined_call_operand.hbm [shape: f32[2,10], index: 7, kind: output, shape index: {}]
  %s8 = sld [smem:[#allocation0]]
  $region38: #{convnet_forward.1} parent=0
    _
  %s10 = ssub.s32 1, %s8
  %s11 = scalar_select 0, %s10, %s8
  $region1: #{convnet_forward.1} parent=0
    #allocation2 [shape = 'u8[1024]{0}', space=vmem, size = 0x400, scoped, tag = 'output window, operand 0, single buffered']
    #allocation3 [shape = 's32[1]{0}', space=sflag, size = 0x4, scoped, tag = 'scoped memory for convnet_forward.1']
    %12 = vsyncpa [#allocation3], 0
    // Predicated region
    $region2: #{convnet_forward.1} parent=1 // pred_check
      _
    $region3: #{convnet_forward.1} parent=1 // pred_check_branch
      %14 = sbr.rel (0) target = $region5
    $region4: #{convnet_forward.1} parent=1 // pred_region
      _
    $region5: #{convnet_forward.1} parent=1 // pred_fallthru
      _
    // Predicated region
    $region6: #{convnet_forward.1} parent=1 // pred_check
      _
    $region7: #{convnet_forward.1} parent=1 // pred_check_branch
      %16 = sbr.rel (0) target = $region9
    $region8: #{convnet_forward.1} parent=1 // pred_region
      _
    $region9: #{convnet_forward.1} parent=1 // pred_fallthru
      _
    // Predicated region
    $region10: #{convnet_forward.1} parent=1 // pred_check
      _
    $region11: #{convnet_forward.1} parent=1 // pred_check_branch
      %18 = sbr.rel (0) target = $region13
    $region12: #{convnet_forward.1} parent=1 // pred_region
      _
    $region13: #{convnet_forward.1} parent=1 // pred_fallthru
      _
    // Predicated region
    $region14: #{convnet_forward.1} parent=1 // pred_check
      _
    $region15: #{convnet_forward.1} parent=1 // pred_check_branch
      %20 = sbr.rel (0) target = $region17
    $region16: #{convnet_forward.1} parent=1 // pred_region
      _
    $region17: #{convnet_forward.1} parent=1 // pred_fallthru
      _
    // Predicated region
    $region18: #{convnet_forward.1} parent=1 // pred_check
      _
    $region19: #{convnet_forward.1} parent=1 // pred_check_branch
      %22 = sbr.rel (0) target = $region21
    $region20: #{convnet_forward.1} parent=1 // pred_region
      _
    $region21: #{convnet_forward.1} parent=1 // pred_fallthru
      _
    // Predicated region
    $region22: #{convnet_forward.1} parent=1 // pred_check
      _
    $region23: #{convnet_forward.1} parent=1 // pred_check_branch
      %24 = sbr.rel (0) target = $region25
    $region24: #{convnet_forward.1} parent=1 // pred_region
      _
    $region25: #{convnet_forward.1} parent=1 // pred_fallthru
      _
    // Predicated region
    $region26: #{convnet_forward.1} parent=1 // pred_check
      _
    $region27: #{convnet_forward.1} parent=1 // pred_check_branch
      %26 = sbr.rel (0) target = $region29
    $region28: #{convnet_forward.1} parent=1 // pred_region
      _
    $region29: #{convnet_forward.1} parent=1 // pred_fallthru
      _
    %v28 = vld [vmem:[%s1] sm:$0xf]
    %v29 = vld [vmem:[%s1 + $0x4] sm:$0xf]
    %v30 = vld [vmem:[%s1 + $0x8] sm:$0xf]
    %v31 = vld [vmem:[%s1 + $0xc] sm:$0x1]
    %v32 = vld [vmem:[%s2] sm:$0x1]
    %v33 = vld [vmem:[%s4] sm:$0x1]
    %v35 = vlaneseq
    %v36 = vshrl.u32 %v35, 7
    %v37 = vsub.s32 0, %v36
    %v38 = vrot.slane %v33, %v37
    %v40 = vadd.f32 %v38, 0.0
    %v41 = vld [vmem:[%s0] sm:$0xf]
    %v42 = vld [vmem:[%s0 + $0x4] sm:$0xf]
    %v43 = vld [vmem:[%s0 + $0x8] sm:$0xf]
    %v44 = vld [vmem:[%s0 + $0xc] sm:$0xf]
    %v45 = vld [vmem:[%s0 + $0x10] sm:$0xf]
    %v46 = vld [vmem:[%s0 + $0x14] sm:$0xf]
    %v47 = vld [vmem:[%s0 + $0x18] sm:$0xf]
    %v48 = vld [vmem:[%s0 + $0x1c] sm:$0xf]
    %v50 = vlaneseq
    %v51 = vshrl.u32 %v50, 7
    %v52 = vsub.s32 0, %v51
    %v53 = vrot.slane %v32, %v52
    %v63 = vunpack.c.l.b16 %v41
    %v64 = vunpack.c.l.b16 %v42
    %v65 = vunpack.c.l.b16 %v43
    %v66 = vunpack.c.l.b16 %v44
    %v67 = vunpack.c.l.b16 %v45
    %v68 = vunpack.c.l.b16 %v46
    %v69 = vunpack.c.l.b16 %v47
    %v70 = vunpack.c.l.b16 %v48
    %v71 = vpack.c.b16 %v64, %v63
    %v72 = vpack.c.b16 %v66, %v65
    %v73 = vpack.c.b16 %v68, %v67
    %v74 = vpack.c.b16 %v70, %v69
    %v79 = vunpack.c.l.b16 %v28
    %v80 = vunpack.c.l.b16 %v29
    %v81 = vunpack.c.l.b16 %v30
    %v82 = vunpack.c.l.b16 %v31
    %v83 = vpack.c.b16 %v80, %v79
    %v84 = vpack.c.b16 %v82, %v81
    %vm86 = vcmask 203776
    %v88 = vsel %vm86, %v71, 0
    %v91 = vsel %vm86, %v72, 0
    %v94 = vsel %vm86, %v73, 0
    %v97 = vsel %vm86, %v74, 0
    %vm99 = vcmask 1043456
    %vm100 = vcmask 1044480
    %v101 = vsel %vm99, 4294967295, 65535
    %v102 = vsel %vm100, %v101, 0
    %v104 = vand.u32 %v84, %v102
    %106 = vmatprep.subr.bf16.mxu0 0
    %107 = vmatpush1.bf16.msra.mxu0 %v83
    %108 = vmatprep.subr.bf16.mxu0 0
    %109 = vmatpush1.bf16.msra.mxu0 %v104
    %110 = vmatprep.subr.bf16.mxu0 0
    %111 = vmatpush1.bf16.msra.mxu0 0
    %112 = vmatprep.subr.bf16.mxu0 0
    %113 = vmatpush1.bf16.msra.mxu0 0
    %114 = vmatprep.subr.bf16.mxu0 0
    %115 = vmatpush1.bf16.msra.mxu0 0
    %116 = vmatprep.subr.bf16.mxu0 0
    %117 = vmatpush1.bf16.msra.mxu0 0
    %118 = vmatprep.subr.bf16.mxu0 0
    %119 = vmatpush1.bf16.msra.mxu0 0
    %120 = vmatprep.subr.bf16.mxu0 0
    %121 = vmatpush1.bf16.msra.mxu0 0
    %122 = vmatprep.subr.bf16.mxu0 0
    %123 = vmatpush1.bf16.msra.mxu0 0
    %124 = vmatprep.subr.bf16.mxu0 0
    %125 = vmatpush1.bf16.msra.mxu0 0
    %126 = vmatprep.subr.bf16.mxu0 0
    %127 = vmatpush1.bf16.msra.mxu0 0
    %128 = vmatprep.subr.bf16.mxu0 0
    %129 = vmatpush1.bf16.msra.mxu0 0
    %130 = vmatprep.subr.bf16.mxu0 0
    %131 = vmatpush1.bf16.msra.mxu0 0
    %132 = vmatprep.subr.bf16.mxu0 0
    %133 = vmatpush1.bf16.msra.mxu0 0
    %134 = vmatprep.subr.bf16.mxu0 0
    %135 = vmatpush1.bf16.msra.mxu0 0
    %136 = vmatprep.subr.bf16.mxu0 0
    %137 = vmatpush1.bf16.msra.mxu0 0
    %138 = vmatprep.mubr.bf16.mxu0 0
    %139 = vmatmul.mubr.bf16.gmra.mrb[0].mxu0 %v88
    %v140 = vpop.f32.mrb[0].mxu0
    %v141 = vadd.f32 %v53, %v140
    %v142 = vpop.f32.mrb[0].mxu0
    %v143 = vpop.f32.mrb[0].mxu0
    %v144 = vadd.f32 %v53, %v143
    %v145 = vpop.f32.mrb[0].mxu0
    %146 = vmatprep.mubr.bf16.mxu0 0
    %147 = vmatmul.mubr.bf16.gmra.mrb[0].mxu0 %v91
    %v148 = vpop.f32.mrb[0].mxu0
    %v149 = vadd.f32 %v53, %v148
    %v150 = vpop.f32.mrb[0].mxu0
    %v151 = vpop.f32.mrb[0].mxu0
    %v152 = vadd.f32 %v53, %v151
    %v153 = vpop.f32.mrb[0].mxu0
    %154 = vmatprep.mubr.bf16.mxu0 0
    %155 = vmatmul.mubr.bf16.gmra.mrb[0].mxu0 %v94
    %v156 = vpop.f32.mrb[0].mxu0
    %v157 = vadd.f32 %v53, %v156
    %v158 = vpop.f32.mrb[0].mxu0
    %v159 = vpop.f32.mrb[0].mxu0
    %v160 = vadd.f32 %v53, %v159
    %v161 = vpop.f32.mrb[0].mxu0
    %162 = vmatprep.mubr.bf16.mxu0 0
    %163 = vmatmul.mubr.bf16.gmra.mrb[0].mxu0 %v97
    %v164 = vpop.f32.mrb[0].mxu0
    %v165 = vadd.f32 %v53, %v164
    %v166 = vpop.f32.mrb[0].mxu0
    %v167 = vpop.f32.mrb[0].mxu0
    %v168 = vadd.f32 %v53, %v167
    %v169 = vpop.f32.mrb[0].mxu0
    %170 = vdwg.mxu0
    %v171 = vmax.f32 %v141, 0.0
    %v172 = vmax.f32 %v144, 0.0
    %v173 = vmax.f32 %v149, 0.0
    %v174 = vmax.f32 %v152, 0.0
    %v175 = vmax.f32 %v157, 0.0
    %v176 = vmax.f32 %v160, 0.0
    %v177 = vmax.f32 %v165, 0.0
    %v178 = vmax.f32 %v168, 0.0
    %v179 = vpack.c.bf16 %v172, %v171
    %v180 = vpack.c.bf16 %v174, %v173
    %v181 = vpack.c.bf16 %v176, %v175
    %v182 = vpack.c.bf16 %v178, %v177
    %v183 = vld [vmem:[%s3] sm:$0xf]
    %v184 = vld [vmem:[%s3 + $0x4] sm:$0xf]
    %v185 = vld [vmem:[%s3 + $0x8] sm:$0xf]
    %v186 = vld [vmem:[%s3 + $0xc] sm:$0xf]
    %v191 = vunpack.c.l.b16 %v183
    %v192 = vunpack.c.l.b16 %v184
    %v193 = vunpack.c.l.b16 %v185
    %v194 = vunpack.c.l.b16 %v186
    %v195 = vpack.c.b16 %v192, %v191
    %v196 = vpack.c.b16 %v194, %v193
    %vm199 = vcmask 261120
    %v201 = vsel %vm199, %v179, 0
    %v204 = vsel %vm199, %v180, 0
    %v207 = vsel %vm199, %v181, 0
    %v210 = vsel %vm199, %v182, 0
    %212 = vmatprep.subr.bf16.mxu0 0
    %213 = vmatpush1.bf16.msra.mxu0 %v195
    %214 = vmatprep.subr.bf16.mxu0 0
    %215 = vmatpush1.bf16.msra.mxu0 %v196
    %216 = vmatprep.subr.bf16.mxu0 0
    %217 = vmatpush1.bf16.msra.mxu0 0
    %218 = vmatprep.subr.bf16.mxu0 0
    %219 = vmatpush1.bf16.msra.mxu0 0
    %220 = vmatprep.subr.bf16.mxu0 0
    %221 = vmatpush1.bf16.msra.mxu0 0
    %222 = vmatprep.subr.bf16.mxu0 0
    %223 = vmatpush1.bf16.msra.mxu0 0
    %224 = vmatprep.subr.bf16.mxu0 0
    %225 = vmatpush1.bf16.msra.mxu0 0
    %226 = vmatprep.subr.bf16.mxu0 0
    %227 = vmatpush1.bf16.msra.mxu0 0
    %228 = vmatprep.subr.bf16.mxu0 0
    %229 = vmatpush1.bf16.msra.mxu0 0
    %230 = vmatprep.subr.bf16.mxu0 0
    %231 = vmatpush1.bf16.msra.mxu0 0
    %232 = vmatprep.subr.bf16.mxu0 0
    %233 = vmatpush1.bf16.msra.mxu0 0
    %234 = vmatprep.subr.bf16.mxu0 0
    %235 = vmatpush1.bf16.msra.mxu0 0
    %236 = vmatprep.subr.bf16.mxu0 0
    %237 = vmatpush1.bf16.msra.mxu0 0
    %238 = vmatprep.subr.bf16.mxu0 0
    %239 = vmatpush1.bf16.msra.mxu0 0
    %240 = vmatprep.subr.bf16.mxu0 0
    %241 = vmatpush1.bf16.msra.mxu0 0
    %242 = vmatprep.subr.bf16.mxu0 0
    %243 = vmatpush1.bf16.msra.mxu0 0
    %244 = vmatprep.mubr.bf16.mxu0 0
    %245 = vmatmul.mubr.bf16.gmra.mrb[0].mxu0 %v201
    %v246 = vpop.f32.mrb[0].mxu0
    %v247 = vadd.f32 0.0, %v246
    %v248 = vpop.f32.mrb[0].mxu0
    %v249 = vpop.f32.mrb[0].mxu0
    %v250 = vadd.f32 0.0, %v249
    %v251 = vpop.f32.mrb[0].mxu0
    %252 = vmatprep.mubr.bf16.mxu0 0
    %253 = vmatmul.mubr.bf16.gmra.mrb[0].mxu0 %v204
    %v254 = vpop.f32.mrb[0].mxu0
    %v255 = vadd.f32 0.0, %v254
    %v256 = vpop.f32.mrb[0].mxu0
    %v257 = vpop.f32.mrb[0].mxu0
    %v258 = vadd.f32 0.0, %v257
    %v259 = vpop.f32.mrb[0].mxu0
    %260 = vmatprep.mubr.bf16.mxu0 0
    %261 = vmatmul.mubr.bf16.gmra.mrb[0].mxu0 %v207
    %v262 = vpop.f32.mrb[0].mxu0
    %v263 = vadd.f32 0.0, %v262
    %v264 = vpop.f32.mrb[0].mxu0
    %v265 = vpop.f32.mrb[0].mxu0
    %v266 = vadd.f32 0.0, %v265
    %v267 = vpop.f32.mrb[0].mxu0
    %268 = vmatprep.mubr.bf16.mxu0 0
    %269 = vmatmul.mubr.bf16.gmra.mrb[0].mxu0 %v210
    %v270 = vpop.f32.mrb[0].mxu0
    %v271 = vadd.f32 0.0, %v270
    %v272 = vpop.f32.mrb[0].mxu0
    %v273 = vpop.f32.mrb[0].mxu0
    %v274 = vpop.f32.mrb[0].mxu0
    %275 = vdwg.mxu0
    %v276 = vadd.f32 %v40, %v247
    %v277 = vadd.f32 %v40, %v250
    %v278 = vadd.f32 %v40, %v255
    %v279 = vadd.f32 %v40, %v258
    %v280 = vadd.f32 %v40, %v263
    %v281 = vadd.f32 %v40, %v266
    %v282 = vadd.f32 %v40, %v271
    %v283 = vld [vmem:[%s0 + $0x20] sm:$0xf]
    %v284 = vld [vmem:[%s0 + $0x24] sm:$0xf]
    %v285 = vld [vmem:[%s0 + $0x28] sm:$0xf]
    %v286 = vld [vmem:[%s0 + $0x2c] sm:$0xf]
    %v287 = vld [vmem:[%s0 + $0x30] sm:$0xf]
    %v288 = vld [vmem:[%s0 + $0x34] sm:$0xf]
    %v289 = vld [vmem:[%s0 + $0x38] sm:$0xf]
    %v290 = vld [vmem:[%s0 + $0x3c] sm:$0xf]
    %v299 = vunpack.c.l.b16 %v283
    %v300 = vunpack.c.l.b16 %v284
    %v301 = vunpack.c.l.b16 %v285
    %v302 = vunpack.c.l.b16 %v286
    %v303 = vunpack.c.l.b16 %v287
    %v304 = vunpack.c.l.b16 %v288
    %v305 = vunpack.c.l.b16 %v289
    %v306 = vunpack.c.l.b16 %v290
    %v307 = vpack.c.b16 %v300, %v299
    %v308 = vpack.c.b16 %v302, %v301
    %v309 = vpack.c.b16 %v304, %v303
    %v310 = vpack.c.b16 %v306, %v305
    %v312 = vsel %vm86, %v307, 0
    %v315 = vsel %vm86, %v308, 0
    %v318 = vsel %vm86, %v309, 0
    %v321 = vsel %vm86, %v310, 0
    %323 = vmatprep.subr.bf16.mxu0 0
    %324 = vmatpush1.bf16.msra.mxu0 %v83
    %325 = vmatprep.subr.bf16.mxu0 0
    %326 = vmatpush1.bf16.msra.mxu0 %v104
    %327 = vmatprep.subr.bf16.mxu0 0
    %328 = vmatpush1.bf16.msra.mxu0 0
    %329 = vmatprep.subr.bf16.mxu0 0
    %330 = vmatpush1.bf16.msra.mxu0 0
    %331 = vmatprep.subr.bf16.mxu0 0
    %332 = vmatpush1.bf16.msra.mxu0 0
    %333 = vmatprep.subr.bf16.mxu0 0
    %334 = vmatpush1.bf16.msra.mxu0 0
    %335 = vmatprep.subr.bf16.mxu0 0
    %336 = vmatpush1.bf16.msra.mxu0 0
    %337 = vmatprep.subr.bf16.mxu0 0
    %338 = vmatpush1.bf16.msra.mxu0 0
    %339 = vmatprep.subr.bf16.mxu0 0
    %340 = vmatpush1.bf16.msra.mxu0 0
    %341 = vmatprep.subr.bf16.mxu0 0
    %342 = vmatpush1.bf16.msra.mxu0 0
    %343 = vmatprep.subr.bf16.mxu0 0
    %344 = vmatpush1.bf16.msra.mxu0 0
    %345 = vmatprep.subr.bf16.mxu0 0
    %346 = vmatpush1.bf16.msra.mxu0 0
    %347 = vmatprep.subr.bf16.mxu0 0
    %348 = vmatpush1.bf16.msra.mxu0 0
    %349 = vmatprep.subr.bf16.mxu0 0
    %350 = vmatpush1.bf16.msra.mxu0 0
    %351 = vmatprep.subr.bf16.mxu0 0
    %352 = vmatpush1.bf16.msra.mxu0 0
    %353 = vmatprep.subr.bf16.mxu0 0
    %354 = vmatpush1.bf16.msra.mxu0 0
    %355 = vmatprep.mubr.bf16.mxu0 0
    %356 = vmatmul.mubr.bf16.gmra.mrb[0].mxu0 %v312
    %v357 = vpop.f32.mrb[0].mxu0
    %v358 = vadd.f32 %v53, %v357
    %v359 = vpop.f32.mrb[0].mxu0
    %v360 = vpop.f32.mrb[0].mxu0
    %v361 = vadd.f32 %v53, %v360
    %v362 = vpop.f32.mrb[0].mxu0
    %363 = vmatprep.mubr.bf16.mxu0 0
    %364 = vmatmul.mubr.bf16.gmra.mrb[0].mxu0 %v315
    %v365 = vpop.f32.mrb[0].mxu0
    %v366 = vadd.f32 %v53, %v365
    %v367 = vpop.f32.mrb[0].mxu0
    %v368 = vpop.f32.mrb[0].mxu0
    %v369 = vadd.f32 %v53, %v368
    %v370 = vpop.f32.mrb[0].mxu0
    %371 = vmatprep.mubr.bf16.mxu0 0
    %372 = vmatmul.mubr.bf16.gmra.mrb[0].mxu0 %v318
    %v373 = vpop.f32.mrb[0].mxu0
    %v374 = vadd.f32 %v53, %v373
    %v375 = vpop.f32.mrb[0].mxu0
    %v376 = vpop.f32.mrb[0].mxu0
    %v377 = vadd.f32 %v53, %v376
    %v378 = vpop.f32.mrb[0].mxu0
    %379 = vmatprep.mubr.bf16.mxu0 0
    %380 = vmatmul.mubr.bf16.gmra.mrb[0].mxu0 %v321
    %v381 = vpop.f32.mrb[0].mxu0
    %v382 = vadd.f32 %v53, %v381
    %v383 = vpop.f32.mrb[0].mxu0
    %v384 = vpop.f32.mrb[0].mxu0
    %v385 = vadd.f32 %v53, %v384
    %v386 = vpop.f32.mrb[0].mxu0
    %387 = vdwg.mxu0
    %v388 = vmax.f32 %v358, 0.0
    %v389 = vmax.f32 %v361, 0.0
    %v390 = vmax.f32 %v366, 0.0
    %v391 = vmax.f32 %v369, 0.0
    %v392 = vmax.f32 %v374, 0.0
    %v393 = vmax.f32 %v377, 0.0
    %v394 = vmax.f32 %v382, 0.0
    %v395 = vmax.f32 %v385, 0.0
    %v396 = vpack.c.bf16 %v389, %v388
    %v397 = vpack.c.bf16 %v391, %v390
    %v398 = vpack.c.bf16 %v393, %v392
    %v399 = vpack.c.bf16 %v395, %v394
    %s400 = scalar_lea.vmem %s3, 16
    %v401 = vld [vmem:[%s400] sm:$0xf]
    %v402 = vld [vmem:[%s400 + $0x4] sm:$0xf]
    %v403 = vld [vmem:[%s400 + $0x8] sm:$0xf]
    %v404 = vld [vmem:[%s400 + $0xc] sm:$0xf]
    %v409 = vunpack.c.l.b16 %v401
    %v410 = vunpack.c.l.b16 %v402
    %v411 = vunpack.c.l.b16 %v403
    %v412 = vunpack.c.l.b16 %v404
    %v413 = vpack.c.b16 %v410, %v409
    %v414 = vpack.c.b16 %v412, %v411
    %v418 = vsel %vm199, %v396, 0
    %v421 = vsel %vm199, %v397, 0
    %v424 = vsel %vm199, %v398, 0
    %v427 = vsel %vm199, %v399, 0
    %429 = vmatprep.subr.bf16.mxu0 0
    %430 = vmatpush1.bf16.msra.mxu0 %v413
    %431 = vmatprep.subr.bf16.mxu0 0
    %432 = vmatpush1.bf16.msra.mxu0 %v414
    %433 = vmatprep.subr.bf16.mxu0 0
    %434 = vmatpush1.bf16.msra.mxu0 0
    %435 = vmatprep.subr.bf16.mxu0 0
    %436 = vmatpush1.bf16.msra.mxu0 0
    %437 = vmatprep.subr.bf16.mxu0 0
    %438 = vmatpush1.bf16.msra.mxu0 0
    %439 = vmatprep.subr.bf16.mxu0 0
    %440 = vmatpush1.bf16.msra.mxu0 0
    %441 = vmatprep.subr.bf16.mxu0 0
    %442 = vmatpush1.bf16.msra.mxu0 0
    %443 = vmatprep.subr.bf16.mxu0 0
    %444 = vmatpush1.bf16.msra.mxu0 0
    %445 = vmatprep.subr.bf16.mxu0 0
    %446 = vmatpush1.bf16.msra.mxu0 0
    %447 = vmatprep.subr.bf16.mxu0 0
    %448 = vmatpush1.bf16.msra.mxu0 0
    %449 = vmatprep.subr.bf16.mxu0 0
    %450 = vmatpush1.bf16.msra.mxu0 0
    %451 = vmatprep.subr.bf16.mxu0 0
    %452 = vmatpush1.bf16.msra.mxu0 0
    %453 = vmatprep.subr.bf16.mxu0 0
    %454 = vmatpush1.bf16.msra.mxu0 0
    %455 = vmatprep.subr.bf16.mxu0 0
    %456 = vmatpush1.bf16.msra.mxu0 0
    %457 = vmatprep.subr.bf16.mxu0 0
    %458 = vmatpush1.bf16.msra.mxu0 0
    %459 = vmatprep.subr.bf16.mxu0 0
    %460 = vmatpush1.bf16.msra.mxu0 0
    %461 = vmatprep.mubr.bf16.mxu0 0
    %462 = vmatmul.mubr.bf16.gmra.mrb[0].mxu0 %v418
    %v463 = vpop.f32.mrb[0].mxu0
    %v464 = vadd.f32 0.0, %v463
    %v465 = vpop.f32.mrb[0].mxu0
    %v466 = vpop.f32.mrb[0].mxu0
    %v467 = vadd.f32 0.0, %v466
    %v468 = vpop.f32.mrb[0].mxu0
    %469 = vmatprep.mubr.bf16.mxu0 0
    %470 = vmatmul.mubr.bf16.gmra.mrb[0].mxu0 %v421
    %v471 = vpop.f32.mrb[0].mxu0
    %v472 = vadd.f32 0.0, %v471
    %v473 = vpop.f32.mrb[0].mxu0
    %v474 = vpop.f32.mrb[0].mxu0
    %v475 = vadd.f32 0.0, %v474
    %v476 = vpop.f32.mrb[0].mxu0
    %477 = vmatprep.mubr.bf16.mxu0 0
    %478 = vmatmul.mubr.bf16.gmra.mrb[0].mxu0 %v424
    %v479 = vpop.f32.mrb[0].mxu0
    %v480 = vadd.f32 0.0, %v479
    %v481 = vpop.f32.mrb[0].mxu0
    %v482 = vpop.f32.mrb[0].mxu0
    %v483 = vadd.f32 0.0, %v482
    %v484 = vpop.f32.mrb[0].mxu0
    %485 = vmatprep.mubr.bf16.mxu0 0
    %486 = vmatmul.mubr.bf16.gmra.mrb[0].mxu0 %v427
    %v487 = vpop.f32.mrb[0].mxu0
    %v488 = vadd.f32 0.0, %v487
    %v489 = vpop.f32.mrb[0].mxu0
    %v490 = vpop.f32.mrb[0].mxu0
    %v491 = vpop.f32.mrb[0].mxu0
    %492 = vdwg.mxu0
    %v493 = vadd.f32 %v276, %v464
    %v494 = vadd.f32 %v277, %v467
    %v495 = vadd.f32 %v278, %v472
    %v496 = vadd.f32 %v279, %v475
    %v497 = vadd.f32 %v280, %v480
    %v498 = vadd.f32 %v281, %v483
    %v499 = vadd.f32 %v282, %v488
    %v500 = vld [vmem:[%s0 + $0x40] sm:$0xf]
    %v501 = vld [vmem:[%s0 + $0x44] sm:$0xf]
    %v502 = vld [vmem:[%s0 + $0x48] sm:$0xf]
    %v503 = vld [vmem:[%s0 + $0x4c] sm:$0xf]
    %v504 = vld [vmem:[%s0 + $0x50] sm:$0xf]
    %v505 = vld [vmem:[%s0 + $0x54] sm:$0xf]
    %v506 = vld [vmem:[%s0 + $0x58] sm:$0xf]
    %v507 = vld [vmem:[%s0 + $0x5c] sm:$0xf]
    %v516 = vunpack.c.l.b16 %v500
    %v517 = vunpack.c.l.b16 %v501
    %v518 = vunpack.c.l.b16 %v502
    %v519 = vunpack.c.l.b16 %v503
    %v520 = vunpack.c.l.b16 %v504
    %v521 = vunpack.c.l.b16 %v505
    %v522 = vunpack.c.l.b16 %v506
    %v523 = vunpack.c.l.b16 %v507
    %v524 = vpack.c.b16 %v517, %v516
    %v525 = vpack.c.b16 %v519, %v518
    %v526 = vpack.c.b16 %v521, %v520
    %v527 = vpack.c.b16 %v523, %v522
    %v529 = vsel %vm86, %v524, 0
    %v532 = vsel %vm86, %v525, 0
    %v535 = vsel %vm86, %v526, 0
    %v538 = vsel %vm86, %v527, 0
    %540 = vmatprep.subr.bf16.mxu0 0
    %541 = vmatpush1.bf16.msra.mxu0 %v83
    %542 = vmatprep.subr.bf16.mxu0 0
    %543 = vmatpush1.bf16.msra.mxu0 %v104
    %544 = vmatprep.subr.bf16.mxu0 0
    %545 = vmatpush1.bf16.msra.mxu0 0
    %546 = vmatprep.subr.bf16.mxu0 0
    %547 = vmatpush1.bf16.msra.mxu0 0
    %548 = vmatprep.subr.bf16.mxu0 0
    %549 = vmatpush1.bf16.msra.mxu0 0
    %550 = vmatprep.subr.bf16.mxu0 0
    %551 = vmatpush1.bf16.msra.mxu0 0
    %552 = vmatprep.subr.bf16.mxu0 0
    %553 = vmatpush1.bf16.msra.mxu0 0
    %554 = vmatprep.subr.bf16.mxu0 0
    %555 = vmatpush1.bf16.msra.mxu0 0
    %556 = vmatprep.subr.bf16.mxu0 0
    %557 = vmatpush1.bf16.msra.mxu0 0
    %558 = vmatprep.subr.bf16.mxu0 0
    %559 = vmatpush1.bf16.msra.mxu0 0
    %560 = vmatprep.subr.bf16.mxu0 0
    %561 = vmatpush1.bf16.msra.mxu0 0
    %562 = vmatprep.subr.bf16.mxu0 0
    %563 = vmatpush1.bf16.msra.mxu0 0
    %564 = vmatprep.subr.bf16.mxu0 0
    %565 = vmatpush1.bf16.msra.mxu0 0
    %566 = vmatprep.subr.bf16.mxu0 0
    %567 = vmatpush1.bf16.msra.mxu0 0
    %568 = vmatprep.subr.bf16.mxu0 0
    %569 = vmatpush1.bf16.msra.mxu0 0
    %570 = vmatprep.subr.bf16.mxu0 0
    %571 = vmatpush1.bf16.msra.mxu0 0
    %572 = vmatprep.mubr.bf16.mxu0 0
    %573 = vmatmul.mubr.bf16.gmra.mrb[0].mxu0 %v529
    %v574 = vpop.f32.mrb[0].mxu0
    %v575 = vadd.f32 %v53, %v574
    %v576 = vpop.f32.mrb[0].mxu0
    %v577 = vpop.f32.mrb[0].mxu0
    %v578 = vadd.f32 %v53, %v577
    %v579 = vpop.f32.mrb[0].mxu0
    %580 = vmatprep.mubr.bf16.mxu0 0
    %581 = vmatmul.mubr.bf16.gmra.mrb[0].mxu0 %v532
    %v582 = vpop.f32.mrb[0].mxu0
    %v583 = vadd.f32 %v53, %v582
    %v584 = vpop.f32.mrb[0].mxu0
    %v585 = vpop.f32.mrb[0].mxu0
    %v586 = vadd.f32 %v53, %v585
    %v587 = vpop.f32.mrb[0].mxu0
    %588 = vmatprep.mubr.bf16.mxu0 0
    %589 = vmatmul.mubr.bf16.gmra.mrb[0].mxu0 %v535
    %v590 = vpop.f32.mrb[0].mxu0
    %v591 = vadd.f32 %v53, %v590
    %v592 = vpop.f32.mrb[0].mxu0
    %v593 = vpop.f32.mrb[0].mxu0
    %v594 = vadd.f32 %v53, %v593
    %v595 = vpop.f32.mrb[0].mxu0
    %596 = vmatprep.mubr.bf16.mxu0 0
    %597 = vmatmul.mubr.bf16.gmra.mrb[0].mxu0 %v538
    %v598 = vpop.f32.mrb[0].mxu0
    %v599 = vadd.f32 %v53, %v598
    %v600 = vpop.f32.mrb[0].mxu0
    %v601 = vpop.f32.mrb[0].mxu0
    %v602 = vadd.f32 %v53, %v601
    %v603 = vpop.f32.mrb[0].mxu0
    %604 = vdwg.mxu0
    %v605 = vmax.f32 %v575, 0.0
    %v606 = vmax.f32 %v578, 0.0
    %v607 = vmax.f32 %v583, 0.0
    %v608 = vmax.f32 %v586, 0.0
    %v609 = vmax.f32 %v591, 0.0
    %v610 = vmax.f32 %v594, 0.0
    %v611 = vmax.f32 %v599, 0.0
    %v612 = vmax.f32 %v602, 0.0
    %v613 = vpack.c.bf16 %v606, %v605
    %v614 = vpack.c.bf16 %v608, %v607
    %v615 = vpack.c.bf16 %v610, %v609
    %v616 = vpack.c.bf16 %v612, %v611
    %s617 = scalar_lea.vmem %s3, 32
    %v618 = vld [vmem:[%s617] sm:$0xf]
    %v619 = vld [vmem:[%s617 + $0x4] sm:$0xf]
    %v620 = vld [vmem:[%s617 + $0x8] sm:$0xf]
    %v621 = vld [vmem:[%s617 + $0xc] sm:$0xf]
    %v626 = vunpack.c.l.b16 %v618
    %v627 = vunpack.c.l.b16 %v619
    %v628 = vunpack.c.l.b16 %v620
    %v629 = vunpack.c.l.b16 %v621
    %v630 = vpack.c.b16 %v627, %v626
    %v631 = vpack.c.b16 %v629, %v628
    %v635 = vsel %vm199, %v613, 0
    %v638 = vsel %vm199, %v614, 0
    %v641 = vsel %vm199, %v615, 0
    %v644 = vsel %vm199, %v616, 0
    %646 = vmatprep.subr.bf16.mxu0 0
    %647 = vmatpush1.bf16.msra.mxu0 %v630
    %648 = vmatprep.subr.bf16.mxu0 0
    %649 = vmatpush1.bf16.msra.mxu0 %v631
    %650 = vmatprep.subr.bf16.mxu0 0
    %651 = vmatpush1.bf16.msra.mxu0 0
    %652 = vmatprep.subr.bf16.mxu0 0
    %653 = vmatpush1.bf16.msra.mxu0 0
    %654 = vmatprep.subr.bf16.mxu0 0
    %655 = vmatpush1.bf16.msra.mxu0 0
    %656 = vmatprep.subr.bf16.mxu0 0
    %657 = vmatpush1.bf16.msra.mxu0 0
    %658 = vmatprep.subr.bf16.mxu0 0
    %659 = vmatpush1.bf16.msra.mxu0 0
    %660 = vmatprep.subr.bf16.mxu0 0
    %661 = vmatpush1.bf16.msra.mxu0 0
    %662 = vmatprep.subr.bf16.mxu0 0
    %663 = vmatpush1.bf16.msra.mxu0 0
    %664 = vmatprep.subr.bf16.mxu0 0
    %665 = vmatpush1.bf16.msra.mxu0 0
    %666 = vmatprep.subr.bf16.mxu0 0
    %667 = vmatpush1.bf16.msra.mxu0 0
    %668 = vmatprep.subr.bf16.mxu0 0
    %669 = vmatpush1.bf16.msra.mxu0 0
    %670 = vmatprep.subr.bf16.mxu0 0
    %671 = vmatpush1.bf16.msra.mxu0 0
    %672 = vmatprep.subr.bf16.mxu0 0
    %673 = vmatpush1.bf16.msra.mxu0 0
    %674 = vmatprep.subr.bf16.mxu0 0
    %675 = vmatpush1.bf16.msra.mxu0 0
    %676 = vmatprep.subr.bf16.mxu0 0
    %677 = vmatpush1.bf16.msra.mxu0 0
    %678 = vmatprep.mubr.bf16.mxu0 0
    %679 = vmatmul.mubr.bf16.gmra.mrb[0].mxu0 %v635
    %v680 = vpop.f32.mrb[0].mxu0
    %v681 = vadd.f32 0.0, %v680
    %v682 = vpop.f32.mrb[0].mxu0
    %v683 = vpop.f32.mrb[0].mxu0
    %v684 = vadd.f32 0.0, %v683
    %v685 = vpop.f32.mrb[0].mxu0
    %686 = vmatprep.mubr.bf16.mxu0 0
    %687 = vmatmul.mubr.bf16.gmra.mrb[0].mxu0 %v638
    %v688 = vpop.f32.mrb[0].mxu0
    %v689 = vadd.f32 0.0, %v688
    %v690 = vpop.f32.mrb[0].mxu0
    %v691 = vpop.f32.mrb[0].mxu0
    %v692 = vadd.f32 0.0, %v691
    %v693 = vpop.f32.mrb[0].mxu0
    %694 = vmatprep.mubr.bf16.mxu0 0
    %695 = vmatmul.mubr.bf16.gmra.mrb[0].mxu0 %v641
    %v696 = vpop.f32.mrb[0].mxu0
    %v697 = vadd.f32 0.0, %v696
    %v698 = vpop.f32.mrb[0].mxu0
    %v699 = vpop.f32.mrb[0].mxu0
    %v700 = vadd.f32 0.0, %v699
    %v701 = vpop.f32.mrb[0].mxu0
    %702 = vmatprep.mubr.bf16.mxu0 0
    %703 = vmatmul.mubr.bf16.gmra.mrb[0].mxu0 %v644
    %v704 = vpop.f32.mrb[0].mxu0
    %v705 = vadd.f32 0.0, %v704
    %v706 = vpop.f32.mrb[0].mxu0
    %v707 = vpop.f32.mrb[0].mxu0
    %v708 = vpop.f32.mrb[0].mxu0
    %709 = vdwg.mxu0
    %v710 = vadd.f32 %v493, %v681
    %v711 = vadd.f32 %v494, %v684
    %v712 = vadd.f32 %v495, %v689
    %v713 = vadd.f32 %v496, %v692
    %v714 = vadd.f32 %v497, %v697
    %v715 = vadd.f32 %v498, %v700
    %v716 = vadd.f32 %v499, %v705
    %v717 = vld [vmem:[%s0 + $0x60] sm:$0xf]
    %v718 = vld [vmem:[%s0 + $0x64] sm:$0xf]
    %v719 = vld [vmem:[%s0 + $0x68] sm:$0xf]
    %v720 = vld [vmem:[%s0 + $0x6c] sm:$0xf]
    %v721 = vld [vmem:[%s0 + $0x70] sm:$0xf]
    %v722 = vld [vmem:[%s0 + $0x74] sm:$0xf]
    %v723 = vld [vmem:[%s0 + $0x78] sm:$0xf]
    %v724 = vld [vmem:[%s0 + $0x7c] sm:$0xf]
    %v733 = vunpack.c.l.b16 %v717
    %v734 = vunpack.c.l.b16 %v718
    %v735 = vunpack.c.l.b16 %v719
    %v736 = vunpack.c.l.b16 %v720
    %v737 = vunpack.c.l.b16 %v721
    %v738 = vunpack.c.l.b16 %v722
    %v739 = vunpack.c.l.b16 %v723
    %v740 = vunpack.c.l.b16 %v724
    %v741 = vpack.c.b16 %v734, %v733
    %v742 = vpack.c.b16 %v736, %v735
    %v743 = vpack.c.b16 %v738, %v737
    %v744 = vpack.c.b16 %v740, %v739
    %v746 = vsel %vm86, %v741, 0
    %v749 = vsel %vm86, %v742, 0
    %v752 = vsel %vm86, %v743, 0
    %v755 = vsel %vm86, %v744, 0
    %757 = vmatprep.subr.bf16.mxu0 0
    %758 = vmatpush1.bf16.msra.mxu0 %v83
    %759 = vmatprep.subr.bf16.mxu0 0
    %760 = vmatpush1.bf16.msra.mxu0 %v104
    %761 = vmatprep.subr.bf16.mxu0 0
    %762 = vmatpush1.bf16.msra.mxu0 0
    %763 = vmatprep.subr.bf16.mxu0 0
    %764 = vmatpush1.bf16.msra.mxu0 0
    %765 = vmatprep.subr.bf16.mxu0 0
    %766 = vmatpush1.bf16.msra.mxu0 0
    %767 = vmatprep.subr.bf16.mxu0 0
    %768 = vmatpush1.bf16.msra.mxu0 0
    %769 = vmatprep.subr.bf16.mxu0 0
    %770 = vmatpush1.bf16.msra.mxu0 0
    %771 = vmatprep.subr.bf16.mxu0 0
    %772 = vmatpush1.bf16.msra.mxu0 0
    %773 = vmatprep.subr.bf16.mxu0 0
    %774 = vmatpush1.bf16.msra.mxu0 0
    %775 = vmatprep.subr.bf16.mxu0 0
    %776 = vmatpush1.bf16.msra.mxu0 0
    %777 = vmatprep.subr.bf16.mxu0 0
    %778 = vmatpush1.bf16.msra.mxu0 0
    %779 = vmatprep.subr.bf16.mxu0 0
    %780 = vmatpush1.bf16.msra.mxu0 0
    %781 = vmatprep.subr.bf16.mxu0 0
    %782 = vmatpush1.bf16.msra.mxu0 0
    %783 = vmatprep.subr.bf16.mxu0 0
    %784 = vmatpush1.bf16.msra.mxu0 0
    %785 = vmatprep.subr.bf16.mxu0 0
    %786 = vmatpush1.bf16.msra.mxu0 0
    %787 = vmatprep.subr.bf16.mxu0 0
    %788 = vmatpush1.bf16.msra.mxu0 0
    %789 = vmatprep.mubr.bf16.mxu0 0
    %790 = vmatmul.mubr.bf16.gmra.mrb[0].mxu0 %v746
    %v791 = vpop.f32.mrb[0].mxu0
    %v792 = vadd.f32 %v53, %v791
    %v793 = vpop.f32.mrb[0].mxu0
    %v794 = vpop.f32.mrb[0].mxu0
    %v795 = vadd.f32 %v53, %v794
    %v796 = vpop.f32.mrb[0].mxu0
    %797 = vmatprep.mubr.bf16.mxu0 0
    %798 = vmatmul.mubr.bf16.gmra.mrb[0].mxu0 %v749
    %v799 = vpop.f32.mrb[0].mxu0
    %v800 = vadd.f32 %v53, %v799
    %v801 = vpop.f32.mrb[0].mxu0
    %v802 = vpop.f32.mrb[0].mxu0
    %v803 = vadd.f32 %v53, %v802
    %v804 = vpop.f32.mrb[0].mxu0
    %805 = vmatprep.mubr.bf16.mxu0 0
    %806 = vmatmul.mubr.bf16.gmra.mrb[0].mxu0 %v752
    %v807 = vpop.f32.mrb[0].mxu0
    %v808 = vadd.f32 %v53, %v807
    %v809 = vpop.f32.mrb[0].mxu0
    %v810 = vpop.f32.mrb[0].mxu0
    %v811 = vadd.f32 %v53, %v810
    %v812 = vpop.f32.mrb[0].mxu0
    %813 = vmatprep.mubr.bf16.mxu0 0
    %814 = vmatmul.mubr.bf16.gmra.mrb[0].mxu0 %v755
    %v815 = vpop.f32.mrb[0].mxu0
    %v816 = vadd.f32 %v53, %v815
    %v817 = vpop.f32.mrb[0].mxu0
    %v818 = vpop.f32.mrb[0].mxu0
    %v819 = vadd.f32 %v53, %v818
    %v820 = vpop.f32.mrb[0].mxu0
    %821 = vdwg.mxu0
    %v822 = vmax.f32 %v792, 0.0
    %v823 = vmax.f32 %v795, 0.0
    %v824 = vmax.f32 %v800, 0.0
    %v825 = vmax.f32 %v803, 0.0
    %v826 = vmax.f32 %v808, 0.0
    %v827 = vmax.f32 %v811, 0.0
    %v828 = vmax.f32 %v816, 0.0
    %v829 = vmax.f32 %v819, 0.0
    %v830 = vpack.c.bf16 %v823, %v822
    %v831 = vpack.c.bf16 %v825, %v824
    %v832 = vpack.c.bf16 %v827, %v826
    %v833 = vpack.c.bf16 %v829, %v828
    %s834 = scalar_lea.vmem %s3, 48
    %v835 = vld [vmem:[%s834] sm:$0xf]
    %v836 = vld [vmem:[%s834 + $0x4] sm:$0xf]
    %v837 = vld [vmem:[%s834 + $0x8] sm:$0xf]
    %v838 = vld [vmem:[%s834 + $0xc] sm:$0xf]
    %v843 = vunpack.c.l.b16 %v835
    %v844 = vunpack.c.l.b16 %v836
    %v845 = vunpack.c.l.b16 %v837
    %v846 = vunpack.c.l.b16 %v838
    %v847 = vpack.c.b16 %v844, %v843
    %v848 = vpack.c.b16 %v846, %v845
    %v852 = vsel %vm199, %v830, 0
    %v855 = vsel %vm199, %v831, 0
    %v858 = vsel %vm199, %v832, 0
    %v861 = vsel %vm199, %v833, 0
    %863 = vmatprep.subr.bf16.mxu0 0
    %864 = vmatpush1.bf16.msra.mxu0 %v847
    %865 = vmatprep.subr.bf16.mxu0 0
    %866 = vmatpush1.bf16.msra.mxu0 %v848
    %867 = vmatprep.subr.bf16.mxu0 0
    %868 = vmatpush1.bf16.msra.mxu0 0
    %869 = vmatprep.subr.bf16.mxu0 0
    %870 = vmatpush1.bf16.msra.mxu0 0
    %871 = vmatprep.subr.bf16.mxu0 0
    %872 = vmatpush1.bf16.msra.mxu0 0
    %873 = vmatprep.subr.bf16.mxu0 0
    %874 = vmatpush1.bf16.msra.mxu0 0
    %875 = vmatprep.subr.bf16.mxu0 0
    %876 = vmatpush1.bf16.msra.mxu0 0
    %877 = vmatprep.subr.bf16.mxu0 0
    %878 = vmatpush1.bf16.msra.mxu0 0
    %879 = vmatprep.subr.bf16.mxu0 0
    %880 = vmatpush1.bf16.msra.mxu0 0
    %881 = vmatprep.subr.bf16.mxu0 0
    %882 = vmatpush1.bf16.msra.mxu0 0
    %883 = vmatprep.subr.bf16.mxu0 0
    %884 = vmatpush1.bf16.msra.mxu0 0
    %885 = vmatprep.subr.bf16.mxu0 0
    %886 = vmatpush1.bf16.msra.mxu0 0
    %887 = vmatprep.subr.bf16.mxu0 0
    %888 = vmatpush1.bf16.msra.mxu0 0
    %889 = vmatprep.subr.bf16.mxu0 0
    %890 = vmatpush1.bf16.msra.mxu0 0
    %891 = vmatprep.subr.bf16.mxu0 0
    %892 = vmatpush1.bf16.msra.mxu0 0
    %893 = vmatprep.subr.bf16.mxu0 0
    %894 = vmatpush1.bf16.msra.mxu0 0
    %895 = vmatprep.mubr.bf16.mxu0 0
    %896 = vmatmul.mubr.bf16.gmra.mrb[0].mxu0 %v852
    %v897 = vpop.f32.mrb[0].mxu0
    %v898 = vadd.f32 0.0, %v897
    %v899 = vpop.f32.mrb[0].mxu0
    %v900 = vpop.f32.mrb[0].mxu0
    %v901 = vadd.f32 0.0, %v900
    %v902 = vpop.f32.mrb[0].mxu0
    %903 = vmatprep.mubr.bf16.mxu0 0
    %904 = vmatmul.mubr.bf16.gmra.mrb[0].mxu0 %v855
    %v905 = vpop.f32.mrb[0].mxu0
    %v906 = vadd.f32 0.0, %v905
    %v907 = vpop.f32.mrb[0].mxu0
    %v908 = vpop.f32.mrb[0].mxu0
    %v909 = vadd.f32 0.0, %v908
    %v910 = vpop.f32.mrb[0].mxu0
    %911 = vmatprep.mubr.bf16.mxu0 0
    %912 = vmatmul.mubr.bf16.gmra.mrb[0].mxu0 %v858
    %v913 = vpop.f32.mrb[0].mxu0
    %v914 = vadd.f32 0.0, %v913
    %v915 = vpop.f32.mrb[0].mxu0
    %v916 = vpop.f32.mrb[0].mxu0
    %v917 = vadd.f32 0.0, %v916
    %v918 = vpop.f32.mrb[0].mxu0
    %919 = vmatprep.mubr.bf16.mxu0 0
    %920 = vmatmul.mubr.bf16.gmra.mrb[0].mxu0 %v861
    %v921 = vpop.f32.mrb[0].mxu0
    %v922 = vadd.f32 0.0, %v921
    %v923 = vpop.f32.mrb[0].mxu0
    %v924 = vpop.f32.mrb[0].mxu0
    %v925 = vpop.f32.mrb[0].mxu0
    %926 = vdwg.mxu0
    %v927 = vadd.f32 %v710, %v898
    %v928 = vadd.f32 %v711, %v901
    %v929 = vadd.f32 %v712, %v906
    %v930 = vadd.f32 %v713, %v909
    %v931 = vadd.f32 %v714, %v914
    %v932 = vadd.f32 %v715, %v917
    %v933 = vadd.f32 %v716, %v922
    %v934 = vld [vmem:[%s0 + $0x80] sm:$0xf]
    %v935 = vld [vmem:[%s0 + $0x84] sm:$0xf]
    %v936 = vld [vmem:[%s0 + $0x88] sm:$0xf]
    %v937 = vld [vmem:[%s0 + $0x8c] sm:$0xf]
    %v938 = vld [vmem:[%s0 + $0x90] sm:$0xf]
    %v939 = vld [vmem:[%s0 + $0x94] sm:$0xf]
    %v940 = vld [vmem:[%s0 + $0x98] sm:$0xf]
    %v941 = vld [vmem:[%s0 + $0x9c] sm:$0xf]
    %v950 = vunpack.c.l.b16 %v934
    %v951 = vunpack.c.l.b16 %v935
    %v952 = vunpack.c.l.b16 %v936
    %v953 = vunpack.c.l.b16 %v937
    %v954 = vunpack.c.l.b16 %v938
    %v955 = vunpack.c.l.b16 %v939
    %v956 = vunpack.c.l.b16 %v940
    %v957 = vunpack.c.l.b16 %v941
    %v958 = vpack.c.b16 %v951, %v950
    %v959 = vpack.c.b16 %v953, %v952
    %v960 = vpack.c.b16 %v955, %v954
    %v961 = vpack.c.b16 %v957, %v956
    %v963 = vsel %vm86, %v958, 0
    %v966 = vsel %vm86, %v959, 0
    %v969 = vsel %vm86, %v960, 0
    %v972 = vsel %vm86, %v961, 0
    %974 = vmatprep.subr.bf16.mxu0 0
    %975 = vmatpush1.bf16.msra.mxu0 %v83
    %976 = vmatprep.subr.bf16.mxu0 0
    %977 = vmatpush1.bf16.msra.mxu0 %v104
    %978 = vmatprep.subr.bf16.mxu0 0
    %979 = vmatpush1.bf16.msra.mxu0 0
    %980 = vmatprep.subr.bf16.mxu0 0
    %981 = vmatpush1.bf16.msra.mxu0 0
    %982 = vmatprep.subr.bf16.mxu0 0
    %983 = vmatpush1.bf16.msra.mxu0 0
    %984 = vmatprep.subr.bf16.mxu0 0
    %985 = vmatpush1.bf16.msra.mxu0 0
    %986 = vmatprep.subr.bf16.mxu0 0
    %987 = vmatpush1.bf16.msra.mxu0 0
    %988 = vmatprep.subr.bf16.mxu0 0
    %989 = vmatpush1.bf16.msra.mxu0 0
    %990 = vmatprep.subr.bf16.mxu0 0
    %991 = vmatpush1.bf16.msra.mxu0 0
    %992 = vmatprep.subr.bf16.mxu0 0
    %993 = vmatpush1.bf16.msra.mxu0 0
    %994 = vmatprep.subr.bf16.mxu0 0
    %995 = vmatpush1.bf16.msra.mxu0 0
    %996 = vmatprep.subr.bf16.mxu0 0
    %997 = vmatpush1.bf16.msra.mxu0 0
    %998 = vmatprep.subr.bf16.mxu0 0
    %999 = vmatpush1.bf16.msra.mxu0 0
    %1000 = vmatprep.subr.bf16.mxu0 0
    %1001 = vmatpush1.bf16.msra.mxu0 0
    %1002 = vmatprep.subr.bf16.mxu0 0
    %1003 = vmatpush1.bf16.msra.mxu0 0
    %1004 = vmatprep.subr.bf16.mxu0 0
    %1005 = vmatpush1.bf16.msra.mxu0 0
    %1006 = vmatprep.mubr.bf16.mxu0 0
    %1007 = vmatmul.mubr.bf16.gmra.mrb[0].mxu0 %v963
    %v1008 = vpop.f32.mrb[0].mxu0
    %v1009 = vadd.f32 %v53, %v1008
    %v1010 = vpop.f32.mrb[0].mxu0
    %v1011 = vpop.f32.mrb[0].mxu0
    %v1012 = vadd.f32 %v53, %v1011
    %v1013 = vpop.f32.mrb[0].mxu0
    %1014 = vmatprep.mubr.bf16.mxu0 0
    %1015 = vmatmul.mubr.bf16.gmra.mrb[0].mxu0 %v966
    %v1016 = vpop.f32.mrb[0].mxu0
    %v1017 = vadd.f32 %v53, %v1016
    %v1018 = vpop.f32.mrb[0].mxu0
    %v1019 = vpop.f32.mrb[0].mxu0
    %v1020 = vadd.f32 %v53, %v1019
    %v1021 = vpop.f32.mrb[0].mxu0
    %1022 = vmatprep.mubr.bf16.mxu0 0
    %1023 = vmatmul.mubr.bf16.gmra.mrb[0].mxu0 %v969
    %v1024 = vpop.f32.mrb[0].mxu0
    %v1025 = vadd.f32 %v53, %v1024
    %v1026 = vpop.f32.mrb[0].mxu0
    %v1027 = vpop.f32.mrb[0].mxu0
    %v1028 = vadd.f32 %v53, %v1027
    %v1029 = vpop.f32.mrb[0].mxu0
    %1030 = vmatprep.mubr.bf16.mxu0 0
    %1031 = vmatmul.mubr.bf16.gmra.mrb[0].mxu0 %v972
    %v1032 = vpop.f32.mrb[0].mxu0
    %v1033 = vadd.f32 %v53, %v1032
    %v1034 = vpop.f32.mrb[0].mxu0
    %v1035 = vpop.f32.mrb[0].mxu0
    %v1036 = vadd.f32 %v53, %v1035
    %v1037 = vpop.f32.mrb[0].mxu0
    %1038 = vdwg.mxu0
    %v1039 = vmax.f32 %v1009, 0.0
    %v1040 = vmax.f32 %v1012, 0.0
    %v1041 = vmax.f32 %v1017, 0.0
    %v1042 = vmax.f32 %v1020, 0.0
    %v1043 = vmax.f32 %v1025, 0.0
    %v1044 = vmax.f32 %v1028, 0.0
    %v1045 = vmax.f32 %v1033, 0.0
    %v1046 = vmax.f32 %v1036, 0.0
    %v1047 = vpack.c.bf16 %v1040, %v1039
    %v1048 = vpack.c.bf16 %v1042, %v1041
    %v1049 = vpack.c.bf16 %v1044, %v1043
    %v1050 = vpack.c.bf16 %v1046, %v1045
    %s1051 = scalar_lea.vmem %s3, 64
    %v1052 = vld [vmem:[%s1051] sm:$0xf]
    %v1053 = vld [vmem:[%s1051 + $0x4] sm:$0xf]
    %v1054 = vld [vmem:[%s1051 + $0x8] sm:$0xf]
    %v1055 = vld [vmem:[%s1051 + $0xc] sm:$0xf]
    %v1060 = vunpack.c.l.b16 %v1052
    %v1061 = vunpack.c.l.b16 %v1053
    %v1062 = vunpack.c.l.b16 %v1054
    %v1063 = vunpack.c.l.b16 %v1055
    %v1064 = vpack.c.b16 %v1061, %v1060
    %v1065 = vpack.c.b16 %v1063, %v1062
    %v1069 = vsel %vm199, %v1047, 0
    %v1072 = vsel %vm199, %v1048, 0
    %v1075 = vsel %vm199, %v1049, 0
    %v1078 = vsel %vm199, %v1050, 0
    %1080 = vmatprep.subr.bf16.mxu0 0
    %1081 = vmatpush1.bf16.msra.mxu0 %v1064
    %1082 = vmatprep.subr.bf16.mxu0 0
    %1083 = vmatpush1.bf16.msra.mxu0 %v1065
    %1084 = vmatprep.subr.bf16.mxu0 0
    %1085 = vmatpush1.bf16.msra.mxu0 0
    %1086 = vmatprep.subr.bf16.mxu0 0
    %1087 = vmatpush1.bf16.msra.mxu0 0
    %1088 = vmatprep.subr.bf16.mxu0 0
    %1089 = vmatpush1.bf16.msra.mxu0 0
    %1090 = vmatprep.subr.bf16.mxu0 0
    %1091 = vmatpush1.bf16.msra.mxu0 0
    %1092 = vmatprep.subr.bf16.mxu0 0
    %1093 = vmatpush1.bf16.msra.mxu0 0
    %1094 = vmatprep.subr.bf16.mxu0 0
    %1095 = vmatpush1.bf16.msra.mxu0 0
    %1096 = vmatprep.subr.bf16.mxu0 0
    %1097 = vmatpush1.bf16.msra.mxu0 0
    %1098 = vmatprep.subr.bf16.mxu0 0
    %1099 = vmatpush1.bf16.msra.mxu0 0
    %1100 = vmatprep.subr.bf16.mxu0 0
    %1101 = vmatpush1.bf16.msra.mxu0 0
    %1102 = vmatprep.subr.bf16.mxu0 0
    %1103 = vmatpush1.bf16.msra.mxu0 0
    %1104 = vmatprep.subr.bf16.mxu0 0
    %1105 = vmatpush1.bf16.msra.mxu0 0
    %1106 = vmatprep.subr.bf16.mxu0 0
    %1107 = vmatpush1.bf16.msra.mxu0 0
    %1108 = vmatprep.subr.bf16.mxu0 0
    %1109 = vmatpush1.bf16.msra.mxu0 0
    %1110 = vmatprep.subr.bf16.mxu0 0
    %1111 = vmatpush1.bf16.msra.mxu0 0
    %1112 = vmatprep.mubr.bf16.mxu0 0
    %1113 = vmatmul.mubr.bf16.gmra.mrb[0].mxu0 %v1069
    %v1114 = vpop.f32.mrb[0].mxu0
    %v1115 = vadd.f32 0.0, %v1114
    %v1116 = vpop.f32.mrb[0].mxu0
    %v1117 = vpop.f32.mrb[0].mxu0
    %v1118 = vadd.f32 0.0, %v1117
    %v1119 = vpop.f32.mrb[0].mxu0
    %1120 = vmatprep.mubr.bf16.mxu0 0
    %1121 = vmatmul.mubr.bf16.gmra.mrb[0].mxu0 %v1072
    %v1122 = vpop.f32.mrb[0].mxu0
    %v1123 = vadd.f32 0.0, %v1122
    %v1124 = vpop.f32.mrb[0].mxu0
    %v1125 = vpop.f32.mrb[0].mxu0
    %v1126 = vadd.f32 0.0, %v1125
    %v1127 = vpop.f32.mrb[0].mxu0
    %1128 = vmatprep.mubr.bf16.mxu0 0
    %1129 = vmatmul.mubr.bf16.gmra.mrb[0].mxu0 %v1075
    %v1130 = vpop.f32.mrb[0].mxu0
    %v1131 = vadd.f32 0.0, %v1130
    %v1132 = vpop.f32.mrb[0].mxu0
    %v1133 = vpop.f32.mrb[0].mxu0
    %v1134 = vadd.f32 0.0, %v1133
    %v1135 = vpop.f32.mrb[0].mxu0
    %1136 = vmatprep.mubr.bf16.mxu0 0
    %1137 = vmatmul.mubr.bf16.gmra.mrb[0].mxu0 %v1078
    %v1138 = vpop.f32.mrb[0].mxu0
    %v1139 = vadd.f32 0.0, %v1138
    %v1140 = vpop.f32.mrb[0].mxu0
    %v1141 = vpop.f32.mrb[0].mxu0
    %v1142 = vpop.f32.mrb[0].mxu0
    %1143 = vdwg.mxu0
    %v1144 = vadd.f32 %v927, %v1115
    %v1145 = vadd.f32 %v928, %v1118
    %v1146 = vadd.f32 %v929, %v1123
    %v1147 = vadd.f32 %v930, %v1126
    %v1148 = vadd.f32 %v931, %v1131
    %v1149 = vadd.f32 %v932, %v1134
    %v1150 = vadd.f32 %v933, %v1139
    %v1151 = vld [vmem:[%s0 + $0xa0] sm:$0xf]
    %v1152 = vld [vmem:[%s0 + $0xa4] sm:$0xf]
    %v1153 = vld [vmem:[%s0 + $0xa8] sm:$0xf]
    %v1154 = vld [vmem:[%s0 + $0xac] sm:$0xf]
    %v1155 = vld [vmem:[%s0 + $0xb0] sm:$0xf]
    %v1156 = vld [vmem:[%s0 + $0xb4] sm:$0xf]
    %v1157 = vld [vmem:[%s0 + $0xb8] sm:$0xf]
    %v1158 = vld [vmem:[%s0 + $0xbc] sm:$0xf]
    %v1167 = vunpack.c.l.b16 %v1151
    %v1168 = vunpack.c.l.b16 %v1152
    %v1169 = vunpack.c.l.b16 %v1153
    %v1170 = vunpack.c.l.b16 %v1154
    %v1171 = vunpack.c.l.b16 %v1155
    %v1172 = vunpack.c.l.b16 %v1156
    %v1173 = vunpack.c.l.b16 %v1157
    %v1174 = vunpack.c.l.b16 %v1158
    %v1175 = vpack.c.b16 %v1168, %v1167
    %v1176 = vpack.c.b16 %v1170, %v1169
    %v1177 = vpack.c.b16 %v1172, %v1171
    %v1178 = vpack.c.b16 %v1174, %v1173
    %v1180 = vsel %vm86, %v1175, 0
    %v1183 = vsel %vm86, %v1176, 0
    %v1186 = vsel %vm86, %v1177, 0
    %v1189 = vsel %vm86, %v1178, 0
    %1191 = vmatprep.subr.bf16.mxu0 0
    %1192 = vmatpush1.bf16.msra.mxu0 %v83
    %1193 = vmatprep.subr.bf16.mxu0 0
    %1194 = vmatpush1.bf16.msra.mxu0 %v104
    %1195 = vmatprep.subr.bf16.mxu0 0
    %1196 = vmatpush1.bf16.msra.mxu0 0
    %1197 = vmatprep.subr.bf16.mxu0 0
    %1198 = vmatpush1.bf16.msra.mxu0 0
    %1199 = vmatprep.subr.bf16.mxu0 0
    %1200 = vmatpush1.bf16.msra.mxu0 0
    %1201 = vmatprep.subr.bf16.mxu0 0
    %1202 = vmatpush1.bf16.msra.mxu0 0
    %1203 = vmatprep.subr.bf16.mxu0 0
    %1204 = vmatpush1.bf16.msra.mxu0 0
    %1205 = vmatprep.subr.bf16.mxu0 0
    %1206 = vmatpush1.bf16.msra.mxu0 0
    %1207 = vmatprep.subr.bf16.mxu0 0
    %1208 = vmatpush1.bf16.msra.mxu0 0
    %1209 = vmatprep.subr.bf16.mxu0 0
    %1210 = vmatpush1.bf16.msra.mxu0 0
    %1211 = vmatprep.subr.bf16.mxu0 0
    %1212 = vmatpush1.bf16.msra.mxu0 0
    %1213 = vmatprep.subr.bf16.mxu0 0
    %1214 = vmatpush1.bf16.msra.mxu0 0
    %1215 = vmatprep.subr.bf16.mxu0 0
    %1216 = vmatpush1.bf16.msra.mxu0 0
    %1217 = vmatprep.subr.bf16.mxu0 0
    %1218 = vmatpush1.bf16.msra.mxu0 0
    %1219 = vmatprep.subr.bf16.mxu0 0
    %1220 = vmatpush1.bf16.msra.mxu0 0
    %1221 = vmatprep.subr.bf16.mxu0 0
    %1222 = vmatpush1.bf16.msra.mxu0 0
    %1223 = vmatprep.mubr.bf16.mxu0 0
    %1224 = vmatmul.mubr.bf16.gmra.mrb[0].mxu0 %v1180
    %v1225 = vpop.f32.mrb[0].mxu0
    %v1226 = vadd.f32 %v53, %v1225
    %v1227 = vpop.f32.mrb[0].mxu0
    %v1228 = vpop.f32.mrb[0].mxu0
    %v1229 = vadd.f32 %v53, %v1228
    %v1230 = vpop.f32.mrb[0].mxu0
    %1231 = vmatprep.mubr.bf16.mxu0 0
    %1232 = vmatmul.mubr.bf16.gmra.mrb[0].mxu0 %v1183
    %v1233 = vpop.f32.mrb[0].mxu0
    %v1234 = vadd.f32 %v53, %v1233
    %v1235 = vpop.f32.mrb[0].mxu0
    %v1236 = vpop.f32.mrb[0].mxu0
    %v1237 = vadd.f32 %v53, %v1236
    %v1238 = vpop.f32.mrb[0].mxu0
    %1239 = vmatprep.mubr.bf16.mxu0 0
    %1240 = vmatmul.mubr.bf16.gmra.mrb[0].mxu0 %v1186
    %v1241 = vpop.f32.mrb[0].mxu0
    %v1242 = vadd.f32 %v53, %v1241
    %v1243 = vpop.f32.mrb[0].mxu0
    %v1244 = vpop.f32.mrb[0].mxu0
    %v1245 = vadd.f32 %v53, %v1244
    %v1246 = vpop.f32.mrb[0].mxu0
    %1247 = vmatprep.mubr.bf16.mxu0 0
    %1248 = vmatmul.mubr.bf16.gmra.mrb[0].mxu0 %v1189
    %v1249 = vpop.f32.mrb[0].mxu0
    %v1250 = vadd.f32 %v53, %v1249
    %v1251 = vpop.f32.mrb[0].mxu0
    %v1252 = vpop.f32.mrb[0].mxu0
    %v1253 = vadd.f32 %v53, %v1252
    %v1254 = vpop.f32.mrb[0].mxu0
    %1255 = vdwg.mxu0
    %v1256 = vmax.f32 %v1226, 0.0
    %v1257 = vmax.f32 %v1229, 0.0
    %v1258 = vmax.f32 %v1234, 0.0
    %v1259 = vmax.f32 %v1237, 0.0
    %v1260 = vmax.f32 %v1242, 0.0
    %v1261 = vmax.f32 %v1245, 0.0
    %v1262 = vmax.f32 %v1250, 0.0
    %v1263 = vmax.f32 %v1253, 0.0
    %v1264 = vpack.c.bf16 %v1257, %v1256
    %v1265 = vpack.c.bf16 %v1259, %v1258
    %v1266 = vpack.c.bf16 %v1261, %v1260
    %v1267 = vpack.c.bf16 %v1263, %v1262
    %s1268 = scalar_lea.vmem %s3, 80
    %v1269 = vld [vmem:[%s1268] sm:$0xf]
    %v1270 = vld [vmem:[%s1268 + $0x4] sm:$0xf]
    %v1271 = vld [vmem:[%s1268 + $0x8] sm:$0xf]
    %v1272 = vld [vmem:[%s1268 + $0xc] sm:$0xf]
    %v1277 = vunpack.c.l.b16 %v1269
    %v1278 = vunpack.c.l.b16 %v1270
    %v1279 = vunpack.c.l.b16 %v1271
    %v1280 = vunpack.c.l.b16 %v1272
    %v1281 = vpack.c.b16 %v1278, %v1277
    %v1282 = vpack.c.b16 %v1280, %v1279
    %v1286 = vsel %vm199, %v1264, 0
    %v1289 = vsel %vm199, %v1265, 0
    %v1292 = vsel %vm199, %v1266, 0
    %v1295 = vsel %vm199, %v1267, 0
    %1297 = vmatprep.subr.bf16.mxu0 0
    %1298 = vmatpush1.bf16.msra.mxu0 %v1281
    %1299 = vmatprep.subr.bf16.mxu0 0
    %1300 = vmatpush1.bf16.msra.mxu0 %v1282
    %1301 = vmatprep.subr.bf16.mxu0 0
    %1302 = vmatpush1.bf16.msra.mxu0 0
    %1303 = vmatprep.subr.bf16.mxu0 0
    %1304 = vmatpush1.bf16.msra.mxu0 0
    %1305 = vmatprep.subr.bf16.mxu0 0
    %1306 = vmatpush1.bf16.msra.mxu0 0
    %1307 = vmatprep.subr.bf16.mxu0 0
    %1308 = vmatpush1.bf16.msra.mxu0 0
    %1309 = vmatprep.subr.bf16.mxu0 0
    %1310 = vmatpush1.bf16.msra.mxu0 0
    %1311 = vmatprep.subr.bf16.mxu0 0
    %1312 = vmatpush1.bf16.msra.mxu0 0
    %1313 = vmatprep.subr.bf16.mxu0 0
    %1314 = vmatpush1.bf16.msra.mxu0 0
    %1315 = vmatprep.subr.bf16.mxu0 0
    %1316 = vmatpush1.bf16.msra.mxu0 0
    %1317 = vmatprep.subr.bf16.mxu0 0
    %1318 = vmatpush1.bf16.msra.mxu0 0
    %1319 = vmatprep.subr.bf16.mxu0 0
    %1320 = vmatpush1.bf16.msra.mxu0 0
    %1321 = vmatprep.subr.bf16.mxu0 0
    %1322 = vmatpush1.bf16.msra.mxu0 0
    %1323 = vmatprep.subr.bf16.mxu0 0
    %1324 = vmatpush1.bf16.msra.mxu0 0
    %1325 = vmatprep.subr.bf16.mxu0 0
    %1326 = vmatpush1.bf16.msra.mxu0 0
    %1327 = vmatprep.subr.bf16.mxu0 0
    %1328 = vmatpush1.bf16.msra.mxu0 0
    %1329 = vmatprep.mubr.bf16.mxu0 0
    %1330 = vmatmul.mubr.bf16.gmra.mrb[0].mxu0 %v1286
    %v1331 = vpop.f32.mrb[0].mxu0
    %v1332 = vadd.f32 0.0, %v1331
    %v1333 = vpop.f32.mrb[0].mxu0
    %v1334 = vpop.f32.mrb[0].mxu0
    %v1335 = vadd.f32 0.0, %v1334
    %v1336 = vpop.f32.mrb[0].mxu0
    %1337 = vmatprep.mubr.bf16.mxu0 0
    %1338 = vmatmul.mubr.bf16.gmra.mrb[0].mxu0 %v1289
    %v1339 = vpop.f32.mrb[0].mxu0
    %v1340 = vadd.f32 0.0, %v1339
    %v1341 = vpop.f32.mrb[0].mxu0
    %v1342 = vpop.f32.mrb[0].mxu0
    %v1343 = vadd.f32 0.0, %v1342
    %v1344 = vpop.f32.mrb[0].mxu0
    %1345 = vmatprep.mubr.bf16.mxu0 0
    %1346 = vmatmul.mubr.bf16.gmra.mrb[0].mxu0 %v1292
    %v1347 = vpop.f32.mrb[0].mxu0
    %v1348 = vadd.f32 0.0, %v1347
    %v1349 = vpop.f32.mrb[0].mxu0
    %v1350 = vpop.f32.mrb[0].mxu0
    %v1351 = vadd.f32 0.0, %v1350
    %v1352 = vpop.f32.mrb[0].mxu0
    %1353 = vmatprep.mubr.bf16.mxu0 0
    %1354 = vmatmul.mubr.bf16.gmra.mrb[0].mxu0 %v1295
    %v1355 = vpop.f32.mrb[0].mxu0
    %v1356 = vadd.f32 0.0, %v1355
    %v1357 = vpop.f32.mrb[0].mxu0
    %v1358 = vpop.f32.mrb[0].mxu0
    %v1359 = vpop.f32.mrb[0].mxu0
    %1360 = vdwg.mxu0
    %v1361 = vadd.f32 %v1144, %v1332
    %v1362 = vadd.f32 %v1145, %v1335
    %v1363 = vadd.f32 %v1146, %v1340
    %v1364 = vadd.f32 %v1147, %v1343
    %v1365 = vadd.f32 %v1148, %v1348
    %v1366 = vadd.f32 %v1149, %v1351
    %v1367 = vadd.f32 %v1150, %v1356
    %v1368 = vld [vmem:[%s0 + $0xc0] sm:$0xf]
    %v1369 = vld [vmem:[%s0 + $0xc4] sm:$0xf]
    %v1370 = vld [vmem:[%s0 + $0xc8] sm:$0xf]
    %v1371 = vld [vmem:[%s0 + $0xcc] sm:$0xf]
    %v1372 = vld [vmem:[%s0 + $0xd0] sm:$0xf]
    %v1373 = vld [vmem:[%s0 + $0xd4] sm:$0xf]
    %v1374 = vld [vmem:[%s0 + $0xd8] sm:$0xf]
    %v1375 = vld [vmem:[%s0 + $0xdc] sm:$0xf]
    %v1384 = vunpack.c.l.b16 %v1368
    %v1385 = vunpack.c.l.b16 %v1369
    %v1386 = vunpack.c.l.b16 %v1370
    %v1387 = vunpack.c.l.b16 %v1371
    %v1388 = vunpack.c.l.b16 %v1372
    %v1389 = vunpack.c.l.b16 %v1373
    %v1390 = vunpack.c.l.b16 %v1374
    %v1391 = vunpack.c.l.b16 %v1375
    %v1392 = vpack.c.b16 %v1385, %v1384
    %v1393 = vpack.c.b16 %v1387, %v1386
    %v1394 = vpack.c.b16 %v1389, %v1388
    %v1395 = vpack.c.b16 %v1391, %v1390
    %v1397 = vsel %vm86, %v1392, 0
    %v1400 = vsel %vm86, %v1393, 0
    %v1403 = vsel %vm86, %v1394, 0
    %v1406 = vsel %vm86, %v1395, 0
    %1408 = vmatprep.subr.bf16.mxu0 0
    %1409 = vmatpush1.bf16.msra.mxu0 %v83
    %1410 = vmatprep.subr.bf16.mxu0 0
    %1411 = vmatpush1.bf16.msra.mxu0 %v104
    %1412 = vmatprep.subr.bf16.mxu0 0
    %1413 = vmatpush1.bf16.msra.mxu0 0
    %1414 = vmatprep.subr.bf16.mxu0 0
    %1415 = vmatpush1.bf16.msra.mxu0 0
    %1416 = vmatprep.subr.bf16.mxu0 0
    %1417 = vmatpush1.bf16.msra.mxu0 0
    %1418 = vmatprep.subr.bf16.mxu0 0
    %1419 = vmatpush1.bf16.msra.mxu0 0
    %1420 = vmatprep.subr.bf16.mxu0 0
    %1421 = vmatpush1.bf16.msra.mxu0 0
    %1422 = vmatprep.subr.bf16.mxu0 0
    %1423 = vmatpush1.bf16.msra.mxu0 0
    %1424 = vmatprep.subr.bf16.mxu0 0
    %1425 = vmatpush1.bf16.msra.mxu0 0
    %1426 = vmatprep.subr.bf16.mxu0 0
    %1427 = vmatpush1.bf16.msra.mxu0 0
    %1428 = vmatprep.subr.bf16.mxu0 0
    %1429 = vmatpush1.bf16.msra.mxu0 0
    %1430 = vmatprep.subr.bf16.mxu0 0
    %1431 = vmatpush1.bf16.msra.mxu0 0
    %1432 = vmatprep.subr.bf16.mxu0 0
    %1433 = vmatpush1.bf16.msra.mxu0 0
    %1434 = vmatprep.subr.bf16.mxu0 0
    %1435 = vmatpush1.bf16.msra.mxu0 0
    %1436 = vmatprep.subr.bf16.mxu0 0
    %1437 = vmatpush1.bf16.msra.mxu0 0
    %1438 = vmatprep.subr.bf16.mxu0 0
    %1439 = vmatpush1.bf16.msra.mxu0 0
    %1440 = vmatprep.mubr.bf16.mxu0 0
    %1441 = vmatmul.mubr.bf16.gmra.mrb[0].mxu0 %v1397
    %v1442 = vpop.f32.mrb[0].mxu0
    %v1443 = vadd.f32 %v53, %v1442
    %v1444 = vpop.f32.mrb[0].mxu0
    %v1445 = vpop.f32.mrb[0].mxu0
    %v1446 = vadd.f32 %v53, %v1445
    %v1447 = vpop.f32.mrb[0].mxu0
    %1448 = vmatprep.mubr.bf16.mxu0 0
    %1449 = vmatmul.mubr.bf16.gmra.mrb[0].mxu0 %v1400
    %v1450 = vpop.f32.mrb[0].mxu0
    %v1451 = vadd.f32 %v53, %v1450
    %v1452 = vpop.f32.mrb[0].mxu0
    %v1453 = vpop.f32.mrb[0].mxu0
    %v1454 = vadd.f32 %v53, %v1453
    %v1455 = vpop.f32.mrb[0].mxu0
    %1456 = vmatprep.mubr.bf16.mxu0 0
    %1457 = vmatmul.mubr.bf16.gmra.mrb[0].mxu0 %v1403
    %v1458 = vpop.f32.mrb[0].mxu0
    %v1459 = vadd.f32 %v53, %v1458
    %v1460 = vpop.f32.mrb[0].mxu0
    %v1461 = vpop.f32.mrb[0].mxu0
    %v1462 = vadd.f32 %v53, %v1461
    %v1463 = vpop.f32.mrb[0].mxu0
    %1464 = vmatprep.mubr.bf16.mxu0 0
    %1465 = vmatmul.mubr.bf16.gmra.mrb[0].mxu0 %v1406
    %v1466 = vpop.f32.mrb[0].mxu0
    %v1467 = vadd.f32 %v53, %v1466
    %v1468 = vpop.f32.mrb[0].mxu0
    %v1469 = vpop.f32.mrb[0].mxu0
    %v1470 = vadd.f32 %v53, %v1469
    %v1471 = vpop.f32.mrb[0].mxu0
    %1472 = vdwg.mxu0
    %v1473 = vmax.f32 %v1443, 0.0
    %v1474 = vmax.f32 %v1446, 0.0
    %v1475 = vmax.f32 %v1451, 0.0
    %v1476 = vmax.f32 %v1454, 0.0
    %v1477 = vmax.f32 %v1459, 0.0
    %v1478 = vmax.f32 %v1462, 0.0
    %v1479 = vmax.f32 %v1467, 0.0
    %v1480 = vmax.f32 %v1470, 0.0
    %v1481 = vpack.c.bf16 %v1474, %v1473
    %v1482 = vpack.c.bf16 %v1476, %v1475
    %v1483 = vpack.c.bf16 %v1478, %v1477
    %v1484 = vpack.c.bf16 %v1480, %v1479
    %s1485 = scalar_lea.vmem %s3, 96
    %v1486 = vld [vmem:[%s1485] sm:$0xf]
    %v1487 = vld [vmem:[%s1485 + $0x4] sm:$0xf]
    %v1488 = vld [vmem:[%s1485 + $0x8] sm:$0xf]
    %v1489 = vld [vmem:[%s1485 + $0xc] sm:$0xf]
    %v1494 = vunpack.c.l.b16 %v1486
    %v1495 = vunpack.c.l.b16 %v1487
    %v1496 = vunpack.c.l.b16 %v1488
    %v1497 = vunpack.c.l.b16 %v1489
    %v1498 = vpack.c.b16 %v1495, %v1494
    %v1499 = vpack.c.b16 %v1497, %v1496
    %v1503 = vsel %vm199, %v1481, 0
    %v1506 = vsel %vm199, %v1482, 0
    %v1509 = vsel %vm199, %v1483, 0
    %v1512 = vsel %vm199, %v1484, 0
    %1514 = vmatprep.subr.bf16.mxu0 0
    %1515 = vmatpush1.bf16.msra.mxu0 %v1498
    %1516 = vmatprep.subr.bf16.mxu0 0
    %1517 = vmatpush1.bf16.msra.mxu0 %v1499
    %1518 = vmatprep.subr.bf16.mxu0 0
    %1519 = vmatpush1.bf16.msra.mxu0 0
    %1520 = vmatprep.subr.bf16.mxu0 0
    %1521 = vmatpush1.bf16.msra.mxu0 0
    %1522 = vmatprep.subr.bf16.mxu0 0
    %1523 = vmatpush1.bf16.msra.mxu0 0
    %1524 = vmatprep.subr.bf16.mxu0 0
    %1525 = vmatpush1.bf16.msra.mxu0 0
    %1526 = vmatprep.subr.bf16.mxu0 0
    %1527 = vmatpush1.bf16.msra.mxu0 0
    %1528 = vmatprep.subr.bf16.mxu0 0
    %1529 = vmatpush1.bf16.msra.mxu0 0
    %1530 = vmatprep.subr.bf16.mxu0 0
    %1531 = vmatpush1.bf16.msra.mxu0 0
    %1532 = vmatprep.subr.bf16.mxu0 0
    %1533 = vmatpush1.bf16.msra.mxu0 0
    %1534 = vmatprep.subr.bf16.mxu0 0
    %1535 = vmatpush1.bf16.msra.mxu0 0
    %1536 = vmatprep.subr.bf16.mxu0 0
    %1537 = vmatpush1.bf16.msra.mxu0 0
    %1538 = vmatprep.subr.bf16.mxu0 0
    %1539 = vmatpush1.bf16.msra.mxu0 0
    %1540 = vmatprep.subr.bf16.mxu0 0
    %1541 = vmatpush1.bf16.msra.mxu0 0
    %1542 = vmatprep.subr.bf16.mxu0 0
    %1543 = vmatpush1.bf16.msra.mxu0 0
    %1544 = vmatprep.subr.bf16.mxu0 0
    %1545 = vmatpush1.bf16.msra.mxu0 0
    %1546 = vmatprep.mubr.bf16.mxu0 0
    %1547 = vmatmul.mubr.bf16.gmra.mrb[0].mxu0 %v1503
    %v1548 = vpop.f32.mrb[0].mxu0
    %v1549 = vadd.f32 0.0, %v1548
    %v1550 = vpop.f32.mrb[0].mxu0
    %v1551 = vpop.f32.mrb[0].mxu0
    %v1552 = vadd.f32 0.0, %v1551
    %v1553 = vpop.f32.mrb[0].mxu0
    %1554 = vmatprep.mubr.bf16.mxu0 0
    %1555 = vmatmul.mubr.bf16.gmra.mrb[0].mxu0 %v1506
    %v1556 = vpop.f32.mrb[0].mxu0
    %v1557 = vadd.f32 0.0, %v1556
    %v1558 = vpop.f32.mrb[0].mxu0
    %v1559 = vpop.f32.mrb[0].mxu0
    %v1560 = vadd.f32 0.0, %v1559
    %v1561 = vpop.f32.mrb[0].mxu0
    %1562 = vmatprep.mubr.bf16.mxu0 0
    %1563 = vmatmul.mubr.bf16.gmra.mrb[0].mxu0 %v1509
    %v1564 = vpop.f32.mrb[0].mxu0
    %v1565 = vadd.f32 0.0, %v1564
    %v1566 = vpop.f32.mrb[0].mxu0
    %v1567 = vpop.f32.mrb[0].mxu0
    %v1568 = vadd.f32 0.0, %v1567
    %v1569 = vpop.f32.mrb[0].mxu0
    %1570 = vmatprep.mubr.bf16.mxu0 0
    %1571 = vmatmul.mubr.bf16.gmra.mrb[0].mxu0 %v1512
    %v1572 = vpop.f32.mrb[0].mxu0
    %v1573 = vadd.f32 0.0, %v1572
    %v1574 = vpop.f32.mrb[0].mxu0
    %v1575 = vpop.f32.mrb[0].mxu0
    %v1576 = vpop.f32.mrb[0].mxu0
    %1577 = vdwg.mxu0
    %v1578 = vadd.f32 %v1361, %v1549
    %v1579 = vadd.f32 %v1362, %v1552
    %v1580 = vadd.f32 %v1363, %v1557
    %v1581 = vadd.f32 %v1364, %v1560
    %v1582 = vadd.f32 %v1365, %v1565
    %v1583 = vadd.f32 %v1366, %v1568
    %v1584 = vadd.f32 %v1367, %v1573
    %v1585 = vld [vmem:[%s0 + $0xe0] sm:$0xf]
    %v1586 = vld [vmem:[%s0 + $0xe4] sm:$0xf]
    %v1587 = vld [vmem:[%s0 + $0xe8] sm:$0xf]
    %v1588 = vld [vmem:[%s0 + $0xec] sm:$0xf]
    %v1589 = vld [vmem:[%s0 + $0xf0] sm:$0xf]
    %v1590 = vld [vmem:[%s0 + $0xf4] sm:$0xf]
    %v1591 = vld [vmem:[%s0 + $0xf8] sm:$0xf]
    %v1592 = vld [vmem:[%s0 + $0xfc] sm:$0xf]
    %v1601 = vunpack.c.l.b16 %v1585
    %v1602 = vunpack.c.l.b16 %v1586
    %v1603 = vunpack.c.l.b16 %v1587
    %v1604 = vunpack.c.l.b16 %v1588
    %v1605 = vunpack.c.l.b16 %v1589
    %v1606 = vunpack.c.l.b16 %v1590
    %v1607 = vunpack.c.l.b16 %v1591
    %v1608 = vunpack.c.l.b16 %v1592
    %v1609 = vpack.c.b16 %v1602, %v1601
    %v1610 = vpack.c.b16 %v1604, %v1603
    %v1611 = vpack.c.b16 %v1606, %v1605
    %v1612 = vpack.c.b16 %v1608, %v1607
    %v1614 = vsel %vm86, %v1609, 0
    %v1617 = vsel %vm86, %v1610, 0
    %v1620 = vsel %vm86, %v1611, 0
    %v1623 = vsel %vm86, %v1612, 0
    %1625 = vmatprep.subr.bf16.mxu0 0
    %1626 = vmatpush1.bf16.msra.mxu0 %v83
    %1627 = vmatprep.subr.bf16.mxu0 0
    %1628 = vmatpush1.bf16.msra.mxu0 %v104
    %1629 = vmatprep.subr.bf16.mxu0 0
    %1630 = vmatpush1.bf16.msra.mxu0 0
    %1631 = vmatprep.subr.bf16.mxu0 0
    %1632 = vmatpush1.bf16.msra.mxu0 0
    %1633 = vmatprep.subr.bf16.mxu0 0
    %1634 = vmatpush1.bf16.msra.mxu0 0
    %1635 = vmatprep.subr.bf16.mxu0 0
    %1636 = vmatpush1.bf16.msra.mxu0 0
    %1637 = vmatprep.subr.bf16.mxu0 0
    %1638 = vmatpush1.bf16.msra.mxu0 0
    %1639 = vmatprep.subr.bf16.mxu0 0
    %1640 = vmatpush1.bf16.msra.mxu0 0
    %1641 = vmatprep.subr.bf16.mxu0 0
    %1642 = vmatpush1.bf16.msra.mxu0 0
    %1643 = vmatprep.subr.bf16.mxu0 0
    %1644 = vmatpush1.bf16.msra.mxu0 0
    %1645 = vmatprep.subr.bf16.mxu0 0
    %1646 = vmatpush1.bf16.msra.mxu0 0
    %1647 = vmatprep.subr.bf16.mxu0 0
    %1648 = vmatpush1.bf16.msra.mxu0 0
    %1649 = vmatprep.subr.bf16.mxu0 0
    %1650 = vmatpush1.bf16.msra.mxu0 0
    %1651 = vmatprep.subr.bf16.mxu0 0
    %1652 = vmatpush1.bf16.msra.mxu0 0
    %1653 = vmatprep.subr.bf16.mxu0 0
    %1654 = vmatpush1.bf16.msra.mxu0 0
    %1655 = vmatprep.subr.bf16.mxu0 0
    %1656 = vmatpush1.bf16.msra.mxu0 0
    %1657 = vmatprep.mubr.bf16.mxu0 0
    %1658 = vmatmul.mubr.bf16.gmra.mrb[0].mxu0 %v1614
    %v1659 = vpop.f32.mrb[0].mxu0
    %v1660 = vadd.f32 %v53, %v1659
    %v1661 = vpop.f32.mrb[0].mxu0
    %v1662 = vpop.f32.mrb[0].mxu0
    %v1663 = vadd.f32 %v53, %v1662
    %v1664 = vpop.f32.mrb[0].mxu0
    %1665 = vmatprep.mubr.bf16.mxu0 0
    %1666 = vmatmul.mubr.bf16.gmra.mrb[0].mxu0 %v1617
    %v1667 = vpop.f32.mrb[0].mxu0
    %v1668 = vadd.f32 %v53, %v1667
    %v1669 = vpop.f32.mrb[0].mxu0
    %v1670 = vpop.f32.mrb[0].mxu0
    %v1671 = vadd.f32 %v53, %v1670
    %v1672 = vpop.f32.mrb[0].mxu0
    %1673 = vmatprep.mubr.bf16.mxu0 0
    %1674 = vmatmul.mubr.bf16.gmra.mrb[0].mxu0 %v1620
    %v1675 = vpop.f32.mrb[0].mxu0
    %v1676 = vadd.f32 %v53, %v1675
    %v1677 = vpop.f32.mrb[0].mxu0
    %v1678 = vpop.f32.mrb[0].mxu0
    %v1679 = vadd.f32 %v53, %v1678
    %v1680 = vpop.f32.mrb[0].mxu0
    %1681 = vmatprep.mubr.bf16.mxu0 0
    %1682 = vmatmul.mubr.bf16.gmra.mrb[0].mxu0 %v1623
    %v1683 = vpop.f32.mrb[0].mxu0
    %v1684 = vadd.f32 %v53, %v1683
    %v1685 = vpop.f32.mrb[0].mxu0
    %v1686 = vpop.f32.mrb[0].mxu0
    %v1687 = vadd.f32 %v53, %v1686
    %v1688 = vpop.f32.mrb[0].mxu0
    %1689 = vdwg.mxu0
    %v1690 = vmax.f32 %v1660, 0.0
    %v1691 = vmax.f32 %v1663, 0.0
    %v1692 = vmax.f32 %v1668, 0.0
    %v1693 = vmax.f32 %v1671, 0.0
    %v1694 = vmax.f32 %v1676, 0.0
    %v1695 = vmax.f32 %v1679, 0.0
    %v1696 = vmax.f32 %v1684, 0.0
    %v1697 = vmax.f32 %v1687, 0.0
    %v1698 = vpack.c.bf16 %v1691, %v1690
    %v1699 = vpack.c.bf16 %v1693, %v1692
    %v1700 = vpack.c.bf16 %v1695, %v1694
    %v1701 = vpack.c.bf16 %v1697, %v1696
    %s1702 = scalar_lea.vmem %s3, 112
    %v1703 = vld [vmem:[%s1702] sm:$0xf]
    %v1704 = vld [vmem:[%s1702 + $0x4] sm:$0xf]
    %v1705 = vld [vmem:[%s1702 + $0x8] sm:$0xf]
    %v1706 = vld [vmem:[%s1702 + $0xc] sm:$0xf]
    %v1711 = vunpack.c.l.b16 %v1703
    %v1712 = vunpack.c.l.b16 %v1704
    %v1713 = vunpack.c.l.b16 %v1705
    %v1714 = vunpack.c.l.b16 %v1706
    %v1715 = vpack.c.b16 %v1712, %v1711
    %v1716 = vpack.c.b16 %v1714, %v1713
    %v1720 = vsel %vm199, %v1698, 0
    %v1723 = vsel %vm199, %v1699, 0
    %v1726 = vsel %vm199, %v1700, 0
    %v1729 = vsel %vm199, %v1701, 0
    %1731 = vmatprep.subr.bf16.mxu0 0
    %1732 = vmatpush1.bf16.msra.mxu0 %v1715
    %1733 = vmatprep.subr.bf16.mxu0 0
    %1734 = vmatpush1.bf16.msra.mxu0 %v1716
    %1735 = vmatprep.subr.bf16.mxu0 0
    %1736 = vmatpush1.bf16.msra.mxu0 0
    %1737 = vmatprep.subr.bf16.mxu0 0
    %1738 = vmatpush1.bf16.msra.mxu0 0
    %1739 = vmatprep.subr.bf16.mxu0 0
    %1740 = vmatpush1.bf16.msra.mxu0 0
    %1741 = vmatprep.subr.bf16.mxu0 0
    %1742 = vmatpush1.bf16.msra.mxu0 0
    %1743 = vmatprep.subr.bf16.mxu0 0
    %1744 = vmatpush1.bf16.msra.mxu0 0
    %1745 = vmatprep.subr.bf16.mxu0 0
    %1746 = vmatpush1.bf16.msra.mxu0 0
    %1747 = vmatprep.subr.bf16.mxu0 0
    %1748 = vmatpush1.bf16.msra.mxu0 0
    %1749 = vmatprep.subr.bf16.mxu0 0
    %1750 = vmatpush1.bf16.msra.mxu0 0
    %1751 = vmatprep.subr.bf16.mxu0 0
    %1752 = vmatpush1.bf16.msra.mxu0 0
    %1753 = vmatprep.subr.bf16.mxu0 0
    %1754 = vmatpush1.bf16.msra.mxu0 0
    %1755 = vmatprep.subr.bf16.mxu0 0
    %1756 = vmatpush1.bf16.msra.mxu0 0
    %1757 = vmatprep.subr.bf16.mxu0 0
    %1758 = vmatpush1.bf16.msra.mxu0 0
    %1759 = vmatprep.subr.bf16.mxu0 0
    %1760 = vmatpush1.bf16.msra.mxu0 0
    %1761 = vmatprep.subr.bf16.mxu0 0
    %1762 = vmatpush1.bf16.msra.mxu0 0
    %1763 = vmatprep.mubr.bf16.mxu0 0
    %1764 = vmatmul.mubr.bf16.gmra.mrb[0].mxu0 %v1720
    %v1765 = vpop.f32.mrb[0].mxu0
    %v1766 = vadd.f32 0.0, %v1765
    %v1767 = vpop.f32.mrb[0].mxu0
    %v1768 = vpop.f32.mrb[0].mxu0
    %v1769 = vadd.f32 0.0, %v1768
    %v1770 = vpop.f32.mrb[0].mxu0
    %1771 = vmatprep.mubr.bf16.mxu0 0
    %1772 = vmatmul.mubr.bf16.gmra.mrb[0].mxu0 %v1723
    %v1773 = vpop.f32.mrb[0].mxu0
    %v1774 = vadd.f32 0.0, %v1773
    %v1775 = vpop.f32.mrb[0].mxu0
    %v1776 = vpop.f32.mrb[0].mxu0
    %v1777 = vadd.f32 0.0, %v1776
    %v1778 = vpop.f32.mrb[0].mxu0
    %1779 = vmatprep.mubr.bf16.mxu0 0
    %1780 = vmatmul.mubr.bf16.gmra.mrb[0].mxu0 %v1726
    %v1781 = vpop.f32.mrb[0].mxu0
    %v1782 = vadd.f32 0.0, %v1781
    %v1783 = vpop.f32.mrb[0].mxu0
    %v1784 = vpop.f32.mrb[0].mxu0
    %v1785 = vadd.f32 0.0, %v1784
    %v1786 = vpop.f32.mrb[0].mxu0
    %1787 = vmatprep.mubr.bf16.mxu0 0
    %1788 = vmatmul.mubr.bf16.gmra.mrb[0].mxu0 %v1729
    %v1789 = vpop.f32.mrb[0].mxu0
    %v1790 = vadd.f32 0.0, %v1789
    %v1791 = vpop.f32.mrb[0].mxu0
    %v1792 = vpop.f32.mrb[0].mxu0
    %v1793 = vpop.f32.mrb[0].mxu0
    %1794 = vdwg.mxu0
    %v1795 = vadd.f32 %v1578, %v1766
    %v1796 = vadd.f32 %v1579, %v1769
    %v1797 = vadd.f32 %v1580, %v1774
    %v1798 = vadd.f32 %v1581, %v1777
    %v1799 = vadd.f32 %v1582, %v1782
    %v1800 = vadd.f32 %v1583, %v1785
    %v1801 = vadd.f32 %v1584, %v1790
    %v1802 = vld [vmem:[%s0 + $0x100] sm:$0xf]
    %v1803 = vld [vmem:[%s0 + $0x104] sm:$0xf]
    %v1804 = vld [vmem:[%s0 + $0x108] sm:$0xf]
    %v1805 = vld [vmem:[%s0 + $0x10c] sm:$0xf]
    %v1806 = vld [vmem:[%s0 + $0x110] sm:$0xf]
    %v1807 = vld [vmem:[%s0 + $0x114] sm:$0xf]
    %v1808 = vld [vmem:[%s0 + $0x118] sm:$0xf]
    %v1809 = vld [vmem:[%s0 + $0x11c] sm:$0xf]
    %v1818 = vunpack.c.l.b16 %v1802
    %v1819 = vunpack.c.l.b16 %v1803
    %v1820 = vunpack.c.l.b16 %v1804
    %v1821 = vunpack.c.l.b16 %v1805
    %v1822 = vunpack.c.l.b16 %v1806
    %v1823 = vunpack.c.l.b16 %v1807
    %v1824 = vunpack.c.l.b16 %v1808
    %v1825 = vunpack.c.l.b16 %v1809
    %v1826 = vpack.c.b16 %v1819, %v1818
    %v1827 = vpack.c.b16 %v1821, %v1820
    %v1828 = vpack.c.b16 %v1823, %v1822
    %v1829 = vpack.c.b16 %v1825, %v1824
    %v1831 = vsel %vm86, %v1826, 0
    %v1834 = vsel %vm86, %v1827, 0
    %v1837 = vsel %vm86, %v1828, 0
    %v1840 = vsel %vm86, %v1829, 0
    %1842 = vmatprep.subr.bf16.mxu0 0
    %1843 = vmatpush1.bf16.msra.mxu0 %v83
    %1844 = vmatprep.subr.bf16.mxu0 0
    %1845 = vmatpush1.bf16.msra.mxu0 %v104
    %1846 = vmatprep.subr.bf16.mxu0 0
    %1847 = vmatpush1.bf16.msra.mxu0 0
    %1848 = vmatprep.subr.bf16.mxu0 0
    %1849 = vmatpush1.bf16.msra.mxu0 0
    %1850 = vmatprep.subr.bf16.mxu0 0
    %1851 = vmatpush1.bf16.msra.mxu0 0
    %1852 = vmatprep.subr.bf16.mxu0 0
    %1853 = vmatpush1.bf16.msra.mxu0 0
    %1854 = vmatprep.subr.bf16.mxu0 0
    %1855 = vmatpush1.bf16.msra.mxu0 0
    %1856 = vmatprep.subr.bf16.mxu0 0
    %1857 = vmatpush1.bf16.msra.mxu0 0
    %1858 = vmatprep.subr.bf16.mxu0 0
    %1859 = vmatpush1.bf16.msra.mxu0 0
    %1860 = vmatprep.subr.bf16.mxu0 0
    %1861 = vmatpush1.bf16.msra.mxu0 0
    %1862 = vmatprep.subr.bf16.mxu0 0
    %1863 = vmatpush1.bf16.msra.mxu0 0
    %1864 = vmatprep.subr.bf16.mxu0 0
    %1865 = vmatpush1.bf16.msra.mxu0 0
    %1866 = vmatprep.subr.bf16.mxu0 0
    %1867 = vmatpush1.bf16.msra.mxu0 0
    %1868 = vmatprep.subr.bf16.mxu0 0
    %1869 = vmatpush1.bf16.msra.mxu0 0
    %1870 = vmatprep.subr.bf16.mxu0 0
    %1871 = vmatpush1.bf16.msra.mxu0 0
    %1872 = vmatprep.subr.bf16.mxu0 0
    %1873 = vmatpush1.bf16.msra.mxu0 0
    %1874 = vmatprep.mubr.bf16.mxu0 0
    %1875 = vmatmul.mubr.bf16.gmra.mrb[0].mxu0 %v1831
    %v1876 = vpop.f32.mrb[0].mxu0
    %v1877 = vadd.f32 %v53, %v1876
    %v1878 = vpop.f32.mrb[0].mxu0
    %v1879 = vpop.f32.mrb[0].mxu0
    %v1880 = vadd.f32 %v53, %v1879
    %v1881 = vpop.f32.mrb[0].mxu0
    %1882 = vmatprep.mubr.bf16.mxu0 0
    %1883 = vmatmul.mubr.bf16.gmra.mrb[0].mxu0 %v1834
    %v1884 = vpop.f32.mrb[0].mxu0
    %v1885 = vadd.f32 %v53, %v1884
    %v1886 = vpop.f32.mrb[0].mxu0
    %v1887 = vpop.f32.mrb[0].mxu0
    %v1888 = vadd.f32 %v53, %v1887
    %v1889 = vpop.f32.mrb[0].mxu0
    %1890 = vmatprep.mubr.bf16.mxu0 0
    %1891 = vmatmul.mubr.bf16.gmra.mrb[0].mxu0 %v1837
    %v1892 = vpop.f32.mrb[0].mxu0
    %v1893 = vadd.f32 %v53, %v1892
    %v1894 = vpop.f32.mrb[0].mxu0
    %v1895 = vpop.f32.mrb[0].mxu0
    %v1896 = vadd.f32 %v53, %v1895
    %v1897 = vpop.f32.mrb[0].mxu0
    %1898 = vmatprep.mubr.bf16.mxu0 0
    %1899 = vmatmul.mubr.bf16.gmra.mrb[0].mxu0 %v1840
    %v1900 = vpop.f32.mrb[0].mxu0
    %v1901 = vadd.f32 %v53, %v1900
    %v1902 = vpop.f32.mrb[0].mxu0
    %v1903 = vpop.f32.mrb[0].mxu0
    %v1904 = vadd.f32 %v53, %v1903
    %v1905 = vpop.f32.mrb[0].mxu0
    %1906 = vdwg.mxu0
    %v1907 = vmax.f32 %v1877, 0.0
    %v1908 = vmax.f32 %v1880, 0.0
    %v1909 = vmax.f32 %v1885, 0.0
    %v1910 = vmax.f32 %v1888, 0.0
    %v1911 = vmax.f32 %v1893, 0.0
    %v1912 = vmax.f32 %v1896, 0.0
    %v1913 = vmax.f32 %v1901, 0.0
    %v1914 = vmax.f32 %v1904, 0.0
    %v1915 = vpack.c.bf16 %v1908, %v1907
    %v1916 = vpack.c.bf16 %v1910, %v1909
    %v1917 = vpack.c.bf16 %v1912, %v1911
    %v1918 = vpack.c.bf16 %v1914, %v1913
    %s1919 = scalar_lea.vmem %s3, 128
    %v1920 = vld [vmem:[%s1919] sm:$0xf]
    %v1921 = vld [vmem:[%s1919 + $0x4] sm:$0xf]
    %v1922 = vld [vmem:[%s1919 + $0x8] sm:$0xf]
    %v1923 = vld [vmem:[%s1919 + $0xc] sm:$0xf]
    %v1928 = vunpack.c.l.b16 %v1920
    %v1929 = vunpack.c.l.b16 %v1921
    %v1930 = vunpack.c.l.b16 %v1922
    %v1931 = vunpack.c.l.b16 %v1923
    %v1932 = vpack.c.b16 %v1929, %v1928
    %v1933 = vpack.c.b16 %v1931, %v1930
    %v1937 = vsel %vm199, %v1915, 0
    %v1940 = vsel %vm199, %v1916, 0
    %v1943 = vsel %vm199, %v1917, 0
    %v1946 = vsel %vm199, %v1918, 0
    %1948 = vmatprep.subr.bf16.mxu0 0
    %1949 = vmatpush1.bf16.msra.mxu0 %v1932
    %1950 = vmatprep.subr.bf16.mxu0 0
    %1951 = vmatpush1.bf16.msra.mxu0 %v1933
    %1952 = vmatprep.subr.bf16.mxu0 0
    %1953 = vmatpush1.bf16.msra.mxu0 0
    %1954 = vmatprep.subr.bf16.mxu0 0
    %1955 = vmatpush1.bf16.msra.mxu0 0
    %1956 = vmatprep.subr.bf16.mxu0 0
    %1957 = vmatpush1.bf16.msra.mxu0 0
    %1958 = vmatprep.subr.bf16.mxu0 0
    %1959 = vmatpush1.bf16.msra.mxu0 0
    %1960 = vmatprep.subr.bf16.mxu0 0
    %1961 = vmatpush1.bf16.msra.mxu0 0
    %1962 = vmatprep.subr.bf16.mxu0 0
    %1963 = vmatpush1.bf16.msra.mxu0 0
    %1964 = vmatprep.subr.bf16.mxu0 0
    %1965 = vmatpush1.bf16.msra.mxu0 0
    %1966 = vmatprep.subr.bf16.mxu0 0
    %1967 = vmatpush1.bf16.msra.mxu0 0
    %1968 = vmatprep.subr.bf16.mxu0 0
    %1969 = vmatpush1.bf16.msra.mxu0 0
    %1970 = vmatprep.subr.bf16.mxu0 0
    %1971 = vmatpush1.bf16.msra.mxu0 0
    %1972 = vmatprep.subr.bf16.mxu0 0
    %1973 = vmatpush1.bf16.msra.mxu0 0
    %1974 = vmatprep.subr.bf16.mxu0 0
    %1975 = vmatpush1.bf16.msra.mxu0 0
    %1976 = vmatprep.subr.bf16.mxu0 0
    %1977 = vmatpush1.bf16.msra.mxu0 0
    %1978 = vmatprep.subr.bf16.mxu0 0
    %1979 = vmatpush1.bf16.msra.mxu0 0
    %1980 = vmatprep.mubr.bf16.mxu0 0
    %1981 = vmatmul.mubr.bf16.gmra.mrb[0].mxu0 %v1937
    %v1982 = vpop.f32.mrb[0].mxu0
    %v1983 = vadd.f32 0.0, %v1982
    %v1984 = vpop.f32.mrb[0].mxu0
    %v1985 = vpop.f32.mrb[0].mxu0
    %v1986 = vadd.f32 0.0, %v1985
    %v1987 = vpop.f32.mrb[0].mxu0
    %1988 = vmatprep.mubr.bf16.mxu0 0
    %1989 = vmatmul.mubr.bf16.gmra.mrb[0].mxu0 %v1940
    %v1990 = vpop.f32.mrb[0].mxu0
    %v1991 = vadd.f32 0.0, %v1990
    %v1992 = vpop.f32.mrb[0].mxu0
    %v1993 = vpop.f32.mrb[0].mxu0
    %v1994 = vadd.f32 0.0, %v1993
    %v1995 = vpop.f32.mrb[0].mxu0
    %1996 = vmatprep.mubr.bf16.mxu0 0
    %1997 = vmatmul.mubr.bf16.gmra.mrb[0].mxu0 %v1943
    %v1998 = vpop.f32.mrb[0].mxu0
    %v1999 = vadd.f32 0.0, %v1998
    %v2000 = vpop.f32.mrb[0].mxu0
    %v2001 = vpop.f32.mrb[0].mxu0
    %v2002 = vadd.f32 0.0, %v2001
    %v2003 = vpop.f32.mrb[0].mxu0
    %2004 = vmatprep.mubr.bf16.mxu0 0
    %2005 = vmatmul.mubr.bf16.gmra.mrb[0].mxu0 %v1946
    %v2006 = vpop.f32.mrb[0].mxu0
    %v2007 = vadd.f32 0.0, %v2006
    %v2008 = vpop.f32.mrb[0].mxu0
    %v2009 = vpop.f32.mrb[0].mxu0
    %v2010 = vpop.f32.mrb[0].mxu0
    %2011 = vdwg.mxu0
    %v2012 = vadd.f32 %v1795, %v1983
    %v2013 = vadd.f32 %v1796, %v1986
    %v2014 = vadd.f32 %v1797, %v1991
    %v2015 = vadd.f32 %v1798, %v1994
    %v2016 = vadd.f32 %v1799, %v1999
    %v2017 = vadd.f32 %v1800, %v2002
    %v2018 = vadd.f32 %v1801, %v2007
    %v2019 = vld [vmem:[%s0 + $0x120] sm:$0xf]
    %v2020 = vld [vmem:[%s0 + $0x124] sm:$0xf]
    %v2021 = vld [vmem:[%s0 + $0x128] sm:$0xf]
    %v2022 = vld [vmem:[%s0 + $0x12c] sm:$0xf]
    %v2023 = vld [vmem:[%s0 + $0x130] sm:$0xf]
    %v2024 = vld [vmem:[%s0 + $0x134] sm:$0xf]
    %v2025 = vld [vmem:[%s0 + $0x138] sm:$0xf]
    %v2026 = vld [vmem:[%s0 + $0x13c] sm:$0xf]
    %v2035 = vunpack.c.l.b16 %v2019
    %v2036 = vunpack.c.l.b16 %v2020
    %v2037 = vunpack.c.l.b16 %v2021
    %v2038 = vunpack.c.l.b16 %v2022
    %v2039 = vunpack.c.l.b16 %v2023
    %v2040 = vunpack.c.l.b16 %v2024
    %v2041 = vunpack.c.l.b16 %v2025
    %v2042 = vunpack.c.l.b16 %v2026
    %v2043 = vpack.c.b16 %v2036, %v2035
    %v2044 = vpack.c.b16 %v2038, %v2037
    %v2045 = vpack.c.b16 %v2040, %v2039
    %v2046 = vpack.c.b16 %v2042, %v2041
    %v2048 = vsel %vm86, %v2043, 0
    %v2051 = vsel %vm86, %v2044, 0
    %v2054 = vsel %vm86, %v2045, 0
    %v2057 = vsel %vm86, %v2046, 0
    %2059 = vmatprep.subr.bf16.mxu0 0
    %2060 = vmatpush1.bf16.msra.mxu0 %v83
    %2061 = vmatprep.subr.bf16.mxu0 0
    %2062 = vmatpush1.bf16.msra.mxu0 %v104
    %2063 = vmatprep.subr.bf16.mxu0 0
    %2064 = vmatpush1.bf16.msra.mxu0 0
    %2065 = vmatprep.subr.bf16.mxu0 0
    %2066 = vmatpush1.bf16.msra.mxu0 0
    %2067 = vmatprep.subr.bf16.mxu0 0
    %2068 = vmatpush1.bf16.msra.mxu0 0
    %2069 = vmatprep.subr.bf16.mxu0 0
    %2070 = vmatpush1.bf16.msra.mxu0 0
    %2071 = vmatprep.subr.bf16.mxu0 0
    %2072 = vmatpush1.bf16.msra.mxu0 0
    %2073 = vmatprep.subr.bf16.mxu0 0
    %2074 = vmatpush1.bf16.msra.mxu0 0
    %2075 = vmatprep.subr.bf16.mxu0 0
    %2076 = vmatpush1.bf16.msra.mxu0 0
    %2077 = vmatprep.subr.bf16.mxu0 0
    %2078 = vmatpush1.bf16.msra.mxu0 0
    %2079 = vmatprep.subr.bf16.mxu0 0
    %2080 = vmatpush1.bf16.msra.mxu0 0
    %2081 = vmatprep.subr.bf16.mxu0 0
    %2082 = vmatpush1.bf16.msra.mxu0 0
    %2083 = vmatprep.subr.bf16.mxu0 0
    %2084 = vmatpush1.bf16.msra.mxu0 0
    %2085 = vmatprep.subr.bf16.mxu0 0
    %2086 = vmatpush1.bf16.msra.mxu0 0
    %2087 = vmatprep.subr.bf16.mxu0 0
    %2088 = vmatpush1.bf16.msra.mxu0 0
    %2089 = vmatprep.subr.bf16.mxu0 0
    %2090 = vmatpush1.bf16.msra.mxu0 0
    %2091 = vmatprep.mubr.bf16.mxu0 0
    %2092 = vmatmul.mubr.bf16.gmra.mrb[0].mxu0 %v2048
    %v2093 = vpop.f32.mrb[0].mxu0
    %v2094 = vadd.f32 %v53, %v2093
    %v2095 = vpop.f32.mrb[0].mxu0
    %v2096 = vpop.f32.mrb[0].mxu0
    %v2097 = vadd.f32 %v53, %v2096
    %v2098 = vpop.f32.mrb[0].mxu0
    %2099 = vmatprep.mubr.bf16.mxu0 0
    %2100 = vmatmul.mubr.bf16.gmra.mrb[0].mxu0 %v2051
    %v2101 = vpop.f32.mrb[0].mxu0
    %v2102 = vadd.f32 %v53, %v2101
    %v2103 = vpop.f32.mrb[0].mxu0
    %v2104 = vpop.f32.mrb[0].mxu0
    %v2105 = vadd.f32 %v53, %v2104
    %v2106 = vpop.f32.mrb[0].mxu0
    %2107 = vmatprep.mubr.bf16.mxu0 0
    %2108 = vmatmul.mubr.bf16.gmra.mrb[0].mxu0 %v2054
    %v2109 = vpop.f32.mrb[0].mxu0
    %v2110 = vadd.f32 %v53, %v2109
    %v2111 = vpop.f32.mrb[0].mxu0
    %v2112 = vpop.f32.mrb[0].mxu0
    %v2113 = vadd.f32 %v53, %v2112
    %v2114 = vpop.f32.mrb[0].mxu0
    %2115 = vmatprep.mubr.bf16.mxu0 0
    %2116 = vmatmul.mubr.bf16.gmra.mrb[0].mxu0 %v2057
    %v2117 = vpop.f32.mrb[0].mxu0
    %v2118 = vadd.f32 %v53, %v2117
    %v2119 = vpop.f32.mrb[0].mxu0
    %v2120 = vpop.f32.mrb[0].mxu0
    %v2121 = vadd.f32 %v53, %v2120
    %v2122 = vpop.f32.mrb[0].mxu0
    %2123 = vdwg.mxu0
    %v2124 = vmax.f32 %v2094, 0.0
    %v2125 = vmax.f32 %v2097, 0.0
    %v2126 = vmax.f32 %v2102, 0.0
    %v2127 = vmax.f32 %v2105, 0.0
    %v2128 = vmax.f32 %v2110, 0.0
    %v2129 = vmax.f32 %v2113, 0.0
    %v2130 = vmax.f32 %v2118, 0.0
    %v2131 = vmax.f32 %v2121, 0.0
    %v2132 = vpack.c.bf16 %v2125, %v2124
    %v2133 = vpack.c.bf16 %v2127, %v2126
    %v2134 = vpack.c.bf16 %v2129, %v2128
    %v2135 = vpack.c.bf16 %v2131, %v2130
    %s2136 = scalar_lea.vmem %s3, 144
    %v2137 = vld [vmem:[%s2136] sm:$0xf]
    %v2138 = vld [vmem:[%s2136 + $0x4] sm:$0xf]
    %v2139 = vld [vmem:[%s2136 + $0x8] sm:$0xf]
    %v2140 = vld [vmem:[%s2136 + $0xc] sm:$0xf]
    %v2145 = vunpack.c.l.b16 %v2137
    %v2146 = vunpack.c.l.b16 %v2138
    %v2147 = vunpack.c.l.b16 %v2139
    %v2148 = vunpack.c.l.b16 %v2140
    %v2149 = vpack.c.b16 %v2146, %v2145
    %v2150 = vpack.c.b16 %v2148, %v2147
    %v2154 = vsel %vm199, %v2132, 0
    %v2157 = vsel %vm199, %v2133, 0
    %v2160 = vsel %vm199, %v2134, 0
    %v2163 = vsel %vm199, %v2135, 0
    %2165 = vmatprep.subr.bf16.mxu0 0
    %2166 = vmatpush1.bf16.msra.mxu0 %v2149
    %2167 = vmatprep.subr.bf16.mxu0 0
    %2168 = vmatpush1.bf16.msra.mxu0 %v2150
    %2169 = vmatprep.subr.bf16.mxu0 0
    %2170 = vmatpush1.bf16.msra.mxu0 0
    %2171 = vmatprep.subr.bf16.mxu0 0
    %2172 = vmatpush1.bf16.msra.mxu0 0
    %2173 = vmatprep.subr.bf16.mxu0 0
    %2174 = vmatpush1.bf16.msra.mxu0 0
    %2175 = vmatprep.subr.bf16.mxu0 0
    %2176 = vmatpush1.bf16.msra.mxu0 0
    %2177 = vmatprep.subr.bf16.mxu0 0
    %2178 = vmatpush1.bf16.msra.mxu0 0
    %2179 = vmatprep.subr.bf16.mxu0 0
    %2180 = vmatpush1.bf16.msra.mxu0 0
    %2181 = vmatprep.subr.bf16.mxu0 0
    %2182 = vmatpush1.bf16.msra.mxu0 0
    %2183 = vmatprep.subr.bf16.mxu0 0
    %2184 = vmatpush1.bf16.msra.mxu0 0
    %2185 = vmatprep.subr.bf16.mxu0 0
    %2186 = vmatpush1.bf16.msra.mxu0 0
    %2187 = vmatprep.subr.bf16.mxu0 0
    %2188 = vmatpush1.bf16.msra.mxu0 0
    %2189 = vmatprep.subr.bf16.mxu0 0
    %2190 = vmatpush1.bf16.msra.mxu0 0
    %2191 = vmatprep.subr.bf16.mxu0 0
    %2192 = vmatpush1.bf16.msra.mxu0 0
    %2193 = vmatprep.subr.bf16.mxu0 0
    %2194 = vmatpush1.bf16.msra.mxu0 0
    %2195 = vmatprep.subr.bf16.mxu0 0
    %2196 = vmatpush1.bf16.msra.mxu0 0
    %2197 = vmatprep.mubr.bf16.mxu0 0
    %2198 = vmatmul.mubr.bf16.gmra.mrb[0].mxu0 %v2154
    %v2199 = vpop.f32.mrb[0].mxu0
    %v2200 = vadd.f32 0.0, %v2199
    %v2201 = vpop.f32.mrb[0].mxu0
    %v2202 = vpop.f32.mrb[0].mxu0
    %v2203 = vadd.f32 0.0, %v2202
    %v2204 = vpop.f32.mrb[0].mxu0
    %2205 = vmatprep.mubr.bf16.mxu0 0
    %2206 = vmatmul.mubr.bf16.gmra.mrb[0].mxu0 %v2157
    %v2207 = vpop.f32.mrb[0].mxu0
    %v2208 = vadd.f32 0.0, %v2207
    %v2209 = vpop.f32.mrb[0].mxu0
    %v2210 = vpop.f32.mrb[0].mxu0
    %v2211 = vadd.f32 0.0, %v2210
    %v2212 = vpop.f32.mrb[0].mxu0
    %2213 = vmatprep.mubr.bf16.mxu0 0
    %2214 = vmatmul.mubr.bf16.gmra.mrb[0].mxu0 %v2160
    %v2215 = vpop.f32.mrb[0].mxu0
    %v2216 = vadd.f32 0.0, %v2215
    %v2217 = vpop.f32.mrb[0].mxu0
    %v2218 = vpop.f32.mrb[0].mxu0
    %v2219 = vadd.f32 0.0, %v2218
    %v2220 = vpop.f32.mrb[0].mxu0
    %2221 = vmatprep.mubr.bf16.mxu0 0
    %2222 = vmatmul.mubr.bf16.gmra.mrb[0].mxu0 %v2163
    %v2223 = vpop.f32.mrb[0].mxu0
    %v2224 = vadd.f32 0.0, %v2223
    %v2225 = vpop.f32.mrb[0].mxu0
    %v2226 = vpop.f32.mrb[0].mxu0
    %v2227 = vpop.f32.mrb[0].mxu0
    %2228 = vdwg.mxu0
    %v2229 = vadd.f32 %v2012, %v2200
    %v2230 = vadd.f32 %v2013, %v2203
    %v2231 = vadd.f32 %v2014, %v2208
    %v2232 = vadd.f32 %v2015, %v2211
    %v2233 = vadd.f32 %v2016, %v2216
    %v2234 = vadd.f32 %v2017, %v2219
    %v2235 = vadd.f32 %v2018, %v2224
    %v2236 = vld [vmem:[%s0 + $0x140] sm:$0xf]
    %v2237 = vld [vmem:[%s0 + $0x144] sm:$0xf]
    %v2238 = vld [vmem:[%s0 + $0x148] sm:$0xf]
    %v2239 = vld [vmem:[%s0 + $0x14c] sm:$0xf]
    %v2240 = vld [vmem:[%s0 + $0x150] sm:$0xf]
    %v2241 = vld [vmem:[%s0 + $0x154] sm:$0xf]
    %v2242 = vld [vmem:[%s0 + $0x158] sm:$0xf]
    %v2243 = vld [vmem:[%s0 + $0x15c] sm:$0xf]
    %v2252 = vunpack.c.l.b16 %v2236
    %v2253 = vunpack.c.l.b16 %v2237
    %v2254 = vunpack.c.l.b16 %v2238
    %v2255 = vunpack.c.l.b16 %v2239
    %v2256 = vunpack.c.l.b16 %v2240
    %v2257 = vunpack.c.l.b16 %v2241
    %v2258 = vunpack.c.l.b16 %v2242
    %v2259 = vunpack.c.l.b16 %v2243
    %v2260 = vpack.c.b16 %v2253, %v2252
    %v2261 = vpack.c.b16 %v2255, %v2254
    %v2262 = vpack.c.b16 %v2257, %v2256
    %v2263 = vpack.c.b16 %v2259, %v2258
    %v2265 = vsel %vm86, %v2260, 0
    %v2268 = vsel %vm86, %v2261, 0
    %v2271 = vsel %vm86, %v2262, 0
    %v2274 = vsel %vm86, %v2263, 0
    %2276 = vmatprep.subr.bf16.mxu0 0
    %2277 = vmatpush1.bf16.msra.mxu0 %v83
    %2278 = vmatprep.subr.bf16.mxu0 0
    %2279 = vmatpush1.bf16.msra.mxu0 %v104
    %2280 = vmatprep.subr.bf16.mxu0 0
    %2281 = vmatpush1.bf16.msra.mxu0 0
    %2282 = vmatprep.subr.bf16.mxu0 0
    %2283 = vmatpush1.bf16.msra.mxu0 0
    %2284 = vmatprep.subr.bf16.mxu0 0
    %2285 = vmatpush1.bf16.msra.mxu0 0
    %2286 = vmatprep.subr.bf16.mxu0 0
    %2287 = vmatpush1.bf16.msra.mxu0 0
    %2288 = vmatprep.subr.bf16.mxu0 0
    %2289 = vmatpush1.bf16.msra.mxu0 0
    %2290 = vmatprep.subr.bf16.mxu0 0
    %2291 = vmatpush1.bf16.msra.mxu0 0
    %2292 = vmatprep.subr.bf16.mxu0 0
    %2293 = vmatpush1.bf16.msra.mxu0 0
    %2294 = vmatprep.subr.bf16.mxu0 0
    %2295 = vmatpush1.bf16.msra.mxu0 0
    %2296 = vmatprep.subr.bf16.mxu0 0
    %2297 = vmatpush1.bf16.msra.mxu0 0
    %2298 = vmatprep.subr.bf16.mxu0 0
    %2299 = vmatpush1.bf16.msra.mxu0 0
    %2300 = vmatprep.subr.bf16.mxu0 0
    %2301 = vmatpush1.bf16.msra.mxu0 0
    %2302 = vmatprep.subr.bf16.mxu0 0
    %2303 = vmatpush1.bf16.msra.mxu0 0
    %2304 = vmatprep.subr.bf16.mxu0 0
    %2305 = vmatpush1.bf16.msra.mxu0 0
    %2306 = vmatprep.subr.bf16.mxu0 0
    %2307 = vmatpush1.bf16.msra.mxu0 0
    %2308 = vmatprep.mubr.bf16.mxu0 0
    %2309 = vmatmul.mubr.bf16.gmra.mrb[0].mxu0 %v2265
    %v2310 = vpop.f32.mrb[0].mxu0
    %v2311 = vadd.f32 %v53, %v2310
    %v2312 = vpop.f32.mrb[0].mxu0
    %v2313 = vpop.f32.mrb[0].mxu0
    %v2314 = vadd.f32 %v53, %v2313
    %v2315 = vpop.f32.mrb[0].mxu0
    %2316 = vmatprep.mubr.bf16.mxu0 0
    %2317 = vmatmul.mubr.bf16.gmra.mrb[0].mxu0 %v2268
    %v2318 = vpop.f32.mrb[0].mxu0
    %v2319 = vadd.f32 %v53, %v2318
    %v2320 = vpop.f32.mrb[0].mxu0
    %v2321 = vpop.f32.mrb[0].mxu0
    %v2322 = vadd.f32 %v53, %v2321
    %v2323 = vpop.f32.mrb[0].mxu0
    %2324 = vmatprep.mubr.bf16.mxu0 0
    %2325 = vmatmul.mubr.bf16.gmra.mrb[0].mxu0 %v2271
    %v2326 = vpop.f32.mrb[0].mxu0
    %v2327 = vadd.f32 %v53, %v2326
    %v2328 = vpop.f32.mrb[0].mxu0
    %v2329 = vpop.f32.mrb[0].mxu0
    %v2330 = vadd.f32 %v53, %v2329
    %v2331 = vpop.f32.mrb[0].mxu0
    %2332 = vmatprep.mubr.bf16.mxu0 0
    %2333 = vmatmul.mubr.bf16.gmra.mrb[0].mxu0 %v2274
    %v2334 = vpop.f32.mrb[0].mxu0
    %v2335 = vadd.f32 %v53, %v2334
    %v2336 = vpop.f32.mrb[0].mxu0
    %v2337 = vpop.f32.mrb[0].mxu0
    %v2338 = vadd.f32 %v53, %v2337
    %v2339 = vpop.f32.mrb[0].mxu0
    %2340 = vdwg.mxu0
    %v2341 = vmax.f32 %v2311, 0.0
    %v2342 = vmax.f32 %v2314, 0.0
    %v2343 = vmax.f32 %v2319, 0.0
    %v2344 = vmax.f32 %v2322, 0.0
    %v2345 = vmax.f32 %v2327, 0.0
    %v2346 = vmax.f32 %v2330, 0.0
    %v2347 = vmax.f32 %v2335, 0.0
    %v2348 = vmax.f32 %v2338, 0.0
    %v2349 = vpack.c.bf16 %v2342, %v2341
    %v2350 = vpack.c.bf16 %v2344, %v2343
    %v2351 = vpack.c.bf16 %v2346, %v2345
    %v2352 = vpack.c.bf16 %v2348, %v2347
    %s2353 = scalar_lea.vmem %s3, 160
    %v2354 = vld [vmem:[%s2353] sm:$0xf]
    %v2355 = vld [vmem:[%s2353 + $0x4] sm:$0xf]
    %v2356 = vld [vmem:[%s2353 + $0x8] sm:$0xf]
    %v2357 = vld [vmem:[%s2353 + $0xc] sm:$0xf]
    %v2362 = vunpack.c.l.b16 %v2354
    %v2363 = vunpack.c.l.b16 %v2355
    %v2364 = vunpack.c.l.b16 %v2356
    %v2365 = vunpack.c.l.b16 %v2357
    %v2366 = vpack.c.b16 %v2363, %v2362
    %v2367 = vpack.c.b16 %v2365, %v2364
    %v2371 = vsel %vm199, %v2349, 0
    %v2374 = vsel %vm199, %v2350, 0
    %v2377 = vsel %vm199, %v2351, 0
    %v2380 = vsel %vm199, %v2352, 0
    %2382 = vmatprep.subr.bf16.mxu0 0
    %2383 = vmatpush1.bf16.msra.mxu0 %v2366
    %2384 = vmatprep.subr.bf16.mxu0 0
    %2385 = vmatpush1.bf16.msra.mxu0 %v2367
    %2386 = vmatprep.subr.bf16.mxu0 0
    %2387 = vmatpush1.bf16.msra.mxu0 0
    %2388 = vmatprep.subr.bf16.mxu0 0
    %2389 = vmatpush1.bf16.msra.mxu0 0
    %2390 = vmatprep.subr.bf16.mxu0 0
    %2391 = vmatpush1.bf16.msra.mxu0 0
    %2392 = vmatprep.subr.bf16.mxu0 0
    %2393 = vmatpush1.bf16.msra.mxu0 0
    %2394 = vmatprep.subr.bf16.mxu0 0
    %2395 = vmatpush1.bf16.msra.mxu0 0
    %2396 = vmatprep.subr.bf16.mxu0 0
    %2397 = vmatpush1.bf16.msra.mxu0 0
    %2398 = vmatprep.subr.bf16.mxu0 0
    %2399 = vmatpush1.bf16.msra.mxu0 0
    %2400 = vmatprep.subr.bf16.mxu0 0
    %2401 = vmatpush1.bf16.msra.mxu0 0
    %2402 = vmatprep.subr.bf16.mxu0 0
    %2403 = vmatpush1.bf16.msra.mxu0 0
    %2404 = vmatprep.subr.bf16.mxu0 0
    %2405 = vmatpush1.bf16.msra.mxu0 0
    %2406 = vmatprep.subr.bf16.mxu0 0
    %2407 = vmatpush1.bf16.msra.mxu0 0
    %2408 = vmatprep.subr.bf16.mxu0 0
    %2409 = vmatpush1.bf16.msra.mxu0 0
    %2410 = vmatprep.subr.bf16.mxu0 0
    %2411 = vmatpush1.bf16.msra.mxu0 0
    %2412 = vmatprep.subr.bf16.mxu0 0
    %2413 = vmatpush1.bf16.msra.mxu0 0
    %2414 = vmatprep.mubr.bf16.mxu0 0
    %2415 = vmatmul.mubr.bf16.gmra.mrb[0].mxu0 %v2371
    %v2416 = vpop.f32.mrb[0].mxu0
    %v2417 = vadd.f32 0.0, %v2416
    %v2418 = vpop.f32.mrb[0].mxu0
    %v2419 = vpop.f32.mrb[0].mxu0
    %v2420 = vadd.f32 0.0, %v2419
    %v2421 = vpop.f32.mrb[0].mxu0
    %2422 = vmatprep.mubr.bf16.mxu0 0
    %2423 = vmatmul.mubr.bf16.gmra.mrb[0].mxu0 %v2374
    %v2424 = vpop.f32.mrb[0].mxu0
    %v2425 = vadd.f32 0.0, %v2424
    %v2426 = vpop.f32.mrb[0].mxu0
    %v2427 = vpop.f32.mrb[0].mxu0
    %v2428 = vadd.f32 0.0, %v2427
    %v2429 = vpop.f32.mrb[0].mxu0
    %2430 = vmatprep.mubr.bf16.mxu0 0
    %2431 = vmatmul.mubr.bf16.gmra.mrb[0].mxu0 %v2377
    %v2432 = vpop.f32.mrb[0].mxu0
    %v2433 = vadd.f32 0.0, %v2432
    %v2434 = vpop.f32.mrb[0].mxu0
    %v2435 = vpop.f32.mrb[0].mxu0
    %v2436 = vadd.f32 0.0, %v2435
    %v2437 = vpop.f32.mrb[0].mxu0
    %2438 = vmatprep.mubr.bf16.mxu0 0
    %2439 = vmatmul.mubr.bf16.gmra.mrb[0].mxu0 %v2380
    %v2440 = vpop.f32.mrb[0].mxu0
    %v2441 = vadd.f32 0.0, %v2440
    %v2442 = vpop.f32.mrb[0].mxu0
    %v2443 = vpop.f32.mrb[0].mxu0
    %v2444 = vpop.f32.mrb[0].mxu0
    %2445 = vdwg.mxu0
    %v2446 = vadd.f32 %v2229, %v2417
    %v2447 = vadd.f32 %v2230, %v2420
    %v2448 = vadd.f32 %v2231, %v2425
    %v2449 = vadd.f32 %v2232, %v2428
    %v2450 = vadd.f32 %v2233, %v2433
    %v2451 = vadd.f32 %v2234, %v2436
    %v2452 = vadd.f32 %v2235, %v2441
    %v2453 = vld [vmem:[%s0 + $0x160] sm:$0xf]
    %v2454 = vld [vmem:[%s0 + $0x164] sm:$0xf]
    %v2455 = vld [vmem:[%s0 + $0x168] sm:$0xf]
    %v2456 = vld [vmem:[%s0 + $0x16c] sm:$0xf]
    %v2457 = vld [vmem:[%s0 + $0x170] sm:$0xf]
    %v2458 = vld [vmem:[%s0 + $0x174] sm:$0xf]
    %v2459 = vld [vmem:[%s0 + $0x178] sm:$0xf]
    %v2460 = vld [vmem:[%s0 + $0x17c] sm:$0xf]
    %v2469 = vunpack.c.l.b16 %v2453
    %v2470 = vunpack.c.l.b16 %v2454
    %v2471 = vunpack.c.l.b16 %v2455
    %v2472 = vunpack.c.l.b16 %v2456
    %v2473 = vunpack.c.l.b16 %v2457
    %v2474 = vunpack.c.l.b16 %v2458
    %v2475 = vunpack.c.l.b16 %v2459
    %v2476 = vunpack.c.l.b16 %v2460
    %v2477 = vpack.c.b16 %v2470, %v2469
    %v2478 = vpack.c.b16 %v2472, %v2471
    %v2479 = vpack.c.b16 %v2474, %v2473
    %v2480 = vpack.c.b16 %v2476, %v2475
    %v2482 = vsel %vm86, %v2477, 0
    %v2485 = vsel %vm86, %v2478, 0
    %v2488 = vsel %vm86, %v2479, 0
    %v2491 = vsel %vm86, %v2480, 0
    %2493 = vmatprep.subr.bf16.mxu0 0
    %2494 = vmatpush1.bf16.msra.mxu0 %v83
    %2495 = vmatprep.subr.bf16.mxu0 0
    %2496 = vmatpush1.bf16.msra.mxu0 %v104
    %2497 = vmatprep.subr.bf16.mxu0 0
    %2498 = vmatpush1.bf16.msra.mxu0 0
    %2499 = vmatprep.subr.bf16.mxu0 0
    %2500 = vmatpush1.bf16.msra.mxu0 0
    %2501 = vmatprep.subr.bf16.mxu0 0
    %2502 = vmatpush1.bf16.msra.mxu0 0
    %2503 = vmatprep.subr.bf16.mxu0 0
    %2504 = vmatpush1.bf16.msra.mxu0 0
    %2505 = vmatprep.subr.bf16.mxu0 0
    %2506 = vmatpush1.bf16.msra.mxu0 0
    %2507 = vmatprep.subr.bf16.mxu0 0
    %2508 = vmatpush1.bf16.msra.mxu0 0
    %2509 = vmatprep.subr.bf16.mxu0 0
    %2510 = vmatpush1.bf16.msra.mxu0 0
    %2511 = vmatprep.subr.bf16.mxu0 0
    %2512 = vmatpush1.bf16.msra.mxu0 0
    %2513 = vmatprep.subr.bf16.mxu0 0
    %2514 = vmatpush1.bf16.msra.mxu0 0
    %2515 = vmatprep.subr.bf16.mxu0 0
    %2516 = vmatpush1.bf16.msra.mxu0 0
    %2517 = vmatprep.subr.bf16.mxu0 0
    %2518 = vmatpush1.bf16.msra.mxu0 0
    %2519 = vmatprep.subr.bf16.mxu0 0
    %2520 = vmatpush1.bf16.msra.mxu0 0
    %2521 = vmatprep.subr.bf16.mxu0 0
    %2522 = vmatpush1.bf16.msra.mxu0 0
    %2523 = vmatprep.subr.bf16.mxu0 0
    %2524 = vmatpush1.bf16.msra.mxu0 0
    %2525 = vmatprep.mubr.bf16.mxu0 0
    %2526 = vmatmul.mubr.bf16.gmra.mrb[0].mxu0 %v2482
    %v2527 = vpop.f32.mrb[0].mxu0
    %v2528 = vadd.f32 %v53, %v2527
    %v2529 = vpop.f32.mrb[0].mxu0
    %v2530 = vpop.f32.mrb[0].mxu0
    %v2531 = vadd.f32 %v53, %v2530
    %v2532 = vpop.f32.mrb[0].mxu0
    %2533 = vmatprep.mubr.bf16.mxu0 0
    %2534 = vmatmul.mubr.bf16.gmra.mrb[0].mxu0 %v2485
    %v2535 = vpop.f32.mrb[0].mxu0
    %v2536 = vadd.f32 %v53, %v2535
    %v2537 = vpop.f32.mrb[0].mxu0
    %v2538 = vpop.f32.mrb[0].mxu0
    %v2539 = vadd.f32 %v53, %v2538
    %v2540 = vpop.f32.mrb[0].mxu0
    %2541 = vmatprep.mubr.bf16.mxu0 0
    %2542 = vmatmul.mubr.bf16.gmra.mrb[0].mxu0 %v2488
    %v2543 = vpop.f32.mrb[0].mxu0
    %v2544 = vadd.f32 %v53, %v2543
    %v2545 = vpop.f32.mrb[0].mxu0
    %v2546 = vpop.f32.mrb[0].mxu0
    %v2547 = vadd.f32 %v53, %v2546
    %v2548 = vpop.f32.mrb[0].mxu0
    %2549 = vmatprep.mubr.bf16.mxu0 0
    %2550 = vmatmul.mubr.bf16.gmra.mrb[0].mxu0 %v2491
    %v2551 = vpop.f32.mrb[0].mxu0
    %v2552 = vadd.f32 %v53, %v2551
    %v2553 = vpop.f32.mrb[0].mxu0
    %v2554 = vpop.f32.mrb[0].mxu0
    %v2555 = vadd.f32 %v53, %v2554
    %v2556 = vpop.f32.mrb[0].mxu0
    %2557 = vdwg.mxu0
    %v2558 = vmax.f32 %v2528, 0.0
    %v2559 = vmax.f32 %v2531, 0.0
    %v2560 = vmax.f32 %v2536, 0.0
    %v2561 = vmax.f32 %v2539, 0.0
    %v2562 = vmax.f32 %v2544, 0.0
    %v2563 = vmax.f32 %v2547, 0.0
    %v2564 = vmax.f32 %v2552, 0.0
    %v2565 = vmax.f32 %v2555, 0.0
    %v2566 = vpack.c.bf16 %v2559, %v2558
    %v2567 = vpack.c.bf16 %v2561, %v2560
    %v2568 = vpack.c.bf16 %v2563, %v2562
    %v2569 = vpack.c.bf16 %v2565, %v2564
    %s2570 = scalar_lea.vmem %s3, 176
    %v2571 = vld [vmem:[%s2570] sm:$0xf]
    %v2572 = vld [vmem:[%s2570 + $0x4] sm:$0xf]
    %v2573 = vld [vmem:[%s2570 + $0x8] sm:$0xf]
    %v2574 = vld [vmem:[%s2570 + $0xc] sm:$0xf]
    %v2579 = vunpack.c.l.b16 %v2571
    %v2580 = vunpack.c.l.b16 %v2572
    %v2581 = vunpack.c.l.b16 %v2573
    %v2582 = vunpack.c.l.b16 %v2574
    %v2583 = vpack.c.b16 %v2580, %v2579
    %v2584 = vpack.c.b16 %v2582, %v2581
    %v2588 = vsel %vm199, %v2566, 0
    %v2591 = vsel %vm199, %v2567, 0
    %v2594 = vsel %vm199, %v2568, 0
    %v2597 = vsel %vm199, %v2569, 0
    %2599 = vmatprep.subr.bf16.mxu0 0
    %2600 = vmatpush1.bf16.msra.mxu0 %v2583
    %2601 = vmatprep.subr.bf16.mxu0 0
    %2602 = vmatpush1.bf16.msra.mxu0 %v2584
    %2603 = vmatprep.subr.bf16.mxu0 0
    %2604 = vmatpush1.bf16.msra.mxu0 0
    %2605 = vmatprep.subr.bf16.mxu0 0
    %2606 = vmatpush1.bf16.msra.mxu0 0
    %2607 = vmatprep.subr.bf16.mxu0 0
    %2608 = vmatpush1.bf16.msra.mxu0 0
    %2609 = vmatprep.subr.bf16.mxu0 0
    %2610 = vmatpush1.bf16.msra.mxu0 0
    %2611 = vmatprep.subr.bf16.mxu0 0
    %2612 = vmatpush1.bf16.msra.mxu0 0
    %2613 = vmatprep.subr.bf16.mxu0 0
    %2614 = vmatpush1.bf16.msra.mxu0 0
    %2615 = vmatprep.subr.bf16.mxu0 0
    %2616 = vmatpush1.bf16.msra.mxu0 0
    %2617 = vmatprep.subr.bf16.mxu0 0
    %2618 = vmatpush1.bf16.msra.mxu0 0
    %2619 = vmatprep.subr.bf16.mxu0 0
    %2620 = vmatpush1.bf16.msra.mxu0 0
    %2621 = vmatprep.subr.bf16.mxu0 0
    %2622 = vmatpush1.bf16.msra.mxu0 0
    %2623 = vmatprep.subr.bf16.mxu0 0
    %2624 = vmatpush1.bf16.msra.mxu0 0
    %2625 = vmatprep.subr.bf16.mxu0 0
    %2626 = vmatpush1.bf16.msra.mxu0 0
    %2627 = vmatprep.subr.bf16.mxu0 0
    %2628 = vmatpush1.bf16.msra.mxu0 0
    %2629 = vmatprep.subr.bf16.mxu0 0
    %2630 = vmatpush1.bf16.msra.mxu0 0
    %2631 = vmatprep.mubr.bf16.mxu0 0
    %2632 = vmatmul.mubr.bf16.gmra.mrb[0].mxu0 %v2588
    %v2633 = vpop.f32.mrb[0].mxu0
    %v2634 = vadd.f32 0.0, %v2633
    %v2635 = vpop.f32.mrb[0].mxu0
    %v2636 = vpop.f32.mrb[0].mxu0
    %v2637 = vadd.f32 0.0, %v2636
    %v2638 = vpop.f32.mrb[0].mxu0
    %2639 = vmatprep.mubr.bf16.mxu0 0
    %2640 = vmatmul.mubr.bf16.gmra.mrb[0].mxu0 %v2591
    %v2641 = vpop.f32.mrb[0].mxu0
    %v2642 = vadd.f32 0.0, %v2641
    %v2643 = vpop.f32.mrb[0].mxu0
    %v2644 = vpop.f32.mrb[0].mxu0
    %v2645 = vadd.f32 0.0, %v2644
    %v2646 = vpop.f32.mrb[0].mxu0
    %2647 = vmatprep.mubr.bf16.mxu0 0
    %2648 = vmatmul.mubr.bf16.gmra.mrb[0].mxu0 %v2594
    %v2649 = vpop.f32.mrb[0].mxu0
    %v2650 = vadd.f32 0.0, %v2649
    %v2651 = vpop.f32.mrb[0].mxu0
    %v2652 = vpop.f32.mrb[0].mxu0
    %v2653 = vadd.f32 0.0, %v2652
    %v2654 = vpop.f32.mrb[0].mxu0
    %2655 = vmatprep.mubr.bf16.mxu0 0
    %2656 = vmatmul.mubr.bf16.gmra.mrb[0].mxu0 %v2597
    %v2657 = vpop.f32.mrb[0].mxu0
    %v2658 = vadd.f32 0.0, %v2657
    %v2659 = vpop.f32.mrb[0].mxu0
    %v2660 = vpop.f32.mrb[0].mxu0
    %v2661 = vpop.f32.mrb[0].mxu0
    %2662 = vdwg.mxu0
    %v2663 = vadd.f32 %v2446, %v2634
    %v2664 = vadd.f32 %v2447, %v2637
    %v2665 = vadd.f32 %v2448, %v2642
    %v2666 = vadd.f32 %v2449, %v2645
    %v2667 = vadd.f32 %v2450, %v2650
    %v2668 = vadd.f32 %v2451, %v2653
    %v2669 = vadd.f32 %v2452, %v2658
    %v2670 = vld [vmem:[%s0 + $0x180] sm:$0xf]
    %v2671 = vld [vmem:[%s0 + $0x184] sm:$0xf]
    %v2672 = vld [vmem:[%s0 + $0x188] sm:$0xf]
    %v2673 = vld [vmem:[%s0 + $0x18c] sm:$0xf]
    %v2674 = vld [vmem:[%s0 + $0x190] sm:$0xf]
    %v2675 = vld [vmem:[%s0 + $0x194] sm:$0xf]
    %v2676 = vld [vmem:[%s0 + $0x198] sm:$0xf]
    %v2677 = vld [vmem:[%s0 + $0x19c] sm:$0xf]
    %v2686 = vunpack.c.l.b16 %v2670
    %v2687 = vunpack.c.l.b16 %v2671
    %v2688 = vunpack.c.l.b16 %v2672
    %v2689 = vunpack.c.l.b16 %v2673
    %v2690 = vunpack.c.l.b16 %v2674
    %v2691 = vunpack.c.l.b16 %v2675
    %v2692 = vunpack.c.l.b16 %v2676
    %v2693 = vunpack.c.l.b16 %v2677
    %v2694 = vpack.c.b16 %v2687, %v2686
    %v2695 = vpack.c.b16 %v2689, %v2688
    %v2696 = vpack.c.b16 %v2691, %v2690
    %v2697 = vpack.c.b16 %v2693, %v2692
    %v2699 = vsel %vm86, %v2694, 0
    %v2702 = vsel %vm86, %v2695, 0
    %v2705 = vsel %vm86, %v2696, 0
    %v2708 = vsel %vm86, %v2697, 0
    %2710 = vmatprep.subr.bf16.mxu0 0
    %2711 = vmatpush1.bf16.msra.mxu0 %v83
    %2712 = vmatprep.subr.bf16.mxu0 0
    %2713 = vmatpush1.bf16.msra.mxu0 %v104
    %2714 = vmatprep.subr.bf16.mxu0 0
    %2715 = vmatpush1.bf16.msra.mxu0 0
    %2716 = vmatprep.subr.bf16.mxu0 0
    %2717 = vmatpush1.bf16.msra.mxu0 0
    %2718 = vmatprep.subr.bf16.mxu0 0
    %2719 = vmatpush1.bf16.msra.mxu0 0
    %2720 = vmatprep.subr.bf16.mxu0 0
    %2721 = vmatpush1.bf16.msra.mxu0 0
    %2722 = vmatprep.subr.bf16.mxu0 0
    %2723 = vmatpush1.bf16.msra.mxu0 0
    %2724 = vmatprep.subr.bf16.mxu0 0
    %2725 = vmatpush1.bf16.msra.mxu0 0
    %2726 = vmatprep.subr.bf16.mxu0 0
    %2727 = vmatpush1.bf16.msra.mxu0 0
    %2728 = vmatprep.subr.bf16.mxu0 0
    %2729 = vmatpush1.bf16.msra.mxu0 0
    %2730 = vmatprep.subr.bf16.mxu0 0
    %2731 = vmatpush1.bf16.msra.mxu0 0
    %2732 = vmatprep.subr.bf16.mxu0 0
    %2733 = vmatpush1.bf16.msra.mxu0 0
    %2734 = vmatprep.subr.bf16.mxu0 0
    %2735 = vmatpush1.bf16.msra.mxu0 0
    %2736 = vmatprep.subr.bf16.mxu0 0
    %2737 = vmatpush1.bf16.msra.mxu0 0
    %2738 = vmatprep.subr.bf16.mxu0 0
    %2739 = vmatpush1.bf16.msra.mxu0 0
    %2740 = vmatprep.subr.bf16.mxu0 0
    %2741 = vmatpush1.bf16.msra.mxu0 0
    %2742 = vmatprep.mubr.bf16.mxu0 0
    %2743 = vmatmul.mubr.bf16.gmra.mrb[0].mxu0 %v2699
    %v2744 = vpop.f32.mrb[0].mxu0
    %v2745 = vadd.f32 %v53, %v2744
    %v2746 = vpop.f32.mrb[0].mxu0
    %v2747 = vpop.f32.mrb[0].mxu0
    %v2748 = vadd.f32 %v53, %v2747
    %v2749 = vpop.f32.mrb[0].mxu0
    %2750 = vmatprep.mubr.bf16.mxu0 0
    %2751 = vmatmul.mubr.bf16.gmra.mrb[0].mxu0 %v2702
    %v2752 = vpop.f32.mrb[0].mxu0
    %v2753 = vadd.f32 %v53, %v2752
    %v2754 = vpop.f32.mrb[0].mxu0
    %v2755 = vpop.f32.mrb[0].mxu0
    %v2756 = vadd.f32 %v53, %v2755
    %v2757 = vpop.f32.mrb[0].mxu0
    %2758 = vmatprep.mubr.bf16.mxu0 0
    %2759 = vmatmul.mubr.bf16.gmra.mrb[0].mxu0 %v2705
    %v2760 = vpop.f32.mrb[0].mxu0
    %v2761 = vadd.f32 %v53, %v2760
    %v2762 = vpop.f32.mrb[0].mxu0
    %v2763 = vpop.f32.mrb[0].mxu0
    %v2764 = vadd.f32 %v53, %v2763
    %v2765 = vpop.f32.mrb[0].mxu0
    %2766 = vmatprep.mubr.bf16.mxu0 0
    %2767 = vmatmul.mubr.bf16.gmra.mrb[0].mxu0 %v2708
    %v2768 = vpop.f32.mrb[0].mxu0
    %v2769 = vadd.f32 %v53, %v2768
    %v2770 = vpop.f32.mrb[0].mxu0
    %v2771 = vpop.f32.mrb[0].mxu0
    %v2772 = vadd.f32 %v53, %v2771
    %v2773 = vpop.f32.mrb[0].mxu0
    %2774 = vdwg.mxu0
    %v2775 = vmax.f32 %v2745, 0.0
    %v2776 = vmax.f32 %v2748, 0.0
    %v2777 = vmax.f32 %v2753, 0.0
    %v2778 = vmax.f32 %v2756, 0.0
    %v2779 = vmax.f32 %v2761, 0.0
    %v2780 = vmax.f32 %v2764, 0.0
    %v2781 = vmax.f32 %v2769, 0.0
    %v2782 = vmax.f32 %v2772, 0.0
    %v2783 = vpack.c.bf16 %v2776, %v2775
    %v2784 = vpack.c.bf16 %v2778, %v2777
    %v2785 = vpack.c.bf16 %v2780, %v2779
    %v2786 = vpack.c.bf16 %v2782, %v2781
    %s2787 = scalar_lea.vmem %s3, 192
    %v2788 = vld [vmem:[%s2787] sm:$0xf]
    %v2789 = vld [vmem:[%s2787 + $0x4] sm:$0xf]
    %v2790 = vld [vmem:[%s2787 + $0x8] sm:$0xf]
    %v2791 = vld [vmem:[%s2787 + $0xc] sm:$0xf]
    %v2796 = vunpack.c.l.b16 %v2788
    %v2797 = vunpack.c.l.b16 %v2789
    %v2798 = vunpack.c.l.b16 %v2790
    %v2799 = vunpack.c.l.b16 %v2791
    %v2800 = vpack.c.b16 %v2797, %v2796
    %v2801 = vpack.c.b16 %v2799, %v2798
    %v2805 = vsel %vm199, %v2783, 0
    %v2808 = vsel %vm199, %v2784, 0
    %v2811 = vsel %vm199, %v2785, 0
    %v2814 = vsel %vm199, %v2786, 0
    %2816 = vmatprep.subr.bf16.mxu0 0
    %2817 = vmatpush1.bf16.msra.mxu0 %v2800
    %2818 = vmatprep.subr.bf16.mxu0 0
    %2819 = vmatpush1.bf16.msra.mxu0 %v2801
    %2820 = vmatprep.subr.bf16.mxu0 0
    %2821 = vmatpush1.bf16.msra.mxu0 0
    %2822 = vmatprep.subr.bf16.mxu0 0
    %2823 = vmatpush1.bf16.msra.mxu0 0
    %2824 = vmatprep.subr.bf16.mxu0 0
    %2825 = vmatpush1.bf16.msra.mxu0 0
    %2826 = vmatprep.subr.bf16.mxu0 0
    %2827 = vmatpush1.bf16.msra.mxu0 0
    %2828 = vmatprep.subr.bf16.mxu0 0
    %2829 = vmatpush1.bf16.msra.mxu0 0
    %2830 = vmatprep.subr.bf16.mxu0 0
    %2831 = vmatpush1.bf16.msra.mxu0 0
    %2832 = vmatprep.subr.bf16.mxu0 0
    %2833 = vmatpush1.bf16.msra.mxu0 0
    %2834 = vmatprep.subr.bf16.mxu0 0
    %2835 = vmatpush1.bf16.msra.mxu0 0
    %2836 = vmatprep.subr.bf16.mxu0 0
    %2837 = vmatpush1.bf16.msra.mxu0 0
    %2838 = vmatprep.subr.bf16.mxu0 0
    %2839 = vmatpush1.bf16.msra.mxu0 0
    %2840 = vmatprep.subr.bf16.mxu0 0
    %2841 = vmatpush1.bf16.msra.mxu0 0
    %2842 = vmatprep.subr.bf16.mxu0 0
    %2843 = vmatpush1.bf16.msra.mxu0 0
    %2844 = vmatprep.subr.bf16.mxu0 0
    %2845 = vmatpush1.bf16.msra.mxu0 0
    %2846 = vmatprep.subr.bf16.mxu0 0
    %2847 = vmatpush1.bf16.msra.mxu0 0
    %2848 = vmatprep.mubr.bf16.mxu0 0
    %2849 = vmatmul.mubr.bf16.gmra.mrb[0].mxu0 %v2805
    %v2850 = vpop.f32.mrb[0].mxu0
    %v2851 = vadd.f32 0.0, %v2850
    %v2852 = vpop.f32.mrb[0].mxu0
    %v2853 = vpop.f32.mrb[0].mxu0
    %v2854 = vadd.f32 0.0, %v2853
    %v2855 = vpop.f32.mrb[0].mxu0
    %2856 = vmatprep.mubr.bf16.mxu0 0
    %2857 = vmatmul.mubr.bf16.gmra.mrb[0].mxu0 %v2808
    %v2858 = vpop.f32.mrb[0].mxu0
    %v2859 = vadd.f32 0.0, %v2858
    %v2860 = vpop.f32.mrb[0].mxu0
    %v2861 = vpop.f32.mrb[0].mxu0
    %v2862 = vadd.f32 0.0, %v2861
    %v2863 = vpop.f32.mrb[0].mxu0
    %2864 = vmatprep.mubr.bf16.mxu0 0
    %2865 = vmatmul.mubr.bf16.gmra.mrb[0].mxu0 %v2811
    %v2866 = vpop.f32.mrb[0].mxu0
    %v2867 = vadd.f32 0.0, %v2866
    %v2868 = vpop.f32.mrb[0].mxu0
    %v2869 = vpop.f32.mrb[0].mxu0
    %v2870 = vadd.f32 0.0, %v2869
    %v2871 = vpop.f32.mrb[0].mxu0
    %2872 = vmatprep.mubr.bf16.mxu0 0
    %2873 = vmatmul.mubr.bf16.gmra.mrb[0].mxu0 %v2814
    %v2874 = vpop.f32.mrb[0].mxu0
    %v2875 = vadd.f32 0.0, %v2874
    %v2876 = vpop.f32.mrb[0].mxu0
    %v2877 = vpop.f32.mrb[0].mxu0
    %v2878 = vpop.f32.mrb[0].mxu0
    %2879 = vdwg.mxu0
    %v2880 = vadd.f32 %v2663, %v2851
    %v2881 = vadd.f32 %v2664, %v2854
    %v2882 = vadd.f32 %v2665, %v2859
    %v2883 = vadd.f32 %v2666, %v2862
    %v2884 = vadd.f32 %v2667, %v2867
    %v2885 = vadd.f32 %v2668, %v2870
    %v2886 = vadd.f32 %v2669, %v2875
    %v2887 = vld [vmem:[%s0 + $0x1a0] sm:$0xf]
    %v2888 = vld [vmem:[%s0 + $0x1a4] sm:$0xf]
    %v2889 = vld [vmem:[%s0 + $0x1a8] sm:$0xf]
    %v2890 = vld [vmem:[%s0 + $0x1ac] sm:$0xf]
    %v2891 = vld [vmem:[%s0 + $0x1b0] sm:$0xf]
    %v2892 = vld [vmem:[%s0 + $0x1b4] sm:$0xf]
    %v2893 = vld [vmem:[%s0 + $0x1b8] sm:$0xf]
    %v2894 = vld [vmem:[%s0 + $0x1bc] sm:$0xf]
    %v2903 = vunpack.c.l.b16 %v2887
    %v2904 = vunpack.c.l.b16 %v2888
    %v2905 = vunpack.c.l.b16 %v2889
    %v2906 = vunpack.c.l.b16 %v2890
    %v2907 = vunpack.c.l.b16 %v2891
    %v2908 = vunpack.c.l.b16 %v2892
    %v2909 = vunpack.c.l.b16 %v2893
    %v2910 = vunpack.c.l.b16 %v2894
    %v2911 = vpack.c.b16 %v2904, %v2903
    %v2912 = vpack.c.b16 %v2906, %v2905
    %v2913 = vpack.c.b16 %v2908, %v2907
    %v2914 = vpack.c.b16 %v2910, %v2909
    %v2916 = vsel %vm86, %v2911, 0
    %v2919 = vsel %vm86, %v2912, 0
    %v2922 = vsel %vm86, %v2913, 0
    %v2925 = vsel %vm86, %v2914, 0
    %2927 = vmatprep.subr.bf16.mxu0 0
    %2928 = vmatpush1.bf16.msra.mxu0 %v83
    %2929 = vmatprep.subr.bf16.mxu0 0
    %2930 = vmatpush1.bf16.msra.mxu0 %v104
    %2931 = vmatprep.subr.bf16.mxu0 0
    %2932 = vmatpush1.bf16.msra.mxu0 0
    %2933 = vmatprep.subr.bf16.mxu0 0
    %2934 = vmatpush1.bf16.msra.mxu0 0
    %2935 = vmatprep.subr.bf16.mxu0 0
    %2936 = vmatpush1.bf16.msra.mxu0 0
    %2937 = vmatprep.subr.bf16.mxu0 0
    %2938 = vmatpush1.bf16.msra.mxu0 0
    %2939 = vmatprep.subr.bf16.mxu0 0
    %2940 = vmatpush1.bf16.msra.mxu0 0
    %2941 = vmatprep.subr.bf16.mxu0 0
    %2942 = vmatpush1.bf16.msra.mxu0 0
    %2943 = vmatprep.subr.bf16.mxu0 0
    %2944 = vmatpush1.bf16.msra.mxu0 0
    %2945 = vmatprep.subr.bf16.mxu0 0
    %2946 = vmatpush1.bf16.msra.mxu0 0
    %2947 = vmatprep.subr.bf16.mxu0 0
    %2948 = vmatpush1.bf16.msra.mxu0 0
    %2949 = vmatprep.subr.bf16.mxu0 0
    %2950 = vmatpush1.bf16.msra.mxu0 0
    %2951 = vmatprep.subr.bf16.mxu0 0
    %2952 = vmatpush1.bf16.msra.mxu0 0
    %2953 = vmatprep.subr.bf16.mxu0 0
    %2954 = vmatpush1.bf16.msra.mxu0 0
    %2955 = vmatprep.subr.bf16.mxu0 0
    %2956 = vmatpush1.bf16.msra.mxu0 0
    %2957 = vmatprep.subr.bf16.mxu0 0
    %2958 = vmatpush1.bf16.msra.mxu0 0
    %2959 = vmatprep.mubr.bf16.mxu0 0
    %2960 = vmatmul.mubr.bf16.gmra.mrb[0].mxu0 %v2916
    %v2961 = vpop.f32.mrb[0].mxu0
    %v2962 = vadd.f32 %v53, %v2961
    %v2963 = vpop.f32.mrb[0].mxu0
    %v2964 = vpop.f32.mrb[0].mxu0
    %v2965 = vadd.f32 %v53, %v2964
    %v2966 = vpop.f32.mrb[0].mxu0
    %2967 = vmatprep.mubr.bf16.mxu0 0
    %2968 = vmatmul.mubr.bf16.gmra.mrb[0].mxu0 %v2919
    %v2969 = vpop.f32.mrb[0].mxu0
    %v2970 = vadd.f32 %v53, %v2969
    %v2971 = vpop.f32.mrb[0].mxu0
    %v2972 = vpop.f32.mrb[0].mxu0
    %v2973 = vadd.f32 %v53, %v2972
    %v2974 = vpop.f32.mrb[0].mxu0
    %2975 = vmatprep.mubr.bf16.mxu0 0
    %2976 = vmatmul.mubr.bf16.gmra.mrb[0].mxu0 %v2922
    %v2977 = vpop.f32.mrb[0].mxu0
    %v2978 = vadd.f32 %v53, %v2977
    %v2979 = vpop.f32.mrb[0].mxu0
    %v2980 = vpop.f32.mrb[0].mxu0
    %v2981 = vadd.f32 %v53, %v2980
    %v2982 = vpop.f32.mrb[0].mxu0
    %2983 = vmatprep.mubr.bf16.mxu0 0
    %2984 = vmatmul.mubr.bf16.gmra.mrb[0].mxu0 %v2925
    %v2985 = vpop.f32.mrb[0].mxu0
    %v2986 = vadd.f32 %v53, %v2985
    %v2987 = vpop.f32.mrb[0].mxu0
    %v2988 = vpop.f32.mrb[0].mxu0
    %v2989 = vadd.f32 %v53, %v2988
    %v2990 = vpop.f32.mrb[0].mxu0
    %2991 = vdwg.mxu0
    %v2992 = vmax.f32 %v2962, 0.0
    %v2993 = vmax.f32 %v2965, 0.0
    %v2994 = vmax.f32 %v2970, 0.0
    %v2995 = vmax.f32 %v2973, 0.0
    %v2996 = vmax.f32 %v2978, 0.0
    %v2997 = vmax.f32 %v2981, 0.0
    %v2998 = vmax.f32 %v2986, 0.0
    %v2999 = vmax.f32 %v2989, 0.0
    %v3000 = vpack.c.bf16 %v2993, %v2992
    %v3001 = vpack.c.bf16 %v2995, %v2994
    %v3002 = vpack.c.bf16 %v2997, %v2996
    %v3003 = vpack.c.bf16 %v2999, %v2998
    %s3004 = scalar_lea.vmem %s3, 208
    %v3005 = vld [vmem:[%s3004] sm:$0xf]
    %v3006 = vld [vmem:[%s3004 + $0x4] sm:$0xf]
    %v3007 = vld [vmem:[%s3004 + $0x8] sm:$0xf]
    %v3008 = vld [vmem:[%s3004 + $0xc] sm:$0xf]
    %v3013 = vunpack.c.l.b16 %v3005
    %v3014 = vunpack.c.l.b16 %v3006
    %v3015 = vunpack.c.l.b16 %v3007
    %v3016 = vunpack.c.l.b16 %v3008
    %v3017 = vpack.c.b16 %v3014, %v3013
    %v3018 = vpack.c.b16 %v3016, %v3015
    %v3022 = vsel %vm199, %v3000, 0
    %v3025 = vsel %vm199, %v3001, 0
    %v3028 = vsel %vm199, %v3002, 0
    %v3031 = vsel %vm199, %v3003, 0
    %3033 = vmatprep.subr.bf16.mxu0 0
    %3034 = vmatpush1.bf16.msra.mxu0 %v3017
    %3035 = vmatprep.subr.bf16.mxu0 0
    %3036 = vmatpush1.bf16.msra.mxu0 %v3018
    %3037 = vmatprep.subr.bf16.mxu0 0
    %3038 = vmatpush1.bf16.msra.mxu0 0
    %3039 = vmatprep.subr.bf16.mxu0 0
    %3040 = vmatpush1.bf16.msra.mxu0 0
    %3041 = vmatprep.subr.bf16.mxu0 0
    %3042 = vmatpush1.bf16.msra.mxu0 0
    %3043 = vmatprep.subr.bf16.mxu0 0
    %3044 = vmatpush1.bf16.msra.mxu0 0
    %3045 = vmatprep.subr.bf16.mxu0 0
    %3046 = vmatpush1.bf16.msra.mxu0 0
    %3047 = vmatprep.subr.bf16.mxu0 0
    %3048 = vmatpush1.bf16.msra.mxu0 0
    %3049 = vmatprep.subr.bf16.mxu0 0
    %3050 = vmatpush1.bf16.msra.mxu0 0
    %3051 = vmatprep.subr.bf16.mxu0 0
    %3052 = vmatpush1.bf16.msra.mxu0 0
    %3053 = vmatprep.subr.bf16.mxu0 0
    %3054 = vmatpush1.bf16.msra.mxu0 0
    %3055 = vmatprep.subr.bf16.mxu0 0
    %3056 = vmatpush1.bf16.msra.mxu0 0
    %3057 = vmatprep.subr.bf16.mxu0 0
    %3058 = vmatpush1.bf16.msra.mxu0 0
    %3059 = vmatprep.subr.bf16.mxu0 0
    %3060 = vmatpush1.bf16.msra.mxu0 0
    %3061 = vmatprep.subr.bf16.mxu0 0
    %3062 = vmatpush1.bf16.msra.mxu0 0
    %3063 = vmatprep.subr.bf16.mxu0 0
    %3064 = vmatpush1.bf16.msra.mxu0 0
    %3065 = vmatprep.mubr.bf16.mxu0 0
    %3066 = vmatmul.mubr.bf16.gmra.mrb[0].mxu0 %v3022
    %v3067 = vpop.f32.mrb[0].mxu0
    %v3068 = vadd.f32 0.0, %v3067
    %v3069 = vpop.f32.mrb[0].mxu0
    %v3070 = vpop.f32.mrb[0].mxu0
    %v3071 = vadd.f32 0.0, %v3070
    %v3072 = vpop.f32.mrb[0].mxu0
    %3073 = vmatprep.mubr.bf16.mxu0 0
    %3074 = vmatmul.mubr.bf16.gmra.mrb[0].mxu0 %v3025
    %v3075 = vpop.f32.mrb[0].mxu0
    %v3076 = vadd.f32 0.0, %v3075
    %v3077 = vpop.f32.mrb[0].mxu0
    %v3078 = vpop.f32.mrb[0].mxu0
    %v3079 = vadd.f32 0.0, %v3078
    %v3080 = vpop.f32.mrb[0].mxu0
    %3081 = vmatprep.mubr.bf16.mxu0 0
    %3082 = vmatmul.mubr.bf16.gmra.mrb[0].mxu0 %v3028
    %v3083 = vpop.f32.mrb[0].mxu0
    %v3084 = vadd.f32 0.0, %v3083
    %v3085 = vpop.f32.mrb[0].mxu0
    %v3086 = vpop.f32.mrb[0].mxu0
    %v3087 = vadd.f32 0.0, %v3086
    %v3088 = vpop.f32.mrb[0].mxu0
    %3089 = vmatprep.mubr.bf16.mxu0 0
    %3090 = vmatmul.mubr.bf16.gmra.mrb[0].mxu0 %v3031
    %v3091 = vpop.f32.mrb[0].mxu0
    %v3092 = vadd.f32 0.0, %v3091
    %v3093 = vpop.f32.mrb[0].mxu0
    %v3094 = vpop.f32.mrb[0].mxu0
    %v3095 = vpop.f32.mrb[0].mxu0
    %3096 = vdwg.mxu0
    %v3097 = vadd.f32 %v2880, %v3068
    %v3098 = vadd.f32 %v2881, %v3071
    %v3099 = vadd.f32 %v2882, %v3076
    %v3100 = vadd.f32 %v2883, %v3079
    %v3101 = vadd.f32 %v2884, %v3084
    %v3102 = vadd.f32 %v2885, %v3087
    %v3103 = vadd.f32 %v2886, %v3092
    %v3104 = vld [vmem:[%s0 + $0x1c0] sm:$0xf]
    %v3105 = vld [vmem:[%s0 + $0x1c4] sm:$0xf]
    %v3106 = vld [vmem:[%s0 + $0x1c8] sm:$0xf]
    %v3107 = vld [vmem:[%s0 + $0x1cc] sm:$0xf]
    %v3108 = vld [vmem:[%s0 + $0x1d0] sm:$0xf]
    %v3109 = vld [vmem:[%s0 + $0x1d4] sm:$0xf]
    %v3110 = vld [vmem:[%s0 + $0x1d8] sm:$0xf]
    %v3111 = vld [vmem:[%s0 + $0x1dc] sm:$0xf]
    %v3120 = vunpack.c.l.b16 %v3104
    %v3121 = vunpack.c.l.b16 %v3105
    %v3122 = vunpack.c.l.b16 %v3106
    %v3123 = vunpack.c.l.b16 %v3107
    %v3124 = vunpack.c.l.b16 %v3108
    %v3125 = vunpack.c.l.b16 %v3109
    %v3126 = vunpack.c.l.b16 %v3110
    %v3127 = vunpack.c.l.b16 %v3111
    %v3128 = vpack.c.b16 %v3121, %v3120
    %v3129 = vpack.c.b16 %v3123, %v3122
    %v3130 = vpack.c.b16 %v3125, %v3124
    %v3131 = vpack.c.b16 %v3127, %v3126
    %v3133 = vsel %vm86, %v3128, 0
    %v3136 = vsel %vm86, %v3129, 0
    %v3139 = vsel %vm86, %v3130, 0
    %v3142 = vsel %vm86, %v3131, 0
    %3144 = vmatprep.subr.bf16.mxu0 0
    %3145 = vmatpush1.bf16.msra.mxu0 %v83
    %3146 = vmatprep.subr.bf16.mxu0 0
    %3147 = vmatpush1.bf16.msra.mxu0 %v104
    %3148 = vmatprep.subr.bf16.mxu0 0
    %3149 = vmatpush1.bf16.msra.mxu0 0
    %3150 = vmatprep.subr.bf16.mxu0 0
    %3151 = vmatpush1.bf16.msra.mxu0 0
    %3152 = vmatprep.subr.bf16.mxu0 0
    %3153 = vmatpush1.bf16.msra.mxu0 0
    %3154 = vmatprep.subr.bf16.mxu0 0
    %3155 = vmatpush1.bf16.msra.mxu0 0
    %3156 = vmatprep.subr.bf16.mxu0 0
    %3157 = vmatpush1.bf16.msra.mxu0 0
    %3158 = vmatprep.subr.bf16.mxu0 0
    %3159 = vmatpush1.bf16.msra.mxu0 0
    %3160 = vmatprep.subr.bf16.mxu0 0
    %3161 = vmatpush1.bf16.msra.mxu0 0
    %3162 = vmatprep.subr.bf16.mxu0 0
    %3163 = vmatpush1.bf16.msra.mxu0 0
    %3164 = vmatprep.subr.bf16.mxu0 0
    %3165 = vmatpush1.bf16.msra.mxu0 0
    %3166 = vmatprep.subr.bf16.mxu0 0
    %3167 = vmatpush1.bf16.msra.mxu0 0
    %3168 = vmatprep.subr.bf16.mxu0 0
    %3169 = vmatpush1.bf16.msra.mxu0 0
    %3170 = vmatprep.subr.bf16.mxu0 0
    %3171 = vmatpush1.bf16.msra.mxu0 0
    %3172 = vmatprep.subr.bf16.mxu0 0
    %3173 = vmatpush1.bf16.msra.mxu0 0
    %3174 = vmatprep.subr.bf16.mxu0 0
    %3175 = vmatpush1.bf16.msra.mxu0 0
    %3176 = vmatprep.mubr.bf16.mxu0 0
    %3177 = vmatmul.mubr.bf16.gmra.mrb[0].mxu0 %v3133
    %v3178 = vpop.f32.mrb[0].mxu0
    %v3179 = vadd.f32 %v53, %v3178
    %v3180 = vpop.f32.mrb[0].mxu0
    %v3181 = vpop.f32.mrb[0].mxu0
    %v3182 = vadd.f32 %v53, %v3181
    %v3183 = vpop.f32.mrb[0].mxu0
    %3184 = vmatprep.mubr.bf16.mxu0 0
    %3185 = vmatmul.mubr.bf16.gmra.mrb[0].mxu0 %v3136
    %v3186 = vpop.f32.mrb[0].mxu0
    %v3187 = vadd.f32 %v53, %v3186
    %v3188 = vpop.f32.mrb[0].mxu0
    %v3189 = vpop.f32.mrb[0].mxu0
    %v3190 = vadd.f32 %v53, %v3189
    %v3191 = vpop.f32.mrb[0].mxu0
    %3192 = vmatprep.mubr.bf16.mxu0 0
    %3193 = vmatmul.mubr.bf16.gmra.mrb[0].mxu0 %v3139
    %v3194 = vpop.f32.mrb[0].mxu0
    %v3195 = vadd.f32 %v53, %v3194
    %v3196 = vpop.f32.mrb[0].mxu0
    %v3197 = vpop.f32.mrb[0].mxu0
    %v3198 = vadd.f32 %v53, %v3197
    %v3199 = vpop.f32.mrb[0].mxu0
    %3200 = vmatprep.mubr.bf16.mxu0 0
    %3201 = vmatmul.mubr.bf16.gmra.mrb[0].mxu0 %v3142
    %v3202 = vpop.f32.mrb[0].mxu0
    %v3203 = vadd.f32 %v53, %v3202
    %v3204 = vpop.f32.mrb[0].mxu0
    %v3205 = vpop.f32.mrb[0].mxu0
    %v3206 = vadd.f32 %v53, %v3205
    %v3207 = vpop.f32.mrb[0].mxu0
    %3208 = vdwg.mxu0
    %v3209 = vmax.f32 %v3179, 0.0
    %v3210 = vmax.f32 %v3182, 0.0
    %v3211 = vmax.f32 %v3187, 0.0
    %v3212 = vmax.f32 %v3190, 0.0
    %v3213 = vmax.f32 %v3195, 0.0
    %v3214 = vmax.f32 %v3198, 0.0
    %v3215 = vmax.f32 %v3203, 0.0
    %v3216 = vmax.f32 %v3206, 0.0
    %v3217 = vpack.c.bf16 %v3210, %v3209
    %v3218 = vpack.c.bf16 %v3212, %v3211
    %v3219 = vpack.c.bf16 %v3214, %v3213
    %v3220 = vpack.c.bf16 %v3216, %v3215
    %s3221 = scalar_lea.vmem %s3, 224
    %v3222 = vld [vmem:[%s3221] sm:$0xf]
    %v3223 = vld [vmem:[%s3221 + $0x4] sm:$0xf]
    %v3224 = vld [vmem:[%s3221 + $0x8] sm:$0xf]
    %v3225 = vld [vmem:[%s3221 + $0xc] sm:$0xf]
    %v3230 = vunpack.c.l.b16 %v3222
    %v3231 = vunpack.c.l.b16 %v3223
    %v3232 = vunpack.c.l.b16 %v3224
    %v3233 = vunpack.c.l.b16 %v3225
    %v3234 = vpack.c.b16 %v3231, %v3230
    %v3235 = vpack.c.b16 %v3233, %v3232
    %v3239 = vsel %vm199, %v3217, 0
    %v3242 = vsel %vm199, %v3218, 0
    %v3245 = vsel %vm199, %v3219, 0
    %v3248 = vsel %vm199, %v3220, 0
    %3250 = vmatprep.subr.bf16.mxu0 0
    %3251 = vmatpush1.bf16.msra.mxu0 %v3234
    %3252 = vmatprep.subr.bf16.mxu0 0
    %3253 = vmatpush1.bf16.msra.mxu0 %v3235
    %3254 = vmatprep.subr.bf16.mxu0 0
    %3255 = vmatpush1.bf16.msra.mxu0 0
    %3256 = vmatprep.subr.bf16.mxu0 0
    %3257 = vmatpush1.bf16.msra.mxu0 0
    %3258 = vmatprep.subr.bf16.mxu0 0
    %3259 = vmatpush1.bf16.msra.mxu0 0
    %3260 = vmatprep.subr.bf16.mxu0 0
    %3261 = vmatpush1.bf16.msra.mxu0 0
    %3262 = vmatprep.subr.bf16.mxu0 0
    %3263 = vmatpush1.bf16.msra.mxu0 0
    %3264 = vmatprep.subr.bf16.mxu0 0
    %3265 = vmatpush1.bf16.msra.mxu0 0
    %3266 = vmatprep.subr.bf16.mxu0 0
    %3267 = vmatpush1.bf16.msra.mxu0 0
    %3268 = vmatprep.subr.bf16.mxu0 0
    %3269 = vmatpush1.bf16.msra.mxu0 0
    %3270 = vmatprep.subr.bf16.mxu0 0
    %3271 = vmatpush1.bf16.msra.mxu0 0
    %3272 = vmatprep.subr.bf16.mxu0 0
    %3273 = vmatpush1.bf16.msra.mxu0 0
    %3274 = vmatprep.subr.bf16.mxu0 0
    %3275 = vmatpush1.bf16.msra.mxu0 0
    %3276 = vmatprep.subr.bf16.mxu0 0
    %3277 = vmatpush1.bf16.msra.mxu0 0
    %3278 = vmatprep.subr.bf16.mxu0 0
    %3279 = vmatpush1.bf16.msra.mxu0 0
    %3280 = vmatprep.subr.bf16.mxu0 0
    %3281 = vmatpush1.bf16.msra.mxu0 0
    %3282 = vmatprep.mubr.bf16.mxu0 0
    %3283 = vmatmul.mubr.bf16.gmra.mrb[0].mxu0 %v3239
    %v3284 = vpop.f32.mrb[0].mxu0
    %v3285 = vadd.f32 0.0, %v3284
    %v3286 = vpop.f32.mrb[0].mxu0
    %v3287 = vpop.f32.mrb[0].mxu0
    %v3288 = vadd.f32 0.0, %v3287
    %v3289 = vpop.f32.mrb[0].mxu0
    %3290 = vmatprep.mubr.bf16.mxu0 0
    %3291 = vmatmul.mubr.bf16.gmra.mrb[0].mxu0 %v3242
    %v3292 = vpop.f32.mrb[0].mxu0
    %v3293 = vadd.f32 0.0, %v3292
    %v3294 = vpop.f32.mrb[0].mxu0
    %v3295 = vpop.f32.mrb[0].mxu0
    %v3296 = vadd.f32 0.0, %v3295
    %v3297 = vpop.f32.mrb[0].mxu0
    %3298 = vmatprep.mubr.bf16.mxu0 0
    %3299 = vmatmul.mubr.bf16.gmra.mrb[0].mxu0 %v3245
    %v3300 = vpop.f32.mrb[0].mxu0
    %v3301 = vadd.f32 0.0, %v3300
    %v3302 = vpop.f32.mrb[0].mxu0
    %v3303 = vpop.f32.mrb[0].mxu0
    %v3304 = vadd.f32 0.0, %v3303
    %v3305 = vpop.f32.mrb[0].mxu0
    %3306 = vmatprep.mubr.bf16.mxu0 0
    %3307 = vmatmul.mubr.bf16.gmra.mrb[0].mxu0 %v3248
    %v3308 = vpop.f32.mrb[0].mxu0
    %v3309 = vadd.f32 0.0, %v3308
    %v3310 = vpop.f32.mrb[0].mxu0
    %v3311 = vpop.f32.mrb[0].mxu0
    %v3312 = vpop.f32.mrb[0].mxu0
    %3313 = vdwg.mxu0
    %v3314 = vadd.f32 %v3097, %v3285
    %v3315 = vadd.f32 %v3098, %v3288
    %v3316 = vadd.f32 %v3099, %v3293
    %v3317 = vadd.f32 %v3100, %v3296
    %v3318 = vadd.f32 %v3101, %v3301
    %v3319 = vadd.f32 %v3102, %v3304
    %v3320 = vadd.f32 %v3103, %v3309
    %v3321 = vld [vmem:[%s0 + $0x1e0] sm:$0xf]
    %v3322 = vld [vmem:[%s0 + $0x1e4] sm:$0xf]
    %v3323 = vld [vmem:[%s0 + $0x1e8] sm:$0xf]
    %v3324 = vld [vmem:[%s0 + $0x1ec] sm:$0xf]
    %v3325 = vld [vmem:[%s0 + $0x1f0] sm:$0xf]
    %v3326 = vld [vmem:[%s0 + $0x1f4] sm:$0xf]
    %v3327 = vld [vmem:[%s0 + $0x1f8] sm:$0xf]
    %v3328 = vld [vmem:[%s0 + $0x1fc] sm:$0xf]
    %v3337 = vunpack.c.l.b16 %v3321
    %v3338 = vunpack.c.l.b16 %v3322
    %v3339 = vunpack.c.l.b16 %v3323
    %v3340 = vunpack.c.l.b16 %v3324
    %v3341 = vunpack.c.l.b16 %v3325
    %v3342 = vunpack.c.l.b16 %v3326
    %v3343 = vunpack.c.l.b16 %v3327
    %v3344 = vunpack.c.l.b16 %v3328
    %v3345 = vpack.c.b16 %v3338, %v3337
    %v3346 = vpack.c.b16 %v3340, %v3339
    %v3347 = vpack.c.b16 %v3342, %v3341
    %v3348 = vpack.c.b16 %v3344, %v3343
    %v3350 = vsel %vm86, %v3345, 0
    %v3353 = vsel %vm86, %v3346, 0
    %v3356 = vsel %vm86, %v3347, 0
    %v3359 = vsel %vm86, %v3348, 0
    %3361 = vmatprep.subr.bf16.mxu0 0
    %3362 = vmatpush1.bf16.msra.mxu0 %v83
    %3363 = vmatprep.subr.bf16.mxu0 0
    %3364 = vmatpush1.bf16.msra.mxu0 %v104
    %3365 = vmatprep.subr.bf16.mxu0 0
    %3366 = vmatpush1.bf16.msra.mxu0 0
    %3367 = vmatprep.subr.bf16.mxu0 0
    %3368 = vmatpush1.bf16.msra.mxu0 0
    %3369 = vmatprep.subr.bf16.mxu0 0
    %3370 = vmatpush1.bf16.msra.mxu0 0
    %3371 = vmatprep.subr.bf16.mxu0 0
    %3372 = vmatpush1.bf16.msra.mxu0 0
    %3373 = vmatprep.subr.bf16.mxu0 0
    %3374 = vmatpush1.bf16.msra.mxu0 0
    %3375 = vmatprep.subr.bf16.mxu0 0
    %3376 = vmatpush1.bf16.msra.mxu0 0
    %3377 = vmatprep.subr.bf16.mxu0 0
    %3378 = vmatpush1.bf16.msra.mxu0 0
    %3379 = vmatprep.subr.bf16.mxu0 0
    %3380 = vmatpush1.bf16.msra.mxu0 0
    %3381 = vmatprep.subr.bf16.mxu0 0
    %3382 = vmatpush1.bf16.msra.mxu0 0
    %3383 = vmatprep.subr.bf16.mxu0 0
    %3384 = vmatpush1.bf16.msra.mxu0 0
    %3385 = vmatprep.subr.bf16.mxu0 0
    %3386 = vmatpush1.bf16.msra.mxu0 0
    %3387 = vmatprep.subr.bf16.mxu0 0
    %3388 = vmatpush1.bf16.msra.mxu0 0
    %3389 = vmatprep.subr.bf16.mxu0 0
    %3390 = vmatpush1.bf16.msra.mxu0 0
    %3391 = vmatprep.subr.bf16.mxu0 0
    %3392 = vmatpush1.bf16.msra.mxu0 0
    %3393 = vmatprep.mubr.bf16.mxu0 0
    %3394 = vmatmul.mubr.bf16.gmra.mrb[0].mxu0 %v3350
    %v3395 = vpop.f32.mrb[0].mxu0
    %v3396 = vadd.f32 %v53, %v3395
    %v3397 = vpop.f32.mrb[0].mxu0
    %v3398 = vpop.f32.mrb[0].mxu0
    %v3399 = vadd.f32 %v53, %v3398
    %v3400 = vpop.f32.mrb[0].mxu0
    %3401 = vmatprep.mubr.bf16.mxu0 0
    %3402 = vmatmul.mubr.bf16.gmra.mrb[0].mxu0 %v3353
    %v3403 = vpop.f32.mrb[0].mxu0
    %v3404 = vadd.f32 %v53, %v3403
    %v3405 = vpop.f32.mrb[0].mxu0
    %v3406 = vpop.f32.mrb[0].mxu0
    %v3407 = vadd.f32 %v53, %v3406
    %v3408 = vpop.f32.mrb[0].mxu0
    %3409 = vmatprep.mubr.bf16.mxu0 0
    %3410 = vmatmul.mubr.bf16.gmra.mrb[0].mxu0 %v3356
    %v3411 = vpop.f32.mrb[0].mxu0
    %v3412 = vadd.f32 %v53, %v3411
    %v3413 = vpop.f32.mrb[0].mxu0
    %v3414 = vpop.f32.mrb[0].mxu0
    %v3415 = vadd.f32 %v53, %v3414
    %v3416 = vpop.f32.mrb[0].mxu0
    %3417 = vmatprep.mubr.bf16.mxu0 0
    %3418 = vmatmul.mubr.bf16.gmra.mrb[0].mxu0 %v3359
    %v3419 = vpop.f32.mrb[0].mxu0
    %v3420 = vadd.f32 %v53, %v3419
    %v3421 = vpop.f32.mrb[0].mxu0
    %v3422 = vpop.f32.mrb[0].mxu0
    %v3423 = vadd.f32 %v53, %v3422
    %v3424 = vpop.f32.mrb[0].mxu0
    %3425 = vdwg.mxu0
    %v3426 = vmax.f32 %v3396, 0.0
    %v3427 = vmax.f32 %v3399, 0.0
    %v3428 = vmax.f32 %v3404, 0.0
    %v3429 = vmax.f32 %v3407, 0.0
    %v3430 = vmax.f32 %v3412, 0.0
    %v3431 = vmax.f32 %v3415, 0.0
    %v3432 = vmax.f32 %v3420, 0.0
    %v3433 = vmax.f32 %v3423, 0.0
    %v3434 = vpack.c.bf16 %v3427, %v3426
    %v3435 = vpack.c.bf16 %v3429, %v3428
    %v3436 = vpack.c.bf16 %v3431, %v3430
    %v3437 = vpack.c.bf16 %v3433, %v3432
    %s3438 = scalar_lea.vmem %s3, 240
    %v3439 = vld [vmem:[%s3438] sm:$0xf]
    %v3440 = vld [vmem:[%s3438 + $0x4] sm:$0xf]
    %v3441 = vld [vmem:[%s3438 + $0x8] sm:$0xf]
    %v3442 = vld [vmem:[%s3438 + $0xc] sm:$0xf]
    %v3447 = vunpack.c.l.b16 %v3439
    %v3448 = vunpack.c.l.b16 %v3440
    %v3449 = vunpack.c.l.b16 %v3441
    %v3450 = vunpack.c.l.b16 %v3442
    %v3451 = vpack.c.b16 %v3448, %v3447
    %v3452 = vpack.c.b16 %v3450, %v3449
    %v3456 = vsel %vm199, %v3434, 0
    %v3459 = vsel %vm199, %v3435, 0
    %v3462 = vsel %vm199, %v3436, 0
    %v3465 = vsel %vm199, %v3437, 0
    %3467 = vmatprep.subr.bf16.mxu0 0
    %3468 = vmatpush1.bf16.msra.mxu0 %v3451
    %3469 = vmatprep.subr.bf16.mxu0 0
    %3470 = vmatpush1.bf16.msra.mxu0 %v3452
    %3471 = vmatprep.subr.bf16.mxu0 0
    %3472 = vmatpush1.bf16.msra.mxu0 0
    %3473 = vmatprep.subr.bf16.mxu0 0
    %3474 = vmatpush1.bf16.msra.mxu0 0
    %3475 = vmatprep.subr.bf16.mxu0 0
    %3476 = vmatpush1.bf16.msra.mxu0 0
    %3477 = vmatprep.subr.bf16.mxu0 0
    %3478 = vmatpush1.bf16.msra.mxu0 0
    %3479 = vmatprep.subr.bf16.mxu0 0
    %3480 = vmatpush1.bf16.msra.mxu0 0
    %3481 = vmatprep.subr.bf16.mxu0 0
    %3482 = vmatpush1.bf16.msra.mxu0 0
    %3483 = vmatprep.subr.bf16.mxu0 0
    %3484 = vmatpush1.bf16.msra.mxu0 0
    %3485 = vmatprep.subr.bf16.mxu0 0
    %3486 = vmatpush1.bf16.msra.mxu0 0
    %3487 = vmatprep.subr.bf16.mxu0 0
    %3488 = vmatpush1.bf16.msra.mxu0 0
    %3489 = vmatprep.subr.bf16.mxu0 0
    %3490 = vmatpush1.bf16.msra.mxu0 0
    %3491 = vmatprep.subr.bf16.mxu0 0
    %3492 = vmatpush1.bf16.msra.mxu0 0
    %3493 = vmatprep.subr.bf16.mxu0 0
    %3494 = vmatpush1.bf16.msra.mxu0 0
    %3495 = vmatprep.subr.bf16.mxu0 0
    %3496 = vmatpush1.bf16.msra.mxu0 0
    %3497 = vmatprep.subr.bf16.mxu0 0
    %3498 = vmatpush1.bf16.msra.mxu0 0
    %3499 = vmatprep.mubr.bf16.mxu0 0
    %3500 = vmatmul.mubr.bf16.gmra.mrb[0].mxu0 %v3456
    %v3501 = vpop.f32.mrb[0].mxu0
    %v3502 = vadd.f32 0.0, %v3501
    %v3503 = vpop.f32.mrb[0].mxu0
    %v3504 = vpop.f32.mrb[0].mxu0
    %v3505 = vadd.f32 0.0, %v3504
    %v3506 = vpop.f32.mrb[0].mxu0
    %3507 = vmatprep.mubr.bf16.mxu0 0
    %3508 = vmatmul.mubr.bf16.gmra.mrb[0].mxu0 %v3459
    %v3509 = vpop.f32.mrb[0].mxu0
    %v3510 = vadd.f32 0.0, %v3509
    %v3511 = vpop.f32.mrb[0].mxu0
    %v3512 = vpop.f32.mrb[0].mxu0
    %v3513 = vadd.f32 0.0, %v3512
    %v3514 = vpop.f32.mrb[0].mxu0
    %3515 = vmatprep.mubr.bf16.mxu0 0
    %3516 = vmatmul.mubr.bf16.gmra.mrb[0].mxu0 %v3462
    %v3517 = vpop.f32.mrb[0].mxu0
    %v3518 = vadd.f32 0.0, %v3517
    %v3519 = vpop.f32.mrb[0].mxu0
    %v3520 = vpop.f32.mrb[0].mxu0
    %v3521 = vadd.f32 0.0, %v3520
    %v3522 = vpop.f32.mrb[0].mxu0
    %3523 = vmatprep.mubr.bf16.mxu0 0
    %3524 = vmatmul.mubr.bf16.gmra.mrb[0].mxu0 %v3465
    %v3525 = vpop.f32.mrb[0].mxu0
    %v3526 = vadd.f32 0.0, %v3525
    %v3527 = vpop.f32.mrb[0].mxu0
    %v3528 = vpop.f32.mrb[0].mxu0
    %v3529 = vpop.f32.mrb[0].mxu0
    %3530 = vdwg.mxu0
    %v3531 = vadd.f32 %v3314, %v3502
    %v3532 = vadd.f32 %v3315, %v3505
    %v3533 = vadd.f32 %v3316, %v3510
    %v3534 = vadd.f32 %v3317, %v3513
    %v3535 = vadd.f32 %v3318, %v3518
    %v3536 = vadd.f32 %v3319, %v3521
    %v3537 = vadd.f32 %v3320, %v3526
    %v3538 = vld [vmem:[%s0 + $0x200] sm:$0xf]
    %v3539 = vld [vmem:[%s0 + $0x204] sm:$0xf]
    %v3540 = vld [vmem:[%s0 + $0x208] sm:$0xf]
    %v3541 = vld [vmem:[%s0 + $0x20c] sm:$0xf]
    %v3542 = vld [vmem:[%s0 + $0x210] sm:$0xf]
    %v3543 = vld [vmem:[%s0 + $0x214] sm:$0xf]
    %v3544 = vld [vmem:[%s0 + $0x218] sm:$0xf]
    %v3545 = vld [vmem:[%s0 + $0x21c] sm:$0xf]
    %v3554 = vunpack.c.l.b16 %v3538
    %v3555 = vunpack.c.l.b16 %v3539
    %v3556 = vunpack.c.l.b16 %v3540
    %v3557 = vunpack.c.l.b16 %v3541
    %v3558 = vunpack.c.l.b16 %v3542
    %v3559 = vunpack.c.l.b16 %v3543
    %v3560 = vunpack.c.l.b16 %v3544
    %v3561 = vunpack.c.l.b16 %v3545
    %v3562 = vpack.c.b16 %v3555, %v3554
    %v3563 = vpack.c.b16 %v3557, %v3556
    %v3564 = vpack.c.b16 %v3559, %v3558
    %v3565 = vpack.c.b16 %v3561, %v3560
    %v3567 = vsel %vm86, %v3562, 0
    %v3570 = vsel %vm86, %v3563, 0
    %v3573 = vsel %vm86, %v3564, 0
    %v3576 = vsel %vm86, %v3565, 0
    %3578 = vmatprep.subr.bf16.mxu0 0
    %3579 = vmatpush1.bf16.msra.mxu0 %v83
    %3580 = vmatprep.subr.bf16.mxu0 0
    %3581 = vmatpush1.bf16.msra.mxu0 %v104
    %3582 = vmatprep.subr.bf16.mxu0 0
    %3583 = vmatpush1.bf16.msra.mxu0 0
    %3584 = vmatprep.subr.bf16.mxu0 0
    %3585 = vmatpush1.bf16.msra.mxu0 0
    %3586 = vmatprep.subr.bf16.mxu0 0
    %3587 = vmatpush1.bf16.msra.mxu0 0
    %3588 = vmatprep.subr.bf16.mxu0 0
    %3589 = vmatpush1.bf16.msra.mxu0 0
    %3590 = vmatprep.subr.bf16.mxu0 0
    %3591 = vmatpush1.bf16.msra.mxu0 0
    %3592 = vmatprep.subr.bf16.mxu0 0
    %3593 = vmatpush1.bf16.msra.mxu0 0
    %3594 = vmatprep.subr.bf16.mxu0 0
    %3595 = vmatpush1.bf16.msra.mxu0 0
    %3596 = vmatprep.subr.bf16.mxu0 0
    %3597 = vmatpush1.bf16.msra.mxu0 0
    %3598 = vmatprep.subr.bf16.mxu0 0
    %3599 = vmatpush1.bf16.msra.mxu0 0
    %3600 = vmatprep.subr.bf16.mxu0 0
    %3601 = vmatpush1.bf16.msra.mxu0 0
    %3602 = vmatprep.subr.bf16.mxu0 0
    %3603 = vmatpush1.bf16.msra.mxu0 0
    %3604 = vmatprep.subr.bf16.mxu0 0
    %3605 = vmatpush1.bf16.msra.mxu0 0
    %3606 = vmatprep.subr.bf16.mxu0 0
    %3607 = vmatpush1.bf16.msra.mxu0 0
    %3608 = vmatprep.subr.bf16.mxu0 0
    %3609 = vmatpush1.bf16.msra.mxu0 0
    %3610 = vmatprep.mubr.bf16.mxu0 0
    %3611 = vmatmul.mubr.bf16.gmra.mrb[0].mxu0 %v3567
    %v3612 = vpop.f32.mrb[0].mxu0
    %v3613 = vadd.f32 %v53, %v3612
    %v3614 = vpop.f32.mrb[0].mxu0
    %v3615 = vpop.f32.mrb[0].mxu0
    %v3616 = vadd.f32 %v53, %v3615
    %v3617 = vpop.f32.mrb[0].mxu0
    %3618 = vmatprep.mubr.bf16.mxu0 0
    %3619 = vmatmul.mubr.bf16.gmra.mrb[0].mxu0 %v3570
    %v3620 = vpop.f32.mrb[0].mxu0
    %v3621 = vadd.f32 %v53, %v3620
    %v3622 = vpop.f32.mrb[0].mxu0
    %v3623 = vpop.f32.mrb[0].mxu0
    %v3624 = vadd.f32 %v53, %v3623
    %v3625 = vpop.f32.mrb[0].mxu0
    %3626 = vmatprep.mubr.bf16.mxu0 0
    %3627 = vmatmul.mubr.bf16.gmra.mrb[0].mxu0 %v3573
    %v3628 = vpop.f32.mrb[0].mxu0
    %v3629 = vadd.f32 %v53, %v3628
    %v3630 = vpop.f32.mrb[0].mxu0
    %v3631 = vpop.f32.mrb[0].mxu0
    %v3632 = vadd.f32 %v53, %v3631
    %v3633 = vpop.f32.mrb[0].mxu0
    %3634 = vmatprep.mubr.bf16.mxu0 0
    %3635 = vmatmul.mubr.bf16.gmra.mrb[0].mxu0 %v3576
    %v3636 = vpop.f32.mrb[0].mxu0
    %v3637 = vadd.f32 %v53, %v3636
    %v3638 = vpop.f32.mrb[0].mxu0
    %v3639 = vpop.f32.mrb[0].mxu0
    %v3640 = vadd.f32 %v53, %v3639
    %v3641 = vpop.f32.mrb[0].mxu0
    %3642 = vdwg.mxu0
    %v3643 = vmax.f32 %v3613, 0.0
    %v3644 = vmax.f32 %v3616, 0.0
    %v3645 = vmax.f32 %v3621, 0.0
    %v3646 = vmax.f32 %v3624, 0.0
    %v3647 = vmax.f32 %v3629, 0.0
    %v3648 = vmax.f32 %v3632, 0.0
    %v3649 = vmax.f32 %v3637, 0.0
    %v3650 = vmax.f32 %v3640, 0.0
    %v3651 = vpack.c.bf16 %v3644, %v3643
    %v3652 = vpack.c.bf16 %v3646, %v3645
    %v3653 = vpack.c.bf16 %v3648, %v3647
    %v3654 = vpack.c.bf16 %v3650, %v3649
    %s3655 = scalar_lea.vmem %s3, 256
    %v3656 = vld [vmem:[%s3655] sm:$0xf]
    %v3657 = vld [vmem:[%s3655 + $0x4] sm:$0xf]
    %v3658 = vld [vmem:[%s3655 + $0x8] sm:$0xf]
    %v3659 = vld [vmem:[%s3655 + $0xc] sm:$0xf]
    %v3664 = vunpack.c.l.b16 %v3656
    %v3665 = vunpack.c.l.b16 %v3657
    %v3666 = vunpack.c.l.b16 %v3658
    %v3667 = vunpack.c.l.b16 %v3659
    %v3668 = vpack.c.b16 %v3665, %v3664
    %v3669 = vpack.c.b16 %v3667, %v3666
    %v3673 = vsel %vm199, %v3651, 0
    %v3676 = vsel %vm199, %v3652, 0
    %v3679 = vsel %vm199, %v3653, 0
    %v3682 = vsel %vm199, %v3654, 0
    %3684 = vmatprep.subr.bf16.mxu0 0
    %3685 = vmatpush1.bf16.msra.mxu0 %v3668
    %3686 = vmatprep.subr.bf16.mxu0 0
    %3687 = vmatpush1.bf16.msra.mxu0 %v3669
    %3688 = vmatprep.subr.bf16.mxu0 0
    %3689 = vmatpush1.bf16.msra.mxu0 0
    %3690 = vmatprep.subr.bf16.mxu0 0
    %3691 = vmatpush1.bf16.msra.mxu0 0
    %3692 = vmatprep.subr.bf16.mxu0 0
    %3693 = vmatpush1.bf16.msra.mxu0 0
    %3694 = vmatprep.subr.bf16.mxu0 0
    %3695 = vmatpush1.bf16.msra.mxu0 0
    %3696 = vmatprep.subr.bf16.mxu0 0
    %3697 = vmatpush1.bf16.msra.mxu0 0
    %3698 = vmatprep.subr.bf16.mxu0 0
    %3699 = vmatpush1.bf16.msra.mxu0 0
    %3700 = vmatprep.subr.bf16.mxu0 0
    %3701 = vmatpush1.bf16.msra.mxu0 0
    %3702 = vmatprep.subr.bf16.mxu0 0
    %3703 = vmatpush1.bf16.msra.mxu0 0
    %3704 = vmatprep.subr.bf16.mxu0 0
    %3705 = vmatpush1.bf16.msra.mxu0 0
    %3706 = vmatprep.subr.bf16.mxu0 0
    %3707 = vmatpush1.bf16.msra.mxu0 0
    %3708 = vmatprep.subr.bf16.mxu0 0
    %3709 = vmatpush1.bf16.msra.mxu0 0
    %3710 = vmatprep.subr.bf16.mxu0 0
    %3711 = vmatpush1.bf16.msra.mxu0 0
    %3712 = vmatprep.subr.bf16.mxu0 0
    %3713 = vmatpush1.bf16.msra.mxu0 0
    %3714 = vmatprep.subr.bf16.mxu0 0
    %3715 = vmatpush1.bf16.msra.mxu0 0
    %3716 = vmatprep.mubr.bf16.mxu0 0
    %3717 = vmatmul.mubr.bf16.gmra.mrb[0].mxu0 %v3673
    %v3718 = vpop.f32.mrb[0].mxu0
    %v3719 = vadd.f32 0.0, %v3718
    %v3720 = vpop.f32.mrb[0].mxu0
    %v3721 = vpop.f32.mrb[0].mxu0
    %v3722 = vadd.f32 0.0, %v3721
    %v3723 = vpop.f32.mrb[0].mxu0
    %3724 = vmatprep.mubr.bf16.mxu0 0
    %3725 = vmatmul.mubr.bf16.gmra.mrb[0].mxu0 %v3676
    %v3726 = vpop.f32.mrb[0].mxu0
    %v3727 = vadd.f32 0.0, %v3726
    %v3728 = vpop.f32.mrb[0].mxu0
    %v3729 = vpop.f32.mrb[0].mxu0
    %v3730 = vadd.f32 0.0, %v3729
    %v3731 = vpop.f32.mrb[0].mxu0
    %3732 = vmatprep.mubr.bf16.mxu0 0
    %3733 = vmatmul.mubr.bf16.gmra.mrb[0].mxu0 %v3679
    %v3734 = vpop.f32.mrb[0].mxu0
    %v3735 = vadd.f32 0.0, %v3734
    %v3736 = vpop.f32.mrb[0].mxu0
    %v3737 = vpop.f32.mrb[0].mxu0
    %v3738 = vadd.f32 0.0, %v3737
    %v3739 = vpop.f32.mrb[0].mxu0
    %3740 = vmatprep.mubr.bf16.mxu0 0
    %3741 = vmatmul.mubr.bf16.gmra.mrb[0].mxu0 %v3682
    %v3742 = vpop.f32.mrb[0].mxu0
    %v3743 = vadd.f32 0.0, %v3742
    %v3744 = vpop.f32.mrb[0].mxu0
    %v3745 = vpop.f32.mrb[0].mxu0
    %v3746 = vpop.f32.mrb[0].mxu0
    %3747 = vdwg.mxu0
    %v3748 = vadd.f32 %v3531, %v3719
    %v3749 = vadd.f32 %v3532, %v3722
    %v3750 = vadd.f32 %v3533, %v3727
    %v3751 = vadd.f32 %v3534, %v3730
    %v3752 = vadd.f32 %v3535, %v3735
    %v3753 = vadd.f32 %v3536, %v3738
    %v3754 = vadd.f32 %v3537, %v3743
    %v3755 = vld [vmem:[%s0 + $0x220] sm:$0xf]
    %v3756 = vld [vmem:[%s0 + $0x224] sm:$0xf]
    %v3757 = vld [vmem:[%s0 + $0x228] sm:$0xf]
    %v3758 = vld [vmem:[%s0 + $0x22c] sm:$0xf]
    %v3759 = vld [vmem:[%s0 + $0x230] sm:$0xf]
    %v3760 = vld [vmem:[%s0 + $0x234] sm:$0xf]
    %v3761 = vld [vmem:[%s0 + $0x238] sm:$0xf]
    %v3762 = vld [vmem:[%s0 + $0x23c] sm:$0xf]
    %v3771 = vunpack.c.l.b16 %v3755
    %v3772 = vunpack.c.l.b16 %v3756
    %v3773 = vunpack.c.l.b16 %v3757
    %v3774 = vunpack.c.l.b16 %v3758
    %v3775 = vunpack.c.l.b16 %v3759
    %v3776 = vunpack.c.l.b16 %v3760
    %v3777 = vunpack.c.l.b16 %v3761
    %v3778 = vunpack.c.l.b16 %v3762
    %v3779 = vpack.c.b16 %v3772, %v3771
    %v3780 = vpack.c.b16 %v3774, %v3773
    %v3781 = vpack.c.b16 %v3776, %v3775
    %v3782 = vpack.c.b16 %v3778, %v3777
    %v3784 = vsel %vm86, %v3779, 0
    %v3787 = vsel %vm86, %v3780, 0
    %v3790 = vsel %vm86, %v3781, 0
    %v3793 = vsel %vm86, %v3782, 0
    %3795 = vmatprep.subr.bf16.mxu0 0
    %3796 = vmatpush1.bf16.msra.mxu0 %v83
    %3797 = vmatprep.subr.bf16.mxu0 0
    %3798 = vmatpush1.bf16.msra.mxu0 %v104
    %3799 = vmatprep.subr.bf16.mxu0 0
    %3800 = vmatpush1.bf16.msra.mxu0 0
    %3801 = vmatprep.subr.bf16.mxu0 0
    %3802 = vmatpush1.bf16.msra.mxu0 0
    %3803 = vmatprep.subr.bf16.mxu0 0
    %3804 = vmatpush1.bf16.msra.mxu0 0
    %3805 = vmatprep.subr.bf16.mxu0 0
    %3806 = vmatpush1.bf16.msra.mxu0 0
    %3807 = vmatprep.subr.bf16.mxu0 0
    %3808 = vmatpush1.bf16.msra.mxu0 0
    %3809 = vmatprep.subr.bf16.mxu0 0
    %3810 = vmatpush1.bf16.msra.mxu0 0
    %3811 = vmatprep.subr.bf16.mxu0 0
    %3812 = vmatpush1.bf16.msra.mxu0 0
    %3813 = vmatprep.subr.bf16.mxu0 0
    %3814 = vmatpush1.bf16.msra.mxu0 0
    %3815 = vmatprep.subr.bf16.mxu0 0
    %3816 = vmatpush1.bf16.msra.mxu0 0
    %3817 = vmatprep.subr.bf16.mxu0 0
    %3818 = vmatpush1.bf16.msra.mxu0 0
    %3819 = vmatprep.subr.bf16.mxu0 0
    %3820 = vmatpush1.bf16.msra.mxu0 0
    %3821 = vmatprep.subr.bf16.mxu0 0
    %3822 = vmatpush1.bf16.msra.mxu0 0
    %3823 = vmatprep.subr.bf16.mxu0 0
    %3824 = vmatpush1.bf16.msra.mxu0 0
    %3825 = vmatprep.subr.bf16.mxu0 0
    %3826 = vmatpush1.bf16.msra.mxu0 0
    %3827 = vmatprep.mubr.bf16.mxu0 0
    %3828 = vmatmul.mubr.bf16.gmra.mrb[0].mxu0 %v3784
    %v3829 = vpop.f32.mrb[0].mxu0
    %v3830 = vadd.f32 %v53, %v3829
    %v3831 = vpop.f32.mrb[0].mxu0
    %v3832 = vpop.f32.mrb[0].mxu0
    %v3833 = vadd.f32 %v53, %v3832
    %v3834 = vpop.f32.mrb[0].mxu0
    %3835 = vmatprep.mubr.bf16.mxu0 0
    %3836 = vmatmul.mubr.bf16.gmra.mrb[0].mxu0 %v3787
    %v3837 = vpop.f32.mrb[0].mxu0
    %v3838 = vadd.f32 %v53, %v3837
    %v3839 = vpop.f32.mrb[0].mxu0
    %v3840 = vpop.f32.mrb[0].mxu0
    %v3841 = vadd.f32 %v53, %v3840
    %v3842 = vpop.f32.mrb[0].mxu0
    %3843 = vmatprep.mubr.bf16.mxu0 0
    %3844 = vmatmul.mubr.bf16.gmra.mrb[0].mxu0 %v3790
    %v3845 = vpop.f32.mrb[0].mxu0
    %v3846 = vadd.f32 %v53, %v3845
    %v3847 = vpop.f32.mrb[0].mxu0
    %v3848 = vpop.f32.mrb[0].mxu0
    %v3849 = vadd.f32 %v53, %v3848
    %v3850 = vpop.f32.mrb[0].mxu0
    %3851 = vmatprep.mubr.bf16.mxu0 0
    %3852 = vmatmul.mubr.bf16.gmra.mrb[0].mxu0 %v3793
    %v3853 = vpop.f32.mrb[0].mxu0
    %v3854 = vadd.f32 %v53, %v3853
    %v3855 = vpop.f32.mrb[0].mxu0
    %v3856 = vpop.f32.mrb[0].mxu0
    %v3857 = vadd.f32 %v53, %v3856
    %v3858 = vpop.f32.mrb[0].mxu0
    %3859 = vdwg.mxu0
    %v3860 = vmax.f32 %v3830, 0.0
    %v3861 = vmax.f32 %v3833, 0.0
    %v3862 = vmax.f32 %v3838, 0.0
    %v3863 = vmax.f32 %v3841, 0.0
    %v3864 = vmax.f32 %v3846, 0.0
    %v3865 = vmax.f32 %v3849, 0.0
    %v3866 = vmax.f32 %v3854, 0.0
    %v3867 = vmax.f32 %v3857, 0.0
    %v3868 = vpack.c.bf16 %v3861, %v3860
    %v3869 = vpack.c.bf16 %v3863, %v3862
    %v3870 = vpack.c.bf16 %v3865, %v3864
    %v3871 = vpack.c.bf16 %v3867, %v3866
    %s3872 = scalar_lea.vmem %s3, 272
    %v3873 = vld [vmem:[%s3872] sm:$0xf]
    %v3874 = vld [vmem:[%s3872 + $0x4] sm:$0xf]
    %v3875 = vld [vmem:[%s3872 + $0x8] sm:$0xf]
    %v3876 = vld [vmem:[%s3872 + $0xc] sm:$0xf]
    %v3881 = vunpack.c.l.b16 %v3873
    %v3882 = vunpack.c.l.b16 %v3874
    %v3883 = vunpack.c.l.b16 %v3875
    %v3884 = vunpack.c.l.b16 %v3876
    %v3885 = vpack.c.b16 %v3882, %v3881
    %v3886 = vpack.c.b16 %v3884, %v3883
    %v3890 = vsel %vm199, %v3868, 0
    %v3893 = vsel %vm199, %v3869, 0
    %v3896 = vsel %vm199, %v3870, 0
    %v3899 = vsel %vm199, %v3871, 0
    %3901 = vmatprep.subr.bf16.mxu0 0
    %3902 = vmatpush1.bf16.msra.mxu0 %v3885
    %3903 = vmatprep.subr.bf16.mxu0 0
    %3904 = vmatpush1.bf16.msra.mxu0 %v3886
    %3905 = vmatprep.subr.bf16.mxu0 0
    %3906 = vmatpush1.bf16.msra.mxu0 0
    %3907 = vmatprep.subr.bf16.mxu0 0
    %3908 = vmatpush1.bf16.msra.mxu0 0
    %3909 = vmatprep.subr.bf16.mxu0 0
    %3910 = vmatpush1.bf16.msra.mxu0 0
    %3911 = vmatprep.subr.bf16.mxu0 0
    %3912 = vmatpush1.bf16.msra.mxu0 0
    %3913 = vmatprep.subr.bf16.mxu0 0
    %3914 = vmatpush1.bf16.msra.mxu0 0
    %3915 = vmatprep.subr.bf16.mxu0 0
    %3916 = vmatpush1.bf16.msra.mxu0 0
    %3917 = vmatprep.subr.bf16.mxu0 0
    %3918 = vmatpush1.bf16.msra.mxu0 0
    %3919 = vmatprep.subr.bf16.mxu0 0
    %3920 = vmatpush1.bf16.msra.mxu0 0
    %3921 = vmatprep.subr.bf16.mxu0 0
    %3922 = vmatpush1.bf16.msra.mxu0 0
    %3923 = vmatprep.subr.bf16.mxu0 0
    %3924 = vmatpush1.bf16.msra.mxu0 0
    %3925 = vmatprep.subr.bf16.mxu0 0
    %3926 = vmatpush1.bf16.msra.mxu0 0
    %3927 = vmatprep.subr.bf16.mxu0 0
    %3928 = vmatpush1.bf16.msra.mxu0 0
    %3929 = vmatprep.subr.bf16.mxu0 0
    %3930 = vmatpush1.bf16.msra.mxu0 0
    %3931 = vmatprep.subr.bf16.mxu0 0
    %3932 = vmatpush1.bf16.msra.mxu0 0
    %3933 = vmatprep.mubr.bf16.mxu0 0
    %3934 = vmatmul.mubr.bf16.gmra.mrb[0].mxu0 %v3890
    %v3935 = vpop.f32.mrb[0].mxu0
    %v3936 = vadd.f32 0.0, %v3935
    %v3937 = vpop.f32.mrb[0].mxu0
    %v3938 = vpop.f32.mrb[0].mxu0
    %v3939 = vadd.f32 0.0, %v3938
    %v3940 = vpop.f32.mrb[0].mxu0
    %3941 = vmatprep.mubr.bf16.mxu0 0
    %3942 = vmatmul.mubr.bf16.gmra.mrb[0].mxu0 %v3893
    %v3943 = vpop.f32.mrb[0].mxu0
    %v3944 = vadd.f32 0.0, %v3943
    %v3945 = vpop.f32.mrb[0].mxu0
    %v3946 = vpop.f32.mrb[0].mxu0
    %v3947 = vadd.f32 0.0, %v3946
    %v3948 = vpop.f32.mrb[0].mxu0
    %3949 = vmatprep.mubr.bf16.mxu0 0
    %3950 = vmatmul.mubr.bf16.gmra.mrb[0].mxu0 %v3896
    %v3951 = vpop.f32.mrb[0].mxu0
    %v3952 = vadd.f32 0.0, %v3951
    %v3953 = vpop.f32.mrb[0].mxu0
    %v3954 = vpop.f32.mrb[0].mxu0
    %v3955 = vadd.f32 0.0, %v3954
    %v3956 = vpop.f32.mrb[0].mxu0
    %3957 = vmatprep.mubr.bf16.mxu0 0
    %3958 = vmatmul.mubr.bf16.gmra.mrb[0].mxu0 %v3899
    %v3959 = vpop.f32.mrb[0].mxu0
    %v3960 = vadd.f32 0.0, %v3959
    %v3961 = vpop.f32.mrb[0].mxu0
    %v3962 = vpop.f32.mrb[0].mxu0
    %v3963 = vpop.f32.mrb[0].mxu0
    %3964 = vdwg.mxu0
    %v3965 = vadd.f32 %v3748, %v3936
    %v3966 = vadd.f32 %v3749, %v3939
    %v3967 = vadd.f32 %v3750, %v3944
    %v3968 = vadd.f32 %v3751, %v3947
    %v3969 = vadd.f32 %v3752, %v3952
    %v3970 = vadd.f32 %v3753, %v3955
    %v3971 = vadd.f32 %v3754, %v3960
    %v3972 = vld [vmem:[%s0 + $0x240] sm:$0xf]
    %v3973 = vld [vmem:[%s0 + $0x244] sm:$0xf]
    %v3974 = vld [vmem:[%s0 + $0x248] sm:$0xf]
    %v3975 = vld [vmem:[%s0 + $0x24c] sm:$0xf]
    %v3976 = vld [vmem:[%s0 + $0x250] sm:$0xf]
    %v3977 = vld [vmem:[%s0 + $0x254] sm:$0xf]
    %v3978 = vld [vmem:[%s0 + $0x258] sm:$0xf]
    %v3979 = vld [vmem:[%s0 + $0x25c] sm:$0xf]
    %v3988 = vunpack.c.l.b16 %v3972
    %v3989 = vunpack.c.l.b16 %v3973
    %v3990 = vunpack.c.l.b16 %v3974
    %v3991 = vunpack.c.l.b16 %v3975
    %v3992 = vunpack.c.l.b16 %v3976
    %v3993 = vunpack.c.l.b16 %v3977
    %v3994 = vunpack.c.l.b16 %v3978
    %v3995 = vunpack.c.l.b16 %v3979
    %v3996 = vpack.c.b16 %v3989, %v3988
    %v3997 = vpack.c.b16 %v3991, %v3990
    %v3998 = vpack.c.b16 %v3993, %v3992
    %v3999 = vpack.c.b16 %v3995, %v3994
    %v4001 = vsel %vm86, %v3996, 0
    %v4004 = vsel %vm86, %v3997, 0
    %v4007 = vsel %vm86, %v3998, 0
    %v4010 = vsel %vm86, %v3999, 0
    %4012 = vmatprep.subr.bf16.mxu0 0
    %4013 = vmatpush1.bf16.msra.mxu0 %v83
    %4014 = vmatprep.subr.bf16.mxu0 0
    %4015 = vmatpush1.bf16.msra.mxu0 %v104
    %4016 = vmatprep.subr.bf16.mxu0 0
    %4017 = vmatpush1.bf16.msra.mxu0 0
    %4018 = vmatprep.subr.bf16.mxu0 0
    %4019 = vmatpush1.bf16.msra.mxu0 0
    %4020 = vmatprep.subr.bf16.mxu0 0
    %4021 = vmatpush1.bf16.msra.mxu0 0
    %4022 = vmatprep.subr.bf16.mxu0 0
    %4023 = vmatpush1.bf16.msra.mxu0 0
    %4024 = vmatprep.subr.bf16.mxu0 0
    %4025 = vmatpush1.bf16.msra.mxu0 0
    %4026 = vmatprep.subr.bf16.mxu0 0
    %4027 = vmatpush1.bf16.msra.mxu0 0
    %4028 = vmatprep.subr.bf16.mxu0 0
    %4029 = vmatpush1.bf16.msra.mxu0 0
    %4030 = vmatprep.subr.bf16.mxu0 0
    %4031 = vmatpush1.bf16.msra.mxu0 0
    %4032 = vmatprep.subr.bf16.mxu0 0
    %4033 = vmatpush1.bf16.msra.mxu0 0
    %4034 = vmatprep.subr.bf16.mxu0 0
    %4035 = vmatpush1.bf16.msra.mxu0 0
    %4036 = vmatprep.subr.bf16.mxu0 0
    %4037 = vmatpush1.bf16.msra.mxu0 0
    %4038 = vmatprep.subr.bf16.mxu0 0
    %4039 = vmatpush1.bf16.msra.mxu0 0
    %4040 = vmatprep.subr.bf16.mxu0 0
    %4041 = vmatpush1.bf16.msra.mxu0 0
    %4042 = vmatprep.subr.bf16.mxu0 0
    %4043 = vmatpush1.bf16.msra.mxu0 0
    %4044 = vmatprep.mubr.bf16.mxu0 0
    %4045 = vmatmul.mubr.bf16.gmra.mrb[0].mxu0 %v4001
    %v4046 = vpop.f32.mrb[0].mxu0
    %v4047 = vadd.f32 %v53, %v4046
    %v4048 = vpop.f32.mrb[0].mxu0
    %v4049 = vpop.f32.mrb[0].mxu0
    %v4050 = vadd.f32 %v53, %v4049
    %v4051 = vpop.f32.mrb[0].mxu0
    %4052 = vmatprep.mubr.bf16.mxu0 0
    %4053 = vmatmul.mubr.bf16.gmra.mrb[0].mxu0 %v4004
    %v4054 = vpop.f32.mrb[0].mxu0
    %v4055 = vadd.f32 %v53, %v4054
    %v4056 = vpop.f32.mrb[0].mxu0
    %v4057 = vpop.f32.mrb[0].mxu0
    %v4058 = vadd.f32 %v53, %v4057
    %v4059 = vpop.f32.mrb[0].mxu0
    %4060 = vmatprep.mubr.bf16.mxu0 0
    %4061 = vmatmul.mubr.bf16.gmra.mrb[0].mxu0 %v4007
    %v4062 = vpop.f32.mrb[0].mxu0
    %v4063 = vadd.f32 %v53, %v4062
    %v4064 = vpop.f32.mrb[0].mxu0
    %v4065 = vpop.f32.mrb[0].mxu0
    %v4066 = vadd.f32 %v53, %v4065
    %v4067 = vpop.f32.mrb[0].mxu0
    %4068 = vmatprep.mubr.bf16.mxu0 0
    %4069 = vmatmul.mubr.bf16.gmra.mrb[0].mxu0 %v4010
    %v4070 = vpop.f32.mrb[0].mxu0
    %v4071 = vadd.f32 %v53, %v4070
    %v4072 = vpop.f32.mrb[0].mxu0
    %v4073 = vpop.f32.mrb[0].mxu0
    %v4074 = vadd.f32 %v53, %v4073
    %v4075 = vpop.f32.mrb[0].mxu0
    %4076 = vdwg.mxu0
    %v4077 = vmax.f32 %v4047, 0.0
    %v4078 = vmax.f32 %v4050, 0.0
    %v4079 = vmax.f32 %v4055, 0.0
    %v4080 = vmax.f32 %v4058, 0.0
    %v4081 = vmax.f32 %v4063, 0.0
    %v4082 = vmax.f32 %v4066, 0.0
    %v4083 = vmax.f32 %v4071, 0.0
    %v4084 = vmax.f32 %v4074, 0.0
    %v4085 = vpack.c.bf16 %v4078, %v4077
    %v4086 = vpack.c.bf16 %v4080, %v4079
    %v4087 = vpack.c.bf16 %v4082, %v4081
    %v4088 = vpack.c.bf16 %v4084, %v4083
    %s4089 = scalar_lea.vmem %s3, 288
    %v4090 = vld [vmem:[%s4089] sm:$0xf]
    %v4091 = vld [vmem:[%s4089 + $0x4] sm:$0xf]
    %v4092 = vld [vmem:[%s4089 + $0x8] sm:$0xf]
    %v4093 = vld [vmem:[%s4089 + $0xc] sm:$0xf]
    %v4098 = vunpack.c.l.b16 %v4090
    %v4099 = vunpack.c.l.b16 %v4091
    %v4100 = vunpack.c.l.b16 %v4092
    %v4101 = vunpack.c.l.b16 %v4093
    %v4102 = vpack.c.b16 %v4099, %v4098
    %v4103 = vpack.c.b16 %v4101, %v4100
    %v4107 = vsel %vm199, %v4085, 0
    %v4110 = vsel %vm199, %v4086, 0
    %v4113 = vsel %vm199, %v4087, 0
    %v4116 = vsel %vm199, %v4088, 0
    %4118 = vmatprep.subr.bf16.mxu0 0
    %4119 = vmatpush1.bf16.msra.mxu0 %v4102
    %4120 = vmatprep.subr.bf16.mxu0 0
    %4121 = vmatpush1.bf16.msra.mxu0 %v4103
    %4122 = vmatprep.subr.bf16.mxu0 0
    %4123 = vmatpush1.bf16.msra.mxu0 0
    %4124 = vmatprep.subr.bf16.mxu0 0
    %4125 = vmatpush1.bf16.msra.mxu0 0
    %4126 = vmatprep.subr.bf16.mxu0 0
    %4127 = vmatpush1.bf16.msra.mxu0 0
    %4128 = vmatprep.subr.bf16.mxu0 0
    %4129 = vmatpush1.bf16.msra.mxu0 0
    %4130 = vmatprep.subr.bf16.mxu0 0
    %4131 = vmatpush1.bf16.msra.mxu0 0
    %4132 = vmatprep.subr.bf16.mxu0 0
    %4133 = vmatpush1.bf16.msra.mxu0 0
    %4134 = vmatprep.subr.bf16.mxu0 0
    %4135 = vmatpush1.bf16.msra.mxu0 0
    %4136 = vmatprep.subr.bf16.mxu0 0
    %4137 = vmatpush1.bf16.msra.mxu0 0
    %4138 = vmatprep.subr.bf16.mxu0 0
    %4139 = vmatpush1.bf16.msra.mxu0 0
    %4140 = vmatprep.subr.bf16.mxu0 0
    %4141 = vmatpush1.bf16.msra.mxu0 0
    %4142 = vmatprep.subr.bf16.mxu0 0
    %4143 = vmatpush1.bf16.msra.mxu0 0
    %4144 = vmatprep.subr.bf16.mxu0 0
    %4145 = vmatpush1.bf16.msra.mxu0 0
    %4146 = vmatprep.subr.bf16.mxu0 0
    %4147 = vmatpush1.bf16.msra.mxu0 0
    %4148 = vmatprep.subr.bf16.mxu0 0
    %4149 = vmatpush1.bf16.msra.mxu0 0
    %4150 = vmatprep.mubr.bf16.mxu0 0
    %4151 = vmatmul.mubr.bf16.gmra.mrb[0].mxu0 %v4107
    %v4152 = vpop.f32.mrb[0].mxu0
    %v4153 = vadd.f32 0.0, %v4152
    %v4154 = vpop.f32.mrb[0].mxu0
    %v4155 = vpop.f32.mrb[0].mxu0
    %v4156 = vadd.f32 0.0, %v4155
    %v4157 = vpop.f32.mrb[0].mxu0
    %4158 = vmatprep.mubr.bf16.mxu0 0
    %4159 = vmatmul.mubr.bf16.gmra.mrb[0].mxu0 %v4110
    %v4160 = vpop.f32.mrb[0].mxu0
    %v4161 = vadd.f32 0.0, %v4160
    %v4162 = vpop.f32.mrb[0].mxu0
    %v4163 = vpop.f32.mrb[0].mxu0
    %v4164 = vadd.f32 0.0, %v4163
    %v4165 = vpop.f32.mrb[0].mxu0
    %4166 = vmatprep.mubr.bf16.mxu0 0
    %4167 = vmatmul.mubr.bf16.gmra.mrb[0].mxu0 %v4113
    %v4168 = vpop.f32.mrb[0].mxu0
    %v4169 = vadd.f32 0.0, %v4168
    %v4170 = vpop.f32.mrb[0].mxu0
    %v4171 = vpop.f32.mrb[0].mxu0
    %v4172 = vadd.f32 0.0, %v4171
    %v4173 = vpop.f32.mrb[0].mxu0
    %4174 = vmatprep.mubr.bf16.mxu0 0
    %4175 = vmatmul.mubr.bf16.gmra.mrb[0].mxu0 %v4116
    %v4176 = vpop.f32.mrb[0].mxu0
    %v4177 = vadd.f32 0.0, %v4176
    %v4178 = vpop.f32.mrb[0].mxu0
    %v4179 = vpop.f32.mrb[0].mxu0
    %v4180 = vpop.f32.mrb[0].mxu0
    %4181 = vdwg.mxu0
    %v4182 = vadd.f32 %v3965, %v4153
    %v4183 = vadd.f32 %v3966, %v4156
    %v4184 = vadd.f32 %v3967, %v4161
    %v4185 = vadd.f32 %v3968, %v4164
    %v4186 = vadd.f32 %v3969, %v4169
    %v4187 = vadd.f32 %v3970, %v4172
    %v4188 = vadd.f32 %v3971, %v4177
    %v4189 = vld [vmem:[%s0 + $0x260] sm:$0xf]
    %v4190 = vld [vmem:[%s0 + $0x264] sm:$0xf]
    %v4191 = vld [vmem:[%s0 + $0x268] sm:$0xf]
    %v4192 = vld [vmem:[%s0 + $0x26c] sm:$0xf]
    %v4193 = vld [vmem:[%s0 + $0x270] sm:$0xf]
    %v4194 = vld [vmem:[%s0 + $0x274] sm:$0xf]
    %v4195 = vld [vmem:[%s0 + $0x278] sm:$0xf]
    %v4196 = vld [vmem:[%s0 + $0x27c] sm:$0xf]
    %v4205 = vunpack.c.l.b16 %v4189
    %v4206 = vunpack.c.l.b16 %v4190
    %v4207 = vunpack.c.l.b16 %v4191
    %v4208 = vunpack.c.l.b16 %v4192
    %v4209 = vunpack.c.l.b16 %v4193
    %v4210 = vunpack.c.l.b16 %v4194
    %v4211 = vunpack.c.l.b16 %v4195
    %v4212 = vunpack.c.l.b16 %v4196
    %v4213 = vpack.c.b16 %v4206, %v4205
    %v4214 = vpack.c.b16 %v4208, %v4207
    %v4215 = vpack.c.b16 %v4210, %v4209
    %v4216 = vpack.c.b16 %v4212, %v4211
    %v4218 = vsel %vm86, %v4213, 0
    %v4221 = vsel %vm86, %v4214, 0
    %v4224 = vsel %vm86, %v4215, 0
    %v4227 = vsel %vm86, %v4216, 0
    %4229 = vmatprep.subr.bf16.mxu0 0
    %4230 = vmatpush1.bf16.msra.mxu0 %v83
    %4231 = vmatprep.subr.bf16.mxu0 0
    %4232 = vmatpush1.bf16.msra.mxu0 %v104
    %4233 = vmatprep.subr.bf16.mxu0 0
    %4234 = vmatpush1.bf16.msra.mxu0 0
    %4235 = vmatprep.subr.bf16.mxu0 0
    %4236 = vmatpush1.bf16.msra.mxu0 0
    %4237 = vmatprep.subr.bf16.mxu0 0
    %4238 = vmatpush1.bf16.msra.mxu0 0
    %4239 = vmatprep.subr.bf16.mxu0 0
    %4240 = vmatpush1.bf16.msra.mxu0 0
    %4241 = vmatprep.subr.bf16.mxu0 0
    %4242 = vmatpush1.bf16.msra.mxu0 0
    %4243 = vmatprep.subr.bf16.mxu0 0
    %4244 = vmatpush1.bf16.msra.mxu0 0
    %4245 = vmatprep.subr.bf16.mxu0 0
    %4246 = vmatpush1.bf16.msra.mxu0 0
    %4247 = vmatprep.subr.bf16.mxu0 0
    %4248 = vmatpush1.bf16.msra.mxu0 0
    %4249 = vmatprep.subr.bf16.mxu0 0
    %4250 = vmatpush1.bf16.msra.mxu0 0
    %4251 = vmatprep.subr.bf16.mxu0 0
    %4252 = vmatpush1.bf16.msra.mxu0 0
    %4253 = vmatprep.subr.bf16.mxu0 0
    %4254 = vmatpush1.bf16.msra.mxu0 0
    %4255 = vmatprep.subr.bf16.mxu0 0
    %4256 = vmatpush1.bf16.msra.mxu0 0
    %4257 = vmatprep.subr.bf16.mxu0 0
    %4258 = vmatpush1.bf16.msra.mxu0 0
    %4259 = vmatprep.subr.bf16.mxu0 0
    %4260 = vmatpush1.bf16.msra.mxu0 0
    %4261 = vmatprep.mubr.bf16.mxu0 0
    %4262 = vmatmul.mubr.bf16.gmra.mrb[0].mxu0 %v4218
    %v4263 = vpop.f32.mrb[0].mxu0
    %v4264 = vadd.f32 %v53, %v4263
    %v4265 = vpop.f32.mrb[0].mxu0
    %v4266 = vpop.f32.mrb[0].mxu0
    %v4267 = vadd.f32 %v53, %v4266
    %v4268 = vpop.f32.mrb[0].mxu0
    %4269 = vmatprep.mubr.bf16.mxu0 0
    %4270 = vmatmul.mubr.bf16.gmra.mrb[0].mxu0 %v4221
    %v4271 = vpop.f32.mrb[0].mxu0
    %v4272 = vadd.f32 %v53, %v4271
    %v4273 = vpop.f32.mrb[0].mxu0
    %v4274 = vpop.f32.mrb[0].mxu0
    %v4275 = vadd.f32 %v53, %v4274
    %v4276 = vpop.f32.mrb[0].mxu0
    %4277 = vmatprep.mubr.bf16.mxu0 0
    %4278 = vmatmul.mubr.bf16.gmra.mrb[0].mxu0 %v4224
    %v4279 = vpop.f32.mrb[0].mxu0
    %v4280 = vadd.f32 %v53, %v4279
    %v4281 = vpop.f32.mrb[0].mxu0
    %v4282 = vpop.f32.mrb[0].mxu0
    %v4283 = vadd.f32 %v53, %v4282
    %v4284 = vpop.f32.mrb[0].mxu0
    %4285 = vmatprep.mubr.bf16.mxu0 0
    %4286 = vmatmul.mubr.bf16.gmra.mrb[0].mxu0 %v4227
    %v4287 = vpop.f32.mrb[0].mxu0
    %v4288 = vadd.f32 %v53, %v4287
    %v4289 = vpop.f32.mrb[0].mxu0
    %v4290 = vpop.f32.mrb[0].mxu0
    %v4291 = vadd.f32 %v53, %v4290
    %v4292 = vpop.f32.mrb[0].mxu0
    %4293 = vdwg.mxu0
    %v4294 = vmax.f32 %v4264, 0.0
    %v4295 = vmax.f32 %v4267, 0.0
    %v4296 = vmax.f32 %v4272, 0.0
    %v4297 = vmax.f32 %v4275, 0.0
    %v4298 = vmax.f32 %v4280, 0.0
    %v4299 = vmax.f32 %v4283, 0.0
    %v4300 = vmax.f32 %v4288, 0.0
    %v4301 = vmax.f32 %v4291, 0.0
    %v4302 = vpack.c.bf16 %v4295, %v4294
    %v4303 = vpack.c.bf16 %v4297, %v4296
    %v4304 = vpack.c.bf16 %v4299, %v4298
    %v4305 = vpack.c.bf16 %v4301, %v4300
    %s4306 = scalar_lea.vmem %s3, 304
    %v4307 = vld [vmem:[%s4306] sm:$0xf]
    %v4308 = vld [vmem:[%s4306 + $0x4] sm:$0xf]
    %v4309 = vld [vmem:[%s4306 + $0x8] sm:$0xf]
    %v4310 = vld [vmem:[%s4306 + $0xc] sm:$0xf]
    %v4315 = vunpack.c.l.b16 %v4307
    %v4316 = vunpack.c.l.b16 %v4308
    %v4317 = vunpack.c.l.b16 %v4309
    %v4318 = vunpack.c.l.b16 %v4310
    %v4319 = vpack.c.b16 %v4316, %v4315
    %v4320 = vpack.c.b16 %v4318, %v4317
    %v4324 = vsel %vm199, %v4302, 0
    %v4327 = vsel %vm199, %v4303, 0
    %v4330 = vsel %vm199, %v4304, 0
    %v4333 = vsel %vm199, %v4305, 0
    %4335 = vmatprep.subr.bf16.mxu0 0
    %4336 = vmatpush1.bf16.msra.mxu0 %v4319
    %4337 = vmatprep.subr.bf16.mxu0 0
    %4338 = vmatpush1.bf16.msra.mxu0 %v4320
    %4339 = vmatprep.subr.bf16.mxu0 0
    %4340 = vmatpush1.bf16.msra.mxu0 0
    %4341 = vmatprep.subr.bf16.mxu0 0
    %4342 = vmatpush1.bf16.msra.mxu0 0
    %4343 = vmatprep.subr.bf16.mxu0 0
    %4344 = vmatpush1.bf16.msra.mxu0 0
    %4345 = vmatprep.subr.bf16.mxu0 0
    %4346 = vmatpush1.bf16.msra.mxu0 0
    %4347 = vmatprep.subr.bf16.mxu0 0
    %4348 = vmatpush1.bf16.msra.mxu0 0
    %4349 = vmatprep.subr.bf16.mxu0 0
    %4350 = vmatpush1.bf16.msra.mxu0 0
    %4351 = vmatprep.subr.bf16.mxu0 0
    %4352 = vmatpush1.bf16.msra.mxu0 0
    %4353 = vmatprep.subr.bf16.mxu0 0
    %4354 = vmatpush1.bf16.msra.mxu0 0
    %4355 = vmatprep.subr.bf16.mxu0 0
    %4356 = vmatpush1.bf16.msra.mxu0 0
    %4357 = vmatprep.subr.bf16.mxu0 0
    %4358 = vmatpush1.bf16.msra.mxu0 0
    %4359 = vmatprep.subr.bf16.mxu0 0
    %4360 = vmatpush1.bf16.msra.mxu0 0
    %4361 = vmatprep.subr.bf16.mxu0 0
    %4362 = vmatpush1.bf16.msra.mxu0 0
    %4363 = vmatprep.subr.bf16.mxu0 0
    %4364 = vmatpush1.bf16.msra.mxu0 0
    %4365 = vmatprep.subr.bf16.mxu0 0
    %4366 = vmatpush1.bf16.msra.mxu0 0
    %4367 = vmatprep.mubr.bf16.mxu0 0
    %4368 = vmatmul.mubr.bf16.gmra.mrb[0].mxu0 %v4324
    %v4369 = vpop.f32.mrb[0].mxu0
    %v4370 = vadd.f32 0.0, %v4369
    %v4371 = vpop.f32.mrb[0].mxu0
    %v4372 = vpop.f32.mrb[0].mxu0
    %v4373 = vadd.f32 0.0, %v4372
    %v4374 = vpop.f32.mrb[0].mxu0
    %4375 = vmatprep.mubr.bf16.mxu0 0
    %4376 = vmatmul.mubr.bf16.gmra.mrb[0].mxu0 %v4327
    %v4377 = vpop.f32.mrb[0].mxu0
    %v4378 = vadd.f32 0.0, %v4377
    %v4379 = vpop.f32.mrb[0].mxu0
    %v4380 = vpop.f32.mrb[0].mxu0
    %v4381 = vadd.f32 0.0, %v4380
    %v4382 = vpop.f32.mrb[0].mxu0
    %4383 = vmatprep.mubr.bf16.mxu0 0
    %4384 = vmatmul.mubr.bf16.gmra.mrb[0].mxu0 %v4330
    %v4385 = vpop.f32.mrb[0].mxu0
    %v4386 = vadd.f32 0.0, %v4385
    %v4387 = vpop.f32.mrb[0].mxu0
    %v4388 = vpop.f32.mrb[0].mxu0
    %v4389 = vadd.f32 0.0, %v4388
    %v4390 = vpop.f32.mrb[0].mxu0
    %4391 = vmatprep.mubr.bf16.mxu0 0
    %4392 = vmatmul.mubr.bf16.gmra.mrb[0].mxu0 %v4333
    %v4393 = vpop.f32.mrb[0].mxu0
    %v4394 = vadd.f32 0.0, %v4393
    %v4395 = vpop.f32.mrb[0].mxu0
    %v4396 = vpop.f32.mrb[0].mxu0
    %v4397 = vpop.f32.mrb[0].mxu0
    %4398 = vdwg.mxu0
    %v4399 = vadd.f32 %v4182, %v4370
    %v4400 = vadd.f32 %v4183, %v4373
    %v4401 = vadd.f32 %v4184, %v4378
    %v4402 = vadd.f32 %v4185, %v4381
    %v4403 = vadd.f32 %v4186, %v4386
    %v4404 = vadd.f32 %v4187, %v4389
    %v4405 = vadd.f32 %v4188, %v4394
    %v4406 = vld [vmem:[%s0 + $0x280] sm:$0xf]
    %v4407 = vld [vmem:[%s0 + $0x284] sm:$0xf]
    %v4408 = vld [vmem:[%s0 + $0x288] sm:$0xf]
    %v4409 = vld [vmem:[%s0 + $0x28c] sm:$0xf]
    %v4410 = vld [vmem:[%s0 + $0x290] sm:$0xf]
    %v4411 = vld [vmem:[%s0 + $0x294] sm:$0xf]
    %v4412 = vld [vmem:[%s0 + $0x298] sm:$0xf]
    %v4413 = vld [vmem:[%s0 + $0x29c] sm:$0xf]
    %v4422 = vunpack.c.l.b16 %v4406
    %v4423 = vunpack.c.l.b16 %v4407
    %v4424 = vunpack.c.l.b16 %v4408
    %v4425 = vunpack.c.l.b16 %v4409
    %v4426 = vunpack.c.l.b16 %v4410
    %v4427 = vunpack.c.l.b16 %v4411
    %v4428 = vunpack.c.l.b16 %v4412
    %v4429 = vunpack.c.l.b16 %v4413
    %v4430 = vpack.c.b16 %v4423, %v4422
    %v4431 = vpack.c.b16 %v4425, %v4424
    %v4432 = vpack.c.b16 %v4427, %v4426
    %v4433 = vpack.c.b16 %v4429, %v4428
    %v4435 = vsel %vm86, %v4430, 0
    %v4438 = vsel %vm86, %v4431, 0
    %v4441 = vsel %vm86, %v4432, 0
    %v4444 = vsel %vm86, %v4433, 0
    %4446 = vmatprep.subr.bf16.mxu0 0
    %4447 = vmatpush1.bf16.msra.mxu0 %v83
    %4448 = vmatprep.subr.bf16.mxu0 0
    %4449 = vmatpush1.bf16.msra.mxu0 %v104
    %4450 = vmatprep.subr.bf16.mxu0 0
    %4451 = vmatpush1.bf16.msra.mxu0 0
    %4452 = vmatprep.subr.bf16.mxu0 0
    %4453 = vmatpush1.bf16.msra.mxu0 0
    %4454 = vmatprep.subr.bf16.mxu0 0
    %4455 = vmatpush1.bf16.msra.mxu0 0
    %4456 = vmatprep.subr.bf16.mxu0 0
    %4457 = vmatpush1.bf16.msra.mxu0 0
    %4458 = vmatprep.subr.bf16.mxu0 0
    %4459 = vmatpush1.bf16.msra.mxu0 0
    %4460 = vmatprep.subr.bf16.mxu0 0
    %4461 = vmatpush1.bf16.msra.mxu0 0
    %4462 = vmatprep.subr.bf16.mxu0 0
    %4463 = vmatpush1.bf16.msra.mxu0 0
    %4464 = vmatprep.subr.bf16.mxu0 0
    %4465 = vmatpush1.bf16.msra.mxu0 0
    %4466 = vmatprep.subr.bf16.mxu0 0
    %4467 = vmatpush1.bf16.msra.mxu0 0
    %4468 = vmatprep.subr.bf16.mxu0 0
    %4469 = vmatpush1.bf16.msra.mxu0 0
    %4470 = vmatprep.subr.bf16.mxu0 0
    %4471 = vmatpush1.bf16.msra.mxu0 0
    %4472 = vmatprep.subr.bf16.mxu0 0
    %4473 = vmatpush1.bf16.msra.mxu0 0
    %4474 = vmatprep.subr.bf16.mxu0 0
    %4475 = vmatpush1.bf16.msra.mxu0 0
    %4476 = vmatprep.subr.bf16.mxu0 0
    %4477 = vmatpush1.bf16.msra.mxu0 0
    %4478 = vmatprep.mubr.bf16.mxu0 0
    %4479 = vmatmul.mubr.bf16.gmra.mrb[0].mxu0 %v4435
    %v4480 = vpop.f32.mrb[0].mxu0
    %v4481 = vadd.f32 %v53, %v4480
    %v4482 = vpop.f32.mrb[0].mxu0
    %v4483 = vpop.f32.mrb[0].mxu0
    %v4484 = vadd.f32 %v53, %v4483
    %v4485 = vpop.f32.mrb[0].mxu0
    %4486 = vmatprep.mubr.bf16.mxu0 0
    %4487 = vmatmul.mubr.bf16.gmra.mrb[0].mxu0 %v4438
    %v4488 = vpop.f32.mrb[0].mxu0
    %v4489 = vadd.f32 %v53, %v4488
    %v4490 = vpop.f32.mrb[0].mxu0
    %v4491 = vpop.f32.mrb[0].mxu0
    %v4492 = vadd.f32 %v53, %v4491
    %v4493 = vpop.f32.mrb[0].mxu0
    %4494 = vmatprep.mubr.bf16.mxu0 0
    %4495 = vmatmul.mubr.bf16.gmra.mrb[0].mxu0 %v4441
    %v4496 = vpop.f32.mrb[0].mxu0
    %v4497 = vadd.f32 %v53, %v4496
    %v4498 = vpop.f32.mrb[0].mxu0
    %v4499 = vpop.f32.mrb[0].mxu0
    %v4500 = vadd.f32 %v53, %v4499
    %v4501 = vpop.f32.mrb[0].mxu0
    %4502 = vmatprep.mubr.bf16.mxu0 0
    %4503 = vmatmul.mubr.bf16.gmra.mrb[0].mxu0 %v4444
    %v4504 = vpop.f32.mrb[0].mxu0
    %v4505 = vadd.f32 %v53, %v4504
    %v4506 = vpop.f32.mrb[0].mxu0
    %v4507 = vpop.f32.mrb[0].mxu0
    %v4508 = vadd.f32 %v53, %v4507
    %v4509 = vpop.f32.mrb[0].mxu0
    %4510 = vdwg.mxu0
    %v4511 = vmax.f32 %v4481, 0.0
    %v4512 = vmax.f32 %v4484, 0.0
    %v4513 = vmax.f32 %v4489, 0.0
    %v4514 = vmax.f32 %v4492, 0.0
    %v4515 = vmax.f32 %v4497, 0.0
    %v4516 = vmax.f32 %v4500, 0.0
    %v4517 = vmax.f32 %v4505, 0.0
    %v4518 = vmax.f32 %v4508, 0.0
    %v4519 = vpack.c.bf16 %v4512, %v4511
    %v4520 = vpack.c.bf16 %v4514, %v4513
    %v4521 = vpack.c.bf16 %v4516, %v4515
    %v4522 = vpack.c.bf16 %v4518, %v4517
    %s4523 = scalar_lea.vmem %s3, 320
    %v4524 = vld [vmem:[%s4523] sm:$0xf]
    %v4525 = vld [vmem:[%s4523 + $0x4] sm:$0xf]
    %v4526 = vld [vmem:[%s4523 + $0x8] sm:$0xf]
    %v4527 = vld [vmem:[%s4523 + $0xc] sm:$0xf]
    %v4532 = vunpack.c.l.b16 %v4524
    %v4533 = vunpack.c.l.b16 %v4525
    %v4534 = vunpack.c.l.b16 %v4526
    %v4535 = vunpack.c.l.b16 %v4527
    %v4536 = vpack.c.b16 %v4533, %v4532
    %v4537 = vpack.c.b16 %v4535, %v4534
    %v4541 = vsel %vm199, %v4519, 0
    %v4544 = vsel %vm199, %v4520, 0
    %v4547 = vsel %vm199, %v4521, 0
    %v4550 = vsel %vm199, %v4522, 0
    %4552 = vmatprep.subr.bf16.mxu0 0
    %4553 = vmatpush1.bf16.msra.mxu0 %v4536
    %4554 = vmatprep.subr.bf16.mxu0 0
    %4555 = vmatpush1.bf16.msra.mxu0 %v4537
    %4556 = vmatprep.subr.bf16.mxu0 0
    %4557 = vmatpush1.bf16.msra.mxu0 0
    %4558 = vmatprep.subr.bf16.mxu0 0
    %4559 = vmatpush1.bf16.msra.mxu0 0
    %4560 = vmatprep.subr.bf16.mxu0 0
    %4561 = vmatpush1.bf16.msra.mxu0 0
    %4562 = vmatprep.subr.bf16.mxu0 0
    %4563 = vmatpush1.bf16.msra.mxu0 0
    %4564 = vmatprep.subr.bf16.mxu0 0
    %4565 = vmatpush1.bf16.msra.mxu0 0
    %4566 = vmatprep.subr.bf16.mxu0 0
    %4567 = vmatpush1.bf16.msra.mxu0 0
    %4568 = vmatprep.subr.bf16.mxu0 0
    %4569 = vmatpush1.bf16.msra.mxu0 0
    %4570 = vmatprep.subr.bf16.mxu0 0
    %4571 = vmatpush1.bf16.msra.mxu0 0
    %4572 = vmatprep.subr.bf16.mxu0 0
    %4573 = vmatpush1.bf16.msra.mxu0 0
    %4574 = vmatprep.subr.bf16.mxu0 0
    %4575 = vmatpush1.bf16.msra.mxu0 0
    %4576 = vmatprep.subr.bf16.mxu0 0
    %4577 = vmatpush1.bf16.msra.mxu0 0
    %4578 = vmatprep.subr.bf16.mxu0 0
    %4579 = vmatpush1.bf16.msra.mxu0 0
    %4580 = vmatprep.subr.bf16.mxu0 0
    %4581 = vmatpush1.bf16.msra.mxu0 0
    %4582 = vmatprep.subr.bf16.mxu0 0
    %4583 = vmatpush1.bf16.msra.mxu0 0
    %4584 = vmatprep.mubr.bf16.mxu0 0
    %4585 = vmatmul.mubr.bf16.gmra.mrb[0].mxu0 %v4541
    %v4586 = vpop.f32.mrb[0].mxu0
    %v4587 = vadd.f32 0.0, %v4586
    %v4588 = vpop.f32.mrb[0].mxu0
    %v4589 = vpop.f32.mrb[0].mxu0
    %v4590 = vadd.f32 0.0, %v4589
    %v4591 = vpop.f32.mrb[0].mxu0
    %4592 = vmatprep.mubr.bf16.mxu0 0
    %4593 = vmatmul.mubr.bf16.gmra.mrb[0].mxu0 %v4544
    %v4594 = vpop.f32.mrb[0].mxu0
    %v4595 = vadd.f32 0.0, %v4594
    %v4596 = vpop.f32.mrb[0].mxu0
    %v4597 = vpop.f32.mrb[0].mxu0
    %v4598 = vadd.f32 0.0, %v4597
    %v4599 = vpop.f32.mrb[0].mxu0
    %4600 = vmatprep.mubr.bf16.mxu0 0
    %4601 = vmatmul.mubr.bf16.gmra.mrb[0].mxu0 %v4547
    %v4602 = vpop.f32.mrb[0].mxu0
    %v4603 = vadd.f32 0.0, %v4602
    %v4604 = vpop.f32.mrb[0].mxu0
    %v4605 = vpop.f32.mrb[0].mxu0
    %v4606 = vadd.f32 0.0, %v4605
    %v4607 = vpop.f32.mrb[0].mxu0
    %4608 = vmatprep.mubr.bf16.mxu0 0
    %4609 = vmatmul.mubr.bf16.gmra.mrb[0].mxu0 %v4550
    %v4610 = vpop.f32.mrb[0].mxu0
    %v4611 = vadd.f32 0.0, %v4610
    %v4612 = vpop.f32.mrb[0].mxu0
    %v4613 = vpop.f32.mrb[0].mxu0
    %v4614 = vpop.f32.mrb[0].mxu0
    %4615 = vdwg.mxu0
    %v4616 = vadd.f32 %v4399, %v4587
    %v4617 = vadd.f32 %v4400, %v4590
    %v4618 = vadd.f32 %v4401, %v4595
    %v4619 = vadd.f32 %v4402, %v4598
    %v4620 = vadd.f32 %v4403, %v4603
    %v4621 = vadd.f32 %v4404, %v4606
    %v4622 = vadd.f32 %v4405, %v4611
    %v4623 = vld [vmem:[%s0 + $0x2a0] sm:$0xf]
    %v4624 = vld [vmem:[%s0 + $0x2a4] sm:$0xf]
    %v4625 = vld [vmem:[%s0 + $0x2a8] sm:$0xf]
    %v4626 = vld [vmem:[%s0 + $0x2ac] sm:$0xf]
    %v4627 = vld [vmem:[%s0 + $0x2b0] sm:$0xf]
    %v4628 = vld [vmem:[%s0 + $0x2b4] sm:$0xf]
    %v4629 = vld [vmem:[%s0 + $0x2b8] sm:$0xf]
    %v4630 = vld [vmem:[%s0 + $0x2bc] sm:$0xf]
    %v4639 = vunpack.c.l.b16 %v4623
    %v4640 = vunpack.c.l.b16 %v4624
    %v4641 = vunpack.c.l.b16 %v4625
    %v4642 = vunpack.c.l.b16 %v4626
    %v4643 = vunpack.c.l.b16 %v4627
    %v4644 = vunpack.c.l.b16 %v4628
    %v4645 = vunpack.c.l.b16 %v4629
    %v4646 = vunpack.c.l.b16 %v4630
    %v4647 = vpack.c.b16 %v4640, %v4639
    %v4648 = vpack.c.b16 %v4642, %v4641
    %v4649 = vpack.c.b16 %v4644, %v4643
    %v4650 = vpack.c.b16 %v4646, %v4645
    %v4652 = vsel %vm86, %v4647, 0
    %v4655 = vsel %vm86, %v4648, 0
    %v4658 = vsel %vm86, %v4649, 0
    %v4661 = vsel %vm86, %v4650, 0
    %4663 = vmatprep.subr.bf16.mxu0 0
    %4664 = vmatpush1.bf16.msra.mxu0 %v83
    %4665 = vmatprep.subr.bf16.mxu0 0
    %4666 = vmatpush1.bf16.msra.mxu0 %v104
    %4667 = vmatprep.subr.bf16.mxu0 0
    %4668 = vmatpush1.bf16.msra.mxu0 0
    %4669 = vmatprep.subr.bf16.mxu0 0
    %4670 = vmatpush1.bf16.msra.mxu0 0
    %4671 = vmatprep.subr.bf16.mxu0 0
    %4672 = vmatpush1.bf16.msra.mxu0 0
    %4673 = vmatprep.subr.bf16.mxu0 0
    %4674 = vmatpush1.bf16.msra.mxu0 0
    %4675 = vmatprep.subr.bf16.mxu0 0
    %4676 = vmatpush1.bf16.msra.mxu0 0
    %4677 = vmatprep.subr.bf16.mxu0 0
    %4678 = vmatpush1.bf16.msra.mxu0 0
    %4679 = vmatprep.subr.bf16.mxu0 0
    %4680 = vmatpush1.bf16.msra.mxu0 0
    %4681 = vmatprep.subr.bf16.mxu0 0
    %4682 = vmatpush1.bf16.msra.mxu0 0
    %4683 = vmatprep.subr.bf16.mxu0 0
    %4684 = vmatpush1.bf16.msra.mxu0 0
    %4685 = vmatprep.subr.bf16.mxu0 0
    %4686 = vmatpush1.bf16.msra.mxu0 0
    %4687 = vmatprep.subr.bf16.mxu0 0
    %4688 = vmatpush1.bf16.msra.mxu0 0
    %4689 = vmatprep.subr.bf16.mxu0 0
    %4690 = vmatpush1.bf16.msra.mxu0 0
    %4691 = vmatprep.subr.bf16.mxu0 0
    %4692 = vmatpush1.bf16.msra.mxu0 0
    %4693 = vmatprep.subr.bf16.mxu0 0
    %4694 = vmatpush1.bf16.msra.mxu0 0
    %4695 = vmatprep.mubr.bf16.mxu0 0
    %4696 = vmatmul.mubr.bf16.gmra.mrb[0].mxu0 %v4652
    %v4697 = vpop.f32.mrb[0].mxu0
    %v4698 = vadd.f32 %v53, %v4697
    %v4699 = vpop.f32.mrb[0].mxu0
    %v4700 = vpop.f32.mrb[0].mxu0
    %v4701 = vadd.f32 %v53, %v4700
    %v4702 = vpop.f32.mrb[0].mxu0
    %4703 = vmatprep.mubr.bf16.mxu0 0
    %4704 = vmatmul.mubr.bf16.gmra.mrb[0].mxu0 %v4655
    %v4705 = vpop.f32.mrb[0].mxu0
    %v4706 = vadd.f32 %v53, %v4705
    %v4707 = vpop.f32.mrb[0].mxu0
    %v4708 = vpop.f32.mrb[0].mxu0
    %v4709 = vadd.f32 %v53, %v4708
    %v4710 = vpop.f32.mrb[0].mxu0
    %4711 = vmatprep.mubr.bf16.mxu0 0
    %4712 = vmatmul.mubr.bf16.gmra.mrb[0].mxu0 %v4658
    %v4713 = vpop.f32.mrb[0].mxu0
    %v4714 = vadd.f32 %v53, %v4713
    %v4715 = vpop.f32.mrb[0].mxu0
    %v4716 = vpop.f32.mrb[0].mxu0
    %v4717 = vadd.f32 %v53, %v4716
    %v4718 = vpop.f32.mrb[0].mxu0
    %4719 = vmatprep.mubr.bf16.mxu0 0
    %4720 = vmatmul.mubr.bf16.gmra.mrb[0].mxu0 %v4661
    %v4721 = vpop.f32.mrb[0].mxu0
    %v4722 = vadd.f32 %v53, %v4721
    %v4723 = vpop.f32.mrb[0].mxu0
    %v4724 = vpop.f32.mrb[0].mxu0
    %v4725 = vadd.f32 %v53, %v4724
    %v4726 = vpop.f32.mrb[0].mxu0
    %4727 = vdwg.mxu0
    %v4728 = vmax.f32 %v4698, 0.0
    %v4729 = vmax.f32 %v4701, 0.0
    %v4730 = vmax.f32 %v4706, 0.0
    %v4731 = vmax.f32 %v4709, 0.0
    %v4732 = vmax.f32 %v4714, 0.0
    %v4733 = vmax.f32 %v4717, 0.0
    %v4734 = vmax.f32 %v4722, 0.0
    %v4735 = vmax.f32 %v4725, 0.0
    %v4736 = vpack.c.bf16 %v4729, %v4728
    %v4737 = vpack.c.bf16 %v4731, %v4730
    %v4738 = vpack.c.bf16 %v4733, %v4732
    %v4739 = vpack.c.bf16 %v4735, %v4734
    %s4740 = scalar_lea.vmem %s3, 336
    %v4741 = vld [vmem:[%s4740] sm:$0xf]
    %v4742 = vld [vmem:[%s4740 + $0x4] sm:$0xf]
    %v4743 = vld [vmem:[%s4740 + $0x8] sm:$0xf]
    %v4744 = vld [vmem:[%s4740 + $0xc] sm:$0xf]
    %v4749 = vunpack.c.l.b16 %v4741
    %v4750 = vunpack.c.l.b16 %v4742
    %v4751 = vunpack.c.l.b16 %v4743
    %v4752 = vunpack.c.l.b16 %v4744
    %v4753 = vpack.c.b16 %v4750, %v4749
    %v4754 = vpack.c.b16 %v4752, %v4751
    %v4758 = vsel %vm199, %v4736, 0
    %v4761 = vsel %vm199, %v4737, 0
    %v4764 = vsel %vm199, %v4738, 0
    %v4767 = vsel %vm199, %v4739, 0
    %4769 = vmatprep.subr.bf16.mxu0 0
    %4770 = vmatpush1.bf16.msra.mxu0 %v4753
    %4771 = vmatprep.subr.bf16.mxu0 0
    %4772 = vmatpush1.bf16.msra.mxu0 %v4754
    %4773 = vmatprep.subr.bf16.mxu0 0
    %4774 = vmatpush1.bf16.msra.mxu0 0
    %4775 = vmatprep.subr.bf16.mxu0 0
    %4776 = vmatpush1.bf16.msra.mxu0 0
    %4777 = vmatprep.subr.bf16.mxu0 0
    %4778 = vmatpush1.bf16.msra.mxu0 0
    %4779 = vmatprep.subr.bf16.mxu0 0
    %4780 = vmatpush1.bf16.msra.mxu0 0
    %4781 = vmatprep.subr.bf16.mxu0 0
    %4782 = vmatpush1.bf16.msra.mxu0 0
    %4783 = vmatprep.subr.bf16.mxu0 0
    %4784 = vmatpush1.bf16.msra.mxu0 0
    %4785 = vmatprep.subr.bf16.mxu0 0
    %4786 = vmatpush1.bf16.msra.mxu0 0
    %4787 = vmatprep.subr.bf16.mxu0 0
    %4788 = vmatpush1.bf16.msra.mxu0 0
    %4789 = vmatprep.subr.bf16.mxu0 0
    %4790 = vmatpush1.bf16.msra.mxu0 0
    %4791 = vmatprep.subr.bf16.mxu0 0
    %4792 = vmatpush1.bf16.msra.mxu0 0
    %4793 = vmatprep.subr.bf16.mxu0 0
    %4794 = vmatpush1.bf16.msra.mxu0 0
    %4795 = vmatprep.subr.bf16.mxu0 0
    %4796 = vmatpush1.bf16.msra.mxu0 0
    %4797 = vmatprep.subr.bf16.mxu0 0
    %4798 = vmatpush1.bf16.msra.mxu0 0
    %4799 = vmatprep.subr.bf16.mxu0 0
    %4800 = vmatpush1.bf16.msra.mxu0 0
    %4801 = vmatprep.mubr.bf16.mxu0 0
    %4802 = vmatmul.mubr.bf16.gmra.mrb[0].mxu0 %v4758
    %v4803 = vpop.f32.mrb[0].mxu0
    %v4804 = vadd.f32 0.0, %v4803
    %v4805 = vpop.f32.mrb[0].mxu0
    %v4806 = vpop.f32.mrb[0].mxu0
    %v4807 = vadd.f32 0.0, %v4806
    %v4808 = vpop.f32.mrb[0].mxu0
    %4809 = vmatprep.mubr.bf16.mxu0 0
    %4810 = vmatmul.mubr.bf16.gmra.mrb[0].mxu0 %v4761
    %v4811 = vpop.f32.mrb[0].mxu0
    %v4812 = vadd.f32 0.0, %v4811
    %v4813 = vpop.f32.mrb[0].mxu0
    %v4814 = vpop.f32.mrb[0].mxu0
    %v4815 = vadd.f32 0.0, %v4814
    %v4816 = vpop.f32.mrb[0].mxu0
    %4817 = vmatprep.mubr.bf16.mxu0 0
    %4818 = vmatmul.mubr.bf16.gmra.mrb[0].mxu0 %v4764
    %v4819 = vpop.f32.mrb[0].mxu0
    %v4820 = vadd.f32 0.0, %v4819
    %v4821 = vpop.f32.mrb[0].mxu0
    %v4822 = vpop.f32.mrb[0].mxu0
    %v4823 = vadd.f32 0.0, %v4822
    %v4824 = vpop.f32.mrb[0].mxu0
    %4825 = vmatprep.mubr.bf16.mxu0 0
    %4826 = vmatmul.mubr.bf16.gmra.mrb[0].mxu0 %v4767
    %v4827 = vpop.f32.mrb[0].mxu0
    %v4828 = vadd.f32 0.0, %v4827
    %v4829 = vpop.f32.mrb[0].mxu0
    %v4830 = vpop.f32.mrb[0].mxu0
    %v4831 = vpop.f32.mrb[0].mxu0
    %4832 = vdwg.mxu0
    %v4833 = vadd.f32 %v4616, %v4804
    %v4834 = vadd.f32 %v4617, %v4807
    %v4835 = vadd.f32 %v4618, %v4812
    %v4836 = vadd.f32 %v4619, %v4815
    %v4837 = vadd.f32 %v4620, %v4820
    %v4838 = vadd.f32 %v4621, %v4823
    %v4839 = vadd.f32 %v4622, %v4828
    %v4840 = vld [vmem:[%s0 + $0x2c0] sm:$0xf]
    %v4841 = vld [vmem:[%s0 + $0x2c4] sm:$0xf]
    %v4842 = vld [vmem:[%s0 + $0x2c8] sm:$0xf]
    %v4843 = vld [vmem:[%s0 + $0x2cc] sm:$0xf]
    %v4844 = vld [vmem:[%s0 + $0x2d0] sm:$0xf]
    %v4845 = vld [vmem:[%s0 + $0x2d4] sm:$0xf]
    %v4846 = vld [vmem:[%s0 + $0x2d8] sm:$0xf]
    %v4847 = vld [vmem:[%s0 + $0x2dc] sm:$0xf]
    %v4856 = vunpack.c.l.b16 %v4840
    %v4857 = vunpack.c.l.b16 %v4841
    %v4858 = vunpack.c.l.b16 %v4842
    %v4859 = vunpack.c.l.b16 %v4843
    %v4860 = vunpack.c.l.b16 %v4844
    %v4861 = vunpack.c.l.b16 %v4845
    %v4862 = vunpack.c.l.b16 %v4846
    %v4863 = vunpack.c.l.b16 %v4847
    %v4864 = vpack.c.b16 %v4857, %v4856
    %v4865 = vpack.c.b16 %v4859, %v4858
    %v4866 = vpack.c.b16 %v4861, %v4860
    %v4867 = vpack.c.b16 %v4863, %v4862
    %v4869 = vsel %vm86, %v4864, 0
    %v4872 = vsel %vm86, %v4865, 0
    %v4875 = vsel %vm86, %v4866, 0
    %v4878 = vsel %vm86, %v4867, 0
    %4880 = vmatprep.subr.bf16.mxu0 0
    %4881 = vmatpush1.bf16.msra.mxu0 %v83
    %4882 = vmatprep.subr.bf16.mxu0 0
    %4883 = vmatpush1.bf16.msra.mxu0 %v104
    %4884 = vmatprep.subr.bf16.mxu0 0
    %4885 = vmatpush1.bf16.msra.mxu0 0
    %4886 = vmatprep.subr.bf16.mxu0 0
    %4887 = vmatpush1.bf16.msra.mxu0 0
    %4888 = vmatprep.subr.bf16.mxu0 0
    %4889 = vmatpush1.bf16.msra.mxu0 0
    %4890 = vmatprep.subr.bf16.mxu0 0
    %4891 = vmatpush1.bf16.msra.mxu0 0
    %4892 = vmatprep.subr.bf16.mxu0 0
    %4893 = vmatpush1.bf16.msra.mxu0 0
    %4894 = vmatprep.subr.bf16.mxu0 0
    %4895 = vmatpush1.bf16.msra.mxu0 0
    %4896 = vmatprep.subr.bf16.mxu0 0
    %4897 = vmatpush1.bf16.msra.mxu0 0
    %4898 = vmatprep.subr.bf16.mxu0 0
    %4899 = vmatpush1.bf16.msra.mxu0 0
    %4900 = vmatprep.subr.bf16.mxu0 0
    %4901 = vmatpush1.bf16.msra.mxu0 0
    %4902 = vmatprep.subr.bf16.mxu0 0
    %4903 = vmatpush1.bf16.msra.mxu0 0
    %4904 = vmatprep.subr.bf16.mxu0 0
    %4905 = vmatpush1.bf16.msra.mxu0 0
    %4906 = vmatprep.subr.bf16.mxu0 0
    %4907 = vmatpush1.bf16.msra.mxu0 0
    %4908 = vmatprep.subr.bf16.mxu0 0
    %4909 = vmatpush1.bf16.msra.mxu0 0
    %4910 = vmatprep.subr.bf16.mxu0 0
    %4911 = vmatpush1.bf16.msra.mxu0 0
    %4912 = vmatprep.mubr.bf16.mxu0 0
    %4913 = vmatmul.mubr.bf16.gmra.mrb[0].mxu0 %v4869
    %v4914 = vpop.f32.mrb[0].mxu0
    %v4915 = vadd.f32 %v53, %v4914
    %v4916 = vpop.f32.mrb[0].mxu0
    %v4917 = vpop.f32.mrb[0].mxu0
    %v4918 = vadd.f32 %v53, %v4917
    %v4919 = vpop.f32.mrb[0].mxu0
    %4920 = vmatprep.mubr.bf16.mxu0 0
    %4921 = vmatmul.mubr.bf16.gmra.mrb[0].mxu0 %v4872
    %v4922 = vpop.f32.mrb[0].mxu0
    %v4923 = vadd.f32 %v53, %v4922
    %v4924 = vpop.f32.mrb[0].mxu0
    %v4925 = vpop.f32.mrb[0].mxu0
    %v4926 = vadd.f32 %v53, %v4925
    %v4927 = vpop.f32.mrb[0].mxu0
    %4928 = vmatprep.mubr.bf16.mxu0 0
    %4929 = vmatmul.mubr.bf16.gmra.mrb[0].mxu0 %v4875
    %v4930 = vpop.f32.mrb[0].mxu0
    %v4931 = vadd.f32 %v53, %v4930
    %v4932 = vpop.f32.mrb[0].mxu0
    %v4933 = vpop.f32.mrb[0].mxu0
    %v4934 = vadd.f32 %v53, %v4933
    %v4935 = vpop.f32.mrb[0].mxu0
    %4936 = vmatprep.mubr.bf16.mxu0 0
    %4937 = vmatmul.mubr.bf16.gmra.mrb[0].mxu0 %v4878
    %v4938 = vpop.f32.mrb[0].mxu0
    %v4939 = vadd.f32 %v53, %v4938
    %v4940 = vpop.f32.mrb[0].mxu0
    %v4941 = vpop.f32.mrb[0].mxu0
    %v4942 = vadd.f32 %v53, %v4941
    %v4943 = vpop.f32.mrb[0].mxu0
    %4944 = vdwg.mxu0
    %v4945 = vmax.f32 %v4915, 0.0
    %v4946 = vmax.f32 %v4918, 0.0
    %v4947 = vmax.f32 %v4923, 0.0
    %v4948 = vmax.f32 %v4926, 0.0
    %v4949 = vmax.f32 %v4931, 0.0
    %v4950 = vmax.f32 %v4934, 0.0
    %v4951 = vmax.f32 %v4939, 0.0
    %v4952 = vmax.f32 %v4942, 0.0
    %v4953 = vpack.c.bf16 %v4946, %v4945
    %v4954 = vpack.c.bf16 %v4948, %v4947
    %v4955 = vpack.c.bf16 %v4950, %v4949
    %v4956 = vpack.c.bf16 %v4952, %v4951
    %s4957 = scalar_lea.vmem %s3, 352
    %v4958 = vld [vmem:[%s4957] sm:$0xf]
    %v4959 = vld [vmem:[%s4957 + $0x4] sm:$0xf]
    %v4960 = vld [vmem:[%s4957 + $0x8] sm:$0xf]
    %v4961 = vld [vmem:[%s4957 + $0xc] sm:$0xf]
    %v4966 = vunpack.c.l.b16 %v4958
    %v4967 = vunpack.c.l.b16 %v4959
    %v4968 = vunpack.c.l.b16 %v4960
    %v4969 = vunpack.c.l.b16 %v4961
    %v4970 = vpack.c.b16 %v4967, %v4966
    %v4971 = vpack.c.b16 %v4969, %v4968
    %v4975 = vsel %vm199, %v4953, 0
    %v4978 = vsel %vm199, %v4954, 0
    %v4981 = vsel %vm199, %v4955, 0
    %v4984 = vsel %vm199, %v4956, 0
    %4986 = vmatprep.subr.bf16.mxu0 0
    %4987 = vmatpush1.bf16.msra.mxu0 %v4970
    %4988 = vmatprep.subr.bf16.mxu0 0
    %4989 = vmatpush1.bf16.msra.mxu0 %v4971
    %4990 = vmatprep.subr.bf16.mxu0 0
    %4991 = vmatpush1.bf16.msra.mxu0 0
    %4992 = vmatprep.subr.bf16.mxu0 0
    %4993 = vmatpush1.bf16.msra.mxu0 0
    %4994 = vmatprep.subr.bf16.mxu0 0
    %4995 = vmatpush1.bf16.msra.mxu0 0
    %4996 = vmatprep.subr.bf16.mxu0 0
    %4997 = vmatpush1.bf16.msra.mxu0 0
    %4998 = vmatprep.subr.bf16.mxu0 0
    %4999 = vmatpush1.bf16.msra.mxu0 0
    %5000 = vmatprep.subr.bf16.mxu0 0
    %5001 = vmatpush1.bf16.msra.mxu0 0
    %5002 = vmatprep.subr.bf16.mxu0 0
    %5003 = vmatpush1.bf16.msra.mxu0 0
    %5004 = vmatprep.subr.bf16.mxu0 0
    %5005 = vmatpush1.bf16.msra.mxu0 0
    %5006 = vmatprep.subr.bf16.mxu0 0
    %5007 = vmatpush1.bf16.msra.mxu0 0
    %5008 = vmatprep.subr.bf16.mxu0 0
    %5009 = vmatpush1.bf16.msra.mxu0 0
    %5010 = vmatprep.subr.bf16.mxu0 0
    %5011 = vmatpush1.bf16.msra.mxu0 0
    %5012 = vmatprep.subr.bf16.mxu0 0
    %5013 = vmatpush1.bf16.msra.mxu0 0
    %5014 = vmatprep.subr.bf16.mxu0 0
    %5015 = vmatpush1.bf16.msra.mxu0 0
    %5016 = vmatprep.subr.bf16.mxu0 0
    %5017 = vmatpush1.bf16.msra.mxu0 0
    %5018 = vmatprep.mubr.bf16.mxu0 0
    %5019 = vmatmul.mubr.bf16.gmra.mrb[0].mxu0 %v4975
    %v5020 = vpop.f32.mrb[0].mxu0
    %v5021 = vadd.f32 0.0, %v5020
    %v5022 = vpop.f32.mrb[0].mxu0
    %v5023 = vpop.f32.mrb[0].mxu0
    %v5024 = vadd.f32 0.0, %v5023
    %v5025 = vpop.f32.mrb[0].mxu0
    %5026 = vmatprep.mubr.bf16.mxu0 0
    %5027 = vmatmul.mubr.bf16.gmra.mrb[0].mxu0 %v4978
    %v5028 = vpop.f32.mrb[0].mxu0
    %v5029 = vadd.f32 0.0, %v5028
    %v5030 = vpop.f32.mrb[0].mxu0
    %v5031 = vpop.f32.mrb[0].mxu0
    %v5032 = vadd.f32 0.0, %v5031
    %v5033 = vpop.f32.mrb[0].mxu0
    %5034 = vmatprep.mubr.bf16.mxu0 0
    %5035 = vmatmul.mubr.bf16.gmra.mrb[0].mxu0 %v4981
    %v5036 = vpop.f32.mrb[0].mxu0
    %v5037 = vadd.f32 0.0, %v5036
    %v5038 = vpop.f32.mrb[0].mxu0
    %v5039 = vpop.f32.mrb[0].mxu0
    %v5040 = vadd.f32 0.0, %v5039
    %v5041 = vpop.f32.mrb[0].mxu0
    %5042 = vmatprep.mubr.bf16.mxu0 0
    %5043 = vmatmul.mubr.bf16.gmra.mrb[0].mxu0 %v4984
    %v5044 = vpop.f32.mrb[0].mxu0
    %v5045 = vadd.f32 0.0, %v5044
    %v5046 = vpop.f32.mrb[0].mxu0
    %v5047 = vpop.f32.mrb[0].mxu0
    %v5048 = vpop.f32.mrb[0].mxu0
    %5049 = vdwg.mxu0
    %v5050 = vadd.f32 %v4833, %v5021
    %v5051 = vadd.f32 %v4834, %v5024
    %v5052 = vadd.f32 %v4835, %v5029
    %v5053 = vadd.f32 %v4836, %v5032
    %v5054 = vadd.f32 %v4837, %v5037
    %v5055 = vadd.f32 %v4838, %v5040
    %v5056 = vadd.f32 %v4839, %v5045
    %v5057 = vld [vmem:[%s0 + $0x2e0] sm:$0xf]
    %v5058 = vld [vmem:[%s0 + $0x2e4] sm:$0xf]
    %v5059 = vld [vmem:[%s0 + $0x2e8] sm:$0xf]
    %v5060 = vld [vmem:[%s0 + $0x2ec] sm:$0xf]
    %v5061 = vld [vmem:[%s0 + $0x2f0] sm:$0xf]
    %v5062 = vld [vmem:[%s0 + $0x2f4] sm:$0xf]
    %v5063 = vld [vmem:[%s0 + $0x2f8] sm:$0xf]
    %v5064 = vld [vmem:[%s0 + $0x2fc] sm:$0xf]
    %v5073 = vunpack.c.l.b16 %v5057
    %v5074 = vunpack.c.l.b16 %v5058
    %v5075 = vunpack.c.l.b16 %v5059
    %v5076 = vunpack.c.l.b16 %v5060
    %v5077 = vunpack.c.l.b16 %v5061
    %v5078 = vunpack.c.l.b16 %v5062
    %v5079 = vunpack.c.l.b16 %v5063
    %v5080 = vunpack.c.l.b16 %v5064
    %v5081 = vpack.c.b16 %v5074, %v5073
    %v5082 = vpack.c.b16 %v5076, %v5075
    %v5083 = vpack.c.b16 %v5078, %v5077
    %v5084 = vpack.c.b16 %v5080, %v5079
    %v5086 = vsel %vm86, %v5081, 0
    %v5089 = vsel %vm86, %v5082, 0
    %v5092 = vsel %vm86, %v5083, 0
    %v5095 = vsel %vm86, %v5084, 0
    %5097 = vmatprep.subr.bf16.mxu0 0
    %5098 = vmatpush1.bf16.msra.mxu0 %v83
    %5099 = vmatprep.subr.bf16.mxu0 0
    %5100 = vmatpush1.bf16.msra.mxu0 %v104
    %5101 = vmatprep.subr.bf16.mxu0 0
    %5102 = vmatpush1.bf16.msra.mxu0 0
    %5103 = vmatprep.subr.bf16.mxu0 0
    %5104 = vmatpush1.bf16.msra.mxu0 0
    %5105 = vmatprep.subr.bf16.mxu0 0
    %5106 = vmatpush1.bf16.msra.mxu0 0
    %5107 = vmatprep.subr.bf16.mxu0 0
    %5108 = vmatpush1.bf16.msra.mxu0 0
    %5109 = vmatprep.subr.bf16.mxu0 0
    %5110 = vmatpush1.bf16.msra.mxu0 0
    %5111 = vmatprep.subr.bf16.mxu0 0
    %5112 = vmatpush1.bf16.msra.mxu0 0
    %5113 = vmatprep.subr.bf16.mxu0 0
    %5114 = vmatpush1.bf16.msra.mxu0 0
    %5115 = vmatprep.subr.bf16.mxu0 0
    %5116 = vmatpush1.bf16.msra.mxu0 0
    %5117 = vmatprep.subr.bf16.mxu0 0
    %5118 = vmatpush1.bf16.msra.mxu0 0
    %5119 = vmatprep.subr.bf16.mxu0 0
    %5120 = vmatpush1.bf16.msra.mxu0 0
    %5121 = vmatprep.subr.bf16.mxu0 0
    %5122 = vmatpush1.bf16.msra.mxu0 0
    %5123 = vmatprep.subr.bf16.mxu0 0
    %5124 = vmatpush1.bf16.msra.mxu0 0
    %5125 = vmatprep.subr.bf16.mxu0 0
    %5126 = vmatpush1.bf16.msra.mxu0 0
    %5127 = vmatprep.subr.bf16.mxu0 0
    %5128 = vmatpush1.bf16.msra.mxu0 0
    %5129 = vmatprep.mubr.bf16.mxu0 0
    %5130 = vmatmul.mubr.bf16.gmra.mrb[0].mxu0 %v5086
    %v5131 = vpop.f32.mrb[0].mxu0
    %v5132 = vadd.f32 %v53, %v5131
    %v5133 = vpop.f32.mrb[0].mxu0
    %v5134 = vpop.f32.mrb[0].mxu0
    %v5135 = vadd.f32 %v53, %v5134
    %v5136 = vpop.f32.mrb[0].mxu0
    %5137 = vmatprep.mubr.bf16.mxu0 0
    %5138 = vmatmul.mubr.bf16.gmra.mrb[0].mxu0 %v5089
    %v5139 = vpop.f32.mrb[0].mxu0
    %v5140 = vadd.f32 %v53, %v5139
    %v5141 = vpop.f32.mrb[0].mxu0
    %v5142 = vpop.f32.mrb[0].mxu0
    %v5143 = vadd.f32 %v53, %v5142
    %v5144 = vpop.f32.mrb[0].mxu0
    %5145 = vmatprep.mubr.bf16.mxu0 0
    %5146 = vmatmul.mubr.bf16.gmra.mrb[0].mxu0 %v5092
    %v5147 = vpop.f32.mrb[0].mxu0
    %v5148 = vadd.f32 %v53, %v5147
    %v5149 = vpop.f32.mrb[0].mxu0
    %v5150 = vpop.f32.mrb[0].mxu0
    %v5151 = vadd.f32 %v53, %v5150
    %v5152 = vpop.f32.mrb[0].mxu0
    %5153 = vmatprep.mubr.bf16.mxu0 0
    %5154 = vmatmul.mubr.bf16.gmra.mrb[0].mxu0 %v5095
    %v5155 = vpop.f32.mrb[0].mxu0
    %v5156 = vadd.f32 %v53, %v5155
    %v5157 = vpop.f32.mrb[0].mxu0
    %v5158 = vpop.f32.mrb[0].mxu0
    %v5159 = vadd.f32 %v53, %v5158
    %v5160 = vpop.f32.mrb[0].mxu0
    %5161 = vdwg.mxu0
    %v5162 = vmax.f32 %v5132, 0.0
    %v5163 = vmax.f32 %v5135, 0.0
    %v5164 = vmax.f32 %v5140, 0.0
    %v5165 = vmax.f32 %v5143, 0.0
    %v5166 = vmax.f32 %v5148, 0.0
    %v5167 = vmax.f32 %v5151, 0.0
    %v5168 = vmax.f32 %v5156, 0.0
    %v5169 = vmax.f32 %v5159, 0.0
    %v5170 = vpack.c.bf16 %v5163, %v5162
    %v5171 = vpack.c.bf16 %v5165, %v5164
    %v5172 = vpack.c.bf16 %v5167, %v5166
    %v5173 = vpack.c.bf16 %v5169, %v5168
    %s5174 = scalar_lea.vmem %s3, 368
    %v5175 = vld [vmem:[%s5174] sm:$0xf]
    %v5176 = vld [vmem:[%s5174 + $0x4] sm:$0xf]
    %v5177 = vld [vmem:[%s5174 + $0x8] sm:$0xf]
    %v5178 = vld [vmem:[%s5174 + $0xc] sm:$0xf]
    %v5183 = vunpack.c.l.b16 %v5175
    %v5184 = vunpack.c.l.b16 %v5176
    %v5185 = vunpack.c.l.b16 %v5177
    %v5186 = vunpack.c.l.b16 %v5178
    %v5187 = vpack.c.b16 %v5184, %v5183
    %v5188 = vpack.c.b16 %v5186, %v5185
    %v5192 = vsel %vm199, %v5170, 0
    %v5195 = vsel %vm199, %v5171, 0
    %v5198 = vsel %vm199, %v5172, 0
    %v5201 = vsel %vm199, %v5173, 0
    %5203 = vmatprep.subr.bf16.mxu0 0
    %5204 = vmatpush1.bf16.msra.mxu0 %v5187
    %5205 = vmatprep.subr.bf16.mxu0 0
    %5206 = vmatpush1.bf16.msra.mxu0 %v5188
    %5207 = vmatprep.subr.bf16.mxu0 0
    %5208 = vmatpush1.bf16.msra.mxu0 0
    %5209 = vmatprep.subr.bf16.mxu0 0
    %5210 = vmatpush1.bf16.msra.mxu0 0
    %5211 = vmatprep.subr.bf16.mxu0 0
    %5212 = vmatpush1.bf16.msra.mxu0 0
    %5213 = vmatprep.subr.bf16.mxu0 0
    %5214 = vmatpush1.bf16.msra.mxu0 0
    %5215 = vmatprep.subr.bf16.mxu0 0
    %5216 = vmatpush1.bf16.msra.mxu0 0
    %5217 = vmatprep.subr.bf16.mxu0 0
    %5218 = vmatpush1.bf16.msra.mxu0 0
    %5219 = vmatprep.subr.bf16.mxu0 0
    %5220 = vmatpush1.bf16.msra.mxu0 0
    %5221 = vmatprep.subr.bf16.mxu0 0
    %5222 = vmatpush1.bf16.msra.mxu0 0
    %5223 = vmatprep.subr.bf16.mxu0 0
    %5224 = vmatpush1.bf16.msra.mxu0 0
    %5225 = vmatprep.subr.bf16.mxu0 0
    %5226 = vmatpush1.bf16.msra.mxu0 0
    %5227 = vmatprep.subr.bf16.mxu0 0
    %5228 = vmatpush1.bf16.msra.mxu0 0
    %5229 = vmatprep.subr.bf16.mxu0 0
    %5230 = vmatpush1.bf16.msra.mxu0 0
    %5231 = vmatprep.subr.bf16.mxu0 0
    %5232 = vmatpush1.bf16.msra.mxu0 0
    %5233 = vmatprep.subr.bf16.mxu0 0
    %5234 = vmatpush1.bf16.msra.mxu0 0
    %5235 = vmatprep.mubr.bf16.mxu0 0
    %5236 = vmatmul.mubr.bf16.gmra.mrb[0].mxu0 %v5192
    %v5237 = vpop.f32.mrb[0].mxu0
    %v5238 = vadd.f32 0.0, %v5237
    %v5239 = vpop.f32.mrb[0].mxu0
    %v5240 = vpop.f32.mrb[0].mxu0
    %v5241 = vadd.f32 0.0, %v5240
    %v5242 = vpop.f32.mrb[0].mxu0
    %5243 = vmatprep.mubr.bf16.mxu0 0
    %5244 = vmatmul.mubr.bf16.gmra.mrb[0].mxu0 %v5195
    %v5245 = vpop.f32.mrb[0].mxu0
    %v5246 = vadd.f32 0.0, %v5245
    %v5247 = vpop.f32.mrb[0].mxu0
    %v5248 = vpop.f32.mrb[0].mxu0
    %v5249 = vadd.f32 0.0, %v5248
    %v5250 = vpop.f32.mrb[0].mxu0
    %5251 = vmatprep.mubr.bf16.mxu0 0
    %5252 = vmatmul.mubr.bf16.gmra.mrb[0].mxu0 %v5198
    %v5253 = vpop.f32.mrb[0].mxu0
    %v5254 = vadd.f32 0.0, %v5253
    %v5255 = vpop.f32.mrb[0].mxu0
    %v5256 = vpop.f32.mrb[0].mxu0
    %v5257 = vadd.f32 0.0, %v5256
    %v5258 = vpop.f32.mrb[0].mxu0
    %5259 = vmatprep.mubr.bf16.mxu0 0
    %5260 = vmatmul.mubr.bf16.gmra.mrb[0].mxu0 %v5201
    %v5261 = vpop.f32.mrb[0].mxu0
    %v5262 = vadd.f32 0.0, %v5261
    %v5263 = vpop.f32.mrb[0].mxu0
    %v5264 = vpop.f32.mrb[0].mxu0
    %v5265 = vpop.f32.mrb[0].mxu0
    %5266 = vdwg.mxu0
    %v5267 = vadd.f32 %v5050, %v5238
    %v5268 = vadd.f32 %v5051, %v5241
    %v5269 = vadd.f32 %v5052, %v5246
    %v5270 = vadd.f32 %v5053, %v5249
    %v5271 = vadd.f32 %v5054, %v5254
    %v5272 = vadd.f32 %v5055, %v5257
    %v5273 = vadd.f32 %v5056, %v5262
    %v5274 = vld [vmem:[%s0 + $0x300] sm:$0xf]
    %v5275 = vld [vmem:[%s0 + $0x304] sm:$0xf]
    %v5276 = vld [vmem:[%s0 + $0x308] sm:$0xf]
    %v5277 = vld [vmem:[%s0 + $0x30c] sm:$0xf]
    %v5278 = vld [vmem:[%s0 + $0x310] sm:$0xf]
    %v5279 = vld [vmem:[%s0 + $0x314] sm:$0xf]
    %v5280 = vld [vmem:[%s0 + $0x318] sm:$0xf]
    %v5281 = vld [vmem:[%s0 + $0x31c] sm:$0xf]
    %v5290 = vunpack.c.l.b16 %v5274
    %v5291 = vunpack.c.l.b16 %v5275
    %v5292 = vunpack.c.l.b16 %v5276
    %v5293 = vunpack.c.l.b16 %v5277
    %v5294 = vunpack.c.l.b16 %v5278
    %v5295 = vunpack.c.l.b16 %v5279
    %v5296 = vunpack.c.l.b16 %v5280
    %v5297 = vunpack.c.l.b16 %v5281
    %v5298 = vpack.c.b16 %v5291, %v5290
    %v5299 = vpack.c.b16 %v5293, %v5292
    %v5300 = vpack.c.b16 %v5295, %v5294
    %v5301 = vpack.c.b16 %v5297, %v5296
    %v5303 = vsel %vm86, %v5298, 0
    %v5306 = vsel %vm86, %v5299, 0
    %v5309 = vsel %vm86, %v5300, 0
    %v5312 = vsel %vm86, %v5301, 0
    %5314 = vmatprep.subr.bf16.mxu0 0
    %5315 = vmatpush1.bf16.msra.mxu0 %v83
    %5316 = vmatprep.subr.bf16.mxu0 0
    %5317 = vmatpush1.bf16.msra.mxu0 %v104
    %5318 = vmatprep.subr.bf16.mxu0 0
    %5319 = vmatpush1.bf16.msra.mxu0 0
    %5320 = vmatprep.subr.bf16.mxu0 0
    %5321 = vmatpush1.bf16.msra.mxu0 0
    %5322 = vmatprep.subr.bf16.mxu0 0
    %5323 = vmatpush1.bf16.msra.mxu0 0
    %5324 = vmatprep.subr.bf16.mxu0 0
    %5325 = vmatpush1.bf16.msra.mxu0 0
    %5326 = vmatprep.subr.bf16.mxu0 0
    %5327 = vmatpush1.bf16.msra.mxu0 0
    %5328 = vmatprep.subr.bf16.mxu0 0
    %5329 = vmatpush1.bf16.msra.mxu0 0
    %5330 = vmatprep.subr.bf16.mxu0 0
    %5331 = vmatpush1.bf16.msra.mxu0 0
    %5332 = vmatprep.subr.bf16.mxu0 0
    %5333 = vmatpush1.bf16.msra.mxu0 0
    %5334 = vmatprep.subr.bf16.mxu0 0
    %5335 = vmatpush1.bf16.msra.mxu0 0
    %5336 = vmatprep.subr.bf16.mxu0 0
    %5337 = vmatpush1.bf16.msra.mxu0 0
    %5338 = vmatprep.subr.bf16.mxu0 0
    %5339 = vmatpush1.bf16.msra.mxu0 0
    %5340 = vmatprep.subr.bf16.mxu0 0
    %5341 = vmatpush1.bf16.msra.mxu0 0
    %5342 = vmatprep.subr.bf16.mxu0 0
    %5343 = vmatpush1.bf16.msra.mxu0 0
    %5344 = vmatprep.subr.bf16.mxu0 0
    %5345 = vmatpush1.bf16.msra.mxu0 0
    %5346 = vmatprep.mubr.bf16.mxu0 0
    %5347 = vmatmul.mubr.bf16.gmra.mrb[0].mxu0 %v5303
    %v5348 = vpop.f32.mrb[0].mxu0
    %v5349 = vadd.f32 %v53, %v5348
    %v5350 = vpop.f32.mrb[0].mxu0
    %v5351 = vpop.f32.mrb[0].mxu0
    %v5352 = vadd.f32 %v53, %v5351
    %v5353 = vpop.f32.mrb[0].mxu0
    %5354 = vmatprep.mubr.bf16.mxu0 0
    %5355 = vmatmul.mubr.bf16.gmra.mrb[0].mxu0 %v5306
    %v5356 = vpop.f32.mrb[0].mxu0
    %v5357 = vadd.f32 %v53, %v5356
    %v5358 = vpop.f32.mrb[0].mxu0
    %v5359 = vpop.f32.mrb[0].mxu0
    %v5360 = vadd.f32 %v53, %v5359
    %v5361 = vpop.f32.mrb[0].mxu0
    %5362 = vmatprep.mubr.bf16.mxu0 0
    %5363 = vmatmul.mubr.bf16.gmra.mrb[0].mxu0 %v5309
    %v5364 = vpop.f32.mrb[0].mxu0
    %v5365 = vadd.f32 %v53, %v5364
    %v5366 = vpop.f32.mrb[0].mxu0
    %v5367 = vpop.f32.mrb[0].mxu0
    %v5368 = vadd.f32 %v53, %v5367
    %v5369 = vpop.f32.mrb[0].mxu0
    %5370 = vmatprep.mubr.bf16.mxu0 0
    %5371 = vmatmul.mubr.bf16.gmra.mrb[0].mxu0 %v5312
    %v5372 = vpop.f32.mrb[0].mxu0
    %v5373 = vadd.f32 %v53, %v5372
    %v5374 = vpop.f32.mrb[0].mxu0
    %v5375 = vpop.f32.mrb[0].mxu0
    %v5376 = vadd.f32 %v53, %v5375
    %v5377 = vpop.f32.mrb[0].mxu0
    %5378 = vdwg.mxu0
    %v5379 = vmax.f32 %v5349, 0.0
    %v5380 = vmax.f32 %v5352, 0.0
    %v5381 = vmax.f32 %v5357, 0.0
    %v5382 = vmax.f32 %v5360, 0.0
    %v5383 = vmax.f32 %v5365, 0.0
    %v5384 = vmax.f32 %v5368, 0.0
    %v5385 = vmax.f32 %v5373, 0.0
    %v5386 = vmax.f32 %v5376, 0.0
    %v5387 = vpack.c.bf16 %v5380, %v5379
    %v5388 = vpack.c.bf16 %v5382, %v5381
    %v5389 = vpack.c.bf16 %v5384, %v5383
    %v5390 = vpack.c.bf16 %v5386, %v5385
    %s5391 = scalar_lea.vmem %s3, 384
    %v5392 = vld [vmem:[%s5391] sm:$0xf]
    %v5393 = vld [vmem:[%s5391 + $0x4] sm:$0xf]
    %v5394 = vld [vmem:[%s5391 + $0x8] sm:$0xf]
    %v5395 = vld [vmem:[%s5391 + $0xc] sm:$0xf]
    %v5400 = vunpack.c.l.b16 %v5392
    %v5401 = vunpack.c.l.b16 %v5393
    %v5402 = vunpack.c.l.b16 %v5394
    %v5403 = vunpack.c.l.b16 %v5395
    %v5404 = vpack.c.b16 %v5401, %v5400
    %v5405 = vpack.c.b16 %v5403, %v5402
    %v5409 = vsel %vm199, %v5387, 0
    %v5412 = vsel %vm199, %v5388, 0
    %v5415 = vsel %vm199, %v5389, 0
    %v5418 = vsel %vm199, %v5390, 0
    %5420 = vmatprep.subr.bf16.mxu0 0
    %5421 = vmatpush1.bf16.msra.mxu0 %v5404
    %5422 = vmatprep.subr.bf16.mxu0 0
    %5423 = vmatpush1.bf16.msra.mxu0 %v5405
    %5424 = vmatprep.subr.bf16.mxu0 0
    %5425 = vmatpush1.bf16.msra.mxu0 0
    %5426 = vmatprep.subr.bf16.mxu0 0
    %5427 = vmatpush1.bf16.msra.mxu0 0
    %5428 = vmatprep.subr.bf16.mxu0 0
    %5429 = vmatpush1.bf16.msra.mxu0 0
    %5430 = vmatprep.subr.bf16.mxu0 0
    %5431 = vmatpush1.bf16.msra.mxu0 0
    %5432 = vmatprep.subr.bf16.mxu0 0
    %5433 = vmatpush1.bf16.msra.mxu0 0
    %5434 = vmatprep.subr.bf16.mxu0 0
    %5435 = vmatpush1.bf16.msra.mxu0 0
    %5436 = vmatprep.subr.bf16.mxu0 0
    %5437 = vmatpush1.bf16.msra.mxu0 0
    %5438 = vmatprep.subr.bf16.mxu0 0
    %5439 = vmatpush1.bf16.msra.mxu0 0
    %5440 = vmatprep.subr.bf16.mxu0 0
    %5441 = vmatpush1.bf16.msra.mxu0 0
    %5442 = vmatprep.subr.bf16.mxu0 0
    %5443 = vmatpush1.bf16.msra.mxu0 0
    %5444 = vmatprep.subr.bf16.mxu0 0
    %5445 = vmatpush1.bf16.msra.mxu0 0
    %5446 = vmatprep.subr.bf16.mxu0 0
    %5447 = vmatpush1.bf16.msra.mxu0 0
    %5448 = vmatprep.subr.bf16.mxu0 0
    %5449 = vmatpush1.bf16.msra.mxu0 0
    %5450 = vmatprep.subr.bf16.mxu0 0
    %5451 = vmatpush1.bf16.msra.mxu0 0
    %5452 = vmatprep.mubr.bf16.mxu0 0
    %5453 = vmatmul.mubr.bf16.gmra.mrb[0].mxu0 %v5409
    %v5454 = vpop.f32.mrb[0].mxu0
    %v5455 = vadd.f32 0.0, %v5454
    %v5456 = vpop.f32.mrb[0].mxu0
    %v5457 = vpop.f32.mrb[0].mxu0
    %v5458 = vadd.f32 0.0, %v5457
    %v5459 = vpop.f32.mrb[0].mxu0
    %5460 = vmatprep.mubr.bf16.mxu0 0
    %5461 = vmatmul.mubr.bf16.gmra.mrb[0].mxu0 %v5412
    %v5462 = vpop.f32.mrb[0].mxu0
    %v5463 = vadd.f32 0.0, %v5462
    %v5464 = vpop.f32.mrb[0].mxu0
    %v5465 = vpop.f32.mrb[0].mxu0
    %v5466 = vadd.f32 0.0, %v5465
    %v5467 = vpop.f32.mrb[0].mxu0
    %5468 = vmatprep.mubr.bf16.mxu0 0
    %5469 = vmatmul.mubr.bf16.gmra.mrb[0].mxu0 %v5415
    %v5470 = vpop.f32.mrb[0].mxu0
    %v5471 = vadd.f32 0.0, %v5470
    %v5472 = vpop.f32.mrb[0].mxu0
    %v5473 = vpop.f32.mrb[0].mxu0
    %v5474 = vadd.f32 0.0, %v5473
    %v5475 = vpop.f32.mrb[0].mxu0
    %5476 = vmatprep.mubr.bf16.mxu0 0
    %5477 = vmatmul.mubr.bf16.gmra.mrb[0].mxu0 %v5418
    %v5478 = vpop.f32.mrb[0].mxu0
    %v5479 = vadd.f32 0.0, %v5478
    %v5480 = vpop.f32.mrb[0].mxu0
    %v5481 = vpop.f32.mrb[0].mxu0
    %v5482 = vpop.f32.mrb[0].mxu0
    %5483 = vdwg.mxu0
    %v5484 = vadd.f32 %v5267, %v5455
    %v5485 = vadd.f32 %v5268, %v5458
    %v5486 = vadd.f32 %v5269, %v5463
    %v5487 = vadd.f32 %v5270, %v5466
    %v5488 = vadd.f32 %v5271, %v5471
    %v5489 = vadd.f32 %v5272, %v5474
    %v5490 = vadd.f32 %v5273, %v5479
    %v5491 = vmax.f32 %v5484, 0.0
    %v5492 = vmax.f32 %v5485, 0.0
    %v5493 = vmax.f32 %v5486, 0.0
    %v5494 = vmax.f32 %v5487, 0.0
    %v5495 = vmax.f32 %v5488, 0.0
    %v5496 = vmax.f32 %v5489, 0.0
    %v5497 = vmax.f32 %v5490, 0.0
    %v5498 = vld [vmem:[%s6] sm:$0x1]
    %v5500 = vlaneseq
    %v5501 = vshrl.u32 %v5500, 7
    %v5502 = vsub.s32 0, %v5501
    %v5503 = vrot.slane %v5498, %v5502
    %v5505 = vadd.f32 %v5503, 0.0
    %v5506 = vld [vmem:[%s5] sm:$0xff]
    %v5507 = vld [vmem:[%s5 + $0x8] sm:$0xff]
    %v5508 = vld [vmem:[%s5 + $0x10] sm:$0xff]
    %v5509 = vld [vmem:[%s5 + $0x18] sm:$0xff]
    %v5510 = vld [vmem:[%s5 + $0x20] sm:$0xff]
    %v5511 = vld [vmem:[%s5 + $0x28] sm:$0xff]
    %v5512 = vld [vmem:[%s5 + $0x30] sm:$0xff]
    %v5513 = vld [vmem:[%s5 + $0x38] sm:$0xff]
    %vm5514 = vcmask 523264
    %v5516 = vsel %vm5514, %v5491, 0
    %5518 = vmatprep.subr.mxu0 0.0
    %5519 = vmatpush1.msra.mxu0 %v5506
    %5520 = vmatprep.subr.mxu0 0.0
    %5521 = vmatpush1.msra.mxu0 %v5507
    %5522 = vmatprep.subr.mxu0 0.0
    %5523 = vmatpush1.msra.mxu0 %v5508
    %5524 = vmatprep.subr.mxu0 0.0
    %5525 = vmatpush1.msra.mxu0 %v5509
    %5526 = vmatprep.subr.mxu0 0.0
    %5527 = vmatpush1.msra.mxu0 %v5510
    %5528 = vmatprep.subr.mxu0 0.0
    %5529 = vmatpush1.msra.mxu0 %v5511
    %5530 = vmatprep.subr.mxu0 0.0
    %5531 = vmatpush1.msra.mxu0 %v5512
    %5532 = vmatprep.subr.mxu0 0.0
    %5533 = vmatpush1.msra.mxu0 %v5513
    %5534 = vmatprep.subr.mxu0 0.0
    %5535 = vmatpush1.msra.mxu0 0.0
    %5536 = vmatprep.subr.mxu0 0.0
    %5537 = vmatpush1.msra.mxu0 0.0
    %5538 = vmatprep.subr.mxu0 0.0
    %5539 = vmatpush1.msra.mxu0 0.0
    %5540 = vmatprep.subr.mxu0 0.0
    %5541 = vmatpush1.msra.mxu0 0.0
    %5542 = vmatprep.subr.mxu0 0.0
    %5543 = vmatpush1.msra.mxu0 0.0
    %5544 = vmatprep.subr.mxu0 0.0
    %5545 = vmatpush1.msra.mxu0 0.0
    %5546 = vmatprep.subr.mxu0 0.0
    %5547 = vmatpush1.msra.mxu0 0.0
    %5548 = vmatprep.subr.mxu0 0.0
    %5549 = vmatpush1.msra.mxu0 0.0
    %5550 = vmatprep.subr.mxu0 0.0
    %5551 = vmatpush1.msra.mxu0 0.0
    %5552 = vmatprep.subr.mxu0 0.0
    %5553 = vmatpush1.msra.mxu0 0.0
    %5554 = vmatprep.subr.mxu0 0.0
    %5555 = vmatpush1.msra.mxu0 0.0
    %5556 = vmatprep.subr.mxu0 0.0
    %5557 = vmatpush1.msra.mxu0 0.0
    %5558 = vmatprep.subr.mxu0 0.0
    %5559 = vmatpush1.msra.mxu0 0.0
    %5560 = vmatprep.subr.mxu0 0.0
    %5561 = vmatpush1.msra.mxu0 0.0
    %5562 = vmatprep.subr.mxu0 0.0
    %5563 = vmatpush1.msra.mxu0 0.0
    %5564 = vmatprep.subr.mxu0 0.0
    %5565 = vmatpush1.msra.mxu0 0.0
    %5566 = vmatprep.subr.mxu0 0.0
    %5567 = vmatpush1.msra.mxu0 0.0
    %5568 = vmatprep.subr.mxu0 0.0
    %5569 = vmatpush1.msra.mxu0 0.0
    %5570 = vmatprep.subr.mxu0 0.0
    %5571 = vmatpush1.msra.mxu0 0.0
    %5572 = vmatprep.subr.mxu0 0.0
    %5573 = vmatpush1.msra.mxu0 0.0
    %5574 = vmatprep.subr.mxu0 0.0
    %5575 = vmatpush1.msra.mxu0 0.0
    %5576 = vmatprep.subr.mxu0 0.0
    %5577 = vmatpush1.msra.mxu0 0.0
    %5578 = vmatprep.subr.mxu0 0.0
    %5579 = vmatpush1.msra.mxu0 0.0
    %5580 = vmatprep.subr.mxu0 0.0
    %5581 = vmatpush1.msra.mxu0 0.0
    %5582 = vmatprep.mubr.f32.mxu0 0.0
    %5583 = vmatmul.mubr.f32.gmra.mrb[0].mxu0 %v5516
    %v5584 = vpop.f32.mrb[0].mxu0
    %v5585 = vadd.f32 0.0, %v5584
    %v5586 = vpop.f32.mrb[0].mxu0
    %5587 = vdwg.mxu0
    %v5588 = vadd.f32 %v5505, %v5585
    %s5589 = scalar_lea.vmem %s5, 64
    %v5590 = vld [vmem:[%s5589] sm:$0xff]
    %v5591 = vld [vmem:[%s5589 + $0x8] sm:$0xff]
    %v5592 = vld [vmem:[%s5589 + $0x10] sm:$0xff]
    %v5593 = vld [vmem:[%s5589 + $0x18] sm:$0xff]
    %v5594 = vld [vmem:[%s5589 + $0x20] sm:$0xff]
    %v5595 = vld [vmem:[%s5589 + $0x28] sm:$0xff]
    %v5596 = vld [vmem:[%s5589 + $0x30] sm:$0xff]
    %v5597 = vld [vmem:[%s5589 + $0x38] sm:$0xff]
    %v5598 = vrot.slane %v5491, 2
    %v5599 = vsel %vm5514, %v5598, 0
    %5601 = vmatprep.subr.mxu0 0.0
    %5602 = vmatpush1.msra.mxu0 %v5590
    %5603 = vmatprep.subr.mxu0 0.0
    %5604 = vmatpush1.msra.mxu0 %v5591
    %5605 = vmatprep.subr.mxu0 0.0
    %5606 = vmatpush1.msra.mxu0 %v5592
    %5607 = vmatprep.subr.mxu0 0.0
    %5608 = vmatpush1.msra.mxu0 %v5593
    %5609 = vmatprep.subr.mxu0 0.0
    %5610 = vmatpush1.msra.mxu0 %v5594
    %5611 = vmatprep.subr.mxu0 0.0
    %5612 = vmatpush1.msra.mxu0 %v5595
    %5613 = vmatprep.subr.mxu0 0.0
    %5614 = vmatpush1.msra.mxu0 %v5596
    %5615 = vmatprep.subr.mxu0 0.0
    %5616 = vmatpush1.msra.mxu0 %v5597
    %5617 = vmatprep.subr.mxu0 0.0
    %5618 = vmatpush1.msra.mxu0 0.0
    %5619 = vmatprep.subr.mxu0 0.0
    %5620 = vmatpush1.msra.mxu0 0.0
    %5621 = vmatprep.subr.mxu0 0.0
    %5622 = vmatpush1.msra.mxu0 0.0
    %5623 = vmatprep.subr.mxu0 0.0
    %5624 = vmatpush1.msra.mxu0 0.0
    %5625 = vmatprep.subr.mxu0 0.0
    %5626 = vmatpush1.msra.mxu0 0.0
    %5627 = vmatprep.subr.mxu0 0.0
    %5628 = vmatpush1.msra.mxu0 0.0
    %5629 = vmatprep.subr.mxu0 0.0
    %5630 = vmatpush1.msra.mxu0 0.0
    %5631 = vmatprep.subr.mxu0 0.0
    %5632 = vmatpush1.msra.mxu0 0.0
    %5633 = vmatprep.subr.mxu0 0.0
    %5634 = vmatpush1.msra.mxu0 0.0
    %5635 = vmatprep.subr.mxu0 0.0
    %5636 = vmatpush1.msra.mxu0 0.0
    %5637 = vmatprep.subr.mxu0 0.0
    %5638 = vmatpush1.msra.mxu0 0.0
    %5639 = vmatprep.subr.mxu0 0.0
    %5640 = vmatpush1.msra.mxu0 0.0
    %5641 = vmatprep.subr.mxu0 0.0
    %5642 = vmatpush1.msra.mxu0 0.0
    %5643 = vmatprep.subr.mxu0 0.0
    %5644 = vmatpush1.msra.mxu0 0.0
    %5645 = vmatprep.subr.mxu0 0.0
    %5646 = vmatpush1.msra.mxu0 0.0
    %5647 = vmatprep.subr.mxu0 0.0
    %5648 = vmatpush1.msra.mxu0 0.0
    %5649 = vmatprep.subr.mxu0 0.0
    %5650 = vmatpush1.msra.mxu0 0.0
    %5651 = vmatprep.subr.mxu0 0.0
    %5652 = vmatpush1.msra.mxu0 0.0
    %5653 = vmatprep.subr.mxu0 0.0
    %5654 = vmatpush1.msra.mxu0 0.0
    %5655 = vmatprep.subr.mxu0 0.0
    %5656 = vmatpush1.msra.mxu0 0.0
    %5657 = vmatprep.subr.mxu0 0.0
    %5658 = vmatpush1.msra.mxu0 0.0
    %5659 = vmatprep.subr.mxu0 0.0
    %5660 = vmatpush1.msra.mxu0 0.0
    %5661 = vmatprep.subr.mxu0 0.0
    %5662 = vmatpush1.msra.mxu0 0.0
    %5663 = vmatprep.subr.mxu0 0.0
    %5664 = vmatpush1.msra.mxu0 0.0
    %5665 = vmatprep.mubr.f32.mxu0 0.0
    %5666 = vmatmul.mubr.f32.gmra.mrb[0].mxu0 %v5599
    %v5667 = vpop.f32.mrb[0].mxu0
    %v5668 = vadd.f32 0.0, %v5667
    %v5669 = vpop.f32.mrb[0].mxu0
    %5670 = vdwg.mxu0
    %v5671 = vadd.f32 %v5588, %v5668
    %s5672 = scalar_lea.vmem %s5, 128
    %v5673 = vld [vmem:[%s5672] sm:$0xff]
    %v5674 = vld [vmem:[%s5672 + $0x8] sm:$0xff]
    %v5675 = vld [vmem:[%s5672 + $0x10] sm:$0xff]
    %v5676 = vld [vmem:[%s5672 + $0x18] sm:$0xff]
    %v5677 = vld [vmem:[%s5672 + $0x20] sm:$0xff]
    %v5678 = vld [vmem:[%s5672 + $0x28] sm:$0xff]
    %v5679 = vld [vmem:[%s5672 + $0x30] sm:$0xff]
    %v5680 = vld [vmem:[%s5672 + $0x38] sm:$0xff]
    %v5681 = vrot.slane %v5491, 4
    %v5682 = vsel %vm5514, %v5681, 0
    %5684 = vmatprep.subr.mxu0 0.0
    %5685 = vmatpush1.msra.mxu0 %v5673
    %5686 = vmatprep.subr.mxu0 0.0
    %5687 = vmatpush1.msra.mxu0 %v5674
    %5688 = vmatprep.subr.mxu0 0.0
    %5689 = vmatpush1.msra.mxu0 %v5675
    %5690 = vmatprep.subr.mxu0 0.0
    %5691 = vmatpush1.msra.mxu0 %v5676
    %5692 = vmatprep.subr.mxu0 0.0
    %5693 = vmatpush1.msra.mxu0 %v5677
    %5694 = vmatprep.subr.mxu0 0.0
    %5695 = vmatpush1.msra.mxu0 %v5678
    %5696 = vmatprep.subr.mxu0 0.0
    %5697 = vmatpush1.msra.mxu0 %v5679
    %5698 = vmatprep.subr.mxu0 0.0
    %5699 = vmatpush1.msra.mxu0 %v5680
    %5700 = vmatprep.subr.mxu0 0.0
    %5701 = vmatpush1.msra.mxu0 0.0
    %5702 = vmatprep.subr.mxu0 0.0
    %5703 = vmatpush1.msra.mxu0 0.0
    %5704 = vmatprep.subr.mxu0 0.0
    %5705 = vmatpush1.msra.mxu0 0.0
    %5706 = vmatprep.subr.mxu0 0.0
    %5707 = vmatpush1.msra.mxu0 0.0
    %5708 = vmatprep.subr.mxu0 0.0
    %5709 = vmatpush1.msra.mxu0 0.0
    %5710 = vmatprep.subr.mxu0 0.0
    %5711 = vmatpush1.msra.mxu0 0.0
    %5712 = vmatprep.subr.mxu0 0.0
    %5713 = vmatpush1.msra.mxu0 0.0
    %5714 = vmatprep.subr.mxu0 0.0
    %5715 = vmatpush1.msra.mxu0 0.0
    %5716 = vmatprep.subr.mxu0 0.0
    %5717 = vmatpush1.msra.mxu0 0.0
    %5718 = vmatprep.subr.mxu0 0.0
    %5719 = vmatpush1.msra.mxu0 0.0
    %5720 = vmatprep.subr.mxu0 0.0
    %5721 = vmatpush1.msra.mxu0 0.0
    %5722 = vmatprep.subr.mxu0 0.0
    %5723 = vmatpush1.msra.mxu0 0.0
    %5724 = vmatprep.subr.mxu0 0.0
    %5725 = vmatpush1.msra.mxu0 0.0
    %5726 = vmatprep.subr.mxu0 0.0
    %5727 = vmatpush1.msra.mxu0 0.0
    %5728 = vmatprep.subr.mxu0 0.0
    %5729 = vmatpush1.msra.mxu0 0.0
    %5730 = vmatprep.subr.mxu0 0.0
    %5731 = vmatpush1.msra.mxu0 0.0
    %5732 = vmatprep.subr.mxu0 0.0
    %5733 = vmatpush1.msra.mxu0 0.0
    %5734 = vmatprep.subr.mxu0 0.0
    %5735 = vmatpush1.msra.mxu0 0.0
    %5736 = vmatprep.subr.mxu0 0.0
    %5737 = vmatpush1.msra.mxu0 0.0
    %5738 = vmatprep.subr.mxu0 0.0
    %5739 = vmatpush1.msra.mxu0 0.0
    %5740 = vmatprep.subr.mxu0 0.0
    %5741 = vmatpush1.msra.mxu0 0.0
    %5742 = vmatprep.subr.mxu0 0.0
    %5743 = vmatpush1.msra.mxu0 0.0
    %5744 = vmatprep.subr.mxu0 0.0
    %5745 = vmatpush1.msra.mxu0 0.0
    %5746 = vmatprep.subr.mxu0 0.0
    %5747 = vmatpush1.msra.mxu0 0.0
    %5748 = vmatprep.mubr.f32.mxu0 0.0
    %5749 = vmatmul.mubr.f32.gmra.mrb[0].mxu0 %v5682
    %v5750 = vpop.f32.mrb[0].mxu0
    %v5751 = vadd.f32 0.0, %v5750
    %v5752 = vpop.f32.mrb[0].mxu0
    %5753 = vdwg.mxu0
    %v5754 = vadd.f32 %v5671, %v5751
    %s5755 = scalar_lea.vmem %s5, 192
    %v5756 = vld [vmem:[%s5755] sm:$0xff]
    %v5757 = vld [vmem:[%s5755 + $0x8] sm:$0xff]
    %v5758 = vld [vmem:[%s5755 + $0x10] sm:$0xff]
    %v5759 = vld [vmem:[%s5755 + $0x18] sm:$0xff]
    %v5760 = vld [vmem:[%s5755 + $0x20] sm:$0xff]
    %v5761 = vld [vmem:[%s5755 + $0x28] sm:$0xff]
    %v5762 = vld [vmem:[%s5755 + $0x30] sm:$0xff]
    %v5763 = vld [vmem:[%s5755 + $0x38] sm:$0xff]
    %v5764 = vrot.slane %v5491, 6
    %v5765 = vsel %vm5514, %v5764, 0
    %5767 = vmatprep.subr.mxu0 0.0
    %5768 = vmatpush1.msra.mxu0 %v5756
    %5769 = vmatprep.subr.mxu0 0.0
    %5770 = vmatpush1.msra.mxu0 %v5757
    %5771 = vmatprep.subr.mxu0 0.0
    %5772 = vmatpush1.msra.mxu0 %v5758
    %5773 = vmatprep.subr.mxu0 0.0
    %5774 = vmatpush1.msra.mxu0 %v5759
    %5775 = vmatprep.subr.mxu0 0.0
    %5776 = vmatpush1.msra.mxu0 %v5760
    %5777 = vmatprep.subr.mxu0 0.0
    %5778 = vmatpush1.msra.mxu0 %v5761
    %5779 = vmatprep.subr.mxu0 0.0
    %5780 = vmatpush1.msra.mxu0 %v5762
    %5781 = vmatprep.subr.mxu0 0.0
    %5782 = vmatpush1.msra.mxu0 %v5763
    %5783 = vmatprep.subr.mxu0 0.0
    %5784 = vmatpush1.msra.mxu0 0.0
    %5785 = vmatprep.subr.mxu0 0.0
    %5786 = vmatpush1.msra.mxu0 0.0
    %5787 = vmatprep.subr.mxu0 0.0
    %5788 = vmatpush1.msra.mxu0 0.0
    %5789 = vmatprep.subr.mxu0 0.0
    %5790 = vmatpush1.msra.mxu0 0.0
    %5791 = vmatprep.subr.mxu0 0.0
    %5792 = vmatpush1.msra.mxu0 0.0
    %5793 = vmatprep.subr.mxu0 0.0
    %5794 = vmatpush1.msra.mxu0 0.0
    %5795 = vmatprep.subr.mxu0 0.0
    %5796 = vmatpush1.msra.mxu0 0.0
    %5797 = vmatprep.subr.mxu0 0.0
    %5798 = vmatpush1.msra.mxu0 0.0
    %5799 = vmatprep.subr.mxu0 0.0
    %5800 = vmatpush1.msra.mxu0 0.0
    %5801 = vmatprep.subr.mxu0 0.0
    %5802 = vmatpush1.msra.mxu0 0.0
    %5803 = vmatprep.subr.mxu0 0.0
    %5804 = vmatpush1.msra.mxu0 0.0
    %5805 = vmatprep.subr.mxu0 0.0
    %5806 = vmatpush1.msra.mxu0 0.0
    %5807 = vmatprep.subr.mxu0 0.0
    %5808 = vmatpush1.msra.mxu0 0.0
    %5809 = vmatprep.subr.mxu0 0.0
    %5810 = vmatpush1.msra.mxu0 0.0
    %5811 = vmatprep.subr.mxu0 0.0
    %5812 = vmatpush1.msra.mxu0 0.0
    %5813 = vmatprep.subr.mxu0 0.0
    %5814 = vmatpush1.msra.mxu0 0.0
    %5815 = vmatprep.subr.mxu0 0.0
    %5816 = vmatpush1.msra.mxu0 0.0
    %5817 = vmatprep.subr.mxu0 0.0
    %5818 = vmatpush1.msra.mxu0 0.0
    %5819 = vmatprep.subr.mxu0 0.0
    %5820 = vmatpush1.msra.mxu0 0.0
    %5821 = vmatprep.subr.mxu0 0.0
    %5822 = vmatpush1.msra.mxu0 0.0
    %5823 = vmatprep.subr.mxu0 0.0
    %5824 = vmatpush1.msra.mxu0 0.0
    %5825 = vmatprep.subr.mxu0 0.0
    %5826 = vmatpush1.msra.mxu0 0.0
    %5827 = vmatprep.subr.mxu0 0.0
    %5828 = vmatpush1.msra.mxu0 0.0
    %5829 = vmatprep.subr.mxu0 0.0
    %5830 = vmatpush1.msra.mxu0 0.0
    %5831 = vmatprep.mubr.f32.mxu0 0.0
    %5832 = vmatmul.mubr.f32.gmra.mrb[0].mxu0 %v5765
    %v5833 = vpop.f32.mrb[0].mxu0
    %v5834 = vadd.f32 0.0, %v5833
    %v5835 = vpop.f32.mrb[0].mxu0
    %5836 = vdwg.mxu0
    %v5837 = vadd.f32 %v5754, %v5834
    %s5838 = scalar_lea.vmem %s5, 256
    %v5839 = vld [vmem:[%s5838] sm:$0xff]
    %v5840 = vld [vmem:[%s5838 + $0x8] sm:$0xff]
    %v5841 = vld [vmem:[%s5838 + $0x10] sm:$0xff]
    %v5842 = vld [vmem:[%s5838 + $0x18] sm:$0xff]
    %v5843 = vld [vmem:[%s5838 + $0x20] sm:$0xff]
    %v5844 = vld [vmem:[%s5838 + $0x28] sm:$0xff]
    %v5845 = vld [vmem:[%s5838 + $0x30] sm:$0xff]
    %v5846 = vld [vmem:[%s5838 + $0x38] sm:$0xff]
    %v5848 = vsel %vm5514, %v5492, 0
    %5850 = vmatprep.subr.mxu0 0.0
    %5851 = vmatpush1.msra.mxu0 %v5839
    %5852 = vmatprep.subr.mxu0 0.0
    %5853 = vmatpush1.msra.mxu0 %v5840
    %5854 = vmatprep.subr.mxu0 0.0
    %5855 = vmatpush1.msra.mxu0 %v5841
    %5856 = vmatprep.subr.mxu0 0.0
    %5857 = vmatpush1.msra.mxu0 %v5842
    %5858 = vmatprep.subr.mxu0 0.0
    %5859 = vmatpush1.msra.mxu0 %v5843
    %5860 = vmatprep.subr.mxu0 0.0
    %5861 = vmatpush1.msra.mxu0 %v5844
    %5862 = vmatprep.subr.mxu0 0.0
    %5863 = vmatpush1.msra.mxu0 %v5845
    %5864 = vmatprep.subr.mxu0 0.0
    %5865 = vmatpush1.msra.mxu0 %v5846
    %5866 = vmatprep.subr.mxu0 0.0
    %5867 = vmatpush1.msra.mxu0 0.0
    %5868 = vmatprep.subr.mxu0 0.0
    %5869 = vmatpush1.msra.mxu0 0.0
    %5870 = vmatprep.subr.mxu0 0.0
    %5871 = vmatpush1.msra.mxu0 0.0
    %5872 = vmatprep.subr.mxu0 0.0
    %5873 = vmatpush1.msra.mxu0 0.0
    %5874 = vmatprep.subr.mxu0 0.0
    %5875 = vmatpush1.msra.mxu0 0.0
    %5876 = vmatprep.subr.mxu0 0.0
    %5877 = vmatpush1.msra.mxu0 0.0
    %5878 = vmatprep.subr.mxu0 0.0
    %5879 = vmatpush1.msra.mxu0 0.0
    %5880 = vmatprep.subr.mxu0 0.0
    %5881 = vmatpush1.msra.mxu0 0.0
    %5882 = vmatprep.subr.mxu0 0.0
    %5883 = vmatpush1.msra.mxu0 0.0
    %5884 = vmatprep.subr.mxu0 0.0
    %5885 = vmatpush1.msra.mxu0 0.0
    %5886 = vmatprep.subr.mxu0 0.0
    %5887 = vmatpush1.msra.mxu0 0.0
    %5888 = vmatprep.subr.mxu0 0.0
    %5889 = vmatpush1.msra.mxu0 0.0
    %5890 = vmatprep.subr.mxu0 0.0
    %5891 = vmatpush1.msra.mxu0 0.0
    %5892 = vmatprep.subr.mxu0 0.0
    %5893 = vmatpush1.msra.mxu0 0.0
    %5894 = vmatprep.subr.mxu0 0.0
    %5895 = vmatpush1.msra.mxu0 0.0
    %5896 = vmatprep.subr.mxu0 0.0
    %5897 = vmatpush1.msra.mxu0 0.0
    %5898 = vmatprep.subr.mxu0 0.0
    %5899 = vmatpush1.msra.mxu0 0.0
    %5900 = vmatprep.subr.mxu0 0.0
    %5901 = vmatpush1.msra.mxu0 0.0
    %5902 = vmatprep.subr.mxu0 0.0
    %5903 = vmatpush1.msra.mxu0 0.0
    %5904 = vmatprep.subr.mxu0 0.0
    %5905 = vmatpush1.msra.mxu0 0.0
    %5906 = vmatprep.subr.mxu0 0.0
    %5907 = vmatpush1.msra.mxu0 0.0
    %5908 = vmatprep.subr.mxu0 0.0
    %5909 = vmatpush1.msra.mxu0 0.0
    %5910 = vmatprep.subr.mxu0 0.0
    %5911 = vmatpush1.msra.mxu0 0.0
    %5912 = vmatprep.subr.mxu0 0.0
    %5913 = vmatpush1.msra.mxu0 0.0
    %5914 = vmatprep.mubr.f32.mxu0 0.0
    %5915 = vmatmul.mubr.f32.gmra.mrb[0].mxu0 %v5848
    %v5916 = vpop.f32.mrb[0].mxu0
    %v5917 = vadd.f32 0.0, %v5916
    %v5918 = vpop.f32.mrb[0].mxu0
    %5919 = vdwg.mxu0
    %v5920 = vadd.f32 %v5837, %v5917
    %s5921 = scalar_lea.vmem %s5, 320
    %v5922 = vld [vmem:[%s5921] sm:$0xff]
    %v5923 = vld [vmem:[%s5921 + $0x8] sm:$0xff]
    %v5924 = vld [vmem:[%s5921 + $0x10] sm:$0xff]
    %v5925 = vld [vmem:[%s5921 + $0x18] sm:$0xff]
    %v5926 = vld [vmem:[%s5921 + $0x20] sm:$0xff]
    %v5927 = vld [vmem:[%s5921 + $0x28] sm:$0xff]
    %v5928 = vld [vmem:[%s5921 + $0x30] sm:$0xff]
    %v5929 = vld [vmem:[%s5921 + $0x38] sm:$0xff]
    %v5930 = vrot.slane %v5492, 2
    %v5931 = vsel %vm5514, %v5930, 0
    %5933 = vmatprep.subr.mxu0 0.0
    %5934 = vmatpush1.msra.mxu0 %v5922
    %5935 = vmatprep.subr.mxu0 0.0
    %5936 = vmatpush1.msra.mxu0 %v5923
    %5937 = vmatprep.subr.mxu0 0.0
    %5938 = vmatpush1.msra.mxu0 %v5924
    %5939 = vmatprep.subr.mxu0 0.0
    %5940 = vmatpush1.msra.mxu0 %v5925
    %5941 = vmatprep.subr.mxu0 0.0
    %5942 = vmatpush1.msra.mxu0 %v5926
    %5943 = vmatprep.subr.mxu0 0.0
    %5944 = vmatpush1.msra.mxu0 %v5927
    %5945 = vmatprep.subr.mxu0 0.0
    %5946 = vmatpush1.msra.mxu0 %v5928
    %5947 = vmatprep.subr.mxu0 0.0
    %5948 = vmatpush1.msra.mxu0 %v5929
    %5949 = vmatprep.subr.mxu0 0.0
    %5950 = vmatpush1.msra.mxu0 0.0
    %5951 = vmatprep.subr.mxu0 0.0
    %5952 = vmatpush1.msra.mxu0 0.0
    %5953 = vmatprep.subr.mxu0 0.0
    %5954 = vmatpush1.msra.mxu0 0.0
    %5955 = vmatprep.subr.mxu0 0.0
    %5956 = vmatpush1.msra.mxu0 0.0
    %5957 = vmatprep.subr.mxu0 0.0
    %5958 = vmatpush1.msra.mxu0 0.0
    %5959 = vmatprep.subr.mxu0 0.0
    %5960 = vmatpush1.msra.mxu0 0.0
    %5961 = vmatprep.subr.mxu0 0.0
    %5962 = vmatpush1.msra.mxu0 0.0
    %5963 = vmatprep.subr.mxu0 0.0
    %5964 = vmatpush1.msra.mxu0 0.0
    %5965 = vmatprep.subr.mxu0 0.0
    %5966 = vmatpush1.msra.mxu0 0.0
    %5967 = vmatprep.subr.mxu0 0.0
    %5968 = vmatpush1.msra.mxu0 0.0
    %5969 = vmatprep.subr.mxu0 0.0
    %5970 = vmatpush1.msra.mxu0 0.0
    %5971 = vmatprep.subr.mxu0 0.0
    %5972 = vmatpush1.msra.mxu0 0.0
    %5973 = vmatprep.subr.mxu0 0.0
    %5974 = vmatpush1.msra.mxu0 0.0
    %5975 = vmatprep.subr.mxu0 0.0
    %5976 = vmatpush1.msra.mxu0 0.0
    %5977 = vmatprep.subr.mxu0 0.0
    %5978 = vmatpush1.msra.mxu0 0.0
    %5979 = vmatprep.subr.mxu0 0.0
    %5980 = vmatpush1.msra.mxu0 0.0
    %5981 = vmatprep.subr.mxu0 0.0
    %5982 = vmatpush1.msra.mxu0 0.0
    %5983 = vmatprep.subr.mxu0 0.0
    %5984 = vmatpush1.msra.mxu0 0.0
    %5985 = vmatprep.subr.mxu0 0.0
    %5986 = vmatpush1.msra.mxu0 0.0
    %5987 = vmatprep.subr.mxu0 0.0
    %5988 = vmatpush1.msra.mxu0 0.0
    %5989 = vmatprep.subr.mxu0 0.0
    %5990 = vmatpush1.msra.mxu0 0.0
    %5991 = vmatprep.subr.mxu0 0.0
    %5992 = vmatpush1.msra.mxu0 0.0
    %5993 = vmatprep.subr.mxu0 0.0
    %5994 = vmatpush1.msra.mxu0 0.0
    %5995 = vmatprep.subr.mxu0 0.0
    %5996 = vmatpush1.msra.mxu0 0.0
    %5997 = vmatprep.mubr.f32.mxu0 0.0
    %5998 = vmatmul.mubr.f32.gmra.mrb[0].mxu0 %v5931
    %v5999 = vpop.f32.mrb[0].mxu0
    %v6000 = vadd.f32 0.0, %v5999
    %v6001 = vpop.f32.mrb[0].mxu0
    %6002 = vdwg.mxu0
    %v6003 = vadd.f32 %v5920, %v6000
    %s6004 = scalar_lea.vmem %s5, 384
    %v6005 = vld [vmem:[%s6004] sm:$0xff]
    %v6006 = vld [vmem:[%s6004 + $0x8] sm:$0xff]
    %v6007 = vld [vmem:[%s6004 + $0x10] sm:$0xff]
    %v6008 = vld [vmem:[%s6004 + $0x18] sm:$0xff]
    %v6009 = vld [vmem:[%s6004 + $0x20] sm:$0xff]
    %v6010 = vld [vmem:[%s6004 + $0x28] sm:$0xff]
    %v6011 = vld [vmem:[%s6004 + $0x30] sm:$0xff]
    %v6012 = vld [vmem:[%s6004 + $0x38] sm:$0xff]
    %v6013 = vrot.slane %v5492, 4
    %v6014 = vsel %vm5514, %v6013, 0
    %6016 = vmatprep.subr.mxu0 0.0
    %6017 = vmatpush1.msra.mxu0 %v6005
    %6018 = vmatprep.subr.mxu0 0.0
    %6019 = vmatpush1.msra.mxu0 %v6006
    %6020 = vmatprep.subr.mxu0 0.0
    %6021 = vmatpush1.msra.mxu0 %v6007
    %6022 = vmatprep.subr.mxu0 0.0
    %6023 = vmatpush1.msra.mxu0 %v6008
    %6024 = vmatprep.subr.mxu0 0.0
    %6025 = vmatpush1.msra.mxu0 %v6009
    %6026 = vmatprep.subr.mxu0 0.0
    %6027 = vmatpush1.msra.mxu0 %v6010
    %6028 = vmatprep.subr.mxu0 0.0
    %6029 = vmatpush1.msra.mxu0 %v6011
    %6030 = vmatprep.subr.mxu0 0.0
    %6031 = vmatpush1.msra.mxu0 %v6012
    %6032 = vmatprep.subr.mxu0 0.0
    %6033 = vmatpush1.msra.mxu0 0.0
    %6034 = vmatprep.subr.mxu0 0.0
    %6035 = vmatpush1.msra.mxu0 0.0
    %6036 = vmatprep.subr.mxu0 0.0
    %6037 = vmatpush1.msra.mxu0 0.0
    %6038 = vmatprep.subr.mxu0 0.0
    %6039 = vmatpush1.msra.mxu0 0.0
    %6040 = vmatprep.subr.mxu0 0.0
    %6041 = vmatpush1.msra.mxu0 0.0
    %6042 = vmatprep.subr.mxu0 0.0
    %6043 = vmatpush1.msra.mxu0 0.0
    %6044 = vmatprep.subr.mxu0 0.0
    %6045 = vmatpush1.msra.mxu0 0.0
    %6046 = vmatprep.subr.mxu0 0.0
    %6047 = vmatpush1.msra.mxu0 0.0
    %6048 = vmatprep.subr.mxu0 0.0
    %6049 = vmatpush1.msra.mxu0 0.0
    %6050 = vmatprep.subr.mxu0 0.0
    %6051 = vmatpush1.msra.mxu0 0.0
    %6052 = vmatprep.subr.mxu0 0.0
    %6053 = vmatpush1.msra.mxu0 0.0
    %6054 = vmatprep.subr.mxu0 0.0
    %6055 = vmatpush1.msra.mxu0 0.0
    %6056 = vmatprep.subr.mxu0 0.0
    %6057 = vmatpush1.msra.mxu0 0.0
    %6058 = vmatprep.subr.mxu0 0.0
    %6059 = vmatpush1.msra.mxu0 0.0
    %6060 = vmatprep.subr.mxu0 0.0
    %6061 = vmatpush1.msra.mxu0 0.0
    %6062 = vmatprep.subr.mxu0 0.0
    %6063 = vmatpush1.msra.mxu0 0.0
    %6064 = vmatprep.subr.mxu0 0.0
    %6065 = vmatpush1.msra.mxu0 0.0
    %6066 = vmatprep.subr.mxu0 0.0
    %6067 = vmatpush1.msra.mxu0 0.0
    %6068 = vmatprep.subr.mxu0 0.0
    %6069 = vmatpush1.msra.mxu0 0.0
    %6070 = vmatprep.subr.mxu0 0.0
    %6071 = vmatpush1.msra.mxu0 0.0
    %6072 = vmatprep.subr.mxu0 0.0
    %6073 = vmatpush1.msra.mxu0 0.0
    %6074 = vmatprep.subr.mxu0 0.0
    %6075 = vmatpush1.msra.mxu0 0.0
    %6076 = vmatprep.subr.mxu0 0.0
    %6077 = vmatpush1.msra.mxu0 0.0
    %6078 = vmatprep.subr.mxu0 0.0
    %6079 = vmatpush1.msra.mxu0 0.0
    %6080 = vmatprep.mubr.f32.mxu0 0.0
    %6081 = vmatmul.mubr.f32.gmra.mrb[0].mxu0 %v6014
    %v6082 = vpop.f32.mrb[0].mxu0
    %v6083 = vadd.f32 0.0, %v6082
    %v6084 = vpop.f32.mrb[0].mxu0
    %6085 = vdwg.mxu0
    %v6086 = vadd.f32 %v6003, %v6083
    %s6087 = scalar_lea.vmem %s5, 448
    %v6088 = vld [vmem:[%s6087] sm:$0xff]
    %v6089 = vld [vmem:[%s6087 + $0x8] sm:$0xff]
    %v6090 = vld [vmem:[%s6087 + $0x10] sm:$0xff]
    %v6091 = vld [vmem:[%s6087 + $0x18] sm:$0xff]
    %v6092 = vld [vmem:[%s6087 + $0x20] sm:$0xff]
    %v6093 = vld [vmem:[%s6087 + $0x28] sm:$0xff]
    %v6094 = vld [vmem:[%s6087 + $0x30] sm:$0xff]
    %v6095 = vld [vmem:[%s6087 + $0x38] sm:$0xff]
    %v6096 = vrot.slane %v5492, 6
    %v6097 = vsel %vm5514, %v6096, 0
    %6099 = vmatprep.subr.mxu0 0.0
    %6100 = vmatpush1.msra.mxu0 %v6088
    %6101 = vmatprep.subr.mxu0 0.0
    %6102 = vmatpush1.msra.mxu0 %v6089
    %6103 = vmatprep.subr.mxu0 0.0
    %6104 = vmatpush1.msra.mxu0 %v6090
    %6105 = vmatprep.subr.mxu0 0.0
    %6106 = vmatpush1.msra.mxu0 %v6091
    %6107 = vmatprep.subr.mxu0 0.0
    %6108 = vmatpush1.msra.mxu0 %v6092
    %6109 = vmatprep.subr.mxu0 0.0
    %6110 = vmatpush1.msra.mxu0 %v6093
    %6111 = vmatprep.subr.mxu0 0.0
    %6112 = vmatpush1.msra.mxu0 %v6094
    %6113 = vmatprep.subr.mxu0 0.0
    %6114 = vmatpush1.msra.mxu0 %v6095
    %6115 = vmatprep.subr.mxu0 0.0
    %6116 = vmatpush1.msra.mxu0 0.0
    %6117 = vmatprep.subr.mxu0 0.0
    %6118 = vmatpush1.msra.mxu0 0.0
    %6119 = vmatprep.subr.mxu0 0.0
    %6120 = vmatpush1.msra.mxu0 0.0
    %6121 = vmatprep.subr.mxu0 0.0
    %6122 = vmatpush1.msra.mxu0 0.0
    %6123 = vmatprep.subr.mxu0 0.0
    %6124 = vmatpush1.msra.mxu0 0.0
    %6125 = vmatprep.subr.mxu0 0.0
    %6126 = vmatpush1.msra.mxu0 0.0
    %6127 = vmatprep.subr.mxu0 0.0
    %6128 = vmatpush1.msra.mxu0 0.0
    %6129 = vmatprep.subr.mxu0 0.0
    %6130 = vmatpush1.msra.mxu0 0.0
    %6131 = vmatprep.subr.mxu0 0.0
    %6132 = vmatpush1.msra.mxu0 0.0
    %6133 = vmatprep.subr.mxu0 0.0
    %6134 = vmatpush1.msra.mxu0 0.0
    %6135 = vmatprep.subr.mxu0 0.0
    %6136 = vmatpush1.msra.mxu0 0.0
    %6137 = vmatprep.subr.mxu0 0.0
    %6138 = vmatpush1.msra.mxu0 0.0
    %6139 = vmatprep.subr.mxu0 0.0
    %6140 = vmatpush1.msra.mxu0 0.0
    %6141 = vmatprep.subr.mxu0 0.0
    %6142 = vmatpush1.msra.mxu0 0.0
    %6143 = vmatprep.subr.mxu0 0.0
    %6144 = vmatpush1.msra.mxu0 0.0
    %6145 = vmatprep.subr.mxu0 0.0
    %6146 = vmatpush1.msra.mxu0 0.0
    %6147 = vmatprep.subr.mxu0 0.0
    %6148 = vmatpush1.msra.mxu0 0.0
    %6149 = vmatprep.subr.mxu0 0.0
    %6150 = vmatpush1.msra.mxu0 0.0
    %6151 = vmatprep.subr.mxu0 0.0
    %6152 = vmatpush1.msra.mxu0 0.0
    %6153 = vmatprep.subr.mxu0 0.0
    %6154 = vmatpush1.msra.mxu0 0.0
    %6155 = vmatprep.subr.mxu0 0.0
    %6156 = vmatpush1.msra.mxu0 0.0
    %6157 = vmatprep.subr.mxu0 0.0
    %6158 = vmatpush1.msra.mxu0 0.0
    %6159 = vmatprep.subr.mxu0 0.0
    %6160 = vmatpush1.msra.mxu0 0.0
    %6161 = vmatprep.subr.mxu0 0.0
    %6162 = vmatpush1.msra.mxu0 0.0
    %6163 = vmatprep.mubr.f32.mxu0 0.0
    %6164 = vmatmul.mubr.f32.gmra.mrb[0].mxu0 %v6097
    %v6165 = vpop.f32.mrb[0].mxu0
    %v6166 = vadd.f32 0.0, %v6165
    %v6167 = vpop.f32.mrb[0].mxu0
    %6168 = vdwg.mxu0
    %v6169 = vadd.f32 %v6086, %v6166
    %s6170 = scalar_lea.vmem %s5, 512
    %v6171 = vld [vmem:[%s6170] sm:$0xff]
    %v6172 = vld [vmem:[%s6170 + $0x8] sm:$0xff]
    %v6173 = vld [vmem:[%s6170 + $0x10] sm:$0xff]
    %v6174 = vld [vmem:[%s6170 + $0x18] sm:$0xff]
    %v6175 = vld [vmem:[%s6170 + $0x20] sm:$0xff]
    %v6176 = vld [vmem:[%s6170 + $0x28] sm:$0xff]
    %v6177 = vld [vmem:[%s6170 + $0x30] sm:$0xff]
    %v6178 = vld [vmem:[%s6170 + $0x38] sm:$0xff]
    %v6180 = vsel %vm5514, %v5493, 0
    %6182 = vmatprep.subr.mxu0 0.0
    %6183 = vmatpush1.msra.mxu0 %v6171
    %6184 = vmatprep.subr.mxu0 0.0
    %6185 = vmatpush1.msra.mxu0 %v6172
    %6186 = vmatprep.subr.mxu0 0.0
    %6187 = vmatpush1.msra.mxu0 %v6173
    %6188 = vmatprep.subr.mxu0 0.0
    %6189 = vmatpush1.msra.mxu0 %v6174
    %6190 = vmatprep.subr.mxu0 0.0
    %6191 = vmatpush1.msra.mxu0 %v6175
    %6192 = vmatprep.subr.mxu0 0.0
    %6193 = vmatpush1.msra.mxu0 %v6176
    %6194 = vmatprep.subr.mxu0 0.0
    %6195 = vmatpush1.msra.mxu0 %v6177
    %6196 = vmatprep.subr.mxu0 0.0
    %6197 = vmatpush1.msra.mxu0 %v6178
    %6198 = vmatprep.subr.mxu0 0.0
    %6199 = vmatpush1.msra.mxu0 0.0
    %6200 = vmatprep.subr.mxu0 0.0
    %6201 = vmatpush1.msra.mxu0 0.0
    %6202 = vmatprep.subr.mxu0 0.0
    %6203 = vmatpush1.msra.mxu0 0.0
    %6204 = vmatprep.subr.mxu0 0.0
    %6205 = vmatpush1.msra.mxu0 0.0
    %6206 = vmatprep.subr.mxu0 0.0
    %6207 = vmatpush1.msra.mxu0 0.0
    %6208 = vmatprep.subr.mxu0 0.0
    %6209 = vmatpush1.msra.mxu0 0.0
    %6210 = vmatprep.subr.mxu0 0.0
    %6211 = vmatpush1.msra.mxu0 0.0
    %6212 = vmatprep.subr.mxu0 0.0
    %6213 = vmatpush1.msra.mxu0 0.0
    %6214 = vmatprep.subr.mxu0 0.0
    %6215 = vmatpush1.msra.mxu0 0.0
    %6216 = vmatprep.subr.mxu0 0.0
    %6217 = vmatpush1.msra.mxu0 0.0
    %6218 = vmatprep.subr.mxu0 0.0
    %6219 = vmatpush1.msra.mxu0 0.0
    %6220 = vmatprep.subr.mxu0 0.0
    %6221 = vmatpush1.msra.mxu0 0.0
    %6222 = vmatprep.subr.mxu0 0.0
    %6223 = vmatpush1.msra.mxu0 0.0
    %6224 = vmatprep.subr.mxu0 0.0
    %6225 = vmatpush1.msra.mxu0 0.0
    %6226 = vmatprep.subr.mxu0 0.0
    %6227 = vmatpush1.msra.mxu0 0.0
    %6228 = vmatprep.subr.mxu0 0.0
    %6229 = vmatpush1.msra.mxu0 0.0
    %6230 = vmatprep.subr.mxu0 0.0
    %6231 = vmatpush1.msra.mxu0 0.0
    %6232 = vmatprep.subr.mxu0 0.0
    %6233 = vmatpush1.msra.mxu0 0.0
    %6234 = vmatprep.subr.mxu0 0.0
    %6235 = vmatpush1.msra.mxu0 0.0
    %6236 = vmatprep.subr.mxu0 0.0
    %6237 = vmatpush1.msra.mxu0 0.0
    %6238 = vmatprep.subr.mxu0 0.0
    %6239 = vmatpush1.msra.mxu0 0.0
    %6240 = vmatprep.subr.mxu0 0.0
    %6241 = vmatpush1.msra.mxu0 0.0
    %6242 = vmatprep.subr.mxu0 0.0
    %6243 = vmatpush1.msra.mxu0 0.0
    %6244 = vmatprep.subr.mxu0 0.0
    %6245 = vmatpush1.msra.mxu0 0.0
    %6246 = vmatprep.mubr.f32.mxu0 0.0
    %6247 = vmatmul.mubr.f32.gmra.mrb[0].mxu0 %v6180
    %v6248 = vpop.f32.mrb[0].mxu0
    %v6249 = vadd.f32 0.0, %v6248
    %v6250 = vpop.f32.mrb[0].mxu0
    %6251 = vdwg.mxu0
    %v6252 = vadd.f32 %v6169, %v6249
    %s6253 = scalar_lea.vmem %s5, 576
    %v6254 = vld [vmem:[%s6253] sm:$0xff]
    %v6255 = vld [vmem:[%s6253 + $0x8] sm:$0xff]
    %v6256 = vld [vmem:[%s6253 + $0x10] sm:$0xff]
    %v6257 = vld [vmem:[%s6253 + $0x18] sm:$0xff]
    %v6258 = vld [vmem:[%s6253 + $0x20] sm:$0xff]
    %v6259 = vld [vmem:[%s6253 + $0x28] sm:$0xff]
    %v6260 = vld [vmem:[%s6253 + $0x30] sm:$0xff]
    %v6261 = vld [vmem:[%s6253 + $0x38] sm:$0xff]
    %v6262 = vrot.slane %v5493, 2
    %v6263 = vsel %vm5514, %v6262, 0
    %6265 = vmatprep.subr.mxu0 0.0
    %6266 = vmatpush1.msra.mxu0 %v6254
    %6267 = vmatprep.subr.mxu0 0.0
    %6268 = vmatpush1.msra.mxu0 %v6255
    %6269 = vmatprep.subr.mxu0 0.0
    %6270 = vmatpush1.msra.mxu0 %v6256
    %6271 = vmatprep.subr.mxu0 0.0
    %6272 = vmatpush1.msra.mxu0 %v6257
    %6273 = vmatprep.subr.mxu0 0.0
    %6274 = vmatpush1.msra.mxu0 %v6258
    %6275 = vmatprep.subr.mxu0 0.0
    %6276 = vmatpush1.msra.mxu0 %v6259
    %6277 = vmatprep.subr.mxu0 0.0
    %6278 = vmatpush1.msra.mxu0 %v6260
    %6279 = vmatprep.subr.mxu0 0.0
    %6280 = vmatpush1.msra.mxu0 %v6261
    %6281 = vmatprep.subr.mxu0 0.0
    %6282 = vmatpush1.msra.mxu0 0.0
    %6283 = vmatprep.subr.mxu0 0.0
    %6284 = vmatpush1.msra.mxu0 0.0
    %6285 = vmatprep.subr.mxu0 0.0
    %6286 = vmatpush1.msra.mxu0 0.0
    %6287 = vmatprep.subr.mxu0 0.0
    %6288 = vmatpush1.msra.mxu0 0.0
    %6289 = vmatprep.subr.mxu0 0.0
    %6290 = vmatpush1.msra.mxu0 0.0
    %6291 = vmatprep.subr.mxu0 0.0
    %6292 = vmatpush1.msra.mxu0 0.0
    %6293 = vmatprep.subr.mxu0 0.0
    %6294 = vmatpush1.msra.mxu0 0.0
    %6295 = vmatprep.subr.mxu0 0.0
    %6296 = vmatpush1.msra.mxu0 0.0
    %6297 = vmatprep.subr.mxu0 0.0
    %6298 = vmatpush1.msra.mxu0 0.0
    %6299 = vmatprep.subr.mxu0 0.0
    %6300 = vmatpush1.msra.mxu0 0.0
    %6301 = vmatprep.subr.mxu0 0.0
    %6302 = vmatpush1.msra.mxu0 0.0
    %6303 = vmatprep.subr.mxu0 0.0
    %6304 = vmatpush1.msra.mxu0 0.0
    %6305 = vmatprep.subr.mxu0 0.0
    %6306 = vmatpush1.msra.mxu0 0.0
    %6307 = vmatprep.subr.mxu0 0.0
    %6308 = vmatpush1.msra.mxu0 0.0
    %6309 = vmatprep.subr.mxu0 0.0
    %6310 = vmatpush1.msra.mxu0 0.0
    %6311 = vmatprep.subr.mxu0 0.0
    %6312 = vmatpush1.msra.mxu0 0.0
    %6313 = vmatprep.subr.mxu0 0.0
    %6314 = vmatpush1.msra.mxu0 0.0
    %6315 = vmatprep.subr.mxu0 0.0
    %6316 = vmatpush1.msra.mxu0 0.0
    %6317 = vmatprep.subr.mxu0 0.0
    %6318 = vmatpush1.msra.mxu0 0.0
    %6319 = vmatprep.subr.mxu0 0.0
    %6320 = vmatpush1.msra.mxu0 0.0
    %6321 = vmatprep.subr.mxu0 0.0
    %6322 = vmatpush1.msra.mxu0 0.0
    %6323 = vmatprep.subr.mxu0 0.0
    %6324 = vmatpush1.msra.mxu0 0.0
    %6325 = vmatprep.subr.mxu0 0.0
    %6326 = vmatpush1.msra.mxu0 0.0
    %6327 = vmatprep.subr.mxu0 0.0
    %6328 = vmatpush1.msra.mxu0 0.0
    %6329 = vmatprep.mubr.f32.mxu0 0.0
    %6330 = vmatmul.mubr.f32.gmra.mrb[0].mxu0 %v6263
    %v6331 = vpop.f32.mrb[0].mxu0
    %v6332 = vadd.f32 0.0, %v6331
    %v6333 = vpop.f32.mrb[0].mxu0
    %6334 = vdwg.mxu0
    %v6335 = vadd.f32 %v6252, %v6332
    %s6336 = scalar_lea.vmem %s5, 640
    %v6337 = vld [vmem:[%s6336] sm:$0xff]
    %v6338 = vld [vmem:[%s6336 + $0x8] sm:$0xff]
    %v6339 = vld [vmem:[%s6336 + $0x10] sm:$0xff]
    %v6340 = vld [vmem:[%s6336 + $0x18] sm:$0xff]
    %v6341 = vld [vmem:[%s6336 + $0x20] sm:$0xff]
    %v6342 = vld [vmem:[%s6336 + $0x28] sm:$0xff]
    %v6343 = vld [vmem:[%s6336 + $0x30] sm:$0xff]
    %v6344 = vld [vmem:[%s6336 + $0x38] sm:$0xff]
    %v6345 = vrot.slane %v5493, 4
    %v6346 = vsel %vm5514, %v6345, 0
    %6348 = vmatprep.subr.mxu0 0.0
    %6349 = vmatpush1.msra.mxu0 %v6337
    %6350 = vmatprep.subr.mxu0 0.0
    %6351 = vmatpush1.msra.mxu0 %v6338
    %6352 = vmatprep.subr.mxu0 0.0
    %6353 = vmatpush1.msra.mxu0 %v6339
    %6354 = vmatprep.subr.mxu0 0.0
    %6355 = vmatpush1.msra.mxu0 %v6340
    %6356 = vmatprep.subr.mxu0 0.0
    %6357 = vmatpush1.msra.mxu0 %v6341
    %6358 = vmatprep.subr.mxu0 0.0
    %6359 = vmatpush1.msra.mxu0 %v6342
    %6360 = vmatprep.subr.mxu0 0.0
    %6361 = vmatpush1.msra.mxu0 %v6343
    %6362 = vmatprep.subr.mxu0 0.0
    %6363 = vmatpush1.msra.mxu0 %v6344
    %6364 = vmatprep.subr.mxu0 0.0
    %6365 = vmatpush1.msra.mxu0 0.0
    %6366 = vmatprep.subr.mxu0 0.0
    %6367 = vmatpush1.msra.mxu0 0.0
    %6368 = vmatprep.subr.mxu0 0.0
    %6369 = vmatpush1.msra.mxu0 0.0
    %6370 = vmatprep.subr.mxu0 0.0
    %6371 = vmatpush1.msra.mxu0 0.0
    %6372 = vmatprep.subr.mxu0 0.0
    %6373 = vmatpush1.msra.mxu0 0.0
    %6374 = vmatprep.subr.mxu0 0.0
    %6375 = vmatpush1.msra.mxu0 0.0
    %6376 = vmatprep.subr.mxu0 0.0
    %6377 = vmatpush1.msra.mxu0 0.0
    %6378 = vmatprep.subr.mxu0 0.0
    %6379 = vmatpush1.msra.mxu0 0.0
    %6380 = vmatprep.subr.mxu0 0.0
    %6381 = vmatpush1.msra.mxu0 0.0
    %6382 = vmatprep.subr.mxu0 0.0
    %6383 = vmatpush1.msra.mxu0 0.0
    %6384 = vmatprep.subr.mxu0 0.0
    %6385 = vmatpush1.msra.mxu0 0.0
    %6386 = vmatprep.subr.mxu0 0.0
    %6387 = vmatpush1.msra.mxu0 0.0
    %6388 = vmatprep.subr.mxu0 0.0
    %6389 = vmatpush1.msra.mxu0 0.0
    %6390 = vmatprep.subr.mxu0 0.0
    %6391 = vmatpush1.msra.mxu0 0.0
    %6392 = vmatprep.subr.mxu0 0.0
    %6393 = vmatpush1.msra.mxu0 0.0
    %6394 = vmatprep.subr.mxu0 0.0
    %6395 = vmatpush1.msra.mxu0 0.0
    %6396 = vmatprep.subr.mxu0 0.0
    %6397 = vmatpush1.msra.mxu0 0.0
    %6398 = vmatprep.subr.mxu0 0.0
    %6399 = vmatpush1.msra.mxu0 0.0
    %6400 = vmatprep.subr.mxu0 0.0
    %6401 = vmatpush1.msra.mxu0 0.0
    %6402 = vmatprep.subr.mxu0 0.0
    %6403 = vmatpush1.msra.mxu0 0.0
    %6404 = vmatprep.subr.mxu0 0.0
    %6405 = vmatpush1.msra.mxu0 0.0
    %6406 = vmatprep.subr.mxu0 0.0
    %6407 = vmatpush1.msra.mxu0 0.0
    %6408 = vmatprep.subr.mxu0 0.0
    %6409 = vmatpush1.msra.mxu0 0.0
    %6410 = vmatprep.subr.mxu0 0.0
    %6411 = vmatpush1.msra.mxu0 0.0
    %6412 = vmatprep.mubr.f32.mxu0 0.0
    %6413 = vmatmul.mubr.f32.gmra.mrb[0].mxu0 %v6346
    %v6414 = vpop.f32.mrb[0].mxu0
    %v6415 = vadd.f32 0.0, %v6414
    %v6416 = vpop.f32.mrb[0].mxu0
    %6417 = vdwg.mxu0
    %v6418 = vadd.f32 %v6335, %v6415
    %s6419 = scalar_lea.vmem %s5, 704
    %v6420 = vld [vmem:[%s6419] sm:$0xff]
    %v6421 = vld [vmem:[%s6419 + $0x8] sm:$0xff]
    %v6422 = vld [vmem:[%s6419 + $0x10] sm:$0xff]
    %v6423 = vld [vmem:[%s6419 + $0x18] sm:$0xff]
    %v6424 = vld [vmem:[%s6419 + $0x20] sm:$0xff]
    %v6425 = vld [vmem:[%s6419 + $0x28] sm:$0xff]
    %v6426 = vld [vmem:[%s6419 + $0x30] sm:$0xff]
    %v6427 = vld [vmem:[%s6419 + $0x38] sm:$0xff]
    %v6428 = vrot.slane %v5493, 6
    %v6429 = vsel %vm5514, %v6428, 0
    %6431 = vmatprep.subr.mxu0 0.0
    %6432 = vmatpush1.msra.mxu0 %v6420
    %6433 = vmatprep.subr.mxu0 0.0
    %6434 = vmatpush1.msra.mxu0 %v6421
    %6435 = vmatprep.subr.mxu0 0.0
    %6436 = vmatpush1.msra.mxu0 %v6422
    %6437 = vmatprep.subr.mxu0 0.0
    %6438 = vmatpush1.msra.mxu0 %v6423
    %6439 = vmatprep.subr.mxu0 0.0
    %6440 = vmatpush1.msra.mxu0 %v6424
    %6441 = vmatprep.subr.mxu0 0.0
    %6442 = vmatpush1.msra.mxu0 %v6425
    %6443 = vmatprep.subr.mxu0 0.0
    %6444 = vmatpush1.msra.mxu0 %v6426
    %6445 = vmatprep.subr.mxu0 0.0
    %6446 = vmatpush1.msra.mxu0 %v6427
    %6447 = vmatprep.subr.mxu0 0.0
    %6448 = vmatpush1.msra.mxu0 0.0
    %6449 = vmatprep.subr.mxu0 0.0
    %6450 = vmatpush1.msra.mxu0 0.0
    %6451 = vmatprep.subr.mxu0 0.0
    %6452 = vmatpush1.msra.mxu0 0.0
    %6453 = vmatprep.subr.mxu0 0.0
    %6454 = vmatpush1.msra.mxu0 0.0
    %6455 = vmatprep.subr.mxu0 0.0
    %6456 = vmatpush1.msra.mxu0 0.0
    %6457 = vmatprep.subr.mxu0 0.0
    %6458 = vmatpush1.msra.mxu0 0.0
    %6459 = vmatprep.subr.mxu0 0.0
    %6460 = vmatpush1.msra.mxu0 0.0
    %6461 = vmatprep.subr.mxu0 0.0
    %6462 = vmatpush1.msra.mxu0 0.0
    %6463 = vmatprep.subr.mxu0 0.0
    %6464 = vmatpush1.msra.mxu0 0.0
    %6465 = vmatprep.subr.mxu0 0.0
    %6466 = vmatpush1.msra.mxu0 0.0
    %6467 = vmatprep.subr.mxu0 0.0
    %6468 = vmatpush1.msra.mxu0 0.0
    %6469 = vmatprep.subr.mxu0 0.0
    %6470 = vmatpush1.msra.mxu0 0.0
    %6471 = vmatprep.subr.mxu0 0.0
    %6472 = vmatpush1.msra.mxu0 0.0
    %6473 = vmatprep.subr.mxu0 0.0
    %6474 = vmatpush1.msra.mxu0 0.0
    %6475 = vmatprep.subr.mxu0 0.0
    %6476 = vmatpush1.msra.mxu0 0.0
    %6477 = vmatprep.subr.mxu0 0.0
    %6478 = vmatpush1.msra.mxu0 0.0
    %6479 = vmatprep.subr.mxu0 0.0
    %6480 = vmatpush1.msra.mxu0 0.0
    %6481 = vmatprep.subr.mxu0 0.0
    %6482 = vmatpush1.msra.mxu0 0.0
    %6483 = vmatprep.subr.mxu0 0.0
    %6484 = vmatpush1.msra.mxu0 0.0
    %6485 = vmatprep.subr.mxu0 0.0
    %6486 = vmatpush1.msra.mxu0 0.0
    %6487 = vmatprep.subr.mxu0 0.0
    %6488 = vmatpush1.msra.mxu0 0.0
    %6489 = vmatprep.subr.mxu0 0.0
    %6490 = vmatpush1.msra.mxu0 0.0
    %6491 = vmatprep.subr.mxu0 0.0
    %6492 = vmatpush1.msra.mxu0 0.0
    %6493 = vmatprep.subr.mxu0 0.0
    %6494 = vmatpush1.msra.mxu0 0.0
    %6495 = vmatprep.mubr.f32.mxu0 0.0
    %6496 = vmatmul.mubr.f32.gmra.mrb[0].mxu0 %v6429
    %v6497 = vpop.f32.mrb[0].mxu0
    %v6498 = vadd.f32 0.0, %v6497
    %v6499 = vpop.f32.mrb[0].mxu0
    %6500 = vdwg.mxu0
    %v6501 = vadd.f32 %v6418, %v6498
    %s6502 = scalar_lea.vmem %s5, 768
    %v6503 = vld [vmem:[%s6502] sm:$0xff]
    %v6504 = vld [vmem:[%s6502 + $0x8] sm:$0xff]
    %v6505 = vld [vmem:[%s6502 + $0x10] sm:$0xff]
    %v6506 = vld [vmem:[%s6502 + $0x18] sm:$0xff]
    %v6507 = vld [vmem:[%s6502 + $0x20] sm:$0xff]
    %v6508 = vld [vmem:[%s6502 + $0x28] sm:$0xff]
    %v6509 = vld [vmem:[%s6502 + $0x30] sm:$0xff]
    %v6510 = vld [vmem:[%s6502 + $0x38] sm:$0xff]
    %v6512 = vsel %vm5514, %v5494, 0
    %6514 = vmatprep.subr.mxu0 0.0
    %6515 = vmatpush1.msra.mxu0 %v6503
    %6516 = vmatprep.subr.mxu0 0.0
    %6517 = vmatpush1.msra.mxu0 %v6504
    %6518 = vmatprep.subr.mxu0 0.0
    %6519 = vmatpush1.msra.mxu0 %v6505
    %6520 = vmatprep.subr.mxu0 0.0
    %6521 = vmatpush1.msra.mxu0 %v6506
    %6522 = vmatprep.subr.mxu0 0.0
    %6523 = vmatpush1.msra.mxu0 %v6507
    %6524 = vmatprep.subr.mxu0 0.0
    %6525 = vmatpush1.msra.mxu0 %v6508
    %6526 = vmatprep.subr.mxu0 0.0
    %6527 = vmatpush1.msra.mxu0 %v6509
    %6528 = vmatprep.subr.mxu0 0.0
    %6529 = vmatpush1.msra.mxu0 %v6510
    %6530 = vmatprep.subr.mxu0 0.0
    %6531 = vmatpush1.msra.mxu0 0.0
    %6532 = vmatprep.subr.mxu0 0.0
    %6533 = vmatpush1.msra.mxu0 0.0
    %6534 = vmatprep.subr.mxu0 0.0
    %6535 = vmatpush1.msra.mxu0 0.0
    %6536 = vmatprep.subr.mxu0 0.0
    %6537 = vmatpush1.msra.mxu0 0.0
    %6538 = vmatprep.subr.mxu0 0.0
    %6539 = vmatpush1.msra.mxu0 0.0
    %6540 = vmatprep.subr.mxu0 0.0
    %6541 = vmatpush1.msra.mxu0 0.0
    %6542 = vmatprep.subr.mxu0 0.0
    %6543 = vmatpush1.msra.mxu0 0.0
    %6544 = vmatprep.subr.mxu0 0.0
    %6545 = vmatpush1.msra.mxu0 0.0
    %6546 = vmatprep.subr.mxu0 0.0
    %6547 = vmatpush1.msra.mxu0 0.0
    %6548 = vmatprep.subr.mxu0 0.0
    %6549 = vmatpush1.msra.mxu0 0.0
    %6550 = vmatprep.subr.mxu0 0.0
    %6551 = vmatpush1.msra.mxu0 0.0
    %6552 = vmatprep.subr.mxu0 0.0
    %6553 = vmatpush1.msra.mxu0 0.0
    %6554 = vmatprep.subr.mxu0 0.0
    %6555 = vmatpush1.msra.mxu0 0.0
    %6556 = vmatprep.subr.mxu0 0.0
    %6557 = vmatpush1.msra.mxu0 0.0
    %6558 = vmatprep.subr.mxu0 0.0
    %6559 = vmatpush1.msra.mxu0 0.0
    %6560 = vmatprep.subr.mxu0 0.0
    %6561 = vmatpush1.msra.mxu0 0.0
    %6562 = vmatprep.subr.mxu0 0.0
    %6563 = vmatpush1.msra.mxu0 0.0
    %6564 = vmatprep.subr.mxu0 0.0
    %6565 = vmatpush1.msra.mxu0 0.0
    %6566 = vmatprep.subr.mxu0 0.0
    %6567 = vmatpush1.msra.mxu0 0.0
    %6568 = vmatprep.subr.mxu0 0.0
    %6569 = vmatpush1.msra.mxu0 0.0
    %6570 = vmatprep.subr.mxu0 0.0
    %6571 = vmatpush1.msra.mxu0 0.0
    %6572 = vmatprep.subr.mxu0 0.0
    %6573 = vmatpush1.msra.mxu0 0.0
    %6574 = vmatprep.subr.mxu0 0.0
    %6575 = vmatpush1.msra.mxu0 0.0
    %6576 = vmatprep.subr.mxu0 0.0
    %6577 = vmatpush1.msra.mxu0 0.0
    %6578 = vmatprep.mubr.f32.mxu0 0.0
    %6579 = vmatmul.mubr.f32.gmra.mrb[0].mxu0 %v6512
    %v6580 = vpop.f32.mrb[0].mxu0
    %v6581 = vadd.f32 0.0, %v6580
    %v6582 = vpop.f32.mrb[0].mxu0
    %6583 = vdwg.mxu0
    %v6584 = vadd.f32 %v6501, %v6581
    %s6585 = scalar_lea.vmem %s5, 832
    %v6586 = vld [vmem:[%s6585] sm:$0xff]
    %v6587 = vld [vmem:[%s6585 + $0x8] sm:$0xff]
    %v6588 = vld [vmem:[%s6585 + $0x10] sm:$0xff]
    %v6589 = vld [vmem:[%s6585 + $0x18] sm:$0xff]
    %v6590 = vld [vmem:[%s6585 + $0x20] sm:$0xff]
    %v6591 = vld [vmem:[%s6585 + $0x28] sm:$0xff]
    %v6592 = vld [vmem:[%s6585 + $0x30] sm:$0xff]
    %v6593 = vld [vmem:[%s6585 + $0x38] sm:$0xff]
    %v6594 = vrot.slane %v5494, 2
    %v6595 = vsel %vm5514, %v6594, 0
    %6597 = vmatprep.subr.mxu0 0.0
    %6598 = vmatpush1.msra.mxu0 %v6586
    %6599 = vmatprep.subr.mxu0 0.0
    %6600 = vmatpush1.msra.mxu0 %v6587
    %6601 = vmatprep.subr.mxu0 0.0
    %6602 = vmatpush1.msra.mxu0 %v6588
    %6603 = vmatprep.subr.mxu0 0.0
    %6604 = vmatpush1.msra.mxu0 %v6589
    %6605 = vmatprep.subr.mxu0 0.0
    %6606 = vmatpush1.msra.mxu0 %v6590
    %6607 = vmatprep.subr.mxu0 0.0
    %6608 = vmatpush1.msra.mxu0 %v6591
    %6609 = vmatprep.subr.mxu0 0.0
    %6610 = vmatpush1.msra.mxu0 %v6592
    %6611 = vmatprep.subr.mxu0 0.0
    %6612 = vmatpush1.msra.mxu0 %v6593
    %6613 = vmatprep.subr.mxu0 0.0
    %6614 = vmatpush1.msra.mxu0 0.0
    %6615 = vmatprep.subr.mxu0 0.0
    %6616 = vmatpush1.msra.mxu0 0.0
    %6617 = vmatprep.subr.mxu0 0.0
    %6618 = vmatpush1.msra.mxu0 0.0
    %6619 = vmatprep.subr.mxu0 0.0
    %6620 = vmatpush1.msra.mxu0 0.0
    %6621 = vmatprep.subr.mxu0 0.0
    %6622 = vmatpush1.msra.mxu0 0.0
    %6623 = vmatprep.subr.mxu0 0.0
    %6624 = vmatpush1.msra.mxu0 0.0
    %6625 = vmatprep.subr.mxu0 0.0
    %6626 = vmatpush1.msra.mxu0 0.0
    %6627 = vmatprep.subr.mxu0 0.0
    %6628 = vmatpush1.msra.mxu0 0.0
    %6629 = vmatprep.subr.mxu0 0.0
    %6630 = vmatpush1.msra.mxu0 0.0
    %6631 = vmatprep.subr.mxu0 0.0
    %6632 = vmatpush1.msra.mxu0 0.0
    %6633 = vmatprep.subr.mxu0 0.0
    %6634 = vmatpush1.msra.mxu0 0.0
    %6635 = vmatprep.subr.mxu0 0.0
    %6636 = vmatpush1.msra.mxu0 0.0
    %6637 = vmatprep.subr.mxu0 0.0
    %6638 = vmatpush1.msra.mxu0 0.0
    %6639 = vmatprep.subr.mxu0 0.0
    %6640 = vmatpush1.msra.mxu0 0.0
    %6641 = vmatprep.subr.mxu0 0.0
    %6642 = vmatpush1.msra.mxu0 0.0
    %6643 = vmatprep.subr.mxu0 0.0
    %6644 = vmatpush1.msra.mxu0 0.0
    %6645 = vmatprep.subr.mxu0 0.0
    %6646 = vmatpush1.msra.mxu0 0.0
    %6647 = vmatprep.subr.mxu0 0.0
    %6648 = vmatpush1.msra.mxu0 0.0
    %6649 = vmatprep.subr.mxu0 0.0
    %6650 = vmatpush1.msra.mxu0 0.0
    %6651 = vmatprep.subr.mxu0 0.0
    %6652 = vmatpush1.msra.mxu0 0.0
    %6653 = vmatprep.subr.mxu0 0.0
    %6654 = vmatpush1.msra.mxu0 0.0
    %6655 = vmatprep.subr.mxu0 0.0
    %6656 = vmatpush1.msra.mxu0 0.0
    %6657 = vmatprep.subr.mxu0 0.0
    %6658 = vmatpush1.msra.mxu0 0.0
    %6659 = vmatprep.subr.mxu0 0.0
    %6660 = vmatpush1.msra.mxu0 0.0
    %6661 = vmatprep.mubr.f32.mxu0 0.0
    %6662 = vmatmul.mubr.f32.gmra.mrb[0].mxu0 %v6595
    %v6663 = vpop.f32.mrb[0].mxu0
    %v6664 = vadd.f32 0.0, %v6663
    %v6665 = vpop.f32.mrb[0].mxu0
    %6666 = vdwg.mxu0
    %v6667 = vadd.f32 %v6584, %v6664
    %s6668 = scalar_lea.vmem %s5, 896
    %v6669 = vld [vmem:[%s6668] sm:$0xff]
    %v6670 = vld [vmem:[%s6668 + $0x8] sm:$0xff]
    %v6671 = vld [vmem:[%s6668 + $0x10] sm:$0xff]
    %v6672 = vld [vmem:[%s6668 + $0x18] sm:$0xff]
    %v6673 = vld [vmem:[%s6668 + $0x20] sm:$0xff]
    %v6674 = vld [vmem:[%s6668 + $0x28] sm:$0xff]
    %v6675 = vld [vmem:[%s6668 + $0x30] sm:$0xff]
    %v6676 = vld [vmem:[%s6668 + $0x38] sm:$0xff]
    %v6677 = vrot.slane %v5494, 4
    %v6678 = vsel %vm5514, %v6677, 0
    %6680 = vmatprep.subr.mxu0 0.0
    %6681 = vmatpush1.msra.mxu0 %v6669
    %6682 = vmatprep.subr.mxu0 0.0
    %6683 = vmatpush1.msra.mxu0 %v6670
    %6684 = vmatprep.subr.mxu0 0.0
    %6685 = vmatpush1.msra.mxu0 %v6671
    %6686 = vmatprep.subr.mxu0 0.0
    %6687 = vmatpush1.msra.mxu0 %v6672
    %6688 = vmatprep.subr.mxu0 0.0
    %6689 = vmatpush1.msra.mxu0 %v6673
    %6690 = vmatprep.subr.mxu0 0.0
    %6691 = vmatpush1.msra.mxu0 %v6674
    %6692 = vmatprep.subr.mxu0 0.0
    %6693 = vmatpush1.msra.mxu0 %v6675
    %6694 = vmatprep.subr.mxu0 0.0
    %6695 = vmatpush1.msra.mxu0 %v6676
    %6696 = vmatprep.subr.mxu0 0.0
    %6697 = vmatpush1.msra.mxu0 0.0
    %6698 = vmatprep.subr.mxu0 0.0
    %6699 = vmatpush1.msra.mxu0 0.0
    %6700 = vmatprep.subr.mxu0 0.0
    %6701 = vmatpush1.msra.mxu0 0.0
    %6702 = vmatprep.subr.mxu0 0.0
    %6703 = vmatpush1.msra.mxu0 0.0
    %6704 = vmatprep.subr.mxu0 0.0
    %6705 = vmatpush1.msra.mxu0 0.0
    %6706 = vmatprep.subr.mxu0 0.0
    %6707 = vmatpush1.msra.mxu0 0.0
    %6708 = vmatprep.subr.mxu0 0.0
    %6709 = vmatpush1.msra.mxu0 0.0
    %6710 = vmatprep.subr.mxu0 0.0
    %6711 = vmatpush1.msra.mxu0 0.0
    %6712 = vmatprep.subr.mxu0 0.0
    %6713 = vmatpush1.msra.mxu0 0.0
    %6714 = vmatprep.subr.mxu0 0.0
    %6715 = vmatpush1.msra.mxu0 0.0
    %6716 = vmatprep.subr.mxu0 0.0
    %6717 = vmatpush1.msra.mxu0 0.0
    %6718 = vmatprep.subr.mxu0 0.0
    %6719 = vmatpush1.msra.mxu0 0.0
    %6720 = vmatprep.subr.mxu0 0.0
    %6721 = vmatpush1.msra.mxu0 0.0
    %6722 = vmatprep.subr.mxu0 0.0
    %6723 = vmatpush1.msra.mxu0 0.0
    %6724 = vmatprep.subr.mxu0 0.0
    %6725 = vmatpush1.msra.mxu0 0.0
    %6726 = vmatprep.subr.mxu0 0.0
    %6727 = vmatpush1.msra.mxu0 0.0
    %6728 = vmatprep.subr.mxu0 0.0
    %6729 = vmatpush1.msra.mxu0 0.0
    %6730 = vmatprep.subr.mxu0 0.0
    %6731 = vmatpush1.msra.mxu0 0.0
    %6732 = vmatprep.subr.mxu0 0.0
    %6733 = vmatpush1.msra.mxu0 0.0
    %6734 = vmatprep.subr.mxu0 0.0
    %6735 = vmatpush1.msra.mxu0 0.0
    %6736 = vmatprep.subr.mxu0 0.0
    %6737 = vmatpush1.msra.mxu0 0.0
    %6738 = vmatprep.subr.mxu0 0.0
    %6739 = vmatpush1.msra.mxu0 0.0
    %6740 = vmatprep.subr.mxu0 0.0
    %6741 = vmatpush1.msra.mxu0 0.0
    %6742 = vmatprep.subr.mxu0 0.0
    %6743 = vmatpush1.msra.mxu0 0.0
    %6744 = vmatprep.mubr.f32.mxu0 0.0
    %6745 = vmatmul.mubr.f32.gmra.mrb[0].mxu0 %v6678
    %v6746 = vpop.f32.mrb[0].mxu0
    %v6747 = vadd.f32 0.0, %v6746
    %v6748 = vpop.f32.mrb[0].mxu0
    %6749 = vdwg.mxu0
    %v6750 = vadd.f32 %v6667, %v6747
    %s6751 = scalar_lea.vmem %s5, 960
    %v6752 = vld [vmem:[%s6751] sm:$0xff]
    %v6753 = vld [vmem:[%s6751 + $0x8] sm:$0xff]
    %v6754 = vld [vmem:[%s6751 + $0x10] sm:$0xff]
    %v6755 = vld [vmem:[%s6751 + $0x18] sm:$0xff]
    %v6756 = vld [vmem:[%s6751 + $0x20] sm:$0xff]
    %v6757 = vld [vmem:[%s6751 + $0x28] sm:$0xff]
    %v6758 = vld [vmem:[%s6751 + $0x30] sm:$0xff]
    %v6759 = vld [vmem:[%s6751 + $0x38] sm:$0xff]
    %v6760 = vrot.slane %v5494, 6
    %v6761 = vsel %vm5514, %v6760, 0
    %6763 = vmatprep.subr.mxu0 0.0
    %6764 = vmatpush1.msra.mxu0 %v6752
    %6765 = vmatprep.subr.mxu0 0.0
    %6766 = vmatpush1.msra.mxu0 %v6753
    %6767 = vmatprep.subr.mxu0 0.0
    %6768 = vmatpush1.msra.mxu0 %v6754
    %6769 = vmatprep.subr.mxu0 0.0
    %6770 = vmatpush1.msra.mxu0 %v6755
    %6771 = vmatprep.subr.mxu0 0.0
    %6772 = vmatpush1.msra.mxu0 %v6756
    %6773 = vmatprep.subr.mxu0 0.0
    %6774 = vmatpush1.msra.mxu0 %v6757
    %6775 = vmatprep.subr.mxu0 0.0
    %6776 = vmatpush1.msra.mxu0 %v6758
    %6777 = vmatprep.subr.mxu0 0.0
    %6778 = vmatpush1.msra.mxu0 %v6759
    %6779 = vmatprep.subr.mxu0 0.0
    %6780 = vmatpush1.msra.mxu0 0.0
    %6781 = vmatprep.subr.mxu0 0.0
    %6782 = vmatpush1.msra.mxu0 0.0
    %6783 = vmatprep.subr.mxu0 0.0
    %6784 = vmatpush1.msra.mxu0 0.0
    %6785 = vmatprep.subr.mxu0 0.0
    %6786 = vmatpush1.msra.mxu0 0.0
    %6787 = vmatprep.subr.mxu0 0.0
    %6788 = vmatpush1.msra.mxu0 0.0
    %6789 = vmatprep.subr.mxu0 0.0
    %6790 = vmatpush1.msra.mxu0 0.0
    %6791 = vmatprep.subr.mxu0 0.0
    %6792 = vmatpush1.msra.mxu0 0.0
    %6793 = vmatprep.subr.mxu0 0.0
    %6794 = vmatpush1.msra.mxu0 0.0
    %6795 = vmatprep.subr.mxu0 0.0
    %6796 = vmatpush1.msra.mxu0 0.0
    %6797 = vmatprep.subr.mxu0 0.0
    %6798 = vmatpush1.msra.mxu0 0.0
    %6799 = vmatprep.subr.mxu0 0.0
    %6800 = vmatpush1.msra.mxu0 0.0
    %6801 = vmatprep.subr.mxu0 0.0
    %6802 = vmatpush1.msra.mxu0 0.0
    %6803 = vmatprep.subr.mxu0 0.0
    %6804 = vmatpush1.msra.mxu0 0.0
    %6805 = vmatprep.subr.mxu0 0.0
    %6806 = vmatpush1.msra.mxu0 0.0
    %6807 = vmatprep.subr.mxu0 0.0
    %6808 = vmatpush1.msra.mxu0 0.0
    %6809 = vmatprep.subr.mxu0 0.0
    %6810 = vmatpush1.msra.mxu0 0.0
    %6811 = vmatprep.subr.mxu0 0.0
    %6812 = vmatpush1.msra.mxu0 0.0
    %6813 = vmatprep.subr.mxu0 0.0
    %6814 = vmatpush1.msra.mxu0 0.0
    %6815 = vmatprep.subr.mxu0 0.0
    %6816 = vmatpush1.msra.mxu0 0.0
    %6817 = vmatprep.subr.mxu0 0.0
    %6818 = vmatpush1.msra.mxu0 0.0
    %6819 = vmatprep.subr.mxu0 0.0
    %6820 = vmatpush1.msra.mxu0 0.0
    %6821 = vmatprep.subr.mxu0 0.0
    %6822 = vmatpush1.msra.mxu0 0.0
    %6823 = vmatprep.subr.mxu0 0.0
    %6824 = vmatpush1.msra.mxu0 0.0
    %6825 = vmatprep.subr.mxu0 0.0
    %6826 = vmatpush1.msra.mxu0 0.0
    %6827 = vmatprep.mubr.f32.mxu0 0.0
    %6828 = vmatmul.mubr.f32.gmra.mrb[0].mxu0 %v6761
    %v6829 = vpop.f32.mrb[0].mxu0
    %v6830 = vadd.f32 0.0, %v6829
    %v6831 = vpop.f32.mrb[0].mxu0
    %6832 = vdwg.mxu0
    %v6833 = vadd.f32 %v6750, %v6830
    %s6834 = scalar_lea.vmem %s5, 1024
    %v6835 = vld [vmem:[%s6834] sm:$0xff]
    %v6836 = vld [vmem:[%s6834 + $0x8] sm:$0xff]
    %v6837 = vld [vmem:[%s6834 + $0x10] sm:$0xff]
    %v6838 = vld [vmem:[%s6834 + $0x18] sm:$0xff]
    %v6839 = vld [vmem:[%s6834 + $0x20] sm:$0xff]
    %v6840 = vld [vmem:[%s6834 + $0x28] sm:$0xff]
    %v6841 = vld [vmem:[%s6834 + $0x30] sm:$0xff]
    %v6842 = vld [vmem:[%s6834 + $0x38] sm:$0xff]
    %v6844 = vsel %vm5514, %v5495, 0
    %6846 = vmatprep.subr.mxu0 0.0
    %6847 = vmatpush1.msra.mxu0 %v6835
    %6848 = vmatprep.subr.mxu0 0.0
    %6849 = vmatpush1.msra.mxu0 %v6836
    %6850 = vmatprep.subr.mxu0 0.0
    %6851 = vmatpush1.msra.mxu0 %v6837
    %6852 = vmatprep.subr.mxu0 0.0
    %6853 = vmatpush1.msra.mxu0 %v6838
    %6854 = vmatprep.subr.mxu0 0.0
    %6855 = vmatpush1.msra.mxu0 %v6839
    %6856 = vmatprep.subr.mxu0 0.0
    %6857 = vmatpush1.msra.mxu0 %v6840
    %6858 = vmatprep.subr.mxu0 0.0
    %6859 = vmatpush1.msra.mxu0 %v6841
    %6860 = vmatprep.subr.mxu0 0.0
    %6861 = vmatpush1.msra.mxu0 %v6842
    %6862 = vmatprep.subr.mxu0 0.0
    %6863 = vmatpush1.msra.mxu0 0.0
    %6864 = vmatprep.subr.mxu0 0.0
    %6865 = vmatpush1.msra.mxu0 0.0
    %6866 = vmatprep.subr.mxu0 0.0
    %6867 = vmatpush1.msra.mxu0 0.0
    %6868 = vmatprep.subr.mxu0 0.0
    %6869 = vmatpush1.msra.mxu0 0.0
    %6870 = vmatprep.subr.mxu0 0.0
    %6871 = vmatpush1.msra.mxu0 0.0
    %6872 = vmatprep.subr.mxu0 0.0
    %6873 = vmatpush1.msra.mxu0 0.0
    %6874 = vmatprep.subr.mxu0 0.0
    %6875 = vmatpush1.msra.mxu0 0.0
    %6876 = vmatprep.subr.mxu0 0.0
    %6877 = vmatpush1.msra.mxu0 0.0
    %6878 = vmatprep.subr.mxu0 0.0
    %6879 = vmatpush1.msra.mxu0 0.0
    %6880 = vmatprep.subr.mxu0 0.0
    %6881 = vmatpush1.msra.mxu0 0.0
    %6882 = vmatprep.subr.mxu0 0.0
    %6883 = vmatpush1.msra.mxu0 0.0
    %6884 = vmatprep.subr.mxu0 0.0
    %6885 = vmatpush1.msra.mxu0 0.0
    %6886 = vmatprep.subr.mxu0 0.0
    %6887 = vmatpush1.msra.mxu0 0.0
    %6888 = vmatprep.subr.mxu0 0.0
    %6889 = vmatpush1.msra.mxu0 0.0
    %6890 = vmatprep.subr.mxu0 0.0
    %6891 = vmatpush1.msra.mxu0 0.0
    %6892 = vmatprep.subr.mxu0 0.0
    %6893 = vmatpush1.msra.mxu0 0.0
    %6894 = vmatprep.subr.mxu0 0.0
    %6895 = vmatpush1.msra.mxu0 0.0
    %6896 = vmatprep.subr.mxu0 0.0
    %6897 = vmatpush1.msra.mxu0 0.0
    %6898 = vmatprep.subr.mxu0 0.0
    %6899 = vmatpush1.msra.mxu0 0.0
    %6900 = vmatprep.subr.mxu0 0.0
    %6901 = vmatpush1.msra.mxu0 0.0
    %6902 = vmatprep.subr.mxu0 0.0
    %6903 = vmatpush1.msra.mxu0 0.0
    %6904 = vmatprep.subr.mxu0 0.0
    %6905 = vmatpush1.msra.mxu0 0.0
    %6906 = vmatprep.subr.mxu0 0.0
    %6907 = vmatpush1.msra.mxu0 0.0
    %6908 = vmatprep.subr.mxu0 0.0
    %6909 = vmatpush1.msra.mxu0 0.0
    %6910 = vmatprep.mubr.f32.mxu0 0.0
    %6911 = vmatmul.mubr.f32.gmra.mrb[0].mxu0 %v6844
    %v6912 = vpop.f32.mrb[0].mxu0
    %v6913 = vadd.f32 0.0, %v6912
    %v6914 = vpop.f32.mrb[0].mxu0
    %6915 = vdwg.mxu0
    %v6916 = vadd.f32 %v6833, %v6913
    %s6917 = scalar_lea.vmem %s5, 1088
    %v6918 = vld [vmem:[%s6917] sm:$0xff]
    %v6919 = vld [vmem:[%s6917 + $0x8] sm:$0xff]
    %v6920 = vld [vmem:[%s6917 + $0x10] sm:$0xff]
    %v6921 = vld [vmem:[%s6917 + $0x18] sm:$0xff]
    %v6922 = vld [vmem:[%s6917 + $0x20] sm:$0xff]
    %v6923 = vld [vmem:[%s6917 + $0x28] sm:$0xff]
    %v6924 = vld [vmem:[%s6917 + $0x30] sm:$0xff]
    %v6925 = vld [vmem:[%s6917 + $0x38] sm:$0xff]
    %v6926 = vrot.slane %v5495, 2
    %v6927 = vsel %vm5514, %v6926, 0
    %6929 = vmatprep.subr.mxu0 0.0
    %6930 = vmatpush1.msra.mxu0 %v6918
    %6931 = vmatprep.subr.mxu0 0.0
    %6932 = vmatpush1.msra.mxu0 %v6919
    %6933 = vmatprep.subr.mxu0 0.0
    %6934 = vmatpush1.msra.mxu0 %v6920
    %6935 = vmatprep.subr.mxu0 0.0
    %6936 = vmatpush1.msra.mxu0 %v6921
    %6937 = vmatprep.subr.mxu0 0.0
    %6938 = vmatpush1.msra.mxu0 %v6922
    %6939 = vmatprep.subr.mxu0 0.0
    %6940 = vmatpush1.msra.mxu0 %v6923
    %6941 = vmatprep.subr.mxu0 0.0
    %6942 = vmatpush1.msra.mxu0 %v6924
    %6943 = vmatprep.subr.mxu0 0.0
    %6944 = vmatpush1.msra.mxu0 %v6925
    %6945 = vmatprep.subr.mxu0 0.0
    %6946 = vmatpush1.msra.mxu0 0.0
    %6947 = vmatprep.subr.mxu0 0.0
    %6948 = vmatpush1.msra.mxu0 0.0
    %6949 = vmatprep.subr.mxu0 0.0
    %6950 = vmatpush1.msra.mxu0 0.0
    %6951 = vmatprep.subr.mxu0 0.0
    %6952 = vmatpush1.msra.mxu0 0.0
    %6953 = vmatprep.subr.mxu0 0.0
    %6954 = vmatpush1.msra.mxu0 0.0
    %6955 = vmatprep.subr.mxu0 0.0
    %6956 = vmatpush1.msra.mxu0 0.0
    %6957 = vmatprep.subr.mxu0 0.0
    %6958 = vmatpush1.msra.mxu0 0.0
    %6959 = vmatprep.subr.mxu0 0.0
    %6960 = vmatpush1.msra.mxu0 0.0
    %6961 = vmatprep.subr.mxu0 0.0
    %6962 = vmatpush1.msra.mxu0 0.0
    %6963 = vmatprep.subr.mxu0 0.0
    %6964 = vmatpush1.msra.mxu0 0.0
    %6965 = vmatprep.subr.mxu0 0.0
    %6966 = vmatpush1.msra.mxu0 0.0
    %6967 = vmatprep.subr.mxu0 0.0
    %6968 = vmatpush1.msra.mxu0 0.0
    %6969 = vmatprep.subr.mxu0 0.0
    %6970 = vmatpush1.msra.mxu0 0.0
    %6971 = vmatprep.subr.mxu0 0.0
    %6972 = vmatpush1.msra.mxu0 0.0
    %6973 = vmatprep.subr.mxu0 0.0
    %6974 = vmatpush1.msra.mxu0 0.0
    %6975 = vmatprep.subr.mxu0 0.0
    %6976 = vmatpush1.msra.mxu0 0.0
    %6977 = vmatprep.subr.mxu0 0.0
    %6978 = vmatpush1.msra.mxu0 0.0
    %6979 = vmatprep.subr.mxu0 0.0
    %6980 = vmatpush1.msra.mxu0 0.0
    %6981 = vmatprep.subr.mxu0 0.0
    %6982 = vmatpush1.msra.mxu0 0.0
    %6983 = vmatprep.subr.mxu0 0.0
    %6984 = vmatpush1.msra.mxu0 0.0
    %6985 = vmatprep.subr.mxu0 0.0
    %6986 = vmatpush1.msra.mxu0 0.0
    %6987 = vmatprep.subr.mxu0 0.0
    %6988 = vmatpush1.msra.mxu0 0.0
    %6989 = vmatprep.subr.mxu0 0.0
    %6990 = vmatpush1.msra.mxu0 0.0
    %6991 = vmatprep.subr.mxu0 0.0
    %6992 = vmatpush1.msra.mxu0 0.0
    %6993 = vmatprep.mubr.f32.mxu0 0.0
    %6994 = vmatmul.mubr.f32.gmra.mrb[0].mxu0 %v6927
    %v6995 = vpop.f32.mrb[0].mxu0
    %v6996 = vadd.f32 0.0, %v6995
    %v6997 = vpop.f32.mrb[0].mxu0
    %6998 = vdwg.mxu0
    %v6999 = vadd.f32 %v6916, %v6996
    %s7000 = scalar_lea.vmem %s5, 1152
    %v7001 = vld [vmem:[%s7000] sm:$0xff]
    %v7002 = vld [vmem:[%s7000 + $0x8] sm:$0xff]
    %v7003 = vld [vmem:[%s7000 + $0x10] sm:$0xff]
    %v7004 = vld [vmem:[%s7000 + $0x18] sm:$0xff]
    %v7005 = vld [vmem:[%s7000 + $0x20] sm:$0xff]
    %v7006 = vld [vmem:[%s7000 + $0x28] sm:$0xff]
    %v7007 = vld [vmem:[%s7000 + $0x30] sm:$0xff]
    %v7008 = vld [vmem:[%s7000 + $0x38] sm:$0xff]
    %v7009 = vrot.slane %v5495, 4
    %v7010 = vsel %vm5514, %v7009, 0
    %7012 = vmatprep.subr.mxu0 0.0
    %7013 = vmatpush1.msra.mxu0 %v7001
    %7014 = vmatprep.subr.mxu0 0.0
    %7015 = vmatpush1.msra.mxu0 %v7002
    %7016 = vmatprep.subr.mxu0 0.0
    %7017 = vmatpush1.msra.mxu0 %v7003
    %7018 = vmatprep.subr.mxu0 0.0
    %7019 = vmatpush1.msra.mxu0 %v7004
    %7020 = vmatprep.subr.mxu0 0.0
    %7021 = vmatpush1.msra.mxu0 %v7005
    %7022 = vmatprep.subr.mxu0 0.0
    %7023 = vmatpush1.msra.mxu0 %v7006
    %7024 = vmatprep.subr.mxu0 0.0
    %7025 = vmatpush1.msra.mxu0 %v7007
    %7026 = vmatprep.subr.mxu0 0.0
    %7027 = vmatpush1.msra.mxu0 %v7008
    %7028 = vmatprep.subr.mxu0 0.0
    %7029 = vmatpush1.msra.mxu0 0.0
    %7030 = vmatprep.subr.mxu0 0.0
    %7031 = vmatpush1.msra.mxu0 0.0
    %7032 = vmatprep.subr.mxu0 0.0
    %7033 = vmatpush1.msra.mxu0 0.0
    %7034 = vmatprep.subr.mxu0 0.0
    %7035 = vmatpush1.msra.mxu0 0.0
    %7036 = vmatprep.subr.mxu0 0.0
    %7037 = vmatpush1.msra.mxu0 0.0
    %7038 = vmatprep.subr.mxu0 0.0
    %7039 = vmatpush1.msra.mxu0 0.0
    %7040 = vmatprep.subr.mxu0 0.0
    %7041 = vmatpush1.msra.mxu0 0.0
    %7042 = vmatprep.subr.mxu0 0.0
    %7043 = vmatpush1.msra.mxu0 0.0
    %7044 = vmatprep.subr.mxu0 0.0
    %7045 = vmatpush1.msra.mxu0 0.0
    %7046 = vmatprep.subr.mxu0 0.0
    %7047 = vmatpush1.msra.mxu0 0.0
    %7048 = vmatprep.subr.mxu0 0.0
    %7049 = vmatpush1.msra.mxu0 0.0
    %7050 = vmatprep.subr.mxu0 0.0
    %7051 = vmatpush1.msra.mxu0 0.0
    %7052 = vmatprep.subr.mxu0 0.0
    %7053 = vmatpush1.msra.mxu0 0.0
    %7054 = vmatprep.subr.mxu0 0.0
    %7055 = vmatpush1.msra.mxu0 0.0
    %7056 = vmatprep.subr.mxu0 0.0
    %7057 = vmatpush1.msra.mxu0 0.0
    %7058 = vmatprep.subr.mxu0 0.0
    %7059 = vmatpush1.msra.mxu0 0.0
    %7060 = vmatprep.subr.mxu0 0.0
    %7061 = vmatpush1.msra.mxu0 0.0
    %7062 = vmatprep.subr.mxu0 0.0
    %7063 = vmatpush1.msra.mxu0 0.0
    %7064 = vmatprep.subr.mxu0 0.0
    %7065 = vmatpush1.msra.mxu0 0.0
    %7066 = vmatprep.subr.mxu0 0.0
    %7067 = vmatpush1.msra.mxu0 0.0
    %7068 = vmatprep.subr.mxu0 0.0
    %7069 = vmatpush1.msra.mxu0 0.0
    %7070 = vmatprep.subr.mxu0 0.0
    %7071 = vmatpush1.msra.mxu0 0.0
    %7072 = vmatprep.subr.mxu0 0.0
    %7073 = vmatpush1.msra.mxu0 0.0
    %7074 = vmatprep.subr.mxu0 0.0
    %7075 = vmatpush1.msra.mxu0 0.0
    %7076 = vmatprep.mubr.f32.mxu0 0.0
    %7077 = vmatmul.mubr.f32.gmra.mrb[0].mxu0 %v7010
    %v7078 = vpop.f32.mrb[0].mxu0
    %v7079 = vadd.f32 0.0, %v7078
    %v7080 = vpop.f32.mrb[0].mxu0
    %7081 = vdwg.mxu0
    %v7082 = vadd.f32 %v6999, %v7079
    %s7083 = scalar_lea.vmem %s5, 1216
    %v7084 = vld [vmem:[%s7083] sm:$0xff]
    %v7085 = vld [vmem:[%s7083 + $0x8] sm:$0xff]
    %v7086 = vld [vmem:[%s7083 + $0x10] sm:$0xff]
    %v7087 = vld [vmem:[%s7083 + $0x18] sm:$0xff]
    %v7088 = vld [vmem:[%s7083 + $0x20] sm:$0xff]
    %v7089 = vld [vmem:[%s7083 + $0x28] sm:$0xff]
    %v7090 = vld [vmem:[%s7083 + $0x30] sm:$0xff]
    %v7091 = vld [vmem:[%s7083 + $0x38] sm:$0xff]
    %v7092 = vrot.slane %v5495, 6
    %v7093 = vsel %vm5514, %v7092, 0
    %7095 = vmatprep.subr.mxu0 0.0
    %7096 = vmatpush1.msra.mxu0 %v7084
    %7097 = vmatprep.subr.mxu0 0.0
    %7098 = vmatpush1.msra.mxu0 %v7085
    %7099 = vmatprep.subr.mxu0 0.0
    %7100 = vmatpush1.msra.mxu0 %v7086
    %7101 = vmatprep.subr.mxu0 0.0
    %7102 = vmatpush1.msra.mxu0 %v7087
    %7103 = vmatprep.subr.mxu0 0.0
    %7104 = vmatpush1.msra.mxu0 %v7088
    %7105 = vmatprep.subr.mxu0 0.0
    %7106 = vmatpush1.msra.mxu0 %v7089
    %7107 = vmatprep.subr.mxu0 0.0
    %7108 = vmatpush1.msra.mxu0 %v7090
    %7109 = vmatprep.subr.mxu0 0.0
    %7110 = vmatpush1.msra.mxu0 %v7091
    %7111 = vmatprep.subr.mxu0 0.0
    %7112 = vmatpush1.msra.mxu0 0.0
    %7113 = vmatprep.subr.mxu0 0.0
    %7114 = vmatpush1.msra.mxu0 0.0
    %7115 = vmatprep.subr.mxu0 0.0
    %7116 = vmatpush1.msra.mxu0 0.0
    %7117 = vmatprep.subr.mxu0 0.0
    %7118 = vmatpush1.msra.mxu0 0.0
    %7119 = vmatprep.subr.mxu0 0.0
    %7120 = vmatpush1.msra.mxu0 0.0
    %7121 = vmatprep.subr.mxu0 0.0
    %7122 = vmatpush1.msra.mxu0 0.0
    %7123 = vmatprep.subr.mxu0 0.0
    %7124 = vmatpush1.msra.mxu0 0.0
    %7125 = vmatprep.subr.mxu0 0.0
    %7126 = vmatpush1.msra.mxu0 0.0
    %7127 = vmatprep.subr.mxu0 0.0
    %7128 = vmatpush1.msra.mxu0 0.0
    %7129 = vmatprep.subr.mxu0 0.0
    %7130 = vmatpush1.msra.mxu0 0.0
    %7131 = vmatprep.subr.mxu0 0.0
    %7132 = vmatpush1.msra.mxu0 0.0
    %7133 = vmatprep.subr.mxu0 0.0
    %7134 = vmatpush1.msra.mxu0 0.0
    %7135 = vmatprep.subr.mxu0 0.0
    %7136 = vmatpush1.msra.mxu0 0.0
    %7137 = vmatprep.subr.mxu0 0.0
    %7138 = vmatpush1.msra.mxu0 0.0
    %7139 = vmatprep.subr.mxu0 0.0
    %7140 = vmatpush1.msra.mxu0 0.0
    %7141 = vmatprep.subr.mxu0 0.0
    %7142 = vmatpush1.msra.mxu0 0.0
    %7143 = vmatprep.subr.mxu0 0.0
    %7144 = vmatpush1.msra.mxu0 0.0
    %7145 = vmatprep.subr.mxu0 0.0
    %7146 = vmatpush1.msra.mxu0 0.0
    %7147 = vmatprep.subr.mxu0 0.0
    %7148 = vmatpush1.msra.mxu0 0.0
    %7149 = vmatprep.subr.mxu0 0.0
    %7150 = vmatpush1.msra.mxu0 0.0
    %7151 = vmatprep.subr.mxu0 0.0
    %7152 = vmatpush1.msra.mxu0 0.0
    %7153 = vmatprep.subr.mxu0 0.0
    %7154 = vmatpush1.msra.mxu0 0.0
    %7155 = vmatprep.subr.mxu0 0.0
    %7156 = vmatpush1.msra.mxu0 0.0
    %7157 = vmatprep.subr.mxu0 0.0
    %7158 = vmatpush1.msra.mxu0 0.0
    %7159 = vmatprep.mubr.f32.mxu0 0.0
    %7160 = vmatmul.mubr.f32.gmra.mrb[0].mxu0 %v7093
    %v7161 = vpop.f32.mrb[0].mxu0
    %v7162 = vadd.f32 0.0, %v7161
    %v7163 = vpop.f32.mrb[0].mxu0
    %7164 = vdwg.mxu0
    %v7165 = vadd.f32 %v7082, %v7162
    %s7166 = scalar_lea.vmem %s5, 1280
    %v7167 = vld [vmem:[%s7166] sm:$0xff]
    %v7168 = vld [vmem:[%s7166 + $0x8] sm:$0xff]
    %v7169 = vld [vmem:[%s7166 + $0x10] sm:$0xff]
    %v7170 = vld [vmem:[%s7166 + $0x18] sm:$0xff]
    %v7171 = vld [vmem:[%s7166 + $0x20] sm:$0xff]
    %v7172 = vld [vmem:[%s7166 + $0x28] sm:$0xff]
    %v7173 = vld [vmem:[%s7166 + $0x30] sm:$0xff]
    %v7174 = vld [vmem:[%s7166 + $0x38] sm:$0xff]
    %v7176 = vsel %vm5514, %v5496, 0
    %7178 = vmatprep.subr.mxu0 0.0
    %7179 = vmatpush1.msra.mxu0 %v7167
    %7180 = vmatprep.subr.mxu0 0.0
    %7181 = vmatpush1.msra.mxu0 %v7168
    %7182 = vmatprep.subr.mxu0 0.0
    %7183 = vmatpush1.msra.mxu0 %v7169
    %7184 = vmatprep.subr.mxu0 0.0
    %7185 = vmatpush1.msra.mxu0 %v7170
    %7186 = vmatprep.subr.mxu0 0.0
    %7187 = vmatpush1.msra.mxu0 %v7171
    %7188 = vmatprep.subr.mxu0 0.0
    %7189 = vmatpush1.msra.mxu0 %v7172
    %7190 = vmatprep.subr.mxu0 0.0
    %7191 = vmatpush1.msra.mxu0 %v7173
    %7192 = vmatprep.subr.mxu0 0.0
    %7193 = vmatpush1.msra.mxu0 %v7174
    %7194 = vmatprep.subr.mxu0 0.0
    %7195 = vmatpush1.msra.mxu0 0.0
    %7196 = vmatprep.subr.mxu0 0.0
    %7197 = vmatpush1.msra.mxu0 0.0
    %7198 = vmatprep.subr.mxu0 0.0
    %7199 = vmatpush1.msra.mxu0 0.0
    %7200 = vmatprep.subr.mxu0 0.0
    %7201 = vmatpush1.msra.mxu0 0.0
    %7202 = vmatprep.subr.mxu0 0.0
    %7203 = vmatpush1.msra.mxu0 0.0
    %7204 = vmatprep.subr.mxu0 0.0
    %7205 = vmatpush1.msra.mxu0 0.0
    %7206 = vmatprep.subr.mxu0 0.0
    %7207 = vmatpush1.msra.mxu0 0.0
    %7208 = vmatprep.subr.mxu0 0.0
    %7209 = vmatpush1.msra.mxu0 0.0
    %7210 = vmatprep.subr.mxu0 0.0
    %7211 = vmatpush1.msra.mxu0 0.0
    %7212 = vmatprep.subr.mxu0 0.0
    %7213 = vmatpush1.msra.mxu0 0.0
    %7214 = vmatprep.subr.mxu0 0.0
    %7215 = vmatpush1.msra.mxu0 0.0
    %7216 = vmatprep.subr.mxu0 0.0
    %7217 = vmatpush1.msra.mxu0 0.0
    %7218 = vmatprep.subr.mxu0 0.0
    %7219 = vmatpush1.msra.mxu0 0.0
    %7220 = vmatprep.subr.mxu0 0.0
    %7221 = vmatpush1.msra.mxu0 0.0
    %7222 = vmatprep.subr.mxu0 0.0
    %7223 = vmatpush1.msra.mxu0 0.0
    %7224 = vmatprep.subr.mxu0 0.0
    %7225 = vmatpush1.msra.mxu0 0.0
    %7226 = vmatprep.subr.mxu0 0.0
    %7227 = vmatpush1.msra.mxu0 0.0
    %7228 = vmatprep.subr.mxu0 0.0
    %7229 = vmatpush1.msra.mxu0 0.0
    %7230 = vmatprep.subr.mxu0 0.0
    %7231 = vmatpush1.msra.mxu0 0.0
    %7232 = vmatprep.subr.mxu0 0.0
    %7233 = vmatpush1.msra.mxu0 0.0
    %7234 = vmatprep.subr.mxu0 0.0
    %7235 = vmatpush1.msra.mxu0 0.0
    %7236 = vmatprep.subr.mxu0 0.0
    %7237 = vmatpush1.msra.mxu0 0.0
    %7238 = vmatprep.subr.mxu0 0.0
    %7239 = vmatpush1.msra.mxu0 0.0
    %7240 = vmatprep.subr.mxu0 0.0
    %7241 = vmatpush1.msra.mxu0 0.0
    %7242 = vmatprep.mubr.f32.mxu0 0.0
    %7243 = vmatmul.mubr.f32.gmra.mrb[0].mxu0 %v7176
    %v7244 = vpop.f32.mrb[0].mxu0
    %v7245 = vadd.f32 0.0, %v7244
    %v7246 = vpop.f32.mrb[0].mxu0
    %7247 = vdwg.mxu0
    %v7248 = vadd.f32 %v7165, %v7245
    %s7249 = scalar_lea.vmem %s5, 1344
    %v7250 = vld [vmem:[%s7249] sm:$0xff]
    %v7251 = vld [vmem:[%s7249 + $0x8] sm:$0xff]
    %v7252 = vld [vmem:[%s7249 + $0x10] sm:$0xff]
    %v7253 = vld [vmem:[%s7249 + $0x18] sm:$0xff]
    %v7254 = vld [vmem:[%s7249 + $0x20] sm:$0xff]
    %v7255 = vld [vmem:[%s7249 + $0x28] sm:$0xff]
    %v7256 = vld [vmem:[%s7249 + $0x30] sm:$0xff]
    %v7257 = vld [vmem:[%s7249 + $0x38] sm:$0xff]
    %v7258 = vrot.slane %v5496, 2
    %v7259 = vsel %vm5514, %v7258, 0
    %7261 = vmatprep.subr.mxu0 0.0
    %7262 = vmatpush1.msra.mxu0 %v7250
    %7263 = vmatprep.subr.mxu0 0.0
    %7264 = vmatpush1.msra.mxu0 %v7251
    %7265 = vmatprep.subr.mxu0 0.0
    %7266 = vmatpush1.msra.mxu0 %v7252
    %7267 = vmatprep.subr.mxu0 0.0
    %7268 = vmatpush1.msra.mxu0 %v7253
    %7269 = vmatprep.subr.mxu0 0.0
    %7270 = vmatpush1.msra.mxu0 %v7254
    %7271 = vmatprep.subr.mxu0 0.0
    %7272 = vmatpush1.msra.mxu0 %v7255
    %7273 = vmatprep.subr.mxu0 0.0
    %7274 = vmatpush1.msra.mxu0 %v7256
    %7275 = vmatprep.subr.mxu0 0.0
    %7276 = vmatpush1.msra.mxu0 %v7257
    %7277 = vmatprep.subr.mxu0 0.0
    %7278 = vmatpush1.msra.mxu0 0.0
    %7279 = vmatprep.subr.mxu0 0.0
    %7280 = vmatpush1.msra.mxu0 0.0
    %7281 = vmatprep.subr.mxu0 0.0
    %7282 = vmatpush1.msra.mxu0 0.0
    %7283 = vmatprep.subr.mxu0 0.0
    %7284 = vmatpush1.msra.mxu0 0.0
    %7285 = vmatprep.subr.mxu0 0.0
    %7286 = vmatpush1.msra.mxu0 0.0
    %7287 = vmatprep.subr.mxu0 0.0
    %7288 = vmatpush1.msra.mxu0 0.0
    %7289 = vmatprep.subr.mxu0 0.0
    %7290 = vmatpush1.msra.mxu0 0.0
    %7291 = vmatprep.subr.mxu0 0.0
    %7292 = vmatpush1.msra.mxu0 0.0
    %7293 = vmatprep.subr.mxu0 0.0
    %7294 = vmatpush1.msra.mxu0 0.0
    %7295 = vmatprep.subr.mxu0 0.0
    %7296 = vmatpush1.msra.mxu0 0.0
    %7297 = vmatprep.subr.mxu0 0.0
    %7298 = vmatpush1.msra.mxu0 0.0
    %7299 = vmatprep.subr.mxu0 0.0
    %7300 = vmatpush1.msra.mxu0 0.0
    %7301 = vmatprep.subr.mxu0 0.0
    %7302 = vmatpush1.msra.mxu0 0.0
    %7303 = vmatprep.subr.mxu0 0.0
    %7304 = vmatpush1.msra.mxu0 0.0
    %7305 = vmatprep.subr.mxu0 0.0
    %7306 = vmatpush1.msra.mxu0 0.0
    %7307 = vmatprep.subr.mxu0 0.0
    %7308 = vmatpush1.msra.mxu0 0.0
    %7309 = vmatprep.subr.mxu0 0.0
    %7310 = vmatpush1.msra.mxu0 0.0
    %7311 = vmatprep.subr.mxu0 0.0
    %7312 = vmatpush1.msra.mxu0 0.0
    %7313 = vmatprep.subr.mxu0 0.0
    %7314 = vmatpush1.msra.mxu0 0.0
    %7315 = vmatprep.subr.mxu0 0.0
    %7316 = vmatpush1.msra.mxu0 0.0
    %7317 = vmatprep.subr.mxu0 0.0
    %7318 = vmatpush1.msra.mxu0 0.0
    %7319 = vmatprep.subr.mxu0 0.0
    %7320 = vmatpush1.msra.mxu0 0.0
    %7321 = vmatprep.subr.mxu0 0.0
    %7322 = vmatpush1.msra.mxu0 0.0
    %7323 = vmatprep.subr.mxu0 0.0
    %7324 = vmatpush1.msra.mxu0 0.0
    %7325 = vmatprep.mubr.f32.mxu0 0.0
    %7326 = vmatmul.mubr.f32.gmra.mrb[0].mxu0 %v7259
    %v7327 = vpop.f32.mrb[0].mxu0
    %v7328 = vadd.f32 0.0, %v7327
    %v7329 = vpop.f32.mrb[0].mxu0
    %7330 = vdwg.mxu0
    %v7331 = vadd.f32 %v7248, %v7328
    %s7332 = scalar_lea.vmem %s5, 1408
    %v7333 = vld [vmem:[%s7332] sm:$0xff]
    %v7334 = vld [vmem:[%s7332 + $0x8] sm:$0xff]
    %v7335 = vld [vmem:[%s7332 + $0x10] sm:$0xff]
    %v7336 = vld [vmem:[%s7332 + $0x18] sm:$0xff]
    %v7337 = vld [vmem:[%s7332 + $0x20] sm:$0xff]
    %v7338 = vld [vmem:[%s7332 + $0x28] sm:$0xff]
    %v7339 = vld [vmem:[%s7332 + $0x30] sm:$0xff]
    %v7340 = vld [vmem:[%s7332 + $0x38] sm:$0xff]
    %v7341 = vrot.slane %v5496, 4
    %v7342 = vsel %vm5514, %v7341, 0
    %7344 = vmatprep.subr.mxu0 0.0
    %7345 = vmatpush1.msra.mxu0 %v7333
    %7346 = vmatprep.subr.mxu0 0.0
    %7347 = vmatpush1.msra.mxu0 %v7334
    %7348 = vmatprep.subr.mxu0 0.0
    %7349 = vmatpush1.msra.mxu0 %v7335
    %7350 = vmatprep.subr.mxu0 0.0
    %7351 = vmatpush1.msra.mxu0 %v7336
    %7352 = vmatprep.subr.mxu0 0.0
    %7353 = vmatpush1.msra.mxu0 %v7337
    %7354 = vmatprep.subr.mxu0 0.0
    %7355 = vmatpush1.msra.mxu0 %v7338
    %7356 = vmatprep.subr.mxu0 0.0
    %7357 = vmatpush1.msra.mxu0 %v7339
    %7358 = vmatprep.subr.mxu0 0.0
    %7359 = vmatpush1.msra.mxu0 %v7340
    %7360 = vmatprep.subr.mxu0 0.0
    %7361 = vmatpush1.msra.mxu0 0.0
    %7362 = vmatprep.subr.mxu0 0.0
    %7363 = vmatpush1.msra.mxu0 0.0
    %7364 = vmatprep.subr.mxu0 0.0
    %7365 = vmatpush1.msra.mxu0 0.0
    %7366 = vmatprep.subr.mxu0 0.0
    %7367 = vmatpush1.msra.mxu0 0.0
    %7368 = vmatprep.subr.mxu0 0.0
    %7369 = vmatpush1.msra.mxu0 0.0
    %7370 = vmatprep.subr.mxu0 0.0
    %7371 = vmatpush1.msra.mxu0 0.0
    %7372 = vmatprep.subr.mxu0 0.0
    %7373 = vmatpush1.msra.mxu0 0.0
    %7374 = vmatprep.subr.mxu0 0.0
    %7375 = vmatpush1.msra.mxu0 0.0
    %7376 = vmatprep.subr.mxu0 0.0
    %7377 = vmatpush1.msra.mxu0 0.0
    %7378 = vmatprep.subr.mxu0 0.0
    %7379 = vmatpush1.msra.mxu0 0.0
    %7380 = vmatprep.subr.mxu0 0.0
    %7381 = vmatpush1.msra.mxu0 0.0
    %7382 = vmatprep.subr.mxu0 0.0
    %7383 = vmatpush1.msra.mxu0 0.0
    %7384 = vmatprep.subr.mxu0 0.0
    %7385 = vmatpush1.msra.mxu0 0.0
    %7386 = vmatprep.subr.mxu0 0.0
    %7387 = vmatpush1.msra.mxu0 0.0
    %7388 = vmatprep.subr.mxu0 0.0
    %7389 = vmatpush1.msra.mxu0 0.0
    %7390 = vmatprep.subr.mxu0 0.0
    %7391 = vmatpush1.msra.mxu0 0.0
    %7392 = vmatprep.subr.mxu0 0.0
    %7393 = vmatpush1.msra.mxu0 0.0
    %7394 = vmatprep.subr.mxu0 0.0
    %7395 = vmatpush1.msra.mxu0 0.0
    %7396 = vmatprep.subr.mxu0 0.0
    %7397 = vmatpush1.msra.mxu0 0.0
    %7398 = vmatprep.subr.mxu0 0.0
    %7399 = vmatpush1.msra.mxu0 0.0
    %7400 = vmatprep.subr.mxu0 0.0
    %7401 = vmatpush1.msra.mxu0 0.0
    %7402 = vmatprep.subr.mxu0 0.0
    %7403 = vmatpush1.msra.mxu0 0.0
    %7404 = vmatprep.subr.mxu0 0.0
    %7405 = vmatpush1.msra.mxu0 0.0
    %7406 = vmatprep.subr.mxu0 0.0
    %7407 = vmatpush1.msra.mxu0 0.0
    %7408 = vmatprep.mubr.f32.mxu0 0.0
    %7409 = vmatmul.mubr.f32.gmra.mrb[0].mxu0 %v7342
    %v7410 = vpop.f32.mrb[0].mxu0
    %v7411 = vadd.f32 0.0, %v7410
    %v7412 = vpop.f32.mrb[0].mxu0
    %7413 = vdwg.mxu0
    %v7414 = vadd.f32 %v7331, %v7411
    %s7415 = scalar_lea.vmem %s5, 1472
    %v7416 = vld [vmem:[%s7415] sm:$0xff]
    %v7417 = vld [vmem:[%s7415 + $0x8] sm:$0xff]
    %v7418 = vld [vmem:[%s7415 + $0x10] sm:$0xff]
    %v7419 = vld [vmem:[%s7415 + $0x18] sm:$0xff]
    %v7420 = vld [vmem:[%s7415 + $0x20] sm:$0xff]
    %v7421 = vld [vmem:[%s7415 + $0x28] sm:$0xff]
    %v7422 = vld [vmem:[%s7415 + $0x30] sm:$0xff]
    %v7423 = vld [vmem:[%s7415 + $0x38] sm:$0xff]
    %v7424 = vrot.slane %v5496, 6
    %v7425 = vsel %vm5514, %v7424, 0
    %7427 = vmatprep.subr.mxu0 0.0
    %7428 = vmatpush1.msra.mxu0 %v7416
    %7429 = vmatprep.subr.mxu0 0.0
    %7430 = vmatpush1.msra.mxu0 %v7417
    %7431 = vmatprep.subr.mxu0 0.0
    %7432 = vmatpush1.msra.mxu0 %v7418
    %7433 = vmatprep.subr.mxu0 0.0
    %7434 = vmatpush1.msra.mxu0 %v7419
    %7435 = vmatprep.subr.mxu0 0.0
    %7436 = vmatpush1.msra.mxu0 %v7420
    %7437 = vmatprep.subr.mxu0 0.0
    %7438 = vmatpush1.msra.mxu0 %v7421
    %7439 = vmatprep.subr.mxu0 0.0
    %7440 = vmatpush1.msra.mxu0 %v7422
    %7441 = vmatprep.subr.mxu0 0.0
    %7442 = vmatpush1.msra.mxu0 %v7423
    %7443 = vmatprep.subr.mxu0 0.0
    %7444 = vmatpush1.msra.mxu0 0.0
    %7445 = vmatprep.subr.mxu0 0.0
    %7446 = vmatpush1.msra.mxu0 0.0
    %7447 = vmatprep.subr.mxu0 0.0
    %7448 = vmatpush1.msra.mxu0 0.0
    %7449 = vmatprep.subr.mxu0 0.0
    %7450 = vmatpush1.msra.mxu0 0.0
    %7451 = vmatprep.subr.mxu0 0.0
    %7452 = vmatpush1.msra.mxu0 0.0
    %7453 = vmatprep.subr.mxu0 0.0
    %7454 = vmatpush1.msra.mxu0 0.0
    %7455 = vmatprep.subr.mxu0 0.0
    %7456 = vmatpush1.msra.mxu0 0.0
    %7457 = vmatprep.subr.mxu0 0.0
    %7458 = vmatpush1.msra.mxu0 0.0
    %7459 = vmatprep.subr.mxu0 0.0
    %7460 = vmatpush1.msra.mxu0 0.0
    %7461 = vmatprep.subr.mxu0 0.0
    %7462 = vmatpush1.msra.mxu0 0.0
    %7463 = vmatprep.subr.mxu0 0.0
    %7464 = vmatpush1.msra.mxu0 0.0
    %7465 = vmatprep.subr.mxu0 0.0
    %7466 = vmatpush1.msra.mxu0 0.0
    %7467 = vmatprep.subr.mxu0 0.0
    %7468 = vmatpush1.msra.mxu0 0.0
    %7469 = vmatprep.subr.mxu0 0.0
    %7470 = vmatpush1.msra.mxu0 0.0
    %7471 = vmatprep.subr.mxu0 0.0
    %7472 = vmatpush1.msra.mxu0 0.0
    %7473 = vmatprep.subr.mxu0 0.0
    %7474 = vmatpush1.msra.mxu0 0.0
    %7475 = vmatprep.subr.mxu0 0.0
    %7476 = vmatpush1.msra.mxu0 0.0
    %7477 = vmatprep.subr.mxu0 0.0
    %7478 = vmatpush1.msra.mxu0 0.0
    %7479 = vmatprep.subr.mxu0 0.0
    %7480 = vmatpush1.msra.mxu0 0.0
    %7481 = vmatprep.subr.mxu0 0.0
    %7482 = vmatpush1.msra.mxu0 0.0
    %7483 = vmatprep.subr.mxu0 0.0
    %7484 = vmatpush1.msra.mxu0 0.0
    %7485 = vmatprep.subr.mxu0 0.0
    %7486 = vmatpush1.msra.mxu0 0.0
    %7487 = vmatprep.subr.mxu0 0.0
    %7488 = vmatpush1.msra.mxu0 0.0
    %7489 = vmatprep.subr.mxu0 0.0
    %7490 = vmatpush1.msra.mxu0 0.0
    %7491 = vmatprep.mubr.f32.mxu0 0.0
    %7492 = vmatmul.mubr.f32.gmra.mrb[0].mxu0 %v7425
    %v7493 = vpop.f32.mrb[0].mxu0
    %v7494 = vadd.f32 0.0, %v7493
    %v7495 = vpop.f32.mrb[0].mxu0
    %7496 = vdwg.mxu0
    %v7497 = vadd.f32 %v7414, %v7494
    %s7498 = scalar_lea.vmem %s5, 1536
    %v7499 = vld [vmem:[%s7498] sm:$0xff]
    %v7500 = vld [vmem:[%s7498 + $0x8] sm:$0xff]
    %v7501 = vld [vmem:[%s7498 + $0x10] sm:$0xff]
    %v7502 = vld [vmem:[%s7498 + $0x18] sm:$0xff]
    %v7503 = vld [vmem:[%s7498 + $0x20] sm:$0xff]
    %v7504 = vld [vmem:[%s7498 + $0x28] sm:$0xff]
    %v7505 = vld [vmem:[%s7498 + $0x30] sm:$0xff]
    %v7506 = vld [vmem:[%s7498 + $0x38] sm:$0xff]
    %v7508 = vsel %vm5514, %v5497, 0
    %7510 = vmatprep.subr.mxu0 0.0
    %7511 = vmatpush1.msra.mxu0 %v7499
    %7512 = vmatprep.subr.mxu0 0.0
    %7513 = vmatpush1.msra.mxu0 %v7500
    %7514 = vmatprep.subr.mxu0 0.0
    %7515 = vmatpush1.msra.mxu0 %v7501
    %7516 = vmatprep.subr.mxu0 0.0
    %7517 = vmatpush1.msra.mxu0 %v7502
    %7518 = vmatprep.subr.mxu0 0.0
    %7519 = vmatpush1.msra.mxu0 %v7503
    %7520 = vmatprep.subr.mxu0 0.0
    %7521 = vmatpush1.msra.mxu0 %v7504
    %7522 = vmatprep.subr.mxu0 0.0
    %7523 = vmatpush1.msra.mxu0 %v7505
    %7524 = vmatprep.subr.mxu0 0.0
    %7525 = vmatpush1.msra.mxu0 %v7506
    %7526 = vmatprep.subr.mxu0 0.0
    %7527 = vmatpush1.msra.mxu0 0.0
    %7528 = vmatprep.subr.mxu0 0.0
    %7529 = vmatpush1.msra.mxu0 0.0
    %7530 = vmatprep.subr.mxu0 0.0
    %7531 = vmatpush1.msra.mxu0 0.0
    %7532 = vmatprep.subr.mxu0 0.0
    %7533 = vmatpush1.msra.mxu0 0.0
    %7534 = vmatprep.subr.mxu0 0.0
    %7535 = vmatpush1.msra.mxu0 0.0
    %7536 = vmatprep.subr.mxu0 0.0
    %7537 = vmatpush1.msra.mxu0 0.0
    %7538 = vmatprep.subr.mxu0 0.0
    %7539 = vmatpush1.msra.mxu0 0.0
    %7540 = vmatprep.subr.mxu0 0.0
    %7541 = vmatpush1.msra.mxu0 0.0
    %7542 = vmatprep.subr.mxu0 0.0
    %7543 = vmatpush1.msra.mxu0 0.0
    %7544 = vmatprep.subr.mxu0 0.0
    %7545 = vmatpush1.msra.mxu0 0.0
    %7546 = vmatprep.subr.mxu0 0.0
    %7547 = vmatpush1.msra.mxu0 0.0
    %7548 = vmatprep.subr.mxu0 0.0
    %7549 = vmatpush1.msra.mxu0 0.0
    %7550 = vmatprep.subr.mxu0 0.0
    %7551 = vmatpush1.msra.mxu0 0.0
    %7552 = vmatprep.subr.mxu0 0.0
    %7553 = vmatpush1.msra.mxu0 0.0
    %7554 = vmatprep.subr.mxu0 0.0
    %7555 = vmatpush1.msra.mxu0 0.0
    %7556 = vmatprep.subr.mxu0 0.0
    %7557 = vmatpush1.msra.mxu0 0.0
    %7558 = vmatprep.subr.mxu0 0.0
    %7559 = vmatpush1.msra.mxu0 0.0
    %7560 = vmatprep.subr.mxu0 0.0
    %7561 = vmatpush1.msra.mxu0 0.0
    %7562 = vmatprep.subr.mxu0 0.0
    %7563 = vmatpush1.msra.mxu0 0.0
    %7564 = vmatprep.subr.mxu0 0.0
    %7565 = vmatpush1.msra.mxu0 0.0
    %7566 = vmatprep.subr.mxu0 0.0
    %7567 = vmatpush1.msra.mxu0 0.0
    %7568 = vmatprep.subr.mxu0 0.0
    %7569 = vmatpush1.msra.mxu0 0.0
    %7570 = vmatprep.subr.mxu0 0.0
    %7571 = vmatpush1.msra.mxu0 0.0
    %7572 = vmatprep.subr.mxu0 0.0
    %7573 = vmatpush1.msra.mxu0 0.0
    %7574 = vmatprep.mubr.f32.mxu0 0.0
    %7575 = vmatmul.mubr.f32.gmra.mrb[0].mxu0 %v7508
    %v7576 = vpop.f32.mrb[0].mxu0
    %v7577 = vadd.f32 0.0, %v7576
    %v7578 = vpop.f32.mrb[0].mxu0
    %7579 = vdwg.mxu0
    %v7580 = vadd.f32 %v7497, %v7577
    %vm7581 = vcmask 74752
    %7582 = vst.msk [vmem:[#allocation2] sm:$0x3] %vm7581, %v7580
    // Predicated region
    $region30: #{convnet_forward.1} parent=1 // pred_check
      _
    $region31: #{convnet_forward.1} parent=1 // pred_check_branch
      %7584 = sbr.rel (0) target = $region33
    $region32: #{convnet_forward.1} parent=1 // pred_region
      %s7586 = ssub.s32 32, 32
      %7587 = vsyncadd [#allocation3], %s7586
      %s7589 = sshll.u32 [#allocation2], 4
      %s7590 = int_to_ptr.vmem [resolvable:$true] %s7589
      %7592 = dma.vmem_to_hbm [thread:$0]  %s7590, 32, %s7, [#allocation3]
    $region33: #{convnet_forward.1} parent=1 // pred_fallthru
      _
    // Predicated region
    $region34: #{convnet_forward.1} parent=1 // pred_check
      _
    $region35: #{convnet_forward.1} parent=1 // pred_check_branch
      %7594 = sbr.rel (0) target = $region37
    $region36: #{convnet_forward.1} parent=1 // pred_region
      %7595 = dma.done [#allocation3], 32
    $region37: #{convnet_forward.1} parent=1 // pred_fallthru
      _
    %7596 = vsyncpa [#allocation3], 1

</llo_original>
